<compile_context>
chip_gen: v7x
topology: tpu7x:2x2x1
jax: 0.10.0
libtpu: 0.0.40
codegen_flags: <defaults>
</compile_context>

<pallas_src>
import jax
import jax.numpy as jnp
from jax import lax
from jax.experimental import pallas as pl
from jax.experimental.pallas import tpu as pltpu


def _enc_conv_kernel(x_ref, w_ref, o_ref):
    # x_ref: (Cin, H, W) VMEM block (one batch element)
    # w_ref: (Cout*Cin*3*3,) f32 in SMEM (PyTorch OIHW conv weight, row-major flattened)
    # o_ref: (Cout, H//2, W//2) VMEM block
    cin, H, W = x_ref.shape
    cout, Ho, Wo = o_ref.shape
    f32 = jnp.float32

    x = x_ref[...].astype(f32)

    # --- Blind_Conv padding: ZeroPad2d((0,0,1,0)) then ReplicationPad2d(1) ------------
    zrow = jnp.zeros((cin, 1, W), f32)
    x1 = jnp.concatenate([zrow, x], axis=1)                            # (cin, H+1, W)
    xp = jnp.concatenate([x1[:, :1, :], x1, x1[:, -1:, :]], axis=1)    # (cin, H+3, W)
    xp = jnp.concatenate([xp[:, :, :1], xp, xp[:, :, -1:]], axis=2)    # (cin, H+3, W+2)

    # --- shift + 2x2 max-pool selector matrices (exact 0/1), built ONCE per step ------
    # Blind_Pool: sh[r] = 0 if r == 0 else act[r-1];  pooled[i,j] = max of sh[2i:2i+2, 2j:2j+2]
    # => even pooled row reads conv row 2i-1 (row -1 -> all zeros), odd pooled row reads 2i;
    #    same even/odd split along columns.
    ri = lax.broadcasted_iota(jnp.int32, (Ho, H), 0)
    rr = lax.broadcasted_iota(jnp.int32, (Ho, H), 1)
    sel_row_e = (rr == 2 * ri - 1).astype(f32)       # (Ho, H); row 0 is all-zero (the pad row)
    sel_row_o = (rr == 2 * ri).astype(f32)           # (Ho, H)
    cc = lax.broadcasted_iota(jnp.int32, (W, Wo), 0)
    cj = lax.broadcasted_iota(jnp.int32, (W, Wo), 1)
    sel_col_e = (cc == 2 * cj).astype(f32)           # (W, Wo)
    sel_col_o = (cc == 2 * cj + 1).astype(f32)       # (W, Wo)

    # --- 3x3 valid conv; only output rows 0..H-1 are produced (Blind_Conv crop folded) ---
    # Tiny channel contraction -> VPU scalar-broadcast FMAs (MXU would be ~99% idle here).
    accs = [jnp.zeros((H, W), f32) for _ in range(cout)]
    for c in range(cin):
        for di in range(3):
            for dj in range(3):
                patch = xp[c, di:di + H, dj:dj + W]          # (H, W)
                base = (c * 3 + di) * 3 + dj
                for oc in range(cout):
                    wv = w_ref[oc * (cin * 9) + base]        # scalar from SMEM
                    accs[oc] = accs[oc] + wv * patch

    # --- LeakyReLU(0.1) + Blind_Pool (shift-down + 2x2 max-pool), per output channel ----
    for oc in range(cout):
        a = accs[oc]
        a = jnp.where(a > 0, a, 0.1 * a)                                   # LeakyReLU(0.1)
        row_e = jnp.dot(sel_row_e, a, preferred_element_type=f32)          # (Ho, W)
        row_o = jnp.dot(sel_row_o, a, preferred_element_type=f32)          # (Ho, W)
        rmax = jnp.maximum(row_e, row_o)
        col_e = jnp.dot(rmax, sel_col_e, preferred_element_type=f32)       # (Ho, Wo)
        col_o = jnp.dot(rmax, sel_col_o, preferred_element_type=f32)       # (Ho, Wo)
        o_ref[oc, :, :] = jnp.maximum(col_e, col_o).astype(o_ref.dtype)


def enc_conv(x, weight):
    """ENC_Conv forward.  x: (N, Cin, H, W), weight: (Cout, Cin, 3, 3) -> (N, Cout, H//2, W//2)."""
    n, cin, h, w = x.shape
    cout = weight.shape[0]
    assert weight.shape == (cout, cin, 3, 3)
    ho, wo = h // 2, w // 2
    w_flat = weight.astype(jnp.float32).reshape(-1)

    return pl.pallas_call(
        _enc_conv_kernel,
        out_shape=jax.ShapeDtypeStruct((n, cout, ho, wo), x.dtype),
        grid_spec=pltpu.PrefetchScalarGridSpec(
            num_scalar_prefetch=0,
            grid=(n,),
            in_specs=[
                pl.BlockSpec((None, cin, h, w), lambda b: (b, 0, 0, 0)),
                pl.BlockSpec(memory_space=pltpu.MemorySpace.SMEM),
            ],
            out_specs=pl.BlockSpec((None, cout, ho, wo), lambda b: (b, 0, 0, 0)),
        ),
        compiler_params=pltpu.CompilerParams(dimension_semantics=("parallel",)),
    )(x, w_flat)


def enc_conv_ref(x, weight):
    """Pure-JAX reference mirroring the PyTorch forward."""
    n, cin, h, w = x.shape
    cout = weight.shape[0]
    xf = x.astype(jnp.float32)
    # Blind_Conv: zero-pad top, replicate-pad 1, 3x3 valid conv, leaky relu, crop last row.
    x1 = jnp.concatenate([jnp.zeros((n, cin, 1, w), jnp.float32), xf], axis=2)
    x2 = jnp.concatenate([x1[:, :, :1, :], x1, x1[:, :, -1:, :]], axis=2)
    x2 = jnp.concatenate([x2[:, :, :, :1], x2, x2[:, :, :, -1:]], axis=3)
    conv = jnp.zeros((n, cout, h, w), jnp.float32)
    for di in range(3):
        for dj in range(3):
            patch = x2[:, :, di:di + h, dj:dj + w]               # (n, cin, h, w)
            wtap = weight[:, :, di, dj].astype(jnp.float32)      # (cout, cin)
            conv = conv + (patch[:, None] * wtap[None, :, :, None, None]).sum(axis=2)
    conv = jnp.where(conv > 0, conv, 0.1 * conv)
    # Blind_Pool: shift rows down by one (zero row on top), then 2x2 max pool.
    shifted = jnp.concatenate(
        [jnp.zeros((n, cout, 1, w), jnp.float32), conv[:, :, :h - 1, :]], axis=2)
    shifted = shifted[:, :, : 2 * (h // 2), : 2 * (w // 2)]
    pooled = shifted.reshape(n, cout, h // 2, 2, w // 2, 2).max(axis=(3, 5))
    return pooled.astype(x.dtype)


if __name__ == "__main__":
    key = jax.random.PRNGKey(0)
    kx, kw = jax.random.split(key)
    N, Cin, Cout, H, W = 2, 4, 8, 16, 16
    x = jax.random.normal(kx, (N, Cin, H, W), dtype=jnp.float32)
    weight = jax.random.normal(kw, (Cout, Cin, 3, 3), dtype=jnp.float32) * 0.2

    y = enc_conv(x, weight)
    jax.block_until_ready(y)
    assert y.shape == (N, Cout, H // 2, W // 2), y.shape

    y_ref = enc_conv_ref(x, weight)
    err = float(jnp.max(jnp.abs(y - y_ref)))
    assert jnp.allclose(y, y_ref, atol=1e-4, rtol=1e-4), f"mismatch vs reference, max err {err}"

    print("KERNEL_OK")
</pallas_src>

<mosaic_0001>
module attributes {stable_mosaic.version = 11 : i64} {
  func.func @_enc_conv_kernel(%arg0: i32, %arg1: memref<1x4x16x16xf32, #tpu.memory_space<vmem>>, %arg2: memref<288xf32, #tpu.memory_space<smem>>, %arg3: memref<1x8x8x8xf32, #tpu.memory_space<vmem>>) attributes {dimension_semantics = [#tpu.dimension_semantics<parallel>], iteration_bounds = array<i64: 2>, scalar_prefetch = 0 : i64, scratch_operands = 0 : i64, tpu.core_type = #tpu.core_type<tc>, window_params = [{transform_indices = @transform_0, window_bounds = array<i64: 1, 4, 16, 16>}, {transform_indices = @transform_1, window_bounds = array<i64: 288>}, {transform_indices = @transform_2, window_bounds = array<i64: 1, 8, 8, 8>}]} {
    %c0 = arith.constant 0 : index
    %c0_0 = arith.constant 0 : index
    %c0_1 = arith.constant 0 : index
    %c0_2 = arith.constant 0 : index
    %0 = vector.load %arg1[%c0, %c0_0, %c0_1, %c0_2] : memref<1x4x16x16xf32, #tpu.memory_space<vmem>>, vector<1x4x16x16xf32>
    %1 = vector.shape_cast %0 : vector<1x4x16x16xf32> to vector<4x16x16xf32>
    %cst = arith.constant 0.000000e+00 : f32
    %2 = vector.broadcast %cst : f32 to vector<4x1x16xf32>
    %3 = tpu.concatenate %2, %1 in 1 : vector<4x1x16xf32>, vector<4x16x16xf32> -> vector<4x17x16xf32>
    %4 = vector.extract_strided_slice %3 {offsets = [0, 0, 0], sizes = [4, 1, 16], strides = [1, 1, 1]} : vector<4x17x16xf32> to vector<4x1x16xf32>
    %5 = vector.extract_strided_slice %3 {offsets = [0, 16, 0], sizes = [4, 1, 16], strides = [1, 1, 1]} : vector<4x17x16xf32> to vector<4x1x16xf32>
    %6 = tpu.concatenate %4, %3, %5 in 1 : vector<4x1x16xf32>, vector<4x17x16xf32>, vector<4x1x16xf32> -> vector<4x19x16xf32>
    %7 = vector.extract_strided_slice %6 {offsets = [0, 0, 0], sizes = [4, 19, 1], strides = [1, 1, 1]} : vector<4x19x16xf32> to vector<4x19x1xf32>
    %8 = vector.extract_strided_slice %6 {offsets = [0, 0, 15], sizes = [4, 19, 1], strides = [1, 1, 1]} : vector<4x19x16xf32> to vector<4x19x1xf32>
    %9 = tpu.concatenate %7, %6, %8 in 2 : vector<4x19x1xf32>, vector<4x19x16xf32>, vector<4x19x1xf32> -> vector<4x19x18xf32>
    %10 = tpu.iota {dimensions = array<i32: 0>} : vector<8x16xi32>
    %11 = tpu.iota {dimensions = array<i32: 1>} : vector<8x16xi32>
    %c2_i32 = arith.constant 2 : i32
    %12 = vector.broadcast %c2_i32 : i32 to vector<8x16xi32>
    %13 = arith.muli %12, %10 : vector<8x16xi32>
    %c1_i32 = arith.constant 1 : i32
    %14 = vector.broadcast %c1_i32 : i32 to vector<8x16xi32>
    %15 = arith.subi %13, %14 : vector<8x16xi32>
    %16 = arith.cmpi eq, %11, %15 : vector<8x16xi32>
    %17 = arith.extui %16 : vector<8x16xi1> to vector<8x16xi32>
    %18 = arith.sitofp %17 : vector<8x16xi32> to vector<8x16xf32>
    %c2_i32_3 = arith.constant 2 : i32
    %19 = vector.broadcast %c2_i32_3 : i32 to vector<8x16xi32>
    %20 = arith.muli %19, %10 : vector<8x16xi32>
    %21 = arith.cmpi eq, %11, %20 : vector<8x16xi32>
    %22 = arith.extui %21 : vector<8x16xi1> to vector<8x16xi32>
    %23 = arith.sitofp %22 : vector<8x16xi32> to vector<8x16xf32>
    %24 = tpu.iota {dimensions = array<i32: 0>} : vector<16x8xi32>
    %25 = tpu.iota {dimensions = array<i32: 1>} : vector<16x8xi32>
    %c2_i32_4 = arith.constant 2 : i32
    %26 = vector.broadcast %c2_i32_4 : i32 to vector<16x8xi32>
    %27 = arith.muli %26, %25 : vector<16x8xi32>
    %28 = arith.cmpi eq, %24, %27 : vector<16x8xi32>
    %29 = arith.extui %28 : vector<16x8xi1> to vector<16x8xi32>
    %30 = arith.sitofp %29 : vector<16x8xi32> to vector<16x8xf32>
    %c2_i32_5 = arith.constant 2 : i32
    %31 = vector.broadcast %c2_i32_5 : i32 to vector<16x8xi32>
    %32 = arith.muli %31, %25 : vector<16x8xi32>
    %c1_i32_6 = arith.constant 1 : i32
    %33 = vector.broadcast %c1_i32_6 : i32 to vector<16x8xi32>
    %34 = arith.addi %32, %33 : vector<16x8xi32>
    %35 = arith.cmpi eq, %24, %34 : vector<16x8xi32>
    %36 = arith.extui %35 : vector<16x8xi1> to vector<16x8xi32>
    %37 = arith.sitofp %36 : vector<16x8xi32> to vector<16x8xf32>
    %cst_7 = arith.constant 0.000000e+00 : f32
    %38 = vector.broadcast %cst_7 : f32 to vector<16x16xf32>
    %cst_8 = arith.constant 0.000000e+00 : f32
    %39 = vector.broadcast %cst_8 : f32 to vector<16x16xf32>
    %cst_9 = arith.constant 0.000000e+00 : f32
    %40 = vector.broadcast %cst_9 : f32 to vector<16x16xf32>
    %cst_10 = arith.constant 0.000000e+00 : f32
    %41 = vector.broadcast %cst_10 : f32 to vector<16x16xf32>
    %cst_11 = arith.constant 0.000000e+00 : f32
    %42 = vector.broadcast %cst_11 : f32 to vector<16x16xf32>
    %cst_12 = arith.constant 0.000000e+00 : f32
    %43 = vector.broadcast %cst_12 : f32 to vector<16x16xf32>
    %cst_13 = arith.constant 0.000000e+00 : f32
    %44 = vector.broadcast %cst_13 : f32 to vector<16x16xf32>
    %cst_14 = arith.constant 0.000000e+00 : f32
    %45 = vector.broadcast %cst_14 : f32 to vector<16x16xf32>
    %46 = vector.extract_strided_slice %9 {offsets = [0, 0, 0], sizes = [1, 16, 16], strides = [1, 1, 1]} : vector<4x19x18xf32> to vector<1x16x16xf32>
    %47 = vector.shape_cast %46 : vector<1x16x16xf32> to vector<16x16xf32>
    %c0_15 = arith.constant 0 : index
    %48 = memref.load %arg2[%c0_15] : memref<288xf32, #tpu.memory_space<smem>>
    %49 = vector.broadcast %48 : f32 to vector<16x16xf32>
    %50 = arith.mulf %49, %47 : vector<16x16xf32>
    %51 = arith.addf %38, %50 : vector<16x16xf32>
    %c36 = arith.constant 36 : index
    %52 = memref.load %arg2[%c36] : memref<288xf32, #tpu.memory_space<smem>>
    %53 = vector.broadcast %52 : f32 to vector<16x16xf32>
    %54 = arith.mulf %53, %47 : vector<16x16xf32>
    %55 = arith.addf %39, %54 : vector<16x16xf32>
    %c72 = arith.constant 72 : index
    %56 = memref.load %arg2[%c72] : memref<288xf32, #tpu.memory_space<smem>>
    %57 = vector.broadcast %56 : f32 to vector<16x16xf32>
    %58 = arith.mulf %57, %47 : vector<16x16xf32>
    %59 = arith.addf %40, %58 : vector<16x16xf32>
    %c108 = arith.constant 108 : index
    %60 = memref.load %arg2[%c108] : memref<288xf32, #tpu.memory_space<smem>>
    %61 = vector.broadcast %60 : f32 to vector<16x16xf32>
    %62 = arith.mulf %61, %47 : vector<16x16xf32>
    %63 = arith.addf %41, %62 : vector<16x16xf32>
    %c144 = arith.constant 144 : index
    %64 = memref.load %arg2[%c144] : memref<288xf32, #tpu.memory_space<smem>>
    %65 = vector.broadcast %64 : f32 to vector<16x16xf32>
    %66 = arith.mulf %65, %47 : vector<16x16xf32>
    %67 = arith.addf %42, %66 : vector<16x16xf32>
    %c180 = arith.constant 180 : index
    %68 = memref.load %arg2[%c180] : memref<288xf32, #tpu.memory_space<smem>>
    %69 = vector.broadcast %68 : f32 to vector<16x16xf32>
    %70 = arith.mulf %69, %47 : vector<16x16xf32>
    %71 = arith.addf %43, %70 : vector<16x16xf32>
    %c216 = arith.constant 216 : index
    %72 = memref.load %arg2[%c216] : memref<288xf32, #tpu.memory_space<smem>>
    %73 = vector.broadcast %72 : f32 to vector<16x16xf32>
    %74 = arith.mulf %73, %47 : vector<16x16xf32>
    %75 = arith.addf %44, %74 : vector<16x16xf32>
    %c252 = arith.constant 252 : index
    %76 = memref.load %arg2[%c252] : memref<288xf32, #tpu.memory_space<smem>>
    %77 = vector.broadcast %76 : f32 to vector<16x16xf32>
    %78 = arith.mulf %77, %47 : vector<16x16xf32>
    %79 = arith.addf %45, %78 : vector<16x16xf32>
    %80 = vector.extract_strided_slice %9 {offsets = [0, 0, 1], sizes = [1, 16, 16], strides = [1, 1, 1]} : vector<4x19x18xf32> to vector<1x16x16xf32>
    %81 = vector.shape_cast %80 : vector<1x16x16xf32> to vector<16x16xf32>
    %c1 = arith.constant 1 : index
    %82 = memref.load %arg2[%c1] : memref<288xf32, #tpu.memory_space<smem>>
    %83 = vector.broadcast %82 : f32 to vector<16x16xf32>
    %84 = arith.mulf %83, %81 : vector<16x16xf32>
    %85 = arith.addf %51, %84 : vector<16x16xf32>
    %c37 = arith.constant 37 : index
    %86 = memref.load %arg2[%c37] : memref<288xf32, #tpu.memory_space<smem>>
    %87 = vector.broadcast %86 : f32 to vector<16x16xf32>
    %88 = arith.mulf %87, %81 : vector<16x16xf32>
    %89 = arith.addf %55, %88 : vector<16x16xf32>
    %c73 = arith.constant 73 : index
    %90 = memref.load %arg2[%c73] : memref<288xf32, #tpu.memory_space<smem>>
    %91 = vector.broadcast %90 : f32 to vector<16x16xf32>
    %92 = arith.mulf %91, %81 : vector<16x16xf32>
    %93 = arith.addf %59, %92 : vector<16x16xf32>
    %c109 = arith.constant 109 : index
    %94 = memref.load %arg2[%c109] : memref<288xf32, #tpu.memory_space<smem>>
    %95 = vector.broadcast %94 : f32 to vector<16x16xf32>
    %96 = arith.mulf %95, %81 : vector<16x16xf32>
    %97 = arith.addf %63, %96 : vector<16x16xf32>
    %c145 = arith.constant 145 : index
    %98 = memref.load %arg2[%c145] : memref<288xf32, #tpu.memory_space<smem>>
    %99 = vector.broadcast %98 : f32 to vector<16x16xf32>
    %100 = arith.mulf %99, %81 : vector<16x16xf32>
    %101 = arith.addf %67, %100 : vector<16x16xf32>
    %c181 = arith.constant 181 : index
    %102 = memref.load %arg2[%c181] : memref<288xf32, #tpu.memory_space<smem>>
    %103 = vector.broadcast %102 : f32 to vector<16x16xf32>
    %104 = arith.mulf %103, %81 : vector<16x16xf32>
    %105 = arith.addf %71, %104 : vector<16x16xf32>
    %c217 = arith.constant 217 : index
    %106 = memref.load %arg2[%c217] : memref<288xf32, #tpu.memory_space<smem>>
    %107 = vector.broadcast %106 : f32 to vector<16x16xf32>
    %108 = arith.mulf %107, %81 : vector<16x16xf32>
    %109 = arith.addf %75, %108 : vector<16x16xf32>
    %c253 = arith.constant 253 : index
    %110 = memref.load %arg2[%c253] : memref<288xf32, #tpu.memory_space<smem>>
    %111 = vector.broadcast %110 : f32 to vector<16x16xf32>
    %112 = arith.mulf %111, %81 : vector<16x16xf32>
    %113 = arith.addf %79, %112 : vector<16x16xf32>
    %114 = vector.extract_strided_slice %9 {offsets = [0, 0, 2], sizes = [1, 16, 16], strides = [1, 1, 1]} : vector<4x19x18xf32> to vector<1x16x16xf32>
    %115 = vector.shape_cast %114 : vector<1x16x16xf32> to vector<16x16xf32>
    %c2 = arith.constant 2 : index
    %116 = memref.load %arg2[%c2] : memref<288xf32, #tpu.memory_space<smem>>
    %117 = vector.broadcast %116 : f32 to vector<16x16xf32>
    %118 = arith.mulf %117, %115 : vector<16x16xf32>
    %119 = arith.addf %85, %118 : vector<16x16xf32>
    %c38 = arith.constant 38 : index
    %120 = memref.load %arg2[%c38] : memref<288xf32, #tpu.memory_space<smem>>
    %121 = vector.broadcast %120 : f32 to vector<16x16xf32>
    %122 = arith.mulf %121, %115 : vector<16x16xf32>
    %123 = arith.addf %89, %122 : vector<16x16xf32>
    %c74 = arith.constant 74 : index
    %124 = memref.load %arg2[%c74] : memref<288xf32, #tpu.memory_space<smem>>
    %125 = vector.broadcast %124 : f32 to vector<16x16xf32>
    %126 = arith.mulf %125, %115 : vector<16x16xf32>
    %127 = arith.addf %93, %126 : vector<16x16xf32>
    %c110 = arith.constant 110 : index
    %128 = memref.load %arg2[%c110] : memref<288xf32, #tpu.memory_space<smem>>
    %129 = vector.broadcast %128 : f32 to vector<16x16xf32>
    %130 = arith.mulf %129, %115 : vector<16x16xf32>
    %131 = arith.addf %97, %130 : vector<16x16xf32>
    %c146 = arith.constant 146 : index
    %132 = memref.load %arg2[%c146] : memref<288xf32, #tpu.memory_space<smem>>
    %133 = vector.broadcast %132 : f32 to vector<16x16xf32>
    %134 = arith.mulf %133, %115 : vector<16x16xf32>
    %135 = arith.addf %101, %134 : vector<16x16xf32>
    %c182 = arith.constant 182 : index
    %136 = memref.load %arg2[%c182] : memref<288xf32, #tpu.memory_space<smem>>
    %137 = vector.broadcast %136 : f32 to vector<16x16xf32>
    %138 = arith.mulf %137, %115 : vector<16x16xf32>
    %139 = arith.addf %105, %138 : vector<16x16xf32>
    %c218 = arith.constant 218 : index
    %140 = memref.load %arg2[%c218] : memref<288xf32, #tpu.memory_space<smem>>
    %141 = vector.broadcast %140 : f32 to vector<16x16xf32>
    %142 = arith.mulf %141, %115 : vector<16x16xf32>
    %143 = arith.addf %109, %142 : vector<16x16xf32>
    %c254 = arith.constant 254 : index
    %144 = memref.load %arg2[%c254] : memref<288xf32, #tpu.memory_space<smem>>
    %145 = vector.broadcast %144 : f32 to vector<16x16xf32>
    %146 = arith.mulf %145, %115 : vector<16x16xf32>
    %147 = arith.addf %113, %146 : vector<16x16xf32>
    %148 = vector.extract_strided_slice %9 {offsets = [0, 1, 0], sizes = [1, 16, 16], strides = [1, 1, 1]} : vector<4x19x18xf32> to vector<1x16x16xf32>
    %149 = vector.shape_cast %148 : vector<1x16x16xf32> to vector<16x16xf32>
    %c3 = arith.constant 3 : index
    %150 = memref.load %arg2[%c3] : memref<288xf32, #tpu.memory_space<smem>>
    %151 = vector.broadcast %150 : f32 to vector<16x16xf32>
    %152 = arith.mulf %151, %149 : vector<16x16xf32>
    %153 = arith.addf %119, %152 : vector<16x16xf32>
    %c39 = arith.constant 39 : index
    %154 = memref.load %arg2[%c39] : memref<288xf32, #tpu.memory_space<smem>>
    %155 = vector.broadcast %154 : f32 to vector<16x16xf32>
    %156 = arith.mulf %155, %149 : vector<16x16xf32>
    %157 = arith.addf %123, %156 : vector<16x16xf32>
    %c75 = arith.constant 75 : index
    %158 = memref.load %arg2[%c75] : memref<288xf32, #tpu.memory_space<smem>>
    %159 = vector.broadcast %158 : f32 to vector<16x16xf32>
    %160 = arith.mulf %159, %149 : vector<16x16xf32>
    %161 = arith.addf %127, %160 : vector<16x16xf32>
    %c111 = arith.constant 111 : index
    %162 = memref.load %arg2[%c111] : memref<288xf32, #tpu.memory_space<smem>>
    %163 = vector.broadcast %162 : f32 to vector<16x16xf32>
    %164 = arith.mulf %163, %149 : vector<16x16xf32>
    %165 = arith.addf %131, %164 : vector<16x16xf32>
    %c147 = arith.constant 147 : index
    %166 = memref.load %arg2[%c147] : memref<288xf32, #tpu.memory_space<smem>>
    %167 = vector.broadcast %166 : f32 to vector<16x16xf32>
    %168 = arith.mulf %167, %149 : vector<16x16xf32>
    %169 = arith.addf %135, %168 : vector<16x16xf32>
    %c183 = arith.constant 183 : index
    %170 = memref.load %arg2[%c183] : memref<288xf32, #tpu.memory_space<smem>>
    %171 = vector.broadcast %170 : f32 to vector<16x16xf32>
    %172 = arith.mulf %171, %149 : vector<16x16xf32>
    %173 = arith.addf %139, %172 : vector<16x16xf32>
    %c219 = arith.constant 219 : index
    %174 = memref.load %arg2[%c219] : memref<288xf32, #tpu.memory_space<smem>>
    %175 = vector.broadcast %174 : f32 to vector<16x16xf32>
    %176 = arith.mulf %175, %149 : vector<16x16xf32>
    %177 = arith.addf %143, %176 : vector<16x16xf32>
    %c255 = arith.constant 255 : index
    %178 = memref.load %arg2[%c255] : memref<288xf32, #tpu.memory_space<smem>>
    %179 = vector.broadcast %178 : f32 to vector<16x16xf32>
    %180 = arith.mulf %179, %149 : vector<16x16xf32>
    %181 = arith.addf %147, %180 : vector<16x16xf32>
    %182 = vector.extract_strided_slice %9 {offsets = [0, 1, 1], sizes = [1, 16, 16], strides = [1, 1, 1]} : vector<4x19x18xf32> to vector<1x16x16xf32>
    %183 = vector.shape_cast %182 : vector<1x16x16xf32> to vector<16x16xf32>
    %c4 = arith.constant 4 : index
    %184 = memref.load %arg2[%c4] : memref<288xf32, #tpu.memory_space<smem>>
    %185 = vector.broadcast %184 : f32 to vector<16x16xf32>
    %186 = arith.mulf %185, %183 : vector<16x16xf32>
    %187 = arith.addf %153, %186 : vector<16x16xf32>
    %c40 = arith.constant 40 : index
    %188 = memref.load %arg2[%c40] : memref<288xf32, #tpu.memory_space<smem>>
    %189 = vector.broadcast %188 : f32 to vector<16x16xf32>
    %190 = arith.mulf %189, %183 : vector<16x16xf32>
    %191 = arith.addf %157, %190 : vector<16x16xf32>
    %c76 = arith.constant 76 : index
    %192 = memref.load %arg2[%c76] : memref<288xf32, #tpu.memory_space<smem>>
    %193 = vector.broadcast %192 : f32 to vector<16x16xf32>
    %194 = arith.mulf %193, %183 : vector<16x16xf32>
    %195 = arith.addf %161, %194 : vector<16x16xf32>
    %c112 = arith.constant 112 : index
    %196 = memref.load %arg2[%c112] : memref<288xf32, #tpu.memory_space<smem>>
    %197 = vector.broadcast %196 : f32 to vector<16x16xf32>
    %198 = arith.mulf %197, %183 : vector<16x16xf32>
    %199 = arith.addf %165, %198 : vector<16x16xf32>
    %c148 = arith.constant 148 : index
    %200 = memref.load %arg2[%c148] : memref<288xf32, #tpu.memory_space<smem>>
    %201 = vector.broadcast %200 : f32 to vector<16x16xf32>
    %202 = arith.mulf %201, %183 : vector<16x16xf32>
    %203 = arith.addf %169, %202 : vector<16x16xf32>
    %c184 = arith.constant 184 : index
    %204 = memref.load %arg2[%c184] : memref<288xf32, #tpu.memory_space<smem>>
    %205 = vector.broadcast %204 : f32 to vector<16x16xf32>
    %206 = arith.mulf %205, %183 : vector<16x16xf32>
    %207 = arith.addf %173, %206 : vector<16x16xf32>
    %c220 = arith.constant 220 : index
    %208 = memref.load %arg2[%c220] : memref<288xf32, #tpu.memory_space<smem>>
    %209 = vector.broadcast %208 : f32 to vector<16x16xf32>
    %210 = arith.mulf %209, %183 : vector<16x16xf32>
    %211 = arith.addf %177, %210 : vector<16x16xf32>
    %c256 = arith.constant 256 : index
    %212 = memref.load %arg2[%c256] : memref<288xf32, #tpu.memory_space<smem>>
    %213 = vector.broadcast %212 : f32 to vector<16x16xf32>
    %214 = arith.mulf %213, %183 : vector<16x16xf32>
    %215 = arith.addf %181, %214 : vector<16x16xf32>
    %216 = vector.extract_strided_slice %9 {offsets = [0, 1, 2], sizes = [1, 16, 16], strides = [1, 1, 1]} : vector<4x19x18xf32> to vector<1x16x16xf32>
    %217 = vector.shape_cast %216 : vector<1x16x16xf32> to vector<16x16xf32>
    %c5 = arith.constant 5 : index
    %218 = memref.load %arg2[%c5] : memref<288xf32, #tpu.memory_space<smem>>
    %219 = vector.broadcast %218 : f32 to vector<16x16xf32>
    %220 = arith.mulf %219, %217 : vector<16x16xf32>
    %221 = arith.addf %187, %220 : vector<16x16xf32>
    %c41 = arith.constant 41 : index
    %222 = memref.load %arg2[%c41] : memref<288xf32, #tpu.memory_space<smem>>
    %223 = vector.broadcast %222 : f32 to vector<16x16xf32>
    %224 = arith.mulf %223, %217 : vector<16x16xf32>
    %225 = arith.addf %191, %224 : vector<16x16xf32>
    %c77 = arith.constant 77 : index
    %226 = memref.load %arg2[%c77] : memref<288xf32, #tpu.memory_space<smem>>
    %227 = vector.broadcast %226 : f32 to vector<16x16xf32>
    %228 = arith.mulf %227, %217 : vector<16x16xf32>
    %229 = arith.addf %195, %228 : vector<16x16xf32>
    %c113 = arith.constant 113 : index
    %230 = memref.load %arg2[%c113] : memref<288xf32, #tpu.memory_space<smem>>
    %231 = vector.broadcast %230 : f32 to vector<16x16xf32>
    %232 = arith.mulf %231, %217 : vector<16x16xf32>
    %233 = arith.addf %199, %232 : vector<16x16xf32>
    %c149 = arith.constant 149 : index
    %234 = memref.load %arg2[%c149] : memref<288xf32, #tpu.memory_space<smem>>
    %235 = vector.broadcast %234 : f32 to vector<16x16xf32>
    %236 = arith.mulf %235, %217 : vector<16x16xf32>
    %237 = arith.addf %203, %236 : vector<16x16xf32>
    %c185 = arith.constant 185 : index
    %238 = memref.load %arg2[%c185] : memref<288xf32, #tpu.memory_space<smem>>
    %239 = vector.broadcast %238 : f32 to vector<16x16xf32>
    %240 = arith.mulf %239, %217 : vector<16x16xf32>
    %241 = arith.addf %207, %240 : vector<16x16xf32>
    %c221 = arith.constant 221 : index
    %242 = memref.load %arg2[%c221] : memref<288xf32, #tpu.memory_space<smem>>
    %243 = vector.broadcast %242 : f32 to vector<16x16xf32>
    %244 = arith.mulf %243, %217 : vector<16x16xf32>
    %245 = arith.addf %211, %244 : vector<16x16xf32>
    %c257 = arith.constant 257 : index
    %246 = memref.load %arg2[%c257] : memref<288xf32, #tpu.memory_space<smem>>
    %247 = vector.broadcast %246 : f32 to vector<16x16xf32>
    %248 = arith.mulf %247, %217 : vector<16x16xf32>
    %249 = arith.addf %215, %248 : vector<16x16xf32>
    %250 = vector.extract_strided_slice %9 {offsets = [0, 2, 0], sizes = [1, 16, 16], strides = [1, 1, 1]} : vector<4x19x18xf32> to vector<1x16x16xf32>
    %251 = vector.shape_cast %250 : vector<1x16x16xf32> to vector<16x16xf32>
    %c6 = arith.constant 6 : index
    %252 = memref.load %arg2[%c6] : memref<288xf32, #tpu.memory_space<smem>>
    %253 = vector.broadcast %252 : f32 to vector<16x16xf32>
    %254 = arith.mulf %253, %251 : vector<16x16xf32>
    %255 = arith.addf %221, %254 : vector<16x16xf32>
    %c42 = arith.constant 42 : index
    %256 = memref.load %arg2[%c42] : memref<288xf32, #tpu.memory_space<smem>>
    %257 = vector.broadcast %256 : f32 to vector<16x16xf32>
    %258 = arith.mulf %257, %251 : vector<16x16xf32>
    %259 = arith.addf %225, %258 : vector<16x16xf32>
    %c78 = arith.constant 78 : index
    %260 = memref.load %arg2[%c78] : memref<288xf32, #tpu.memory_space<smem>>
    %261 = vector.broadcast %260 : f32 to vector<16x16xf32>
    %262 = arith.mulf %261, %251 : vector<16x16xf32>
    %263 = arith.addf %229, %262 : vector<16x16xf32>
    %c114 = arith.constant 114 : index
    %264 = memref.load %arg2[%c114] : memref<288xf32, #tpu.memory_space<smem>>
    %265 = vector.broadcast %264 : f32 to vector<16x16xf32>
    %266 = arith.mulf %265, %251 : vector<16x16xf32>
    %267 = arith.addf %233, %266 : vector<16x16xf32>
    %c150 = arith.constant 150 : index
    %268 = memref.load %arg2[%c150] : memref<288xf32, #tpu.memory_space<smem>>
    %269 = vector.broadcast %268 : f32 to vector<16x16xf32>
    %270 = arith.mulf %269, %251 : vector<16x16xf32>
    %271 = arith.addf %237, %270 : vector<16x16xf32>
    %c186 = arith.constant 186 : index
    %272 = memref.load %arg2[%c186] : memref<288xf32, #tpu.memory_space<smem>>
    %273 = vector.broadcast %272 : f32 to vector<16x16xf32>
    %274 = arith.mulf %273, %251 : vector<16x16xf32>
    %275 = arith.addf %241, %274 : vector<16x16xf32>
    %c222 = arith.constant 222 : index
    %276 = memref.load %arg2[%c222] : memref<288xf32, #tpu.memory_space<smem>>
    %277 = vector.broadcast %276 : f32 to vector<16x16xf32>
    %278 = arith.mulf %277, %251 : vector<16x16xf32>
    %279 = arith.addf %245, %278 : vector<16x16xf32>
    %c258 = arith.constant 258 : index
    %280 = memref.load %arg2[%c258] : memref<288xf32, #tpu.memory_space<smem>>
    %281 = vector.broadcast %280 : f32 to vector<16x16xf32>
    %282 = arith.mulf %281, %251 : vector<16x16xf32>
    %283 = arith.addf %249, %282 : vector<16x16xf32>
    %284 = vector.extract_strided_slice %9 {offsets = [0, 2, 1], sizes = [1, 16, 16], strides = [1, 1, 1]} : vector<4x19x18xf32> to vector<1x16x16xf32>
    %285 = vector.shape_cast %284 : vector<1x16x16xf32> to vector<16x16xf32>
    %c7 = arith.constant 7 : index
    %286 = memref.load %arg2[%c7] : memref<288xf32, #tpu.memory_space<smem>>
    %287 = vector.broadcast %286 : f32 to vector<16x16xf32>
    %288 = arith.mulf %287, %285 : vector<16x16xf32>
    %289 = arith.addf %255, %288 : vector<16x16xf32>
    %c43 = arith.constant 43 : index
    %290 = memref.load %arg2[%c43] : memref<288xf32, #tpu.memory_space<smem>>
    %291 = vector.broadcast %290 : f32 to vector<16x16xf32>
    %292 = arith.mulf %291, %285 : vector<16x16xf32>
    %293 = arith.addf %259, %292 : vector<16x16xf32>
    %c79 = arith.constant 79 : index
    %294 = memref.load %arg2[%c79] : memref<288xf32, #tpu.memory_space<smem>>
    %295 = vector.broadcast %294 : f32 to vector<16x16xf32>
    %296 = arith.mulf %295, %285 : vector<16x16xf32>
    %297 = arith.addf %263, %296 : vector<16x16xf32>
    %c115 = arith.constant 115 : index
    %298 = memref.load %arg2[%c115] : memref<288xf32, #tpu.memory_space<smem>>
    %299 = vector.broadcast %298 : f32 to vector<16x16xf32>
    %300 = arith.mulf %299, %285 : vector<16x16xf32>
    %301 = arith.addf %267, %300 : vector<16x16xf32>
    %c151 = arith.constant 151 : index
    %302 = memref.load %arg2[%c151] : memref<288xf32, #tpu.memory_space<smem>>
    %303 = vector.broadcast %302 : f32 to vector<16x16xf32>
    %304 = arith.mulf %303, %285 : vector<16x16xf32>
    %305 = arith.addf %271, %304 : vector<16x16xf32>
    %c187 = arith.constant 187 : index
    %306 = memref.load %arg2[%c187] : memref<288xf32, #tpu.memory_space<smem>>
    %307 = vector.broadcast %306 : f32 to vector<16x16xf32>
    %308 = arith.mulf %307, %285 : vector<16x16xf32>
    %309 = arith.addf %275, %308 : vector<16x16xf32>
    %c223 = arith.constant 223 : index
    %310 = memref.load %arg2[%c223] : memref<288xf32, #tpu.memory_space<smem>>
    %311 = vector.broadcast %310 : f32 to vector<16x16xf32>
    %312 = arith.mulf %311, %285 : vector<16x16xf32>
    %313 = arith.addf %279, %312 : vector<16x16xf32>
    %c259 = arith.constant 259 : index
    %314 = memref.load %arg2[%c259] : memref<288xf32, #tpu.memory_space<smem>>
    %315 = vector.broadcast %314 : f32 to vector<16x16xf32>
    %316 = arith.mulf %315, %285 : vector<16x16xf32>
    %317 = arith.addf %283, %316 : vector<16x16xf32>
    %318 = vector.extract_strided_slice %9 {offsets = [0, 2, 2], sizes = [1, 16, 16], strides = [1, 1, 1]} : vector<4x19x18xf32> to vector<1x16x16xf32>
    %319 = vector.shape_cast %318 : vector<1x16x16xf32> to vector<16x16xf32>
    %c8 = arith.constant 8 : index
    %320 = memref.load %arg2[%c8] : memref<288xf32, #tpu.memory_space<smem>>
    %321 = vector.broadcast %320 : f32 to vector<16x16xf32>
    %322 = arith.mulf %321, %319 : vector<16x16xf32>
    %323 = arith.addf %289, %322 : vector<16x16xf32>
    %c44 = arith.constant 44 : index
    %324 = memref.load %arg2[%c44] : memref<288xf32, #tpu.memory_space<smem>>
    %325 = vector.broadcast %324 : f32 to vector<16x16xf32>
    %326 = arith.mulf %325, %319 : vector<16x16xf32>
    %327 = arith.addf %293, %326 : vector<16x16xf32>
    %c80 = arith.constant 80 : index
    %328 = memref.load %arg2[%c80] : memref<288xf32, #tpu.memory_space<smem>>
    %329 = vector.broadcast %328 : f32 to vector<16x16xf32>
    %330 = arith.mulf %329, %319 : vector<16x16xf32>
    %331 = arith.addf %297, %330 : vector<16x16xf32>
    %c116 = arith.constant 116 : index
    %332 = memref.load %arg2[%c116] : memref<288xf32, #tpu.memory_space<smem>>
    %333 = vector.broadcast %332 : f32 to vector<16x16xf32>
    %334 = arith.mulf %333, %319 : vector<16x16xf32>
    %335 = arith.addf %301, %334 : vector<16x16xf32>
    %c152 = arith.constant 152 : index
    %336 = memref.load %arg2[%c152] : memref<288xf32, #tpu.memory_space<smem>>
    %337 = vector.broadcast %336 : f32 to vector<16x16xf32>
    %338 = arith.mulf %337, %319 : vector<16x16xf32>
    %339 = arith.addf %305, %338 : vector<16x16xf32>
    %c188 = arith.constant 188 : index
    %340 = memref.load %arg2[%c188] : memref<288xf32, #tpu.memory_space<smem>>
    %341 = vector.broadcast %340 : f32 to vector<16x16xf32>
    %342 = arith.mulf %341, %319 : vector<16x16xf32>
    %343 = arith.addf %309, %342 : vector<16x16xf32>
    %c224 = arith.constant 224 : index
    %344 = memref.load %arg2[%c224] : memref<288xf32, #tpu.memory_space<smem>>
    %345 = vector.broadcast %344 : f32 to vector<16x16xf32>
    %346 = arith.mulf %345, %319 : vector<16x16xf32>
    %347 = arith.addf %313, %346 : vector<16x16xf32>
    %c260 = arith.constant 260 : index
    %348 = memref.load %arg2[%c260] : memref<288xf32, #tpu.memory_space<smem>>
    %349 = vector.broadcast %348 : f32 to vector<16x16xf32>
    %350 = arith.mulf %349, %319 : vector<16x16xf32>
    %351 = arith.addf %317, %350 : vector<16x16xf32>
    %352 = vector.extract_strided_slice %9 {offsets = [1, 0, 0], sizes = [1, 16, 16], strides = [1, 1, 1]} : vector<4x19x18xf32> to vector<1x16x16xf32>
    %353 = vector.shape_cast %352 : vector<1x16x16xf32> to vector<16x16xf32>
    %c9 = arith.constant 9 : index
    %354 = memref.load %arg2[%c9] : memref<288xf32, #tpu.memory_space<smem>>
    %355 = vector.broadcast %354 : f32 to vector<16x16xf32>
    %356 = arith.mulf %355, %353 : vector<16x16xf32>
    %357 = arith.addf %323, %356 : vector<16x16xf32>
    %c45 = arith.constant 45 : index
    %358 = memref.load %arg2[%c45] : memref<288xf32, #tpu.memory_space<smem>>
    %359 = vector.broadcast %358 : f32 to vector<16x16xf32>
    %360 = arith.mulf %359, %353 : vector<16x16xf32>
    %361 = arith.addf %327, %360 : vector<16x16xf32>
    %c81 = arith.constant 81 : index
    %362 = memref.load %arg2[%c81] : memref<288xf32, #tpu.memory_space<smem>>
    %363 = vector.broadcast %362 : f32 to vector<16x16xf32>
    %364 = arith.mulf %363, %353 : vector<16x16xf32>
    %365 = arith.addf %331, %364 : vector<16x16xf32>
    %c117 = arith.constant 117 : index
    %366 = memref.load %arg2[%c117] : memref<288xf32, #tpu.memory_space<smem>>
    %367 = vector.broadcast %366 : f32 to vector<16x16xf32>
    %368 = arith.mulf %367, %353 : vector<16x16xf32>
    %369 = arith.addf %335, %368 : vector<16x16xf32>
    %c153 = arith.constant 153 : index
    %370 = memref.load %arg2[%c153] : memref<288xf32, #tpu.memory_space<smem>>
    %371 = vector.broadcast %370 : f32 to vector<16x16xf32>
    %372 = arith.mulf %371, %353 : vector<16x16xf32>
    %373 = arith.addf %339, %372 : vector<16x16xf32>
    %c189 = arith.constant 189 : index
    %374 = memref.load %arg2[%c189] : memref<288xf32, #tpu.memory_space<smem>>
    %375 = vector.broadcast %374 : f32 to vector<16x16xf32>
    %376 = arith.mulf %375, %353 : vector<16x16xf32>
    %377 = arith.addf %343, %376 : vector<16x16xf32>
    %c225 = arith.constant 225 : index
    %378 = memref.load %arg2[%c225] : memref<288xf32, #tpu.memory_space<smem>>
    %379 = vector.broadcast %378 : f32 to vector<16x16xf32>
    %380 = arith.mulf %379, %353 : vector<16x16xf32>
    %381 = arith.addf %347, %380 : vector<16x16xf32>
    %c261 = arith.constant 261 : index
    %382 = memref.load %arg2[%c261] : memref<288xf32, #tpu.memory_space<smem>>
    %383 = vector.broadcast %382 : f32 to vector<16x16xf32>
    %384 = arith.mulf %383, %353 : vector<16x16xf32>
    %385 = arith.addf %351, %384 : vector<16x16xf32>
    %386 = vector.extract_strided_slice %9 {offsets = [1, 0, 1], sizes = [1, 16, 16], strides = [1, 1, 1]} : vector<4x19x18xf32> to vector<1x16x16xf32>
    %387 = vector.shape_cast %386 : vector<1x16x16xf32> to vector<16x16xf32>
    %c10 = arith.constant 10 : index
    %388 = memref.load %arg2[%c10] : memref<288xf32, #tpu.memory_space<smem>>
    %389 = vector.broadcast %388 : f32 to vector<16x16xf32>
    %390 = arith.mulf %389, %387 : vector<16x16xf32>
    %391 = arith.addf %357, %390 : vector<16x16xf32>
    %c46 = arith.constant 46 : index
    %392 = memref.load %arg2[%c46] : memref<288xf32, #tpu.memory_space<smem>>
    %393 = vector.broadcast %392 : f32 to vector<16x16xf32>
    %394 = arith.mulf %393, %387 : vector<16x16xf32>
    %395 = arith.addf %361, %394 : vector<16x16xf32>
    %c82 = arith.constant 82 : index
    %396 = memref.load %arg2[%c82] : memref<288xf32, #tpu.memory_space<smem>>
    %397 = vector.broadcast %396 : f32 to vector<16x16xf32>
    %398 = arith.mulf %397, %387 : vector<16x16xf32>
    %399 = arith.addf %365, %398 : vector<16x16xf32>
    %c118 = arith.constant 118 : index
    %400 = memref.load %arg2[%c118] : memref<288xf32, #tpu.memory_space<smem>>
    %401 = vector.broadcast %400 : f32 to vector<16x16xf32>
    %402 = arith.mulf %401, %387 : vector<16x16xf32>
    %403 = arith.addf %369, %402 : vector<16x16xf32>
    %c154 = arith.constant 154 : index
    %404 = memref.load %arg2[%c154] : memref<288xf32, #tpu.memory_space<smem>>
    %405 = vector.broadcast %404 : f32 to vector<16x16xf32>
    %406 = arith.mulf %405, %387 : vector<16x16xf32>
    %407 = arith.addf %373, %406 : vector<16x16xf32>
    %c190 = arith.constant 190 : index
    %408 = memref.load %arg2[%c190] : memref<288xf32, #tpu.memory_space<smem>>
    %409 = vector.broadcast %408 : f32 to vector<16x16xf32>
    %410 = arith.mulf %409, %387 : vector<16x16xf32>
    %411 = arith.addf %377, %410 : vector<16x16xf32>
    %c226 = arith.constant 226 : index
    %412 = memref.load %arg2[%c226] : memref<288xf32, #tpu.memory_space<smem>>
    %413 = vector.broadcast %412 : f32 to vector<16x16xf32>
    %414 = arith.mulf %413, %387 : vector<16x16xf32>
    %415 = arith.addf %381, %414 : vector<16x16xf32>
    %c262 = arith.constant 262 : index
    %416 = memref.load %arg2[%c262] : memref<288xf32, #tpu.memory_space<smem>>
    %417 = vector.broadcast %416 : f32 to vector<16x16xf32>
    %418 = arith.mulf %417, %387 : vector<16x16xf32>
    %419 = arith.addf %385, %418 : vector<16x16xf32>
    %420 = vector.extract_strided_slice %9 {offsets = [1, 0, 2], sizes = [1, 16, 16], strides = [1, 1, 1]} : vector<4x19x18xf32> to vector<1x16x16xf32>
    %421 = vector.shape_cast %420 : vector<1x16x16xf32> to vector<16x16xf32>
    %c11 = arith.constant 11 : index
    %422 = memref.load %arg2[%c11] : memref<288xf32, #tpu.memory_space<smem>>
    %423 = vector.broadcast %422 : f32 to vector<16x16xf32>
    %424 = arith.mulf %423, %421 : vector<16x16xf32>
    %425 = arith.addf %391, %424 : vector<16x16xf32>
    %c47 = arith.constant 47 : index
    %426 = memref.load %arg2[%c47] : memref<288xf32, #tpu.memory_space<smem>>
    %427 = vector.broadcast %426 : f32 to vector<16x16xf32>
    %428 = arith.mulf %427, %421 : vector<16x16xf32>
    %429 = arith.addf %395, %428 : vector<16x16xf32>
    %c83 = arith.constant 83 : index
    %430 = memref.load %arg2[%c83] : memref<288xf32, #tpu.memory_space<smem>>
    %431 = vector.broadcast %430 : f32 to vector<16x16xf32>
    %432 = arith.mulf %431, %421 : vector<16x16xf32>
    %433 = arith.addf %399, %432 : vector<16x16xf32>
    %c119 = arith.constant 119 : index
    %434 = memref.load %arg2[%c119] : memref<288xf32, #tpu.memory_space<smem>>
    %435 = vector.broadcast %434 : f32 to vector<16x16xf32>
    %436 = arith.mulf %435, %421 : vector<16x16xf32>
    %437 = arith.addf %403, %436 : vector<16x16xf32>
    %c155 = arith.constant 155 : index
    %438 = memref.load %arg2[%c155] : memref<288xf32, #tpu.memory_space<smem>>
    %439 = vector.broadcast %438 : f32 to vector<16x16xf32>
    %440 = arith.mulf %439, %421 : vector<16x16xf32>
    %441 = arith.addf %407, %440 : vector<16x16xf32>
    %c191 = arith.constant 191 : index
    %442 = memref.load %arg2[%c191] : memref<288xf32, #tpu.memory_space<smem>>
    %443 = vector.broadcast %442 : f32 to vector<16x16xf32>
    %444 = arith.mulf %443, %421 : vector<16x16xf32>
    %445 = arith.addf %411, %444 : vector<16x16xf32>
    %c227 = arith.constant 227 : index
    %446 = memref.load %arg2[%c227] : memref<288xf32, #tpu.memory_space<smem>>
    %447 = vector.broadcast %446 : f32 to vector<16x16xf32>
    %448 = arith.mulf %447, %421 : vector<16x16xf32>
    %449 = arith.addf %415, %448 : vector<16x16xf32>
    %c263 = arith.constant 263 : index
    %450 = memref.load %arg2[%c263] : memref<288xf32, #tpu.memory_space<smem>>
    %451 = vector.broadcast %450 : f32 to vector<16x16xf32>
    %452 = arith.mulf %451, %421 : vector<16x16xf32>
    %453 = arith.addf %419, %452 : vector<16x16xf32>
    %454 = vector.extract_strided_slice %9 {offsets = [1, 1, 0], sizes = [1, 16, 16], strides = [1, 1, 1]} : vector<4x19x18xf32> to vector<1x16x16xf32>
    %455 = vector.shape_cast %454 : vector<1x16x16xf32> to vector<16x16xf32>
    %c12 = arith.constant 12 : index
    %456 = memref.load %arg2[%c12] : memref<288xf32, #tpu.memory_space<smem>>
    %457 = vector.broadcast %456 : f32 to vector<16x16xf32>
    %458 = arith.mulf %457, %455 : vector<16x16xf32>
    %459 = arith.addf %425, %458 : vector<16x16xf32>
    %c48 = arith.constant 48 : index
    %460 = memref.load %arg2[%c48] : memref<288xf32, #tpu.memory_space<smem>>
    %461 = vector.broadcast %460 : f32 to vector<16x16xf32>
    %462 = arith.mulf %461, %455 : vector<16x16xf32>
    %463 = arith.addf %429, %462 : vector<16x16xf32>
    %c84 = arith.constant 84 : index
    %464 = memref.load %arg2[%c84] : memref<288xf32, #tpu.memory_space<smem>>
    %465 = vector.broadcast %464 : f32 to vector<16x16xf32>
    %466 = arith.mulf %465, %455 : vector<16x16xf32>
    %467 = arith.addf %433, %466 : vector<16x16xf32>
    %c120 = arith.constant 120 : index
    %468 = memref.load %arg2[%c120] : memref<288xf32, #tpu.memory_space<smem>>
    %469 = vector.broadcast %468 : f32 to vector<16x16xf32>
    %470 = arith.mulf %469, %455 : vector<16x16xf32>
    %471 = arith.addf %437, %470 : vector<16x16xf32>
    %c156 = arith.constant 156 : index
    %472 = memref.load %arg2[%c156] : memref<288xf32, #tpu.memory_space<smem>>
    %473 = vector.broadcast %472 : f32 to vector<16x16xf32>
    %474 = arith.mulf %473, %455 : vector<16x16xf32>
    %475 = arith.addf %441, %474 : vector<16x16xf32>
    %c192 = arith.constant 192 : index
    %476 = memref.load %arg2[%c192] : memref<288xf32, #tpu.memory_space<smem>>
    %477 = vector.broadcast %476 : f32 to vector<16x16xf32>
    %478 = arith.mulf %477, %455 : vector<16x16xf32>
    %479 = arith.addf %445, %478 : vector<16x16xf32>
    %c228 = arith.constant 228 : index
    %480 = memref.load %arg2[%c228] : memref<288xf32, #tpu.memory_space<smem>>
    %481 = vector.broadcast %480 : f32 to vector<16x16xf32>
    %482 = arith.mulf %481, %455 : vector<16x16xf32>
    %483 = arith.addf %449, %482 : vector<16x16xf32>
    %c264 = arith.constant 264 : index
    %484 = memref.load %arg2[%c264] : memref<288xf32, #tpu.memory_space<smem>>
    %485 = vector.broadcast %484 : f32 to vector<16x16xf32>
    %486 = arith.mulf %485, %455 : vector<16x16xf32>
    %487 = arith.addf %453, %486 : vector<16x16xf32>
    %488 = vector.extract_strided_slice %9 {offsets = [1, 1, 1], sizes = [1, 16, 16], strides = [1, 1, 1]} : vector<4x19x18xf32> to vector<1x16x16xf32>
    %489 = vector.shape_cast %488 : vector<1x16x16xf32> to vector<16x16xf32>
    %c13 = arith.constant 13 : index
    %490 = memref.load %arg2[%c13] : memref<288xf32, #tpu.memory_space<smem>>
    %491 = vector.broadcast %490 : f32 to vector<16x16xf32>
    %492 = arith.mulf %491, %489 : vector<16x16xf32>
    %493 = arith.addf %459, %492 : vector<16x16xf32>
    %c49 = arith.constant 49 : index
    %494 = memref.load %arg2[%c49] : memref<288xf32, #tpu.memory_space<smem>>
    %495 = vector.broadcast %494 : f32 to vector<16x16xf32>
    %496 = arith.mulf %495, %489 : vector<16x16xf32>
    %497 = arith.addf %463, %496 : vector<16x16xf32>
    %c85 = arith.constant 85 : index
    %498 = memref.load %arg2[%c85] : memref<288xf32, #tpu.memory_space<smem>>
    %499 = vector.broadcast %498 : f32 to vector<16x16xf32>
    %500 = arith.mulf %499, %489 : vector<16x16xf32>
    %501 = arith.addf %467, %500 : vector<16x16xf32>
    %c121 = arith.constant 121 : index
    %502 = memref.load %arg2[%c121] : memref<288xf32, #tpu.memory_space<smem>>
    %503 = vector.broadcast %502 : f32 to vector<16x16xf32>
    %504 = arith.mulf %503, %489 : vector<16x16xf32>
    %505 = arith.addf %471, %504 : vector<16x16xf32>
    %c157 = arith.constant 157 : index
    %506 = memref.load %arg2[%c157] : memref<288xf32, #tpu.memory_space<smem>>
    %507 = vector.broadcast %506 : f32 to vector<16x16xf32>
    %508 = arith.mulf %507, %489 : vector<16x16xf32>
    %509 = arith.addf %475, %508 : vector<16x16xf32>
    %c193 = arith.constant 193 : index
    %510 = memref.load %arg2[%c193] : memref<288xf32, #tpu.memory_space<smem>>
    %511 = vector.broadcast %510 : f32 to vector<16x16xf32>
    %512 = arith.mulf %511, %489 : vector<16x16xf32>
    %513 = arith.addf %479, %512 : vector<16x16xf32>
    %c229 = arith.constant 229 : index
    %514 = memref.load %arg2[%c229] : memref<288xf32, #tpu.memory_space<smem>>
    %515 = vector.broadcast %514 : f32 to vector<16x16xf32>
    %516 = arith.mulf %515, %489 : vector<16x16xf32>
    %517 = arith.addf %483, %516 : vector<16x16xf32>
    %c265 = arith.constant 265 : index
    %518 = memref.load %arg2[%c265] : memref<288xf32, #tpu.memory_space<smem>>
    %519 = vector.broadcast %518 : f32 to vector<16x16xf32>
    %520 = arith.mulf %519, %489 : vector<16x16xf32>
    %521 = arith.addf %487, %520 : vector<16x16xf32>
    %522 = vector.extract_strided_slice %9 {offsets = [1, 1, 2], sizes = [1, 16, 16], strides = [1, 1, 1]} : vector<4x19x18xf32> to vector<1x16x16xf32>
    %523 = vector.shape_cast %522 : vector<1x16x16xf32> to vector<16x16xf32>
    %c14 = arith.constant 14 : index
    %524 = memref.load %arg2[%c14] : memref<288xf32, #tpu.memory_space<smem>>
    %525 = vector.broadcast %524 : f32 to vector<16x16xf32>
    %526 = arith.mulf %525, %523 : vector<16x16xf32>
    %527 = arith.addf %493, %526 : vector<16x16xf32>
    %c50 = arith.constant 50 : index
    %528 = memref.load %arg2[%c50] : memref<288xf32, #tpu.memory_space<smem>>
    %529 = vector.broadcast %528 : f32 to vector<16x16xf32>
    %530 = arith.mulf %529, %523 : vector<16x16xf32>
    %531 = arith.addf %497, %530 : vector<16x16xf32>
    %c86 = arith.constant 86 : index
    %532 = memref.load %arg2[%c86] : memref<288xf32, #tpu.memory_space<smem>>
    %533 = vector.broadcast %532 : f32 to vector<16x16xf32>
    %534 = arith.mulf %533, %523 : vector<16x16xf32>
    %535 = arith.addf %501, %534 : vector<16x16xf32>
    %c122 = arith.constant 122 : index
    %536 = memref.load %arg2[%c122] : memref<288xf32, #tpu.memory_space<smem>>
    %537 = vector.broadcast %536 : f32 to vector<16x16xf32>
    %538 = arith.mulf %537, %523 : vector<16x16xf32>
    %539 = arith.addf %505, %538 : vector<16x16xf32>
    %c158 = arith.constant 158 : index
    %540 = memref.load %arg2[%c158] : memref<288xf32, #tpu.memory_space<smem>>
    %541 = vector.broadcast %540 : f32 to vector<16x16xf32>
    %542 = arith.mulf %541, %523 : vector<16x16xf32>
    %543 = arith.addf %509, %542 : vector<16x16xf32>
    %c194 = arith.constant 194 : index
    %544 = memref.load %arg2[%c194] : memref<288xf32, #tpu.memory_space<smem>>
    %545 = vector.broadcast %544 : f32 to vector<16x16xf32>
    %546 = arith.mulf %545, %523 : vector<16x16xf32>
    %547 = arith.addf %513, %546 : vector<16x16xf32>
    %c230 = arith.constant 230 : index
    %548 = memref.load %arg2[%c230] : memref<288xf32, #tpu.memory_space<smem>>
    %549 = vector.broadcast %548 : f32 to vector<16x16xf32>
    %550 = arith.mulf %549, %523 : vector<16x16xf32>
    %551 = arith.addf %517, %550 : vector<16x16xf32>
    %c266 = arith.constant 266 : index
    %552 = memref.load %arg2[%c266] : memref<288xf32, #tpu.memory_space<smem>>
    %553 = vector.broadcast %552 : f32 to vector<16x16xf32>
    %554 = arith.mulf %553, %523 : vector<16x16xf32>
    %555 = arith.addf %521, %554 : vector<16x16xf32>
    %556 = vector.extract_strided_slice %9 {offsets = [1, 2, 0], sizes = [1, 16, 16], strides = [1, 1, 1]} : vector<4x19x18xf32> to vector<1x16x16xf32>
    %557 = vector.shape_cast %556 : vector<1x16x16xf32> to vector<16x16xf32>
    %c15 = arith.constant 15 : index
    %558 = memref.load %arg2[%c15] : memref<288xf32, #tpu.memory_space<smem>>
    %559 = vector.broadcast %558 : f32 to vector<16x16xf32>
    %560 = arith.mulf %559, %557 : vector<16x16xf32>
    %561 = arith.addf %527, %560 : vector<16x16xf32>
    %c51 = arith.constant 51 : index
    %562 = memref.load %arg2[%c51] : memref<288xf32, #tpu.memory_space<smem>>
    %563 = vector.broadcast %562 : f32 to vector<16x16xf32>
    %564 = arith.mulf %563, %557 : vector<16x16xf32>
    %565 = arith.addf %531, %564 : vector<16x16xf32>
    %c87 = arith.constant 87 : index
    %566 = memref.load %arg2[%c87] : memref<288xf32, #tpu.memory_space<smem>>
    %567 = vector.broadcast %566 : f32 to vector<16x16xf32>
    %568 = arith.mulf %567, %557 : vector<16x16xf32>
    %569 = arith.addf %535, %568 : vector<16x16xf32>
    %c123 = arith.constant 123 : index
    %570 = memref.load %arg2[%c123] : memref<288xf32, #tpu.memory_space<smem>>
    %571 = vector.broadcast %570 : f32 to vector<16x16xf32>
    %572 = arith.mulf %571, %557 : vector<16x16xf32>
    %573 = arith.addf %539, %572 : vector<16x16xf32>
    %c159 = arith.constant 159 : index
    %574 = memref.load %arg2[%c159] : memref<288xf32, #tpu.memory_space<smem>>
    %575 = vector.broadcast %574 : f32 to vector<16x16xf32>
    %576 = arith.mulf %575, %557 : vector<16x16xf32>
    %577 = arith.addf %543, %576 : vector<16x16xf32>
    %c195 = arith.constant 195 : index
    %578 = memref.load %arg2[%c195] : memref<288xf32, #tpu.memory_space<smem>>
    %579 = vector.broadcast %578 : f32 to vector<16x16xf32>
    %580 = arith.mulf %579, %557 : vector<16x16xf32>
    %581 = arith.addf %547, %580 : vector<16x16xf32>
    %c231 = arith.constant 231 : index
    %582 = memref.load %arg2[%c231] : memref<288xf32, #tpu.memory_space<smem>>
    %583 = vector.broadcast %582 : f32 to vector<16x16xf32>
    %584 = arith.mulf %583, %557 : vector<16x16xf32>
    %585 = arith.addf %551, %584 : vector<16x16xf32>
    %c267 = arith.constant 267 : index
    %586 = memref.load %arg2[%c267] : memref<288xf32, #tpu.memory_space<smem>>
    %587 = vector.broadcast %586 : f32 to vector<16x16xf32>
    %588 = arith.mulf %587, %557 : vector<16x16xf32>
    %589 = arith.addf %555, %588 : vector<16x16xf32>
    %590 = vector.extract_strided_slice %9 {offsets = [1, 2, 1], sizes = [1, 16, 16], strides = [1, 1, 1]} : vector<4x19x18xf32> to vector<1x16x16xf32>
    %591 = vector.shape_cast %590 : vector<1x16x16xf32> to vector<16x16xf32>
    %c16 = arith.constant 16 : index
    %592 = memref.load %arg2[%c16] : memref<288xf32, #tpu.memory_space<smem>>
    %593 = vector.broadcast %592 : f32 to vector<16x16xf32>
    %594 = arith.mulf %593, %591 : vector<16x16xf32>
    %595 = arith.addf %561, %594 : vector<16x16xf32>
    %c52 = arith.constant 52 : index
    %596 = memref.load %arg2[%c52] : memref<288xf32, #tpu.memory_space<smem>>
    %597 = vector.broadcast %596 : f32 to vector<16x16xf32>
    %598 = arith.mulf %597, %591 : vector<16x16xf32>
    %599 = arith.addf %565, %598 : vector<16x16xf32>
    %c88 = arith.constant 88 : index
    %600 = memref.load %arg2[%c88] : memref<288xf32, #tpu.memory_space<smem>>
    %601 = vector.broadcast %600 : f32 to vector<16x16xf32>
    %602 = arith.mulf %601, %591 : vector<16x16xf32>
    %603 = arith.addf %569, %602 : vector<16x16xf32>
    %c124 = arith.constant 124 : index
    %604 = memref.load %arg2[%c124] : memref<288xf32, #tpu.memory_space<smem>>
    %605 = vector.broadcast %604 : f32 to vector<16x16xf32>
    %606 = arith.mulf %605, %591 : vector<16x16xf32>
    %607 = arith.addf %573, %606 : vector<16x16xf32>
    %c160 = arith.constant 160 : index
    %608 = memref.load %arg2[%c160] : memref<288xf32, #tpu.memory_space<smem>>
    %609 = vector.broadcast %608 : f32 to vector<16x16xf32>
    %610 = arith.mulf %609, %591 : vector<16x16xf32>
    %611 = arith.addf %577, %610 : vector<16x16xf32>
    %c196 = arith.constant 196 : index
    %612 = memref.load %arg2[%c196] : memref<288xf32, #tpu.memory_space<smem>>
    %613 = vector.broadcast %612 : f32 to vector<16x16xf32>
    %614 = arith.mulf %613, %591 : vector<16x16xf32>
    %615 = arith.addf %581, %614 : vector<16x16xf32>
    %c232 = arith.constant 232 : index
    %616 = memref.load %arg2[%c232] : memref<288xf32, #tpu.memory_space<smem>>
    %617 = vector.broadcast %616 : f32 to vector<16x16xf32>
    %618 = arith.mulf %617, %591 : vector<16x16xf32>
    %619 = arith.addf %585, %618 : vector<16x16xf32>
    %c268 = arith.constant 268 : index
    %620 = memref.load %arg2[%c268] : memref<288xf32, #tpu.memory_space<smem>>
    %621 = vector.broadcast %620 : f32 to vector<16x16xf32>
    %622 = arith.mulf %621, %591 : vector<16x16xf32>
    %623 = arith.addf %589, %622 : vector<16x16xf32>
    %624 = vector.extract_strided_slice %9 {offsets = [1, 2, 2], sizes = [1, 16, 16], strides = [1, 1, 1]} : vector<4x19x18xf32> to vector<1x16x16xf32>
    %625 = vector.shape_cast %624 : vector<1x16x16xf32> to vector<16x16xf32>
    %c17 = arith.constant 17 : index
    %626 = memref.load %arg2[%c17] : memref<288xf32, #tpu.memory_space<smem>>
    %627 = vector.broadcast %626 : f32 to vector<16x16xf32>
    %628 = arith.mulf %627, %625 : vector<16x16xf32>
    %629 = arith.addf %595, %628 : vector<16x16xf32>
    %c53 = arith.constant 53 : index
    %630 = memref.load %arg2[%c53] : memref<288xf32, #tpu.memory_space<smem>>
    %631 = vector.broadcast %630 : f32 to vector<16x16xf32>
    %632 = arith.mulf %631, %625 : vector<16x16xf32>
    %633 = arith.addf %599, %632 : vector<16x16xf32>
    %c89 = arith.constant 89 : index
    %634 = memref.load %arg2[%c89] : memref<288xf32, #tpu.memory_space<smem>>
    %635 = vector.broadcast %634 : f32 to vector<16x16xf32>
    %636 = arith.mulf %635, %625 : vector<16x16xf32>
    %637 = arith.addf %603, %636 : vector<16x16xf32>
    %c125 = arith.constant 125 : index
    %638 = memref.load %arg2[%c125] : memref<288xf32, #tpu.memory_space<smem>>
    %639 = vector.broadcast %638 : f32 to vector<16x16xf32>
    %640 = arith.mulf %639, %625 : vector<16x16xf32>
    %641 = arith.addf %607, %640 : vector<16x16xf32>
    %c161 = arith.constant 161 : index
    %642 = memref.load %arg2[%c161] : memref<288xf32, #tpu.memory_space<smem>>
    %643 = vector.broadcast %642 : f32 to vector<16x16xf32>
    %644 = arith.mulf %643, %625 : vector<16x16xf32>
    %645 = arith.addf %611, %644 : vector<16x16xf32>
    %c197 = arith.constant 197 : index
    %646 = memref.load %arg2[%c197] : memref<288xf32, #tpu.memory_space<smem>>
    %647 = vector.broadcast %646 : f32 to vector<16x16xf32>
    %648 = arith.mulf %647, %625 : vector<16x16xf32>
    %649 = arith.addf %615, %648 : vector<16x16xf32>
    %c233 = arith.constant 233 : index
    %650 = memref.load %arg2[%c233] : memref<288xf32, #tpu.memory_space<smem>>
    %651 = vector.broadcast %650 : f32 to vector<16x16xf32>
    %652 = arith.mulf %651, %625 : vector<16x16xf32>
    %653 = arith.addf %619, %652 : vector<16x16xf32>
    %c269 = arith.constant 269 : index
    %654 = memref.load %arg2[%c269] : memref<288xf32, #tpu.memory_space<smem>>
    %655 = vector.broadcast %654 : f32 to vector<16x16xf32>
    %656 = arith.mulf %655, %625 : vector<16x16xf32>
    %657 = arith.addf %623, %656 : vector<16x16xf32>
    %658 = vector.extract_strided_slice %9 {offsets = [2, 0, 0], sizes = [1, 16, 16], strides = [1, 1, 1]} : vector<4x19x18xf32> to vector<1x16x16xf32>
    %659 = vector.shape_cast %658 : vector<1x16x16xf32> to vector<16x16xf32>
    %c18 = arith.constant 18 : index
    %660 = memref.load %arg2[%c18] : memref<288xf32, #tpu.memory_space<smem>>
    %661 = vector.broadcast %660 : f32 to vector<16x16xf32>
    %662 = arith.mulf %661, %659 : vector<16x16xf32>
    %663 = arith.addf %629, %662 : vector<16x16xf32>
    %c54 = arith.constant 54 : index
    %664 = memref.load %arg2[%c54] : memref<288xf32, #tpu.memory_space<smem>>
    %665 = vector.broadcast %664 : f32 to vector<16x16xf32>
    %666 = arith.mulf %665, %659 : vector<16x16xf32>
    %667 = arith.addf %633, %666 : vector<16x16xf32>
    %c90 = arith.constant 90 : index
    %668 = memref.load %arg2[%c90] : memref<288xf32, #tpu.memory_space<smem>>
    %669 = vector.broadcast %668 : f32 to vector<16x16xf32>
    %670 = arith.mulf %669, %659 : vector<16x16xf32>
    %671 = arith.addf %637, %670 : vector<16x16xf32>
    %c126 = arith.constant 126 : index
    %672 = memref.load %arg2[%c126] : memref<288xf32, #tpu.memory_space<smem>>
    %673 = vector.broadcast %672 : f32 to vector<16x16xf32>
    %674 = arith.mulf %673, %659 : vector<16x16xf32>
    %675 = arith.addf %641, %674 : vector<16x16xf32>
    %c162 = arith.constant 162 : index
    %676 = memref.load %arg2[%c162] : memref<288xf32, #tpu.memory_space<smem>>
    %677 = vector.broadcast %676 : f32 to vector<16x16xf32>
    %678 = arith.mulf %677, %659 : vector<16x16xf32>
    %679 = arith.addf %645, %678 : vector<16x16xf32>
    %c198 = arith.constant 198 : index
    %680 = memref.load %arg2[%c198] : memref<288xf32, #tpu.memory_space<smem>>
    %681 = vector.broadcast %680 : f32 to vector<16x16xf32>
    %682 = arith.mulf %681, %659 : vector<16x16xf32>
    %683 = arith.addf %649, %682 : vector<16x16xf32>
    %c234 = arith.constant 234 : index
    %684 = memref.load %arg2[%c234] : memref<288xf32, #tpu.memory_space<smem>>
    %685 = vector.broadcast %684 : f32 to vector<16x16xf32>
    %686 = arith.mulf %685, %659 : vector<16x16xf32>
    %687 = arith.addf %653, %686 : vector<16x16xf32>
    %c270 = arith.constant 270 : index
    %688 = memref.load %arg2[%c270] : memref<288xf32, #tpu.memory_space<smem>>
    %689 = vector.broadcast %688 : f32 to vector<16x16xf32>
    %690 = arith.mulf %689, %659 : vector<16x16xf32>
    %691 = arith.addf %657, %690 : vector<16x16xf32>
    %692 = vector.extract_strided_slice %9 {offsets = [2, 0, 1], sizes = [1, 16, 16], strides = [1, 1, 1]} : vector<4x19x18xf32> to vector<1x16x16xf32>
    %693 = vector.shape_cast %692 : vector<1x16x16xf32> to vector<16x16xf32>
    %c19 = arith.constant 19 : index
    %694 = memref.load %arg2[%c19] : memref<288xf32, #tpu.memory_space<smem>>
    %695 = vector.broadcast %694 : f32 to vector<16x16xf32>
    %696 = arith.mulf %695, %693 : vector<16x16xf32>
    %697 = arith.addf %663, %696 : vector<16x16xf32>
    %c55 = arith.constant 55 : index
    %698 = memref.load %arg2[%c55] : memref<288xf32, #tpu.memory_space<smem>>
    %699 = vector.broadcast %698 : f32 to vector<16x16xf32>
    %700 = arith.mulf %699, %693 : vector<16x16xf32>
    %701 = arith.addf %667, %700 : vector<16x16xf32>
    %c91 = arith.constant 91 : index
    %702 = memref.load %arg2[%c91] : memref<288xf32, #tpu.memory_space<smem>>
    %703 = vector.broadcast %702 : f32 to vector<16x16xf32>
    %704 = arith.mulf %703, %693 : vector<16x16xf32>
    %705 = arith.addf %671, %704 : vector<16x16xf32>
    %c127 = arith.constant 127 : index
    %706 = memref.load %arg2[%c127] : memref<288xf32, #tpu.memory_space<smem>>
    %707 = vector.broadcast %706 : f32 to vector<16x16xf32>
    %708 = arith.mulf %707, %693 : vector<16x16xf32>
    %709 = arith.addf %675, %708 : vector<16x16xf32>
    %c163 = arith.constant 163 : index
    %710 = memref.load %arg2[%c163] : memref<288xf32, #tpu.memory_space<smem>>
    %711 = vector.broadcast %710 : f32 to vector<16x16xf32>
    %712 = arith.mulf %711, %693 : vector<16x16xf32>
    %713 = arith.addf %679, %712 : vector<16x16xf32>
    %c199 = arith.constant 199 : index
    %714 = memref.load %arg2[%c199] : memref<288xf32, #tpu.memory_space<smem>>
    %715 = vector.broadcast %714 : f32 to vector<16x16xf32>
    %716 = arith.mulf %715, %693 : vector<16x16xf32>
    %717 = arith.addf %683, %716 : vector<16x16xf32>
    %c235 = arith.constant 235 : index
    %718 = memref.load %arg2[%c235] : memref<288xf32, #tpu.memory_space<smem>>
    %719 = vector.broadcast %718 : f32 to vector<16x16xf32>
    %720 = arith.mulf %719, %693 : vector<16x16xf32>
    %721 = arith.addf %687, %720 : vector<16x16xf32>
    %c271 = arith.constant 271 : index
    %722 = memref.load %arg2[%c271] : memref<288xf32, #tpu.memory_space<smem>>
    %723 = vector.broadcast %722 : f32 to vector<16x16xf32>
    %724 = arith.mulf %723, %693 : vector<16x16xf32>
    %725 = arith.addf %691, %724 : vector<16x16xf32>
    %726 = vector.extract_strided_slice %9 {offsets = [2, 0, 2], sizes = [1, 16, 16], strides = [1, 1, 1]} : vector<4x19x18xf32> to vector<1x16x16xf32>
    %727 = vector.shape_cast %726 : vector<1x16x16xf32> to vector<16x16xf32>
    %c20 = arith.constant 20 : index
    %728 = memref.load %arg2[%c20] : memref<288xf32, #tpu.memory_space<smem>>
    %729 = vector.broadcast %728 : f32 to vector<16x16xf32>
    %730 = arith.mulf %729, %727 : vector<16x16xf32>
    %731 = arith.addf %697, %730 : vector<16x16xf32>
    %c56 = arith.constant 56 : index
    %732 = memref.load %arg2[%c56] : memref<288xf32, #tpu.memory_space<smem>>
    %733 = vector.broadcast %732 : f32 to vector<16x16xf32>
    %734 = arith.mulf %733, %727 : vector<16x16xf32>
    %735 = arith.addf %701, %734 : vector<16x16xf32>
    %c92 = arith.constant 92 : index
    %736 = memref.load %arg2[%c92] : memref<288xf32, #tpu.memory_space<smem>>
    %737 = vector.broadcast %736 : f32 to vector<16x16xf32>
    %738 = arith.mulf %737, %727 : vector<16x16xf32>
    %739 = arith.addf %705, %738 : vector<16x16xf32>
    %c128 = arith.constant 128 : index
    %740 = memref.load %arg2[%c128] : memref<288xf32, #tpu.memory_space<smem>>
    %741 = vector.broadcast %740 : f32 to vector<16x16xf32>
    %742 = arith.mulf %741, %727 : vector<16x16xf32>
    %743 = arith.addf %709, %742 : vector<16x16xf32>
    %c164 = arith.constant 164 : index
    %744 = memref.load %arg2[%c164] : memref<288xf32, #tpu.memory_space<smem>>
    %745 = vector.broadcast %744 : f32 to vector<16x16xf32>
    %746 = arith.mulf %745, %727 : vector<16x16xf32>
    %747 = arith.addf %713, %746 : vector<16x16xf32>
    %c200 = arith.constant 200 : index
    %748 = memref.load %arg2[%c200] : memref<288xf32, #tpu.memory_space<smem>>
    %749 = vector.broadcast %748 : f32 to vector<16x16xf32>
    %750 = arith.mulf %749, %727 : vector<16x16xf32>
    %751 = arith.addf %717, %750 : vector<16x16xf32>
    %c236 = arith.constant 236 : index
    %752 = memref.load %arg2[%c236] : memref<288xf32, #tpu.memory_space<smem>>
    %753 = vector.broadcast %752 : f32 to vector<16x16xf32>
    %754 = arith.mulf %753, %727 : vector<16x16xf32>
    %755 = arith.addf %721, %754 : vector<16x16xf32>
    %c272 = arith.constant 272 : index
    %756 = memref.load %arg2[%c272] : memref<288xf32, #tpu.memory_space<smem>>
    %757 = vector.broadcast %756 : f32 to vector<16x16xf32>
    %758 = arith.mulf %757, %727 : vector<16x16xf32>
    %759 = arith.addf %725, %758 : vector<16x16xf32>
    %760 = vector.extract_strided_slice %9 {offsets = [2, 1, 0], sizes = [1, 16, 16], strides = [1, 1, 1]} : vector<4x19x18xf32> to vector<1x16x16xf32>
    %761 = vector.shape_cast %760 : vector<1x16x16xf32> to vector<16x16xf32>
    %c21 = arith.constant 21 : index
    %762 = memref.load %arg2[%c21] : memref<288xf32, #tpu.memory_space<smem>>
    %763 = vector.broadcast %762 : f32 to vector<16x16xf32>
    %764 = arith.mulf %763, %761 : vector<16x16xf32>
    %765 = arith.addf %731, %764 : vector<16x16xf32>
    %c57 = arith.constant 57 : index
    %766 = memref.load %arg2[%c57] : memref<288xf32, #tpu.memory_space<smem>>
    %767 = vector.broadcast %766 : f32 to vector<16x16xf32>
    %768 = arith.mulf %767, %761 : vector<16x16xf32>
    %769 = arith.addf %735, %768 : vector<16x16xf32>
    %c93 = arith.constant 93 : index
    %770 = memref.load %arg2[%c93] : memref<288xf32, #tpu.memory_space<smem>>
    %771 = vector.broadcast %770 : f32 to vector<16x16xf32>
    %772 = arith.mulf %771, %761 : vector<16x16xf32>
    %773 = arith.addf %739, %772 : vector<16x16xf32>
    %c129 = arith.constant 129 : index
    %774 = memref.load %arg2[%c129] : memref<288xf32, #tpu.memory_space<smem>>
    %775 = vector.broadcast %774 : f32 to vector<16x16xf32>
    %776 = arith.mulf %775, %761 : vector<16x16xf32>
    %777 = arith.addf %743, %776 : vector<16x16xf32>
    %c165 = arith.constant 165 : index
    %778 = memref.load %arg2[%c165] : memref<288xf32, #tpu.memory_space<smem>>
    %779 = vector.broadcast %778 : f32 to vector<16x16xf32>
    %780 = arith.mulf %779, %761 : vector<16x16xf32>
    %781 = arith.addf %747, %780 : vector<16x16xf32>
    %c201 = arith.constant 201 : index
    %782 = memref.load %arg2[%c201] : memref<288xf32, #tpu.memory_space<smem>>
    %783 = vector.broadcast %782 : f32 to vector<16x16xf32>
    %784 = arith.mulf %783, %761 : vector<16x16xf32>
    %785 = arith.addf %751, %784 : vector<16x16xf32>
    %c237 = arith.constant 237 : index
    %786 = memref.load %arg2[%c237] : memref<288xf32, #tpu.memory_space<smem>>
    %787 = vector.broadcast %786 : f32 to vector<16x16xf32>
    %788 = arith.mulf %787, %761 : vector<16x16xf32>
    %789 = arith.addf %755, %788 : vector<16x16xf32>
    %c273 = arith.constant 273 : index
    %790 = memref.load %arg2[%c273] : memref<288xf32, #tpu.memory_space<smem>>
    %791 = vector.broadcast %790 : f32 to vector<16x16xf32>
    %792 = arith.mulf %791, %761 : vector<16x16xf32>
    %793 = arith.addf %759, %792 : vector<16x16xf32>
    %794 = vector.extract_strided_slice %9 {offsets = [2, 1, 1], sizes = [1, 16, 16], strides = [1, 1, 1]} : vector<4x19x18xf32> to vector<1x16x16xf32>
    %795 = vector.shape_cast %794 : vector<1x16x16xf32> to vector<16x16xf32>
    %c22 = arith.constant 22 : index
    %796 = memref.load %arg2[%c22] : memref<288xf32, #tpu.memory_space<smem>>
    %797 = vector.broadcast %796 : f32 to vector<16x16xf32>
    %798 = arith.mulf %797, %795 : vector<16x16xf32>
    %799 = arith.addf %765, %798 : vector<16x16xf32>
    %c58 = arith.constant 58 : index
    %800 = memref.load %arg2[%c58] : memref<288xf32, #tpu.memory_space<smem>>
    %801 = vector.broadcast %800 : f32 to vector<16x16xf32>
    %802 = arith.mulf %801, %795 : vector<16x16xf32>
    %803 = arith.addf %769, %802 : vector<16x16xf32>
    %c94 = arith.constant 94 : index
    %804 = memref.load %arg2[%c94] : memref<288xf32, #tpu.memory_space<smem>>
    %805 = vector.broadcast %804 : f32 to vector<16x16xf32>
    %806 = arith.mulf %805, %795 : vector<16x16xf32>
    %807 = arith.addf %773, %806 : vector<16x16xf32>
    %c130 = arith.constant 130 : index
    %808 = memref.load %arg2[%c130] : memref<288xf32, #tpu.memory_space<smem>>
    %809 = vector.broadcast %808 : f32 to vector<16x16xf32>
    %810 = arith.mulf %809, %795 : vector<16x16xf32>
    %811 = arith.addf %777, %810 : vector<16x16xf32>
    %c166 = arith.constant 166 : index
    %812 = memref.load %arg2[%c166] : memref<288xf32, #tpu.memory_space<smem>>
    %813 = vector.broadcast %812 : f32 to vector<16x16xf32>
    %814 = arith.mulf %813, %795 : vector<16x16xf32>
    %815 = arith.addf %781, %814 : vector<16x16xf32>
    %c202 = arith.constant 202 : index
    %816 = memref.load %arg2[%c202] : memref<288xf32, #tpu.memory_space<smem>>
    %817 = vector.broadcast %816 : f32 to vector<16x16xf32>
    %818 = arith.mulf %817, %795 : vector<16x16xf32>
    %819 = arith.addf %785, %818 : vector<16x16xf32>
    %c238 = arith.constant 238 : index
    %820 = memref.load %arg2[%c238] : memref<288xf32, #tpu.memory_space<smem>>
    %821 = vector.broadcast %820 : f32 to vector<16x16xf32>
    %822 = arith.mulf %821, %795 : vector<16x16xf32>
    %823 = arith.addf %789, %822 : vector<16x16xf32>
    %c274 = arith.constant 274 : index
    %824 = memref.load %arg2[%c274] : memref<288xf32, #tpu.memory_space<smem>>
    %825 = vector.broadcast %824 : f32 to vector<16x16xf32>
    %826 = arith.mulf %825, %795 : vector<16x16xf32>
    %827 = arith.addf %793, %826 : vector<16x16xf32>
    %828 = vector.extract_strided_slice %9 {offsets = [2, 1, 2], sizes = [1, 16, 16], strides = [1, 1, 1]} : vector<4x19x18xf32> to vector<1x16x16xf32>
    %829 = vector.shape_cast %828 : vector<1x16x16xf32> to vector<16x16xf32>
    %c23 = arith.constant 23 : index
    %830 = memref.load %arg2[%c23] : memref<288xf32, #tpu.memory_space<smem>>
    %831 = vector.broadcast %830 : f32 to vector<16x16xf32>
    %832 = arith.mulf %831, %829 : vector<16x16xf32>
    %833 = arith.addf %799, %832 : vector<16x16xf32>
    %c59 = arith.constant 59 : index
    %834 = memref.load %arg2[%c59] : memref<288xf32, #tpu.memory_space<smem>>
    %835 = vector.broadcast %834 : f32 to vector<16x16xf32>
    %836 = arith.mulf %835, %829 : vector<16x16xf32>
    %837 = arith.addf %803, %836 : vector<16x16xf32>
    %c95 = arith.constant 95 : index
    %838 = memref.load %arg2[%c95] : memref<288xf32, #tpu.memory_space<smem>>
    %839 = vector.broadcast %838 : f32 to vector<16x16xf32>
    %840 = arith.mulf %839, %829 : vector<16x16xf32>
    %841 = arith.addf %807, %840 : vector<16x16xf32>
    %c131 = arith.constant 131 : index
    %842 = memref.load %arg2[%c131] : memref<288xf32, #tpu.memory_space<smem>>
    %843 = vector.broadcast %842 : f32 to vector<16x16xf32>
    %844 = arith.mulf %843, %829 : vector<16x16xf32>
    %845 = arith.addf %811, %844 : vector<16x16xf32>
    %c167 = arith.constant 167 : index
    %846 = memref.load %arg2[%c167] : memref<288xf32, #tpu.memory_space<smem>>
    %847 = vector.broadcast %846 : f32 to vector<16x16xf32>
    %848 = arith.mulf %847, %829 : vector<16x16xf32>
    %849 = arith.addf %815, %848 : vector<16x16xf32>
    %c203 = arith.constant 203 : index
    %850 = memref.load %arg2[%c203] : memref<288xf32, #tpu.memory_space<smem>>
    %851 = vector.broadcast %850 : f32 to vector<16x16xf32>
    %852 = arith.mulf %851, %829 : vector<16x16xf32>
    %853 = arith.addf %819, %852 : vector<16x16xf32>
    %c239 = arith.constant 239 : index
    %854 = memref.load %arg2[%c239] : memref<288xf32, #tpu.memory_space<smem>>
    %855 = vector.broadcast %854 : f32 to vector<16x16xf32>
    %856 = arith.mulf %855, %829 : vector<16x16xf32>
    %857 = arith.addf %823, %856 : vector<16x16xf32>
    %c275 = arith.constant 275 : index
    %858 = memref.load %arg2[%c275] : memref<288xf32, #tpu.memory_space<smem>>
    %859 = vector.broadcast %858 : f32 to vector<16x16xf32>
    %860 = arith.mulf %859, %829 : vector<16x16xf32>
    %861 = arith.addf %827, %860 : vector<16x16xf32>
    %862 = vector.extract_strided_slice %9 {offsets = [2, 2, 0], sizes = [1, 16, 16], strides = [1, 1, 1]} : vector<4x19x18xf32> to vector<1x16x16xf32>
    %863 = vector.shape_cast %862 : vector<1x16x16xf32> to vector<16x16xf32>
    %c24 = arith.constant 24 : index
    %864 = memref.load %arg2[%c24] : memref<288xf32, #tpu.memory_space<smem>>
    %865 = vector.broadcast %864 : f32 to vector<16x16xf32>
    %866 = arith.mulf %865, %863 : vector<16x16xf32>
    %867 = arith.addf %833, %866 : vector<16x16xf32>
    %c60 = arith.constant 60 : index
    %868 = memref.load %arg2[%c60] : memref<288xf32, #tpu.memory_space<smem>>
    %869 = vector.broadcast %868 : f32 to vector<16x16xf32>
    %870 = arith.mulf %869, %863 : vector<16x16xf32>
    %871 = arith.addf %837, %870 : vector<16x16xf32>
    %c96 = arith.constant 96 : index
    %872 = memref.load %arg2[%c96] : memref<288xf32, #tpu.memory_space<smem>>
    %873 = vector.broadcast %872 : f32 to vector<16x16xf32>
    %874 = arith.mulf %873, %863 : vector<16x16xf32>
    %875 = arith.addf %841, %874 : vector<16x16xf32>
    %c132 = arith.constant 132 : index
    %876 = memref.load %arg2[%c132] : memref<288xf32, #tpu.memory_space<smem>>
    %877 = vector.broadcast %876 : f32 to vector<16x16xf32>
    %878 = arith.mulf %877, %863 : vector<16x16xf32>
    %879 = arith.addf %845, %878 : vector<16x16xf32>
    %c168 = arith.constant 168 : index
    %880 = memref.load %arg2[%c168] : memref<288xf32, #tpu.memory_space<smem>>
    %881 = vector.broadcast %880 : f32 to vector<16x16xf32>
    %882 = arith.mulf %881, %863 : vector<16x16xf32>
    %883 = arith.addf %849, %882 : vector<16x16xf32>
    %c204 = arith.constant 204 : index
    %884 = memref.load %arg2[%c204] : memref<288xf32, #tpu.memory_space<smem>>
    %885 = vector.broadcast %884 : f32 to vector<16x16xf32>
    %886 = arith.mulf %885, %863 : vector<16x16xf32>
    %887 = arith.addf %853, %886 : vector<16x16xf32>
    %c240 = arith.constant 240 : index
    %888 = memref.load %arg2[%c240] : memref<288xf32, #tpu.memory_space<smem>>
    %889 = vector.broadcast %888 : f32 to vector<16x16xf32>
    %890 = arith.mulf %889, %863 : vector<16x16xf32>
    %891 = arith.addf %857, %890 : vector<16x16xf32>
    %c276 = arith.constant 276 : index
    %892 = memref.load %arg2[%c276] : memref<288xf32, #tpu.memory_space<smem>>
    %893 = vector.broadcast %892 : f32 to vector<16x16xf32>
    %894 = arith.mulf %893, %863 : vector<16x16xf32>
    %895 = arith.addf %861, %894 : vector<16x16xf32>
    %896 = vector.extract_strided_slice %9 {offsets = [2, 2, 1], sizes = [1, 16, 16], strides = [1, 1, 1]} : vector<4x19x18xf32> to vector<1x16x16xf32>
    %897 = vector.shape_cast %896 : vector<1x16x16xf32> to vector<16x16xf32>
    %c25 = arith.constant 25 : index
    %898 = memref.load %arg2[%c25] : memref<288xf32, #tpu.memory_space<smem>>
    %899 = vector.broadcast %898 : f32 to vector<16x16xf32>
    %900 = arith.mulf %899, %897 : vector<16x16xf32>
    %901 = arith.addf %867, %900 : vector<16x16xf32>
    %c61 = arith.constant 61 : index
    %902 = memref.load %arg2[%c61] : memref<288xf32, #tpu.memory_space<smem>>
    %903 = vector.broadcast %902 : f32 to vector<16x16xf32>
    %904 = arith.mulf %903, %897 : vector<16x16xf32>
    %905 = arith.addf %871, %904 : vector<16x16xf32>
    %c97 = arith.constant 97 : index
    %906 = memref.load %arg2[%c97] : memref<288xf32, #tpu.memory_space<smem>>
    %907 = vector.broadcast %906 : f32 to vector<16x16xf32>
    %908 = arith.mulf %907, %897 : vector<16x16xf32>
    %909 = arith.addf %875, %908 : vector<16x16xf32>
    %c133 = arith.constant 133 : index
    %910 = memref.load %arg2[%c133] : memref<288xf32, #tpu.memory_space<smem>>
    %911 = vector.broadcast %910 : f32 to vector<16x16xf32>
    %912 = arith.mulf %911, %897 : vector<16x16xf32>
    %913 = arith.addf %879, %912 : vector<16x16xf32>
    %c169 = arith.constant 169 : index
    %914 = memref.load %arg2[%c169] : memref<288xf32, #tpu.memory_space<smem>>
    %915 = vector.broadcast %914 : f32 to vector<16x16xf32>
    %916 = arith.mulf %915, %897 : vector<16x16xf32>
    %917 = arith.addf %883, %916 : vector<16x16xf32>
    %c205 = arith.constant 205 : index
    %918 = memref.load %arg2[%c205] : memref<288xf32, #tpu.memory_space<smem>>
    %919 = vector.broadcast %918 : f32 to vector<16x16xf32>
    %920 = arith.mulf %919, %897 : vector<16x16xf32>
    %921 = arith.addf %887, %920 : vector<16x16xf32>
    %c241 = arith.constant 241 : index
    %922 = memref.load %arg2[%c241] : memref<288xf32, #tpu.memory_space<smem>>
    %923 = vector.broadcast %922 : f32 to vector<16x16xf32>
    %924 = arith.mulf %923, %897 : vector<16x16xf32>
    %925 = arith.addf %891, %924 : vector<16x16xf32>
    %c277 = arith.constant 277 : index
    %926 = memref.load %arg2[%c277] : memref<288xf32, #tpu.memory_space<smem>>
    %927 = vector.broadcast %926 : f32 to vector<16x16xf32>
    %928 = arith.mulf %927, %897 : vector<16x16xf32>
    %929 = arith.addf %895, %928 : vector<16x16xf32>
    %930 = vector.extract_strided_slice %9 {offsets = [2, 2, 2], sizes = [1, 16, 16], strides = [1, 1, 1]} : vector<4x19x18xf32> to vector<1x16x16xf32>
    %931 = vector.shape_cast %930 : vector<1x16x16xf32> to vector<16x16xf32>
    %c26 = arith.constant 26 : index
    %932 = memref.load %arg2[%c26] : memref<288xf32, #tpu.memory_space<smem>>
    %933 = vector.broadcast %932 : f32 to vector<16x16xf32>
    %934 = arith.mulf %933, %931 : vector<16x16xf32>
    %935 = arith.addf %901, %934 : vector<16x16xf32>
    %c62 = arith.constant 62 : index
    %936 = memref.load %arg2[%c62] : memref<288xf32, #tpu.memory_space<smem>>
    %937 = vector.broadcast %936 : f32 to vector<16x16xf32>
    %938 = arith.mulf %937, %931 : vector<16x16xf32>
    %939 = arith.addf %905, %938 : vector<16x16xf32>
    %c98 = arith.constant 98 : index
    %940 = memref.load %arg2[%c98] : memref<288xf32, #tpu.memory_space<smem>>
    %941 = vector.broadcast %940 : f32 to vector<16x16xf32>
    %942 = arith.mulf %941, %931 : vector<16x16xf32>
    %943 = arith.addf %909, %942 : vector<16x16xf32>
    %c134 = arith.constant 134 : index
    %944 = memref.load %arg2[%c134] : memref<288xf32, #tpu.memory_space<smem>>
    %945 = vector.broadcast %944 : f32 to vector<16x16xf32>
    %946 = arith.mulf %945, %931 : vector<16x16xf32>
    %947 = arith.addf %913, %946 : vector<16x16xf32>
    %c170 = arith.constant 170 : index
    %948 = memref.load %arg2[%c170] : memref<288xf32, #tpu.memory_space<smem>>
    %949 = vector.broadcast %948 : f32 to vector<16x16xf32>
    %950 = arith.mulf %949, %931 : vector<16x16xf32>
    %951 = arith.addf %917, %950 : vector<16x16xf32>
    %c206 = arith.constant 206 : index
    %952 = memref.load %arg2[%c206] : memref<288xf32, #tpu.memory_space<smem>>
    %953 = vector.broadcast %952 : f32 to vector<16x16xf32>
    %954 = arith.mulf %953, %931 : vector<16x16xf32>
    %955 = arith.addf %921, %954 : vector<16x16xf32>
    %c242 = arith.constant 242 : index
    %956 = memref.load %arg2[%c242] : memref<288xf32, #tpu.memory_space<smem>>
    %957 = vector.broadcast %956 : f32 to vector<16x16xf32>
    %958 = arith.mulf %957, %931 : vector<16x16xf32>
    %959 = arith.addf %925, %958 : vector<16x16xf32>
    %c278 = arith.constant 278 : index
    %960 = memref.load %arg2[%c278] : memref<288xf32, #tpu.memory_space<smem>>
    %961 = vector.broadcast %960 : f32 to vector<16x16xf32>
    %962 = arith.mulf %961, %931 : vector<16x16xf32>
    %963 = arith.addf %929, %962 : vector<16x16xf32>
    %964 = vector.extract_strided_slice %9 {offsets = [3, 0, 0], sizes = [1, 16, 16], strides = [1, 1, 1]} : vector<4x19x18xf32> to vector<1x16x16xf32>
    %965 = vector.shape_cast %964 : vector<1x16x16xf32> to vector<16x16xf32>
    %c27 = arith.constant 27 : index
    %966 = memref.load %arg2[%c27] : memref<288xf32, #tpu.memory_space<smem>>
    %967 = vector.broadcast %966 : f32 to vector<16x16xf32>
    %968 = arith.mulf %967, %965 : vector<16x16xf32>
    %969 = arith.addf %935, %968 : vector<16x16xf32>
    %c63 = arith.constant 63 : index
    %970 = memref.load %arg2[%c63] : memref<288xf32, #tpu.memory_space<smem>>
    %971 = vector.broadcast %970 : f32 to vector<16x16xf32>
    %972 = arith.mulf %971, %965 : vector<16x16xf32>
    %973 = arith.addf %939, %972 : vector<16x16xf32>
    %c99 = arith.constant 99 : index
    %974 = memref.load %arg2[%c99] : memref<288xf32, #tpu.memory_space<smem>>
    %975 = vector.broadcast %974 : f32 to vector<16x16xf32>
    %976 = arith.mulf %975, %965 : vector<16x16xf32>
    %977 = arith.addf %943, %976 : vector<16x16xf32>
    %c135 = arith.constant 135 : index
    %978 = memref.load %arg2[%c135] : memref<288xf32, #tpu.memory_space<smem>>
    %979 = vector.broadcast %978 : f32 to vector<16x16xf32>
    %980 = arith.mulf %979, %965 : vector<16x16xf32>
    %981 = arith.addf %947, %980 : vector<16x16xf32>
    %c171 = arith.constant 171 : index
    %982 = memref.load %arg2[%c171] : memref<288xf32, #tpu.memory_space<smem>>
    %983 = vector.broadcast %982 : f32 to vector<16x16xf32>
    %984 = arith.mulf %983, %965 : vector<16x16xf32>
    %985 = arith.addf %951, %984 : vector<16x16xf32>
    %c207 = arith.constant 207 : index
    %986 = memref.load %arg2[%c207] : memref<288xf32, #tpu.memory_space<smem>>
    %987 = vector.broadcast %986 : f32 to vector<16x16xf32>
    %988 = arith.mulf %987, %965 : vector<16x16xf32>
    %989 = arith.addf %955, %988 : vector<16x16xf32>
    %c243 = arith.constant 243 : index
    %990 = memref.load %arg2[%c243] : memref<288xf32, #tpu.memory_space<smem>>
    %991 = vector.broadcast %990 : f32 to vector<16x16xf32>
    %992 = arith.mulf %991, %965 : vector<16x16xf32>
    %993 = arith.addf %959, %992 : vector<16x16xf32>
    %c279 = arith.constant 279 : index
    %994 = memref.load %arg2[%c279] : memref<288xf32, #tpu.memory_space<smem>>
    %995 = vector.broadcast %994 : f32 to vector<16x16xf32>
    %996 = arith.mulf %995, %965 : vector<16x16xf32>
    %997 = arith.addf %963, %996 : vector<16x16xf32>
    %998 = vector.extract_strided_slice %9 {offsets = [3, 0, 1], sizes = [1, 16, 16], strides = [1, 1, 1]} : vector<4x19x18xf32> to vector<1x16x16xf32>
    %999 = vector.shape_cast %998 : vector<1x16x16xf32> to vector<16x16xf32>
    %c28 = arith.constant 28 : index
    %1000 = memref.load %arg2[%c28] : memref<288xf32, #tpu.memory_space<smem>>
    %1001 = vector.broadcast %1000 : f32 to vector<16x16xf32>
    %1002 = arith.mulf %1001, %999 : vector<16x16xf32>
    %1003 = arith.addf %969, %1002 : vector<16x16xf32>
    %c64 = arith.constant 64 : index
    %1004 = memref.load %arg2[%c64] : memref<288xf32, #tpu.memory_space<smem>>
    %1005 = vector.broadcast %1004 : f32 to vector<16x16xf32>
    %1006 = arith.mulf %1005, %999 : vector<16x16xf32>
    %1007 = arith.addf %973, %1006 : vector<16x16xf32>
    %c100 = arith.constant 100 : index
    %1008 = memref.load %arg2[%c100] : memref<288xf32, #tpu.memory_space<smem>>
    %1009 = vector.broadcast %1008 : f32 to vector<16x16xf32>
    %1010 = arith.mulf %1009, %999 : vector<16x16xf32>
    %1011 = arith.addf %977, %1010 : vector<16x16xf32>
    %c136 = arith.constant 136 : index
    %1012 = memref.load %arg2[%c136] : memref<288xf32, #tpu.memory_space<smem>>
    %1013 = vector.broadcast %1012 : f32 to vector<16x16xf32>
    %1014 = arith.mulf %1013, %999 : vector<16x16xf32>
    %1015 = arith.addf %981, %1014 : vector<16x16xf32>
    %c172 = arith.constant 172 : index
    %1016 = memref.load %arg2[%c172] : memref<288xf32, #tpu.memory_space<smem>>
    %1017 = vector.broadcast %1016 : f32 to vector<16x16xf32>
    %1018 = arith.mulf %1017, %999 : vector<16x16xf32>
    %1019 = arith.addf %985, %1018 : vector<16x16xf32>
    %c208 = arith.constant 208 : index
    %1020 = memref.load %arg2[%c208] : memref<288xf32, #tpu.memory_space<smem>>
    %1021 = vector.broadcast %1020 : f32 to vector<16x16xf32>
    %1022 = arith.mulf %1021, %999 : vector<16x16xf32>
    %1023 = arith.addf %989, %1022 : vector<16x16xf32>
    %c244 = arith.constant 244 : index
    %1024 = memref.load %arg2[%c244] : memref<288xf32, #tpu.memory_space<smem>>
    %1025 = vector.broadcast %1024 : f32 to vector<16x16xf32>
    %1026 = arith.mulf %1025, %999 : vector<16x16xf32>
    %1027 = arith.addf %993, %1026 : vector<16x16xf32>
    %c280 = arith.constant 280 : index
    %1028 = memref.load %arg2[%c280] : memref<288xf32, #tpu.memory_space<smem>>
    %1029 = vector.broadcast %1028 : f32 to vector<16x16xf32>
    %1030 = arith.mulf %1029, %999 : vector<16x16xf32>
    %1031 = arith.addf %997, %1030 : vector<16x16xf32>
    %1032 = vector.extract_strided_slice %9 {offsets = [3, 0, 2], sizes = [1, 16, 16], strides = [1, 1, 1]} : vector<4x19x18xf32> to vector<1x16x16xf32>
    %1033 = vector.shape_cast %1032 : vector<1x16x16xf32> to vector<16x16xf32>
    %c29 = arith.constant 29 : index
    %1034 = memref.load %arg2[%c29] : memref<288xf32, #tpu.memory_space<smem>>
    %1035 = vector.broadcast %1034 : f32 to vector<16x16xf32>
    %1036 = arith.mulf %1035, %1033 : vector<16x16xf32>
    %1037 = arith.addf %1003, %1036 : vector<16x16xf32>
    %c65 = arith.constant 65 : index
    %1038 = memref.load %arg2[%c65] : memref<288xf32, #tpu.memory_space<smem>>
    %1039 = vector.broadcast %1038 : f32 to vector<16x16xf32>
    %1040 = arith.mulf %1039, %1033 : vector<16x16xf32>
    %1041 = arith.addf %1007, %1040 : vector<16x16xf32>
    %c101 = arith.constant 101 : index
    %1042 = memref.load %arg2[%c101] : memref<288xf32, #tpu.memory_space<smem>>
    %1043 = vector.broadcast %1042 : f32 to vector<16x16xf32>
    %1044 = arith.mulf %1043, %1033 : vector<16x16xf32>
    %1045 = arith.addf %1011, %1044 : vector<16x16xf32>
    %c137 = arith.constant 137 : index
    %1046 = memref.load %arg2[%c137] : memref<288xf32, #tpu.memory_space<smem>>
    %1047 = vector.broadcast %1046 : f32 to vector<16x16xf32>
    %1048 = arith.mulf %1047, %1033 : vector<16x16xf32>
    %1049 = arith.addf %1015, %1048 : vector<16x16xf32>
    %c173 = arith.constant 173 : index
    %1050 = memref.load %arg2[%c173] : memref<288xf32, #tpu.memory_space<smem>>
    %1051 = vector.broadcast %1050 : f32 to vector<16x16xf32>
    %1052 = arith.mulf %1051, %1033 : vector<16x16xf32>
    %1053 = arith.addf %1019, %1052 : vector<16x16xf32>
    %c209 = arith.constant 209 : index
    %1054 = memref.load %arg2[%c209] : memref<288xf32, #tpu.memory_space<smem>>
    %1055 = vector.broadcast %1054 : f32 to vector<16x16xf32>
    %1056 = arith.mulf %1055, %1033 : vector<16x16xf32>
    %1057 = arith.addf %1023, %1056 : vector<16x16xf32>
    %c245 = arith.constant 245 : index
    %1058 = memref.load %arg2[%c245] : memref<288xf32, #tpu.memory_space<smem>>
    %1059 = vector.broadcast %1058 : f32 to vector<16x16xf32>
    %1060 = arith.mulf %1059, %1033 : vector<16x16xf32>
    %1061 = arith.addf %1027, %1060 : vector<16x16xf32>
    %c281 = arith.constant 281 : index
    %1062 = memref.load %arg2[%c281] : memref<288xf32, #tpu.memory_space<smem>>
    %1063 = vector.broadcast %1062 : f32 to vector<16x16xf32>
    %1064 = arith.mulf %1063, %1033 : vector<16x16xf32>
    %1065 = arith.addf %1031, %1064 : vector<16x16xf32>
    %1066 = vector.extract_strided_slice %9 {offsets = [3, 1, 0], sizes = [1, 16, 16], strides = [1, 1, 1]} : vector<4x19x18xf32> to vector<1x16x16xf32>
    %1067 = vector.shape_cast %1066 : vector<1x16x16xf32> to vector<16x16xf32>
    %c30 = arith.constant 30 : index
    %1068 = memref.load %arg2[%c30] : memref<288xf32, #tpu.memory_space<smem>>
    %1069 = vector.broadcast %1068 : f32 to vector<16x16xf32>
    %1070 = arith.mulf %1069, %1067 : vector<16x16xf32>
    %1071 = arith.addf %1037, %1070 : vector<16x16xf32>
    %c66 = arith.constant 66 : index
    %1072 = memref.load %arg2[%c66] : memref<288xf32, #tpu.memory_space<smem>>
    %1073 = vector.broadcast %1072 : f32 to vector<16x16xf32>
    %1074 = arith.mulf %1073, %1067 : vector<16x16xf32>
    %1075 = arith.addf %1041, %1074 : vector<16x16xf32>
    %c102 = arith.constant 102 : index
    %1076 = memref.load %arg2[%c102] : memref<288xf32, #tpu.memory_space<smem>>
    %1077 = vector.broadcast %1076 : f32 to vector<16x16xf32>
    %1078 = arith.mulf %1077, %1067 : vector<16x16xf32>
    %1079 = arith.addf %1045, %1078 : vector<16x16xf32>
    %c138 = arith.constant 138 : index
    %1080 = memref.load %arg2[%c138] : memref<288xf32, #tpu.memory_space<smem>>
    %1081 = vector.broadcast %1080 : f32 to vector<16x16xf32>
    %1082 = arith.mulf %1081, %1067 : vector<16x16xf32>
    %1083 = arith.addf %1049, %1082 : vector<16x16xf32>
    %c174 = arith.constant 174 : index
    %1084 = memref.load %arg2[%c174] : memref<288xf32, #tpu.memory_space<smem>>
    %1085 = vector.broadcast %1084 : f32 to vector<16x16xf32>
    %1086 = arith.mulf %1085, %1067 : vector<16x16xf32>
    %1087 = arith.addf %1053, %1086 : vector<16x16xf32>
    %c210 = arith.constant 210 : index
    %1088 = memref.load %arg2[%c210] : memref<288xf32, #tpu.memory_space<smem>>
    %1089 = vector.broadcast %1088 : f32 to vector<16x16xf32>
    %1090 = arith.mulf %1089, %1067 : vector<16x16xf32>
    %1091 = arith.addf %1057, %1090 : vector<16x16xf32>
    %c246 = arith.constant 246 : index
    %1092 = memref.load %arg2[%c246] : memref<288xf32, #tpu.memory_space<smem>>
    %1093 = vector.broadcast %1092 : f32 to vector<16x16xf32>
    %1094 = arith.mulf %1093, %1067 : vector<16x16xf32>
    %1095 = arith.addf %1061, %1094 : vector<16x16xf32>
    %c282 = arith.constant 282 : index
    %1096 = memref.load %arg2[%c282] : memref<288xf32, #tpu.memory_space<smem>>
    %1097 = vector.broadcast %1096 : f32 to vector<16x16xf32>
    %1098 = arith.mulf %1097, %1067 : vector<16x16xf32>
    %1099 = arith.addf %1065, %1098 : vector<16x16xf32>
    %1100 = vector.extract_strided_slice %9 {offsets = [3, 1, 1], sizes = [1, 16, 16], strides = [1, 1, 1]} : vector<4x19x18xf32> to vector<1x16x16xf32>
    %1101 = vector.shape_cast %1100 : vector<1x16x16xf32> to vector<16x16xf32>
    %c31 = arith.constant 31 : index
    %1102 = memref.load %arg2[%c31] : memref<288xf32, #tpu.memory_space<smem>>
    %1103 = vector.broadcast %1102 : f32 to vector<16x16xf32>
    %1104 = arith.mulf %1103, %1101 : vector<16x16xf32>
    %1105 = arith.addf %1071, %1104 : vector<16x16xf32>
    %c67 = arith.constant 67 : index
    %1106 = memref.load %arg2[%c67] : memref<288xf32, #tpu.memory_space<smem>>
    %1107 = vector.broadcast %1106 : f32 to vector<16x16xf32>
    %1108 = arith.mulf %1107, %1101 : vector<16x16xf32>
    %1109 = arith.addf %1075, %1108 : vector<16x16xf32>
    %c103 = arith.constant 103 : index
    %1110 = memref.load %arg2[%c103] : memref<288xf32, #tpu.memory_space<smem>>
    %1111 = vector.broadcast %1110 : f32 to vector<16x16xf32>
    %1112 = arith.mulf %1111, %1101 : vector<16x16xf32>
    %1113 = arith.addf %1079, %1112 : vector<16x16xf32>
    %c139 = arith.constant 139 : index
    %1114 = memref.load %arg2[%c139] : memref<288xf32, #tpu.memory_space<smem>>
    %1115 = vector.broadcast %1114 : f32 to vector<16x16xf32>
    %1116 = arith.mulf %1115, %1101 : vector<16x16xf32>
    %1117 = arith.addf %1083, %1116 : vector<16x16xf32>
    %c175 = arith.constant 175 : index
    %1118 = memref.load %arg2[%c175] : memref<288xf32, #tpu.memory_space<smem>>
    %1119 = vector.broadcast %1118 : f32 to vector<16x16xf32>
    %1120 = arith.mulf %1119, %1101 : vector<16x16xf32>
    %1121 = arith.addf %1087, %1120 : vector<16x16xf32>
    %c211 = arith.constant 211 : index
    %1122 = memref.load %arg2[%c211] : memref<288xf32, #tpu.memory_space<smem>>
    %1123 = vector.broadcast %1122 : f32 to vector<16x16xf32>
    %1124 = arith.mulf %1123, %1101 : vector<16x16xf32>
    %1125 = arith.addf %1091, %1124 : vector<16x16xf32>
    %c247 = arith.constant 247 : index
    %1126 = memref.load %arg2[%c247] : memref<288xf32, #tpu.memory_space<smem>>
    %1127 = vector.broadcast %1126 : f32 to vector<16x16xf32>
    %1128 = arith.mulf %1127, %1101 : vector<16x16xf32>
    %1129 = arith.addf %1095, %1128 : vector<16x16xf32>
    %c283 = arith.constant 283 : index
    %1130 = memref.load %arg2[%c283] : memref<288xf32, #tpu.memory_space<smem>>
    %1131 = vector.broadcast %1130 : f32 to vector<16x16xf32>
    %1132 = arith.mulf %1131, %1101 : vector<16x16xf32>
    %1133 = arith.addf %1099, %1132 : vector<16x16xf32>
    %1134 = vector.extract_strided_slice %9 {offsets = [3, 1, 2], sizes = [1, 16, 16], strides = [1, 1, 1]} : vector<4x19x18xf32> to vector<1x16x16xf32>
    %1135 = vector.shape_cast %1134 : vector<1x16x16xf32> to vector<16x16xf32>
    %c32 = arith.constant 32 : index
    %1136 = memref.load %arg2[%c32] : memref<288xf32, #tpu.memory_space<smem>>
    %1137 = vector.broadcast %1136 : f32 to vector<16x16xf32>
    %1138 = arith.mulf %1137, %1135 : vector<16x16xf32>
    %1139 = arith.addf %1105, %1138 : vector<16x16xf32>
    %c68 = arith.constant 68 : index
    %1140 = memref.load %arg2[%c68] : memref<288xf32, #tpu.memory_space<smem>>
    %1141 = vector.broadcast %1140 : f32 to vector<16x16xf32>
    %1142 = arith.mulf %1141, %1135 : vector<16x16xf32>
    %1143 = arith.addf %1109, %1142 : vector<16x16xf32>
    %c104 = arith.constant 104 : index
    %1144 = memref.load %arg2[%c104] : memref<288xf32, #tpu.memory_space<smem>>
    %1145 = vector.broadcast %1144 : f32 to vector<16x16xf32>
    %1146 = arith.mulf %1145, %1135 : vector<16x16xf32>
    %1147 = arith.addf %1113, %1146 : vector<16x16xf32>
    %c140 = arith.constant 140 : index
    %1148 = memref.load %arg2[%c140] : memref<288xf32, #tpu.memory_space<smem>>
    %1149 = vector.broadcast %1148 : f32 to vector<16x16xf32>
    %1150 = arith.mulf %1149, %1135 : vector<16x16xf32>
    %1151 = arith.addf %1117, %1150 : vector<16x16xf32>
    %c176 = arith.constant 176 : index
    %1152 = memref.load %arg2[%c176] : memref<288xf32, #tpu.memory_space<smem>>
    %1153 = vector.broadcast %1152 : f32 to vector<16x16xf32>
    %1154 = arith.mulf %1153, %1135 : vector<16x16xf32>
    %1155 = arith.addf %1121, %1154 : vector<16x16xf32>
    %c212 = arith.constant 212 : index
    %1156 = memref.load %arg2[%c212] : memref<288xf32, #tpu.memory_space<smem>>
    %1157 = vector.broadcast %1156 : f32 to vector<16x16xf32>
    %1158 = arith.mulf %1157, %1135 : vector<16x16xf32>
    %1159 = arith.addf %1125, %1158 : vector<16x16xf32>
    %c248 = arith.constant 248 : index
    %1160 = memref.load %arg2[%c248] : memref<288xf32, #tpu.memory_space<smem>>
    %1161 = vector.broadcast %1160 : f32 to vector<16x16xf32>
    %1162 = arith.mulf %1161, %1135 : vector<16x16xf32>
    %1163 = arith.addf %1129, %1162 : vector<16x16xf32>
    %c284 = arith.constant 284 : index
    %1164 = memref.load %arg2[%c284] : memref<288xf32, #tpu.memory_space<smem>>
    %1165 = vector.broadcast %1164 : f32 to vector<16x16xf32>
    %1166 = arith.mulf %1165, %1135 : vector<16x16xf32>
    %1167 = arith.addf %1133, %1166 : vector<16x16xf32>
    %1168 = vector.extract_strided_slice %9 {offsets = [3, 2, 0], sizes = [1, 16, 16], strides = [1, 1, 1]} : vector<4x19x18xf32> to vector<1x16x16xf32>
    %1169 = vector.shape_cast %1168 : vector<1x16x16xf32> to vector<16x16xf32>
    %c33 = arith.constant 33 : index
    %1170 = memref.load %arg2[%c33] : memref<288xf32, #tpu.memory_space<smem>>
    %1171 = vector.broadcast %1170 : f32 to vector<16x16xf32>
    %1172 = arith.mulf %1171, %1169 : vector<16x16xf32>
    %1173 = arith.addf %1139, %1172 : vector<16x16xf32>
    %c69 = arith.constant 69 : index
    %1174 = memref.load %arg2[%c69] : memref<288xf32, #tpu.memory_space<smem>>
    %1175 = vector.broadcast %1174 : f32 to vector<16x16xf32>
    %1176 = arith.mulf %1175, %1169 : vector<16x16xf32>
    %1177 = arith.addf %1143, %1176 : vector<16x16xf32>
    %c105 = arith.constant 105 : index
    %1178 = memref.load %arg2[%c105] : memref<288xf32, #tpu.memory_space<smem>>
    %1179 = vector.broadcast %1178 : f32 to vector<16x16xf32>
    %1180 = arith.mulf %1179, %1169 : vector<16x16xf32>
    %1181 = arith.addf %1147, %1180 : vector<16x16xf32>
    %c141 = arith.constant 141 : index
    %1182 = memref.load %arg2[%c141] : memref<288xf32, #tpu.memory_space<smem>>
    %1183 = vector.broadcast %1182 : f32 to vector<16x16xf32>
    %1184 = arith.mulf %1183, %1169 : vector<16x16xf32>
    %1185 = arith.addf %1151, %1184 : vector<16x16xf32>
    %c177 = arith.constant 177 : index
    %1186 = memref.load %arg2[%c177] : memref<288xf32, #tpu.memory_space<smem>>
    %1187 = vector.broadcast %1186 : f32 to vector<16x16xf32>
    %1188 = arith.mulf %1187, %1169 : vector<16x16xf32>
    %1189 = arith.addf %1155, %1188 : vector<16x16xf32>
    %c213 = arith.constant 213 : index
    %1190 = memref.load %arg2[%c213] : memref<288xf32, #tpu.memory_space<smem>>
    %1191 = vector.broadcast %1190 : f32 to vector<16x16xf32>
    %1192 = arith.mulf %1191, %1169 : vector<16x16xf32>
    %1193 = arith.addf %1159, %1192 : vector<16x16xf32>
    %c249 = arith.constant 249 : index
    %1194 = memref.load %arg2[%c249] : memref<288xf32, #tpu.memory_space<smem>>
    %1195 = vector.broadcast %1194 : f32 to vector<16x16xf32>
    %1196 = arith.mulf %1195, %1169 : vector<16x16xf32>
    %1197 = arith.addf %1163, %1196 : vector<16x16xf32>
    %c285 = arith.constant 285 : index
    %1198 = memref.load %arg2[%c285] : memref<288xf32, #tpu.memory_space<smem>>
    %1199 = vector.broadcast %1198 : f32 to vector<16x16xf32>
    %1200 = arith.mulf %1199, %1169 : vector<16x16xf32>
    %1201 = arith.addf %1167, %1200 : vector<16x16xf32>
    %1202 = vector.extract_strided_slice %9 {offsets = [3, 2, 1], sizes = [1, 16, 16], strides = [1, 1, 1]} : vector<4x19x18xf32> to vector<1x16x16xf32>
    %1203 = vector.shape_cast %1202 : vector<1x16x16xf32> to vector<16x16xf32>
    %c34 = arith.constant 34 : index
    %1204 = memref.load %arg2[%c34] : memref<288xf32, #tpu.memory_space<smem>>
    %1205 = vector.broadcast %1204 : f32 to vector<16x16xf32>
    %1206 = arith.mulf %1205, %1203 : vector<16x16xf32>
    %1207 = arith.addf %1173, %1206 : vector<16x16xf32>
    %c70 = arith.constant 70 : index
    %1208 = memref.load %arg2[%c70] : memref<288xf32, #tpu.memory_space<smem>>
    %1209 = vector.broadcast %1208 : f32 to vector<16x16xf32>
    %1210 = arith.mulf %1209, %1203 : vector<16x16xf32>
    %1211 = arith.addf %1177, %1210 : vector<16x16xf32>
    %c106 = arith.constant 106 : index
    %1212 = memref.load %arg2[%c106] : memref<288xf32, #tpu.memory_space<smem>>
    %1213 = vector.broadcast %1212 : f32 to vector<16x16xf32>
    %1214 = arith.mulf %1213, %1203 : vector<16x16xf32>
    %1215 = arith.addf %1181, %1214 : vector<16x16xf32>
    %c142 = arith.constant 142 : index
    %1216 = memref.load %arg2[%c142] : memref<288xf32, #tpu.memory_space<smem>>
    %1217 = vector.broadcast %1216 : f32 to vector<16x16xf32>
    %1218 = arith.mulf %1217, %1203 : vector<16x16xf32>
    %1219 = arith.addf %1185, %1218 : vector<16x16xf32>
    %c178 = arith.constant 178 : index
    %1220 = memref.load %arg2[%c178] : memref<288xf32, #tpu.memory_space<smem>>
    %1221 = vector.broadcast %1220 : f32 to vector<16x16xf32>
    %1222 = arith.mulf %1221, %1203 : vector<16x16xf32>
    %1223 = arith.addf %1189, %1222 : vector<16x16xf32>
    %c214 = arith.constant 214 : index
    %1224 = memref.load %arg2[%c214] : memref<288xf32, #tpu.memory_space<smem>>
    %1225 = vector.broadcast %1224 : f32 to vector<16x16xf32>
    %1226 = arith.mulf %1225, %1203 : vector<16x16xf32>
    %1227 = arith.addf %1193, %1226 : vector<16x16xf32>
    %c250 = arith.constant 250 : index
    %1228 = memref.load %arg2[%c250] : memref<288xf32, #tpu.memory_space<smem>>
    %1229 = vector.broadcast %1228 : f32 to vector<16x16xf32>
    %1230 = arith.mulf %1229, %1203 : vector<16x16xf32>
    %1231 = arith.addf %1197, %1230 : vector<16x16xf32>
    %c286 = arith.constant 286 : index
    %1232 = memref.load %arg2[%c286] : memref<288xf32, #tpu.memory_space<smem>>
    %1233 = vector.broadcast %1232 : f32 to vector<16x16xf32>
    %1234 = arith.mulf %1233, %1203 : vector<16x16xf32>
    %1235 = arith.addf %1201, %1234 : vector<16x16xf32>
    %1236 = vector.extract_strided_slice %9 {offsets = [3, 2, 2], sizes = [1, 16, 16], strides = [1, 1, 1]} : vector<4x19x18xf32> to vector<1x16x16xf32>
    %1237 = vector.shape_cast %1236 : vector<1x16x16xf32> to vector<16x16xf32>
    %c35 = arith.constant 35 : index
    %1238 = memref.load %arg2[%c35] : memref<288xf32, #tpu.memory_space<smem>>
    %1239 = vector.broadcast %1238 : f32 to vector<16x16xf32>
    %1240 = arith.mulf %1239, %1237 : vector<16x16xf32>
    %1241 = arith.addf %1207, %1240 : vector<16x16xf32>
    %c71 = arith.constant 71 : index
    %1242 = memref.load %arg2[%c71] : memref<288xf32, #tpu.memory_space<smem>>
    %1243 = vector.broadcast %1242 : f32 to vector<16x16xf32>
    %1244 = arith.mulf %1243, %1237 : vector<16x16xf32>
    %1245 = arith.addf %1211, %1244 : vector<16x16xf32>
    %c107 = arith.constant 107 : index
    %1246 = memref.load %arg2[%c107] : memref<288xf32, #tpu.memory_space<smem>>
    %1247 = vector.broadcast %1246 : f32 to vector<16x16xf32>
    %1248 = arith.mulf %1247, %1237 : vector<16x16xf32>
    %1249 = arith.addf %1215, %1248 : vector<16x16xf32>
    %c143 = arith.constant 143 : index
    %1250 = memref.load %arg2[%c143] : memref<288xf32, #tpu.memory_space<smem>>
    %1251 = vector.broadcast %1250 : f32 to vector<16x16xf32>
    %1252 = arith.mulf %1251, %1237 : vector<16x16xf32>
    %1253 = arith.addf %1219, %1252 : vector<16x16xf32>
    %c179 = arith.constant 179 : index
    %1254 = memref.load %arg2[%c179] : memref<288xf32, #tpu.memory_space<smem>>
    %1255 = vector.broadcast %1254 : f32 to vector<16x16xf32>
    %1256 = arith.mulf %1255, %1237 : vector<16x16xf32>
    %1257 = arith.addf %1223, %1256 : vector<16x16xf32>
    %c215 = arith.constant 215 : index
    %1258 = memref.load %arg2[%c215] : memref<288xf32, #tpu.memory_space<smem>>
    %1259 = vector.broadcast %1258 : f32 to vector<16x16xf32>
    %1260 = arith.mulf %1259, %1237 : vector<16x16xf32>
    %1261 = arith.addf %1227, %1260 : vector<16x16xf32>
    %c251 = arith.constant 251 : index
    %1262 = memref.load %arg2[%c251] : memref<288xf32, #tpu.memory_space<smem>>
    %1263 = vector.broadcast %1262 : f32 to vector<16x16xf32>
    %1264 = arith.mulf %1263, %1237 : vector<16x16xf32>
    %1265 = arith.addf %1231, %1264 : vector<16x16xf32>
    %c287 = arith.constant 287 : index
    %1266 = memref.load %arg2[%c287] : memref<288xf32, #tpu.memory_space<smem>>
    %1267 = vector.broadcast %1266 : f32 to vector<16x16xf32>
    %1268 = arith.mulf %1267, %1237 : vector<16x16xf32>
    %1269 = arith.addf %1235, %1268 : vector<16x16xf32>
    %cst_16 = arith.constant 0.000000e+00 : f32
    %1270 = vector.broadcast %cst_16 : f32 to vector<16x16xf32>
    %1271 = arith.cmpf ogt, %1241, %1270 : vector<16x16xf32>
    %cst_17 = arith.constant 1.000000e-01 : f32
    %1272 = vector.broadcast %cst_17 : f32 to vector<16x16xf32>
    %1273 = arith.mulf %1272, %1241 : vector<16x16xf32>
    %1274 = arith.select %1271, %1241, %1273 : vector<16x16xi1>, vector<16x16xf32>
    %cst_18 = arith.constant dense<0.000000e+00> : vector<8x16xf32>
    %1275 = tpu.matmul %18, %1274, %cst_18 {dimension_numbers = #tpu.dot_dimension_numbers<[1], [0], [0], [1], [0, 0, 1, 1], [], []>} : vector<8x16xf32>, vector<16x16xf32>, vector<8x16xf32> -> vector<8x16xf32>
    %cst_19 = arith.constant dense<0.000000e+00> : vector<8x16xf32>
    %1276 = tpu.matmul %23, %1274, %cst_19 {dimension_numbers = #tpu.dot_dimension_numbers<[1], [0], [0], [1], [0, 0, 1, 1], [], []>} : vector<8x16xf32>, vector<16x16xf32>, vector<8x16xf32> -> vector<8x16xf32>
    %1277 = arith.maximumf %1275, %1276 : vector<8x16xf32>
    %cst_20 = arith.constant dense<0.000000e+00> : vector<8x8xf32>
    %1278 = tpu.matmul %1277, %30, %cst_20 {dimension_numbers = #tpu.dot_dimension_numbers<[1], [0], [0], [1], [0, 0, 1, 1], [], []>} : vector<8x16xf32>, vector<16x8xf32>, vector<8x8xf32> -> vector<8x8xf32>
    %cst_21 = arith.constant dense<0.000000e+00> : vector<8x8xf32>
    %1279 = tpu.matmul %1277, %37, %cst_21 {dimension_numbers = #tpu.dot_dimension_numbers<[1], [0], [0], [1], [0, 0, 1, 1], [], []>} : vector<8x16xf32>, vector<16x8xf32>, vector<8x8xf32> -> vector<8x8xf32>
    %1280 = arith.maximumf %1278, %1279 : vector<8x8xf32>
    %c0_22 = arith.constant 0 : index
    %c0_23 = arith.constant 0 : index
    %c0_24 = arith.constant 0 : index
    %c0_25 = arith.constant 0 : index
    %1281 = vector.load %arg3[%c0_22, %c0_23, %c0_24, %c0_25] : memref<1x8x8x8xf32, #tpu.memory_space<vmem>>, vector<1x1x8x8xf32>
    %1282 = vector.shape_cast %1281 : vector<1x1x8x8xf32> to vector<8x8xf32>
    %1283 = vector.shape_cast %1280 : vector<8x8xf32> to vector<1x1x8x8xf32>
    tpu.vector_store %arg3[%c0_22, %c0_23, %c0_24, %c0_25], %1283 {strides = array<i32>} : memref<1x8x8x8xf32, #tpu.memory_space<vmem>>, vector<1x1x8x8xf32>,
    %cst_26 = arith.constant 0.000000e+00 : f32
    %1284 = vector.broadcast %cst_26 : f32 to vector<16x16xf32>
    %1285 = arith.cmpf ogt, %1245, %1284 : vector<16x16xf32>
    %cst_27 = arith.constant 1.000000e-01 : f32
    %1286 = vector.broadcast %cst_27 : f32 to vector<16x16xf32>
    %1287 = arith.mulf %1286, %1245 : vector<16x16xf32>
    %1288 = arith.select %1285, %1245, %1287 : vector<16x16xi1>, vector<16x16xf32>
    %cst_28 = arith.constant dense<0.000000e+00> : vector<8x16xf32>
    %1289 = tpu.matmul %18, %1288, %cst_28 {dimension_numbers = #tpu.dot_dimension_numbers<[1], [0], [0], [1], [0, 0, 1, 1], [], []>} : vector<8x16xf32>, vector<16x16xf32>, vector<8x16xf32> -> vector<8x16xf32>
    %cst_29 = arith.constant dense<0.000000e+00> : vector<8x16xf32>
    %1290 = tpu.matmul %23, %1288, %cst_29 {dimension_numbers = #tpu.dot_dimension_numbers<[1], [0], [0], [1], [0, 0, 1, 1], [], []>} : vector<8x16xf32>, vector<16x16xf32>, vector<8x16xf32> -> vector<8x16xf32>
    %1291 = arith.maximumf %1289, %1290 : vector<8x16xf32>
    %cst_30 = arith.constant dense<0.000000e+00> : vector<8x8xf32>
    %1292 = tpu.matmul %1291, %30, %cst_30 {dimension_numbers = #tpu.dot_dimension_numbers<[1], [0], [0], [1], [0, 0, 1, 1], [], []>} : vector<8x16xf32>, vector<16x8xf32>, vector<8x8xf32> -> vector<8x8xf32>
    %cst_31 = arith.constant dense<0.000000e+00> : vector<8x8xf32>
    %1293 = tpu.matmul %1291, %37, %cst_31 {dimension_numbers = #tpu.dot_dimension_numbers<[1], [0], [0], [1], [0, 0, 1, 1], [], []>} : vector<8x16xf32>, vector<16x8xf32>, vector<8x8xf32> -> vector<8x8xf32>
    %1294 = arith.maximumf %1292, %1293 : vector<8x8xf32>
    %c0_32 = arith.constant 0 : index
    %c1_33 = arith.constant 1 : index
    %c0_34 = arith.constant 0 : index
    %c0_35 = arith.constant 0 : index
    %1295 = vector.load %arg3[%c0_32, %c1_33, %c0_34, %c0_35] : memref<1x8x8x8xf32, #tpu.memory_space<vmem>>, vector<1x1x8x8xf32>
    %1296 = vector.shape_cast %1295 : vector<1x1x8x8xf32> to vector<8x8xf32>
    %1297 = vector.shape_cast %1294 : vector<8x8xf32> to vector<1x1x8x8xf32>
    tpu.vector_store %arg3[%c0_32, %c1_33, %c0_34, %c0_35], %1297 {strides = array<i32>} : memref<1x8x8x8xf32, #tpu.memory_space<vmem>>, vector<1x1x8x8xf32>,
    %cst_36 = arith.constant 0.000000e+00 : f32
    %1298 = vector.broadcast %cst_36 : f32 to vector<16x16xf32>
    %1299 = arith.cmpf ogt, %1249, %1298 : vector<16x16xf32>
    %cst_37 = arith.constant 1.000000e-01 : f32
    %1300 = vector.broadcast %cst_37 : f32 to vector<16x16xf32>
    %1301 = arith.mulf %1300, %1249 : vector<16x16xf32>
    %1302 = arith.select %1299, %1249, %1301 : vector<16x16xi1>, vector<16x16xf32>
    %cst_38 = arith.constant dense<0.000000e+00> : vector<8x16xf32>
    %1303 = tpu.matmul %18, %1302, %cst_38 {dimension_numbers = #tpu.dot_dimension_numbers<[1], [0], [0], [1], [0, 0, 1, 1], [], []>} : vector<8x16xf32>, vector<16x16xf32>, vector<8x16xf32> -> vector<8x16xf32>
    %cst_39 = arith.constant dense<0.000000e+00> : vector<8x16xf32>
    %1304 = tpu.matmul %23, %1302, %cst_39 {dimension_numbers = #tpu.dot_dimension_numbers<[1], [0], [0], [1], [0, 0, 1, 1], [], []>} : vector<8x16xf32>, vector<16x16xf32>, vector<8x16xf32> -> vector<8x16xf32>
    %1305 = arith.maximumf %1303, %1304 : vector<8x16xf32>
    %cst_40 = arith.constant dense<0.000000e+00> : vector<8x8xf32>
    %1306 = tpu.matmul %1305, %30, %cst_40 {dimension_numbers = #tpu.dot_dimension_numbers<[1], [0], [0], [1], [0, 0, 1, 1], [], []>} : vector<8x16xf32>, vector<16x8xf32>, vector<8x8xf32> -> vector<8x8xf32>
    %cst_41 = arith.constant dense<0.000000e+00> : vector<8x8xf32>
    %1307 = tpu.matmul %1305, %37, %cst_41 {dimension_numbers = #tpu.dot_dimension_numbers<[1], [0], [0], [1], [0, 0, 1, 1], [], []>} : vector<8x16xf32>, vector<16x8xf32>, vector<8x8xf32> -> vector<8x8xf32>
    %1308 = arith.maximumf %1306, %1307 : vector<8x8xf32>
    %c0_42 = arith.constant 0 : index
    %c2_43 = arith.constant 2 : index
    %c0_44 = arith.constant 0 : index
    %c0_45 = arith.constant 0 : index
    %1309 = vector.load %arg3[%c0_42, %c2_43, %c0_44, %c0_45] : memref<1x8x8x8xf32, #tpu.memory_space<vmem>>, vector<1x1x8x8xf32>
    %1310 = vector.shape_cast %1309 : vector<1x1x8x8xf32> to vector<8x8xf32>
    %1311 = vector.shape_cast %1308 : vector<8x8xf32> to vector<1x1x8x8xf32>
    tpu.vector_store %arg3[%c0_42, %c2_43, %c0_44, %c0_45], %1311 {strides = array<i32>} : memref<1x8x8x8xf32, #tpu.memory_space<vmem>>, vector<1x1x8x8xf32>,
    %cst_46 = arith.constant 0.000000e+00 : f32
    %1312 = vector.broadcast %cst_46 : f32 to vector<16x16xf32>
    %1313 = arith.cmpf ogt, %1253, %1312 : vector<16x16xf32>
    %cst_47 = arith.constant 1.000000e-01 : f32
    %1314 = vector.broadcast %cst_47 : f32 to vector<16x16xf32>
    %1315 = arith.mulf %1314, %1253 : vector<16x16xf32>
    %1316 = arith.select %1313, %1253, %1315 : vector<16x16xi1>, vector<16x16xf32>
    %cst_48 = arith.constant dense<0.000000e+00> : vector<8x16xf32>
    %1317 = tpu.matmul %18, %1316, %cst_48 {dimension_numbers = #tpu.dot_dimension_numbers<[1], [0], [0], [1], [0, 0, 1, 1], [], []>} : vector<8x16xf32>, vector<16x16xf32>, vector<8x16xf32> -> vector<8x16xf32>
    %cst_49 = arith.constant dense<0.000000e+00> : vector<8x16xf32>
    %1318 = tpu.matmul %23, %1316, %cst_49 {dimension_numbers = #tpu.dot_dimension_numbers<[1], [0], [0], [1], [0, 0, 1, 1], [], []>} : vector<8x16xf32>, vector<16x16xf32>, vector<8x16xf32> -> vector<8x16xf32>
    %1319 = arith.maximumf %1317, %1318 : vector<8x16xf32>
    %cst_50 = arith.constant dense<0.000000e+00> : vector<8x8xf32>
    %1320 = tpu.matmul %1319, %30, %cst_50 {dimension_numbers = #tpu.dot_dimension_numbers<[1], [0], [0], [1], [0, 0, 1, 1], [], []>} : vector<8x16xf32>, vector<16x8xf32>, vector<8x8xf32> -> vector<8x8xf32>
    %cst_51 = arith.constant dense<0.000000e+00> : vector<8x8xf32>
    %1321 = tpu.matmul %1319, %37, %cst_51 {dimension_numbers = #tpu.dot_dimension_numbers<[1], [0], [0], [1], [0, 0, 1, 1], [], []>} : vector<8x16xf32>, vector<16x8xf32>, vector<8x8xf32> -> vector<8x8xf32>
    %1322 = arith.maximumf %1320, %1321 : vector<8x8xf32>
    %c0_52 = arith.constant 0 : index
    %c3_53 = arith.constant 3 : index
    %c0_54 = arith.constant 0 : index
    %c0_55 = arith.constant 0 : index
    %1323 = vector.load %arg3[%c0_52, %c3_53, %c0_54, %c0_55] : memref<1x8x8x8xf32, #tpu.memory_space<vmem>>, vector<1x1x8x8xf32>
    %1324 = vector.shape_cast %1323 : vector<1x1x8x8xf32> to vector<8x8xf32>
    %1325 = vector.shape_cast %1322 : vector<8x8xf32> to vector<1x1x8x8xf32>
    tpu.vector_store %arg3[%c0_52, %c3_53, %c0_54, %c0_55], %1325 {strides = array<i32>} : memref<1x8x8x8xf32, #tpu.memory_space<vmem>>, vector<1x1x8x8xf32>,
    %cst_56 = arith.constant 0.000000e+00 : f32
    %1326 = vector.broadcast %cst_56 : f32 to vector<16x16xf32>
    %1327 = arith.cmpf ogt, %1257, %1326 : vector<16x16xf32>
    %cst_57 = arith.constant 1.000000e-01 : f32
    %1328 = vector.broadcast %cst_57 : f32 to vector<16x16xf32>
    %1329 = arith.mulf %1328, %1257 : vector<16x16xf32>
    %1330 = arith.select %1327, %1257, %1329 : vector<16x16xi1>, vector<16x16xf32>
    %cst_58 = arith.constant dense<0.000000e+00> : vector<8x16xf32>
    %1331 = tpu.matmul %18, %1330, %cst_58 {dimension_numbers = #tpu.dot_dimension_numbers<[1], [0], [0], [1], [0, 0, 1, 1], [], []>} : vector<8x16xf32>, vector<16x16xf32>, vector<8x16xf32> -> vector<8x16xf32>
    %cst_59 = arith.constant dense<0.000000e+00> : vector<8x16xf32>
    %1332 = tpu.matmul %23, %1330, %cst_59 {dimension_numbers = #tpu.dot_dimension_numbers<[1], [0], [0], [1], [0, 0, 1, 1], [], []>} : vector<8x16xf32>, vector<16x16xf32>, vector<8x16xf32> -> vector<8x16xf32>
    %1333 = arith.maximumf %1331, %1332 : vector<8x16xf32>
    %cst_60 = arith.constant dense<0.000000e+00> : vector<8x8xf32>
    %1334 = tpu.matmul %1333, %30, %cst_60 {dimension_numbers = #tpu.dot_dimension_numbers<[1], [0], [0], [1], [0, 0, 1, 1], [], []>} : vector<8x16xf32>, vector<16x8xf32>, vector<8x8xf32> -> vector<8x8xf32>
    %cst_61 = arith.constant dense<0.000000e+00> : vector<8x8xf32>
    %1335 = tpu.matmul %1333, %37, %cst_61 {dimension_numbers = #tpu.dot_dimension_numbers<[1], [0], [0], [1], [0, 0, 1, 1], [], []>} : vector<8x16xf32>, vector<16x8xf32>, vector<8x8xf32> -> vector<8x8xf32>
    %1336 = arith.maximumf %1334, %1335 : vector<8x8xf32>
    %c0_62 = arith.constant 0 : index
    %c4_63 = arith.constant 4 : index
    %c0_64 = arith.constant 0 : index
    %c0_65 = arith.constant 0 : index
    %1337 = vector.load %arg3[%c0_62, %c4_63, %c0_64, %c0_65] : memref<1x8x8x8xf32, #tpu.memory_space<vmem>>, vector<1x1x8x8xf32>
    %1338 = vector.shape_cast %1337 : vector<1x1x8x8xf32> to vector<8x8xf32>
    %1339 = vector.shape_cast %1336 : vector<8x8xf32> to vector<1x1x8x8xf32>
    tpu.vector_store %arg3[%c0_62, %c4_63, %c0_64, %c0_65], %1339 {strides = array<i32>} : memref<1x8x8x8xf32, #tpu.memory_space<vmem>>, vector<1x1x8x8xf32>,
    %cst_66 = arith.constant 0.000000e+00 : f32
    %1340 = vector.broadcast %cst_66 : f32 to vector<16x16xf32>
    %1341 = arith.cmpf ogt, %1261, %1340 : vector<16x16xf32>
    %cst_67 = arith.constant 1.000000e-01 : f32
    %1342 = vector.broadcast %cst_67 : f32 to vector<16x16xf32>
    %1343 = arith.mulf %1342, %1261 : vector<16x16xf32>
    %1344 = arith.select %1341, %1261, %1343 : vector<16x16xi1>, vector<16x16xf32>
    %cst_68 = arith.constant dense<0.000000e+00> : vector<8x16xf32>
    %1345 = tpu.matmul %18, %1344, %cst_68 {dimension_numbers = #tpu.dot_dimension_numbers<[1], [0], [0], [1], [0, 0, 1, 1], [], []>} : vector<8x16xf32>, vector<16x16xf32>, vector<8x16xf32> -> vector<8x16xf32>
    %cst_69 = arith.constant dense<0.000000e+00> : vector<8x16xf32>
    %1346 = tpu.matmul %23, %1344, %cst_69 {dimension_numbers = #tpu.dot_dimension_numbers<[1], [0], [0], [1], [0, 0, 1, 1], [], []>} : vector<8x16xf32>, vector<16x16xf32>, vector<8x16xf32> -> vector<8x16xf32>
    %1347 = arith.maximumf %1345, %1346 : vector<8x16xf32>
    %cst_70 = arith.constant dense<0.000000e+00> : vector<8x8xf32>
    %1348 = tpu.matmul %1347, %30, %cst_70 {dimension_numbers = #tpu.dot_dimension_numbers<[1], [0], [0], [1], [0, 0, 1, 1], [], []>} : vector<8x16xf32>, vector<16x8xf32>, vector<8x8xf32> -> vector<8x8xf32>
    %cst_71 = arith.constant dense<0.000000e+00> : vector<8x8xf32>
    %1349 = tpu.matmul %1347, %37, %cst_71 {dimension_numbers = #tpu.dot_dimension_numbers<[1], [0], [0], [1], [0, 0, 1, 1], [], []>} : vector<8x16xf32>, vector<16x8xf32>, vector<8x8xf32> -> vector<8x8xf32>
    %1350 = arith.maximumf %1348, %1349 : vector<8x8xf32>
    %c0_72 = arith.constant 0 : index
    %c5_73 = arith.constant 5 : index
    %c0_74 = arith.constant 0 : index
    %c0_75 = arith.constant 0 : index
    %1351 = vector.load %arg3[%c0_72, %c5_73, %c0_74, %c0_75] : memref<1x8x8x8xf32, #tpu.memory_space<vmem>>, vector<1x1x8x8xf32>
    %1352 = vector.shape_cast %1351 : vector<1x1x8x8xf32> to vector<8x8xf32>
    %1353 = vector.shape_cast %1350 : vector<8x8xf32> to vector<1x1x8x8xf32>
    tpu.vector_store %arg3[%c0_72, %c5_73, %c0_74, %c0_75], %1353 {strides = array<i32>} : memref<1x8x8x8xf32, #tpu.memory_space<vmem>>, vector<1x1x8x8xf32>,
    %cst_76 = arith.constant 0.000000e+00 : f32
    %1354 = vector.broadcast %cst_76 : f32 to vector<16x16xf32>
    %1355 = arith.cmpf ogt, %1265, %1354 : vector<16x16xf32>
    %cst_77 = arith.constant 1.000000e-01 : f32
    %1356 = vector.broadcast %cst_77 : f32 to vector<16x16xf32>
    %1357 = arith.mulf %1356, %1265 : vector<16x16xf32>
    %1358 = arith.select %1355, %1265, %1357 : vector<16x16xi1>, vector<16x16xf32>
    %cst_78 = arith.constant dense<0.000000e+00> : vector<8x16xf32>
    %1359 = tpu.matmul %18, %1358, %cst_78 {dimension_numbers = #tpu.dot_dimension_numbers<[1], [0], [0], [1], [0, 0, 1, 1], [], []>} : vector<8x16xf32>, vector<16x16xf32>, vector<8x16xf32> -> vector<8x16xf32>
    %cst_79 = arith.constant dense<0.000000e+00> : vector<8x16xf32>
    %1360 = tpu.matmul %23, %1358, %cst_79 {dimension_numbers = #tpu.dot_dimension_numbers<[1], [0], [0], [1], [0, 0, 1, 1], [], []>} : vector<8x16xf32>, vector<16x16xf32>, vector<8x16xf32> -> vector<8x16xf32>
    %1361 = arith.maximumf %1359, %1360 : vector<8x16xf32>
    %cst_80 = arith.constant dense<0.000000e+00> : vector<8x8xf32>
    %1362 = tpu.matmul %1361, %30, %cst_80 {dimension_numbers = #tpu.dot_dimension_numbers<[1], [0], [0], [1], [0, 0, 1, 1], [], []>} : vector<8x16xf32>, vector<16x8xf32>, vector<8x8xf32> -> vector<8x8xf32>
    %cst_81 = arith.constant dense<0.000000e+00> : vector<8x8xf32>
    %1363 = tpu.matmul %1361, %37, %cst_81 {dimension_numbers = #tpu.dot_dimension_numbers<[1], [0], [0], [1], [0, 0, 1, 1], [], []>} : vector<8x16xf32>, vector<16x8xf32>, vector<8x8xf32> -> vector<8x8xf32>
    %1364 = arith.maximumf %1362, %1363 : vector<8x8xf32>
    %c0_82 = arith.constant 0 : index
    %c6_83 = arith.constant 6 : index
    %c0_84 = arith.constant 0 : index
    %c0_85 = arith.constant 0 : index
    %1365 = vector.load %arg3[%c0_82, %c6_83, %c0_84, %c0_85] : memref<1x8x8x8xf32, #tpu.memory_space<vmem>>, vector<1x1x8x8xf32>
    %1366 = vector.shape_cast %1365 : vector<1x1x8x8xf32> to vector<8x8xf32>
    %1367 = vector.shape_cast %1364 : vector<8x8xf32> to vector<1x1x8x8xf32>
    tpu.vector_store %arg3[%c0_82, %c6_83, %c0_84, %c0_85], %1367 {strides = array<i32>} : memref<1x8x8x8xf32, #tpu.memory_space<vmem>>, vector<1x1x8x8xf32>,
    %cst_86 = arith.constant 0.000000e+00 : f32
    %1368 = vector.broadcast %cst_86 : f32 to vector<16x16xf32>
    %1369 = arith.cmpf ogt, %1269, %1368 : vector<16x16xf32>
    %cst_87 = arith.constant 1.000000e-01 : f32
    %1370 = vector.broadcast %cst_87 : f32 to vector<16x16xf32>
    %1371 = arith.mulf %1370, %1269 : vector<16x16xf32>
    %1372 = arith.select %1369, %1269, %1371 : vector<16x16xi1>, vector<16x16xf32>
    %cst_88 = arith.constant dense<0.000000e+00> : vector<8x16xf32>
    %1373 = tpu.matmul %18, %1372, %cst_88 {dimension_numbers = #tpu.dot_dimension_numbers<[1], [0], [0], [1], [0, 0, 1, 1], [], []>} : vector<8x16xf32>, vector<16x16xf32>, vector<8x16xf32> -> vector<8x16xf32>
    %cst_89 = arith.constant dense<0.000000e+00> : vector<8x16xf32>
    %1374 = tpu.matmul %23, %1372, %cst_89 {dimension_numbers = #tpu.dot_dimension_numbers<[1], [0], [0], [1], [0, 0, 1, 1], [], []>} : vector<8x16xf32>, vector<16x16xf32>, vector<8x16xf32> -> vector<8x16xf32>
    %1375 = arith.maximumf %1373, %1374 : vector<8x16xf32>
    %cst_90 = arith.constant dense<0.000000e+00> : vector<8x8xf32>
    %1376 = tpu.matmul %1375, %30, %cst_90 {dimension_numbers = #tpu.dot_dimension_numbers<[1], [0], [0], [1], [0, 0, 1, 1], [], []>} : vector<8x16xf32>, vector<16x8xf32>, vector<8x8xf32> -> vector<8x8xf32>
    %cst_91 = arith.constant dense<0.000000e+00> : vector<8x8xf32>
    %1377 = tpu.matmul %1375, %37, %cst_91 {dimension_numbers = #tpu.dot_dimension_numbers<[1], [0], [0], [1], [0, 0, 1, 1], [], []>} : vector<8x16xf32>, vector<16x8xf32>, vector<8x8xf32> -> vector<8x8xf32>
    %1378 = arith.maximumf %1376, %1377 : vector<8x8xf32>
    %c0_92 = arith.constant 0 : index
    %c7_93 = arith.constant 7 : index
    %c0_94 = arith.constant 0 : index
    %c0_95 = arith.constant 0 : index
    %1379 = vector.load %arg3[%c0_92, %c7_93, %c0_94, %c0_95] : memref<1x8x8x8xf32, #tpu.memory_space<vmem>>, vector<1x1x8x8xf32>
    %1380 = vector.shape_cast %1379 : vector<1x1x8x8xf32> to vector<8x8xf32>
    %1381 = vector.shape_cast %1378 : vector<8x8xf32> to vector<1x1x8x8xf32>
    tpu.vector_store %arg3[%c0_92, %c7_93, %c0_94, %c0_95], %1381 {strides = array<i32>} : memref<1x8x8x8xf32, #tpu.memory_space<vmem>>, vector<1x1x8x8xf32>,
    return
  }
  func.func @transform_0(%arg0: i32) -> (i32, i32, i32, i32) {
    %c0_i32 = arith.constant 0 : i32
    %c0_i32_0 = arith.constant 0 : i32
    %c0_i32_1 = arith.constant 0 : i32
    %c0_i32_2 = arith.constant 0 : i32
    return %arg0, %c0_i32, %c0_i32_0, %c0_i32_1 : i32, i32, i32, i32
  }
  func.func @transform_1(%arg0: i32) -> i32 {
    %c0_i32 = arith.constant 0 : i32
    %c0_i32_0 = arith.constant 0 : i32
    return %c0_i32 : i32
  }
  func.func @transform_2(%arg0: i32) -> (i32, i32, i32, i32) {
    %c0_i32 = arith.constant 0 : i32
    %c0_i32_0 = arith.constant 0 : i32
    %c0_i32_1 = arith.constant 0 : i32
    %c0_i32_2 = arith.constant 0 : i32
    return %arg0, %c0_i32, %c0_i32_0, %c0_i32_1 : i32, i32, i32, i32
  }
}

</mosaic_0001>

<llo_original>
// kernel: tpu_custom_call.1
$region0: #{tpu_custom_call.1}
  #allocation0 [shape = 'u32[]', space=smem, size = 0x4, offset = 0x4, fixed_abs, tag = 'smem constant byte address 0x4 - core index']
  #allocation1 [shape = 'u32[144,128]{1,0:T(1,128)}', space=vmem, size = 0x12000, scoped, tag = 'internal scratch']
  %s0 = inlined_call_operand.hbm [shape: f32[2,4,16,16], index: 0, kind: input, shape index: {}]
  %s1 = inlined_call_operand.hbm [shape: f32[288], index: 1, kind: input, shape index: {}]
  %s2 = inlined_call_operand.hbm [shape: f32[2,8,8,8], index: 2, kind: output, shape index: {}]
  %s3 = sld [smem:[#allocation0]]
  $region49: #{tpu_custom_call.1} parent=0
    _
  %s5 = ssub.s32 1, %s3
  %s6 = scalar_select 0, %s5, %s3
  $region1: #{tpu_custom_call.1} parent=0
    #allocation2 [shape = 'u8[65536]{0}', space=vmem, size = 0x10000, scoped, tag = 'input window, operand 0']
    #allocation3 [shape = 's32[2]{0}', space=sflag, size = 0x8, scoped, tag = 'scoped memory for tpu_custom_call.1']
    #allocation4 [shape = 's32[2]{0}', space=sflag, size = 0x8, scoped, tag = 'scoped memory for tpu_custom_call.1']
    #allocation5 [shape = 's32[2]{0}', space=sflag, size = 0x8, scoped, tag = 'scoped memory for tpu_custom_call.1']
    #allocation6 [shape = 'u8[1536]{0}', space=smem, size = 0x600, scoped, tag = 'input window, operand 1, single buffered']
    #allocation7 [shape = 'u8[65536]{0}', space=vmem, size = 0x10000, scoped, tag = 'output window, operand 0']
    %7 = vsyncpa [#allocation3], 0
    %s8 = scalar_lea.sflag [#allocation3], 1
    %9 = vsyncpa %s8, 0
    %10 = vsyncpa [#allocation5], 0
    %11 = vsyncpa [#allocation4], 0
    %s12 = scalar_lea.sflag [#allocation4], 1
    %13 = vsyncpa %s12, 0
    loop: start=0, step=1, limit=4
    $region2: #{tpu_custom_call.1} parent=1 // loop_pre_header
      _
    $region3: #{tpu_custom_call.1} parent=1 // loop_header
      %s15 = sphi 0, %s19
      %p16 = scmp.ge.s32.totalorder %s15, 4
      %s25 = sphi 0, %s27
      %s28 = sphi 0, %s25
      %s29 = sphi 0, %s28
      %s45 = sphi 0, %s29
      %s49 = sphi 0, %s49
      %s51 = sphi 0, %s49
      %s52 = sphi 0, %s51
      %s66 = sphi 0, %s52
      %s72 = sphi 0, %s74
      %s75 = sphi 0, %s72
      %s76 = sphi 0, %s75
      %s92 = sphi 0, %s76
    $region4: #{tpu_custom_call.1} parent=1 // loop_header_branch
      %18 = sbr.rel (%p16) target = $region8
    $region5: #{tpu_custom_call.1} parent=1 // loop_body
      %s20 = ssub.s32 %s15, 1
      %s21 = ssub.s32 %s15, 2
      %s22 = sadd.s32 %s15, 1
      %s23 = ssub.s32 %s15, %s22
      %p24 = scmp.eq.s32.totalorder %s23, 0
      %s26 = sadd.s32 %s25, 1
      %s27 = scalar_select %p24, %s25, %s26
      %p30 = pneg %p24
      %p31 = scmp.eq.s32.totalorder %s15, 1
      %p32 = por %p30, %p31
      %p33 = scmp.ne.s32.totalorder %s25, %s28
      %p34 = scmp.eq.s32.totalorder %s15, 0
      %p35 = por %p33, %p34
      %p36 = scmp.ne.s32.totalorder %s25, %s28
      %p37 = scmp.eq.s32.totalorder %s20, 1
      %p38 = por %p36, %p37
      %p39 = scmp.ne.s32.totalorder %s28, %s29
      %p40 = scmp.eq.s32.totalorder %s20, 0
      %p41 = por %p39, %p40
      %p42 = scmp.ne.s32.totalorder %s28, %s29
      %p43 = scmp.eq.s32.totalorder %s21, 1
      %p44 = por %p42, %p43
      %p46 = scmp.ne.s32.totalorder %s29, %s45
      %p47 = scmp.eq.s32.totalorder %s21, 0
      %p48 = por %p46, %p47
      %s50 = sadd.s32 %s49, 1
      %p53 = scmp.eq.s32.totalorder %s15, 1
      %p54 = scmp.ne.s32.totalorder %s49, %s51
      %p55 = scmp.eq.s32.totalorder %s15, 0
      %p56 = por %p54, %p55
      %p57 = scmp.ne.s32.totalorder %s49, %s51
      %p58 = scmp.eq.s32.totalorder %s20, 1
      %p59 = por %p57, %p58
      %p60 = scmp.ne.s32.totalorder %s51, %s52
      %p61 = scmp.eq.s32.totalorder %s20, 0
      %p62 = por %p60, %p61
      %p63 = scmp.ne.s32.totalorder %s51, %s52
      %p64 = scmp.eq.s32.totalorder %s21, 1
      %p65 = por %p63, %p64
      %p67 = scmp.ne.s32.totalorder %s52, %s66
      %p68 = scmp.eq.s32.totalorder %s21, 0
      %p69 = por %p67, %p68
      %s70 = ssub.s32 %s15, %s22
      %p71 = scmp.eq.s32.totalorder %s70, 0
      %s73 = sadd.s32 %s72, 1
      %s74 = scalar_select %p71, %s72, %s73
      %p77 = pneg %p71
      %p78 = scmp.eq.s32.totalorder %s15, 1
      %p79 = por %p77, %p78
      %p80 = scmp.ne.s32.totalorder %s72, %s75
      %p81 = scmp.eq.s32.totalorder %s15, 0
      %p82 = por %p80, %p81
      %p83 = scmp.ne.s32.totalorder %s72, %s75
      %p84 = scmp.eq.s32.totalorder %s20, 1
      %p85 = por %p83, %p84
      %p86 = scmp.ne.s32.totalorder %s75, %s76
      %p87 = scmp.eq.s32.totalorder %s20, 0
      %p88 = por %p86, %p87
      %p89 = scmp.ne.s32.totalorder %s75, %s76
      %p90 = scmp.eq.s32.totalorder %s21, 1
      %p91 = por %p89, %p90
      %p93 = scmp.ne.s32.totalorder %s76, %s92
      %p94 = scmp.eq.s32.totalorder %s21, 0
      %p95 = por %p93, %p94
      %p96 = scmp.le.s32.totalorder 1, %s15
      %p97 = scmp.lt.s32.totalorder %s15, 3
      %p98 = pnand %p96, %p97
      %p99 = pneg %p98
      // Predicated region
      $region9: #{tpu_custom_call.1} parent=5 // pred_check
        _
      $region10: #{tpu_custom_call.1} parent=5 // pred_check_branch
        %101 = sbr.rel (%p98) target = $region12
      $region11: #{tpu_custom_call.1} parent=5 // pred_region
        %s102 = ssub.s32 %s15, 1
        // Predicated region
        $region13: #{tpu_custom_call.1} parent=11 // pred_check
          %p103 = pneg %p62
        $region14: #{tpu_custom_call.1} parent=11 // pred_check_branch
          %105 = sbr.rel (%p103) target = $region16
        $region15: #{tpu_custom_call.1} parent=11 // pred_region
          %s107 = ssub.s32 48, 48
          %108 = vsyncadd [#allocation5], %s107
          %111 = dma.hbm_to_smem %s1, 48, [#allocation6], [#allocation5]
        $region16: #{tpu_custom_call.1} parent=11 // pred_fallthru
          _
      $region12: #{tpu_custom_call.1} parent=5 // pred_fallthru
        _
      %p112 = scmp.lt.s32.totalorder %s15, 2
      // Predicated region
      $region17: #{tpu_custom_call.1} parent=5 // pred_check
        %p113 = pneg %p112
      $region18: #{tpu_custom_call.1} parent=5 // pred_check_branch
        %115 = sbr.rel (%p113) target = $region20
      $region19: #{tpu_custom_call.1} parent=5 // pred_region
        // Predicated region
        $region21: #{tpu_custom_call.1} parent=19 // pred_check
          %p116 = pneg %p35
        $region22: #{tpu_custom_call.1} parent=19 // pred_check_branch
          %118 = sbr.rel (%p116) target = $region24
        $region23: #{tpu_custom_call.1} parent=19 // pred_region
          %s119 = sand.u32 %s25, 1
          %s120 = scalar_lea.sflag [#allocation3], %s119
          %s121 = sand.u32 %s25, 1
          %s122 = smul.addr %s121, 64
          %s123 = scalar_lea.vmem [#allocation2], %s122
          %s125 = ssub.s32 1024, 1024
          %126 = vsyncadd %s120, %s125
          %s127 = smul.addr %s15, 8
          %s128 = smul.addr %s127, 128
          %s129 = scalar_lea.hbm %s0, %s128
          %s130 = sshll.u32 %s123, 4
          %s131 = int_to_ptr.vmem [resolvable:$true] %s130
          %136 = dma.hbm_to_vmem [thread:$0]  %s129, 1024, %s131, %s120, 128, 128, 8
        $region24: #{tpu_custom_call.1} parent=19 // pred_fallthru
          _
      $region20: #{tpu_custom_call.1} parent=5 // pred_fallthru
        _
      %p137 = scmp.le.s32.totalorder 1, %s15
      %p138 = scmp.lt.s32.totalorder %s15, 3
      %p139 = pnand %p137, %p138
      %p140 = pneg %p139
      // Predicated region
      $region25: #{tpu_custom_call.1} parent=5 // pred_check
        _
      $region26: #{tpu_custom_call.1} parent=5 // pred_check_branch
        %142 = sbr.rel (%p139) target = $region28
      $region27: #{tpu_custom_call.1} parent=5 // pred_region
        %s143 = ssub.s32 %s15, 1
        %s144 = sand.u32 %s28, 1
        %s145 = scalar_lea.sflag [#allocation3], %s144
        %s146 = sand.u32 %s28, 1
        %s147 = smul.addr %s146, 64
        %s148 = scalar_lea.vmem [#allocation2], %s147
        // Predicated region
        $region29: #{tpu_custom_call.1} parent=27 // pred_check
          %p149 = pneg %p41
        $region30: #{tpu_custom_call.1} parent=27 // pred_check_branch
          %151 = sbr.rel (%p149) target = $region32
        $region31: #{tpu_custom_call.1} parent=27 // pred_region
          %152 = dma.done %s145, 1024
        $region32: #{tpu_custom_call.1} parent=27 // pred_fallthru
          _
        // Predicated region
        $region33: #{tpu_custom_call.1} parent=27 // pred_check
          %p153 = pneg %p62
        $region34: #{tpu_custom_call.1} parent=27 // pred_check_branch
          %155 = sbr.rel (%p153) target = $region36
        $region35: #{tpu_custom_call.1} parent=27 // pred_region
          %156 = dma.done [#allocation5], 48
        $region36: #{tpu_custom_call.1} parent=27 // pred_fallthru
          _
        %157 = sfence
        %s158 = sand.u32 %s28, 1
        %s159 = scalar_lea.sflag [#allocation3], %s158
        %s160 = sand.u32 %s28, 1
        %s161 = smul.addr %s160, 64
        %s162 = scalar_lea.vmem [#allocation2], %s161
        %p163 = pneg %p41
        %p164 = pneg %p38
        %p165 = pneg %p62
        %p166 = pneg %p59
        %p167 = pneg %p88
        %p168 = pneg %p85
        %s169 = sand.u32 %s75, 1
        %s170 = scalar_lea.sflag [#allocation4], %s169
        %s171 = sand.u32 %s75, 1
        %s172 = smul.addr %s171, 64
        %s173 = scalar_lea.vmem [#allocation7], %s172
        %v174 = vld [vmem:[%s148] sm:$0xff]
        %v175 = vld [vmem:[%s148 + $0x8] sm:$0xff]
        %v176 = vld [vmem:[%s148 + $0x10] sm:$0xff]
        %v177 = vld [vmem:[%s148 + $0x18] sm:$0xff]
        %v178 = vld [vmem:[%s148 + $0x20] sm:$0xff]
        %v179 = vld [vmem:[%s148 + $0x28] sm:$0xff]
        %v180 = vld [vmem:[%s148 + $0x30] sm:$0xff]
        %v181 = vld [vmem:[%s148 + $0x38] sm:$0xff]
        %vm190 = vcmask 1040384
        %v191 = vrot.slane %v174, 7
        %v192 = vrot.slane %v175, 7
        %v193 = vsel %vm190, %v191, %v192
        %v194 = vrot.slane %v176, 7
        %v195 = vrot.slane %v177, 7
        %v196 = vsel %vm190, %v194, %v195
        %v197 = vrot.slane %v178, 7
        %v198 = vrot.slane %v179, 7
        %v199 = vsel %vm190, %v197, %v198
        %v200 = vrot.slane %v180, 7
        %v201 = vrot.slane %v181, 7
        %v202 = vsel %vm190, %v200, %v201
        %v207 = vsel %vm190, 0.0, %v191
        %v208 = vsel %vm190, 0.0, %v194
        %v209 = vsel %vm190, 0.0, %v197
        %v210 = vsel %vm190, 0.0, %v200
        %v215 = vrot.slane %v207, 7
        %v216 = vrot.slane %v193, 7
        %v217 = vsel %vm190, %v215, %v216
        %v218 = vrot.slane %v192, 7
        %v219 = vsel %vm190, %v216, %v218
        %v220 = vrot.slane %v208, 7
        %v221 = vrot.slane %v196, 7
        %v222 = vsel %vm190, %v220, %v221
        %v223 = vrot.slane %v195, 7
        %v224 = vsel %vm190, %v221, %v223
        %v225 = vrot.slane %v209, 7
        %v226 = vrot.slane %v199, 7
        %v227 = vsel %vm190, %v225, %v226
        %v228 = vrot.slane %v198, 7
        %v229 = vsel %vm190, %v226, %v228
        %v230 = vrot.slane %v210, 7
        %v231 = vrot.slane %v202, 7
        %v232 = vsel %vm190, %v230, %v231
        %v233 = vrot.slane %v201, 7
        %v234 = vsel %vm190, %v231, %v233
        %v247 = vrot.slane %v192, 6
        %v248 = vrot.slane %v195, 6
        %v249 = vrot.slane %v198, 6
        %v250 = vrot.slane %v201, 6
        %v255 = vsel %vm190, %v207, %v215
        %v256 = vsel %vm190, %v208, %v220
        %v257 = vsel %vm190, %v209, %v225
        %v258 = vsel %vm190, %v210, %v230
        %vm259 = vcmask 1041408
        %v260 = vsel %vm259, %v219, %v247
        %v261 = vsel %vm259, %v224, %v248
        %v262 = vsel %vm259, %v229, %v249
        %v263 = vsel %vm259, %v234, %v250
        %272 = vrot.lane.b32.xlu0 %v255, 1
        %v273 = vpop.permute.xlu0 %272
        %274 = vrot.lane.b32.xlu0 %v217, 1
        %v275 = vpop.permute.xlu0 %274
        %276 = vrot.lane.b32.xlu0 %v260, 1
        %v277 = vpop.permute.xlu0 %276
        %278 = vrot.lane.b32.xlu0 %v256, 1
        %v279 = vpop.permute.xlu0 %278
        %280 = vrot.lane.b32.xlu0 %v222, 1
        %v281 = vpop.permute.xlu0 %280
        %282 = vrot.lane.b32.xlu0 %v261, 1
        %v283 = vpop.permute.xlu0 %282
        %284 = vrot.lane.b32.xlu0 %v257, 1
        %v285 = vpop.permute.xlu0 %284
        %286 = vrot.lane.b32.xlu0 %v227, 1
        %v287 = vpop.permute.xlu0 %286
        %288 = vrot.lane.b32.xlu0 %v262, 1
        %v289 = vpop.permute.xlu0 %288
        %290 = vrot.lane.b32.xlu0 %v258, 1
        %v291 = vpop.permute.xlu0 %290
        %292 = vrot.lane.b32.xlu0 %v232, 1
        %v293 = vpop.permute.xlu0 %292
        %294 = vrot.lane.b32.xlu0 %v263, 1
        %v295 = vpop.permute.xlu0 %294
        %308 = vrot.lane.b32.xlu0 %v255, 2
        %v309 = vpop.permute.xlu0 %308
        %310 = vrot.lane.b32.xlu0 %v217, 2
        %v311 = vpop.permute.xlu0 %310
        %312 = vrot.lane.b32.xlu0 %v260, 2
        %v313 = vpop.permute.xlu0 %312
        %314 = vrot.lane.b32.xlu0 %v256, 2
        %v315 = vpop.permute.xlu0 %314
        %316 = vrot.lane.b32.xlu0 %v222, 2
        %v317 = vpop.permute.xlu0 %316
        %318 = vrot.lane.b32.xlu0 %v261, 2
        %v319 = vpop.permute.xlu0 %318
        %320 = vrot.lane.b32.xlu0 %v257, 2
        %v321 = vpop.permute.xlu0 %320
        %322 = vrot.lane.b32.xlu0 %v227, 2
        %v323 = vpop.permute.xlu0 %322
        %324 = vrot.lane.b32.xlu0 %v262, 2
        %v325 = vpop.permute.xlu0 %324
        %326 = vrot.lane.b32.xlu0 %v258, 2
        %v327 = vpop.permute.xlu0 %326
        %328 = vrot.lane.b32.xlu0 %v232, 2
        %v329 = vpop.permute.xlu0 %328
        %330 = vrot.lane.b32.xlu0 %v263, 2
        %v331 = vpop.permute.xlu0 %330
        %vm344 = vcmask 7168
        %v345 = vsel %vm344, %v255, %v273
        %v346 = vsel %vm344, %v217, %v275
        %v347 = vsel %vm344, %v260, %v277
        %v348 = vsel %vm344, %v256, %v279
        %v349 = vsel %vm344, %v222, %v281
        %v350 = vsel %vm344, %v261, %v283
        %v351 = vsel %vm344, %v257, %v285
        %v352 = vsel %vm344, %v227, %v287
        %v353 = vsel %vm344, %v262, %v289
        %v354 = vsel %vm344, %v258, %v291
        %v355 = vsel %vm344, %v232, %v293
        %v356 = vsel %vm344, %v263, %v295
        %vm357 = vcmask 138240
        %v358 = vsel %vm357, %v345, %v309
        %v359 = vsel %vm357, %v346, %v311
        %v360 = vsel %vm357, %v347, %v313
        %v361 = vsel %vm357, %v348, %v315
        %v362 = vsel %vm357, %v349, %v317
        %v363 = vsel %vm357, %v350, %v319
        %v364 = vsel %vm357, %v351, %v321
        %v365 = vsel %vm357, %v352, %v323
        %v366 = vsel %vm357, %v353, %v325
        %v367 = vsel %vm357, %v354, %v327
        %v368 = vsel %vm357, %v355, %v329
        %v369 = vsel %vm357, %v356, %v331
        %v370 = vlaneseq
        %v371 = vshrl.u32 %v370, 7
        %v372 = vlaneseq
        %v373 = vand.u32 %v372, 127
        %v374 = vmul.u32 %v371, 2
        %v375 = vsub.s32 %v374, 1
        %vm376 = vcmp.eq.s32.totalorder %v373, %v375
        %v377 = vsel %vm376, 1, 0
        %v378 = vcvt.s32.f32 %v377
        %vm379 = vcmp.eq.s32.totalorder %v373, %v374
        %v380 = vsel %vm379, 1, 0
        %v381 = vcvt.s32.f32 %v380
        %v382 = vadd.s32 %v371, 8
        %v383 = vmul.u32 %v373, 2
        %vm384 = vcmp.eq.s32.totalorder %v371, %v383
        %vm385 = vcmp.eq.s32.totalorder %v382, %v383
        %v386 = vsel %vm384, 1, 0
        %v387 = vsel %vm385, 1, 0
        %v388 = vcvt.s32.f32 %v386
        %v389 = vcvt.s32.f32 %v387
        %v390 = vadd.s32 %v383, 1
        %vm391 = vcmp.eq.s32.totalorder %v371, %v390
        %vm392 = vcmp.eq.s32.totalorder %v382, %v390
        %v393 = vsel %vm391, 1, 0
        %v394 = vsel %vm392, 1, 0
        %v395 = vcvt.s32.f32 %v393
        %v396 = vcvt.s32.f32 %v394
        %s397 = sld [smem:[#allocation6]]
        %v398 = vstv %s397
        %v399 = vmul.f32 %v398, %v358
        %v400 = vmul.f32 %v398, %v359
        %v401 = vadd.f32 %v399, 0.0
        %v402 = vadd.f32 %v400, 0.0
        %s403 = sld [smem:[#allocation6 + $0x24]]
        %v404 = vstv %s403
        %v405 = vmul.f32 %v404, %v358
        %v406 = vmul.f32 %v404, %v359
        %v407 = vadd.f32 %v405, 0.0
        %v408 = vadd.f32 %v406, 0.0
        %s409 = sld [smem:[#allocation6 + $0x48]]
        %v410 = vstv %s409
        %v411 = vmul.f32 %v410, %v358
        %v412 = vmul.f32 %v410, %v359
        %v413 = vadd.f32 %v411, 0.0
        %v414 = vadd.f32 %v412, 0.0
        %s415 = sld [smem:[#allocation6 + $0x6c]]
        %v416 = vstv %s415
        %v417 = vmul.f32 %v416, %v358
        %v418 = vmul.f32 %v416, %v359
        %v419 = vadd.f32 %v417, 0.0
        %v420 = vadd.f32 %v418, 0.0
        %s421 = sld [smem:[#allocation6 + $0x90]]
        %v422 = vstv %s421
        %v423 = vmul.f32 %v422, %v358
        %v424 = vmul.f32 %v422, %v359
        %v425 = vadd.f32 %v423, 0.0
        %v426 = vadd.f32 %v424, 0.0
        %s427 = sld [smem:[#allocation6 + $0xb4]]
        %v428 = vstv %s427
        %v429 = vmul.f32 %v428, %v358
        %v430 = vmul.f32 %v428, %v359
        %v431 = vadd.f32 %v429, 0.0
        %v432 = vadd.f32 %v430, 0.0
        %s433 = sld [smem:[#allocation6 + $0xd8]]
        %v434 = vstv %s433
        %v435 = vmul.f32 %v434, %v358
        %v436 = vmul.f32 %v434, %v359
        %v437 = vadd.f32 %v435, 0.0
        %v438 = vadd.f32 %v436, 0.0
        %s439 = sld [smem:[#allocation6 + $0xfc]]
        %v440 = vstv %s439
        %v441 = vmul.f32 %v440, %v358
        %v442 = vmul.f32 %v440, %v359
        %v443 = vadd.f32 %v441, 0.0
        %v444 = vadd.f32 %v442, 0.0
        %s445 = sld [smem:[#allocation6 + $0x1]]
        %v446 = vstv %s445
        %v447 = vmul.f32 %v446, %v358
        %v448 = vmul.f32 %v446, %v359
        %451 = vrot.lane.b32.xlu0 %v447, 127
        %v452 = vpop.permute.xlu0 %451
        %453 = vrot.lane.b32.xlu0 %v448, 127
        %v454 = vpop.permute.xlu0 %453
        %v457 = vadd.f32 %v401, %v452
        %v458 = vadd.f32 %v402, %v454
        %s459 = sld [smem:[#allocation6 + $0x25]]
        %v460 = vstv %s459
        %v461 = vmul.f32 %v460, %v358
        %v462 = vmul.f32 %v460, %v359
        %465 = vrot.lane.b32.xlu0 %v461, 127
        %v466 = vpop.permute.xlu0 %465
        %467 = vrot.lane.b32.xlu0 %v462, 127
        %v468 = vpop.permute.xlu0 %467
        %v471 = vadd.f32 %v407, %v466
        %v472 = vadd.f32 %v408, %v468
        %s473 = sld [smem:[#allocation6 + $0x49]]
        %v474 = vstv %s473
        %v475 = vmul.f32 %v474, %v358
        %v476 = vmul.f32 %v474, %v359
        %479 = vrot.lane.b32.xlu0 %v475, 127
        %v480 = vpop.permute.xlu0 %479
        %481 = vrot.lane.b32.xlu0 %v476, 127
        %v482 = vpop.permute.xlu0 %481
        %v485 = vadd.f32 %v413, %v480
        %v486 = vadd.f32 %v414, %v482
        %s487 = sld [smem:[#allocation6 + $0x6d]]
        %v488 = vstv %s487
        %v489 = vmul.f32 %v488, %v358
        %v490 = vmul.f32 %v488, %v359
        %493 = vrot.lane.b32.xlu0 %v489, 127
        %v494 = vpop.permute.xlu0 %493
        %495 = vrot.lane.b32.xlu0 %v490, 127
        %v496 = vpop.permute.xlu0 %495
        %v499 = vadd.f32 %v419, %v494
        %v500 = vadd.f32 %v420, %v496
        %s501 = sld [smem:[#allocation6 + $0x91]]
        %v502 = vstv %s501
        %v503 = vmul.f32 %v502, %v358
        %v504 = vmul.f32 %v502, %v359
        %507 = vrot.lane.b32.xlu0 %v503, 127
        %v508 = vpop.permute.xlu0 %507
        %509 = vrot.lane.b32.xlu0 %v504, 127
        %v510 = vpop.permute.xlu0 %509
        %v513 = vadd.f32 %v425, %v508
        %v514 = vadd.f32 %v426, %v510
        %s515 = sld [smem:[#allocation6 + $0xb5]]
        %v516 = vstv %s515
        %v517 = vmul.f32 %v516, %v358
        %v518 = vmul.f32 %v516, %v359
        %521 = vrot.lane.b32.xlu0 %v517, 127
        %v522 = vpop.permute.xlu0 %521
        %523 = vrot.lane.b32.xlu0 %v518, 127
        %v524 = vpop.permute.xlu0 %523
        %v527 = vadd.f32 %v431, %v522
        %v528 = vadd.f32 %v432, %v524
        %s529 = sld [smem:[#allocation6 + $0xd9]]
        %v530 = vstv %s529
        %v531 = vmul.f32 %v530, %v358
        %v532 = vmul.f32 %v530, %v359
        %535 = vrot.lane.b32.xlu0 %v531, 127
        %v536 = vpop.permute.xlu0 %535
        %537 = vrot.lane.b32.xlu0 %v532, 127
        %v538 = vpop.permute.xlu0 %537
        %v541 = vadd.f32 %v437, %v536
        %v542 = vadd.f32 %v438, %v538
        %s543 = sld [smem:[#allocation6 + $0xfd]]
        %v544 = vstv %s543
        %v545 = vmul.f32 %v544, %v358
        %v546 = vmul.f32 %v544, %v359
        %549 = vrot.lane.b32.xlu0 %v545, 127
        %v550 = vpop.permute.xlu0 %549
        %551 = vrot.lane.b32.xlu0 %v546, 127
        %v552 = vpop.permute.xlu0 %551
        %v555 = vadd.f32 %v443, %v550
        %v556 = vadd.f32 %v444, %v552
        %s557 = sld [smem:[#allocation6 + $0x2]]
        %v558 = vstv %s557
        %v559 = vmul.f32 %v558, %v358
        %v560 = vmul.f32 %v558, %v359
        %563 = vrot.lane.b32.xlu0 %v559, 126
        %v564 = vpop.permute.xlu0 %563
        %565 = vrot.lane.b32.xlu0 %v560, 126
        %v566 = vpop.permute.xlu0 %565
        %v569 = vadd.f32 %v457, %v564
        %v570 = vadd.f32 %v458, %v566
        %s571 = sld [smem:[#allocation6 + $0x26]]
        %v572 = vstv %s571
        %v573 = vmul.f32 %v572, %v358
        %v574 = vmul.f32 %v572, %v359
        %577 = vrot.lane.b32.xlu0 %v573, 126
        %v578 = vpop.permute.xlu0 %577
        %579 = vrot.lane.b32.xlu0 %v574, 126
        %v580 = vpop.permute.xlu0 %579
        %v583 = vadd.f32 %v471, %v578
        %v584 = vadd.f32 %v472, %v580
        %s585 = sld [smem:[#allocation6 + $0x4a]]
        %v586 = vstv %s585
        %v587 = vmul.f32 %v586, %v358
        %v588 = vmul.f32 %v586, %v359
        %591 = vrot.lane.b32.xlu0 %v587, 126
        %v592 = vpop.permute.xlu0 %591
        %593 = vrot.lane.b32.xlu0 %v588, 126
        %v594 = vpop.permute.xlu0 %593
        %v597 = vadd.f32 %v485, %v592
        %v598 = vadd.f32 %v486, %v594
        %s599 = sld [smem:[#allocation6 + $0x6e]]
        %v600 = vstv %s599
        %v601 = vmul.f32 %v600, %v358
        %v602 = vmul.f32 %v600, %v359
        %605 = vrot.lane.b32.xlu0 %v601, 126
        %v606 = vpop.permute.xlu0 %605
        %607 = vrot.lane.b32.xlu0 %v602, 126
        %v608 = vpop.permute.xlu0 %607
        %v611 = vadd.f32 %v499, %v606
        %v612 = vadd.f32 %v500, %v608
        %s613 = sld [smem:[#allocation6 + $0x92]]
        %v614 = vstv %s613
        %v615 = vmul.f32 %v614, %v358
        %v616 = vmul.f32 %v614, %v359
        %619 = vrot.lane.b32.xlu0 %v615, 126
        %v620 = vpop.permute.xlu0 %619
        %621 = vrot.lane.b32.xlu0 %v616, 126
        %v622 = vpop.permute.xlu0 %621
        %v625 = vadd.f32 %v513, %v620
        %v626 = vadd.f32 %v514, %v622
        %s627 = sld [smem:[#allocation6 + $0xb6]]
        %v628 = vstv %s627
        %v629 = vmul.f32 %v628, %v358
        %v630 = vmul.f32 %v628, %v359
        %633 = vrot.lane.b32.xlu0 %v629, 126
        %v634 = vpop.permute.xlu0 %633
        %635 = vrot.lane.b32.xlu0 %v630, 126
        %v636 = vpop.permute.xlu0 %635
        %v639 = vadd.f32 %v527, %v634
        %v640 = vadd.f32 %v528, %v636
        %s641 = sld [smem:[#allocation6 + $0xda]]
        %v642 = vstv %s641
        %v643 = vmul.f32 %v642, %v358
        %v644 = vmul.f32 %v642, %v359
        %647 = vrot.lane.b32.xlu0 %v643, 126
        %v648 = vpop.permute.xlu0 %647
        %649 = vrot.lane.b32.xlu0 %v644, 126
        %v650 = vpop.permute.xlu0 %649
        %v653 = vadd.f32 %v541, %v648
        %v654 = vadd.f32 %v542, %v650
        %s655 = sld [smem:[#allocation6 + $0xfe]]
        %v656 = vstv %s655
        %v657 = vmul.f32 %v656, %v358
        %v658 = vmul.f32 %v656, %v359
        %661 = vrot.lane.b32.xlu0 %v657, 126
        %v662 = vpop.permute.xlu0 %661
        %663 = vrot.lane.b32.xlu0 %v658, 126
        %v664 = vpop.permute.xlu0 %663
        %v667 = vadd.f32 %v555, %v662
        %v668 = vadd.f32 %v556, %v664
        %s669 = sld [smem:[#allocation6 + $0x3]]
        %v670 = vstv %s669
        %v671 = vmul.f32 %v670, %v358
        %v672 = vmul.f32 %v670, %v359
        %v673 = vmul.f32 %v670, %v360
        %vm677 = vcmask 1046528
        %v678 = vrot.slane %v671, 1
        %v679 = vrot.slane %v672, 1
        %v680 = vsel %vm677, %v678, %v679
        %v681 = vrot.slane %v673, 1
        %v682 = vsel %vm677, %v679, %v681
        %v685 = vadd.f32 %v569, %v680
        %v686 = vadd.f32 %v570, %v682
        %s687 = sld [smem:[#allocation6 + $0x27]]
        %v688 = vstv %s687
        %v689 = vmul.f32 %v688, %v358
        %v690 = vmul.f32 %v688, %v359
        %v691 = vmul.f32 %v688, %v360
        %v695 = vrot.slane %v689, 1
        %v696 = vrot.slane %v690, 1
        %v697 = vsel %vm677, %v695, %v696
        %v698 = vrot.slane %v691, 1
        %v699 = vsel %vm677, %v696, %v698
        %v702 = vadd.f32 %v583, %v697
        %v703 = vadd.f32 %v584, %v699
        %s704 = sld [smem:[#allocation6 + $0x4b]]
        %v705 = vstv %s704
        %v706 = vmul.f32 %v705, %v358
        %v707 = vmul.f32 %v705, %v359
        %v708 = vmul.f32 %v705, %v360
        %v712 = vrot.slane %v706, 1
        %v713 = vrot.slane %v707, 1
        %v714 = vsel %vm677, %v712, %v713
        %v715 = vrot.slane %v708, 1
        %v716 = vsel %vm677, %v713, %v715
        %v719 = vadd.f32 %v597, %v714
        %v720 = vadd.f32 %v598, %v716
        %s721 = sld [smem:[#allocation6 + $0x6f]]
        %v722 = vstv %s721
        %v723 = vmul.f32 %v722, %v358
        %v724 = vmul.f32 %v722, %v359
        %v725 = vmul.f32 %v722, %v360
        %v729 = vrot.slane %v723, 1
        %v730 = vrot.slane %v724, 1
        %v731 = vsel %vm677, %v729, %v730
        %v732 = vrot.slane %v725, 1
        %v733 = vsel %vm677, %v730, %v732
        %v736 = vadd.f32 %v611, %v731
        %v737 = vadd.f32 %v612, %v733
        %s738 = sld [smem:[#allocation6 + $0x93]]
        %v739 = vstv %s738
        %v740 = vmul.f32 %v739, %v358
        %v741 = vmul.f32 %v739, %v359
        %v742 = vmul.f32 %v739, %v360
        %v746 = vrot.slane %v740, 1
        %v747 = vrot.slane %v741, 1
        %v748 = vsel %vm677, %v746, %v747
        %v749 = vrot.slane %v742, 1
        %v750 = vsel %vm677, %v747, %v749
        %v753 = vadd.f32 %v625, %v748
        %v754 = vadd.f32 %v626, %v750
        %s755 = sld [smem:[#allocation6 + $0xb7]]
        %v756 = vstv %s755
        %v757 = vmul.f32 %v756, %v358
        %v758 = vmul.f32 %v756, %v359
        %v759 = vmul.f32 %v756, %v360
        %v763 = vrot.slane %v757, 1
        %v764 = vrot.slane %v758, 1
        %v765 = vsel %vm677, %v763, %v764
        %v766 = vrot.slane %v759, 1
        %v767 = vsel %vm677, %v764, %v766
        %v770 = vadd.f32 %v639, %v765
        %v771 = vadd.f32 %v640, %v767
        %s772 = sld [smem:[#allocation6 + $0xdb]]
        %v773 = vstv %s772
        %v774 = vmul.f32 %v773, %v358
        %v775 = vmul.f32 %v773, %v359
        %v776 = vmul.f32 %v773, %v360
        %v780 = vrot.slane %v774, 1
        %v781 = vrot.slane %v775, 1
        %v782 = vsel %vm677, %v780, %v781
        %v783 = vrot.slane %v776, 1
        %v784 = vsel %vm677, %v781, %v783
        %v787 = vadd.f32 %v653, %v782
        %v788 = vadd.f32 %v654, %v784
        %s789 = sld [smem:[#allocation6 + $0xff]]
        %v790 = vstv %s789
        %v791 = vmul.f32 %v790, %v358
        %v792 = vmul.f32 %v790, %v359
        %v793 = vmul.f32 %v790, %v360
        %v797 = vrot.slane %v791, 1
        %v798 = vrot.slane %v792, 1
        %v799 = vsel %vm677, %v797, %v798
        %v800 = vrot.slane %v793, 1
        %v801 = vsel %vm677, %v798, %v800
        %v804 = vadd.f32 %v667, %v799
        %v805 = vadd.f32 %v668, %v801
        %s806 = sld [smem:[#allocation6 + $0x4]]
        %v807 = vstv %s806
        %v808 = vmul.f32 %v807, %v358
        %v809 = vmul.f32 %v807, %v359
        %v810 = vmul.f32 %v807, %v360
        %v814 = vrot.slane %v808, 1
        %v815 = vrot.slane %v809, 1
        %v816 = vsel %vm677, %v814, %v815
        %v817 = vrot.slane %v810, 1
        %v818 = vsel %vm677, %v815, %v817
        %819 = vrot.lane.b32.xlu0 %v816, 127
        %v820 = vpop.permute.xlu0 %819
        %821 = vrot.lane.b32.xlu0 %v818, 127
        %v822 = vpop.permute.xlu0 %821
        %v825 = vadd.f32 %v685, %v820
        %v826 = vadd.f32 %v686, %v822
        %s827 = sld [smem:[#allocation6 + $0x28]]
        %v828 = vstv %s827
        %v829 = vmul.f32 %v828, %v358
        %v830 = vmul.f32 %v828, %v359
        %v831 = vmul.f32 %v828, %v360
        %v835 = vrot.slane %v829, 1
        %v836 = vrot.slane %v830, 1
        %v837 = vsel %vm677, %v835, %v836
        %v838 = vrot.slane %v831, 1
        %v839 = vsel %vm677, %v836, %v838
        %840 = vrot.lane.b32.xlu0 %v837, 127
        %v841 = vpop.permute.xlu0 %840
        %842 = vrot.lane.b32.xlu0 %v839, 127
        %v843 = vpop.permute.xlu0 %842
        %v846 = vadd.f32 %v702, %v841
        %v847 = vadd.f32 %v703, %v843
        %s848 = sld [smem:[#allocation6 + $0x4c]]
        %v849 = vstv %s848
        %v850 = vmul.f32 %v849, %v358
        %v851 = vmul.f32 %v849, %v359
        %v852 = vmul.f32 %v849, %v360
        %v856 = vrot.slane %v850, 1
        %v857 = vrot.slane %v851, 1
        %v858 = vsel %vm677, %v856, %v857
        %v859 = vrot.slane %v852, 1
        %v860 = vsel %vm677, %v857, %v859
        %861 = vrot.lane.b32.xlu0 %v858, 127
        %v862 = vpop.permute.xlu0 %861
        %863 = vrot.lane.b32.xlu0 %v860, 127
        %v864 = vpop.permute.xlu0 %863
        %v867 = vadd.f32 %v719, %v862
        %v868 = vadd.f32 %v720, %v864
        %s869 = sld [smem:[#allocation6 + $0x70]]
        %v870 = vstv %s869
        %v871 = vmul.f32 %v870, %v358
        %v872 = vmul.f32 %v870, %v359
        %v873 = vmul.f32 %v870, %v360
        %v877 = vrot.slane %v871, 1
        %v878 = vrot.slane %v872, 1
        %v879 = vsel %vm677, %v877, %v878
        %v880 = vrot.slane %v873, 1
        %v881 = vsel %vm677, %v878, %v880
        %882 = vrot.lane.b32.xlu0 %v879, 127
        %v883 = vpop.permute.xlu0 %882
        %884 = vrot.lane.b32.xlu0 %v881, 127
        %v885 = vpop.permute.xlu0 %884
        %v888 = vadd.f32 %v736, %v883
        %v889 = vadd.f32 %v737, %v885
        %s890 = sld [smem:[#allocation6 + $0x94]]
        %v891 = vstv %s890
        %v892 = vmul.f32 %v891, %v358
        %v893 = vmul.f32 %v891, %v359
        %v894 = vmul.f32 %v891, %v360
        %v898 = vrot.slane %v892, 1
        %v899 = vrot.slane %v893, 1
        %v900 = vsel %vm677, %v898, %v899
        %v901 = vrot.slane %v894, 1
        %v902 = vsel %vm677, %v899, %v901
        %903 = vrot.lane.b32.xlu0 %v900, 127
        %v904 = vpop.permute.xlu0 %903
        %905 = vrot.lane.b32.xlu0 %v902, 127
        %v906 = vpop.permute.xlu0 %905
        %v909 = vadd.f32 %v753, %v904
        %v910 = vadd.f32 %v754, %v906
        %s911 = sld [smem:[#allocation6 + $0xb8]]
        %v912 = vstv %s911
        %v913 = vmul.f32 %v912, %v358
        %v914 = vmul.f32 %v912, %v359
        %v915 = vmul.f32 %v912, %v360
        %v919 = vrot.slane %v913, 1
        %v920 = vrot.slane %v914, 1
        %v921 = vsel %vm677, %v919, %v920
        %v922 = vrot.slane %v915, 1
        %v923 = vsel %vm677, %v920, %v922
        %924 = vrot.lane.b32.xlu0 %v921, 127
        %v925 = vpop.permute.xlu0 %924
        %926 = vrot.lane.b32.xlu0 %v923, 127
        %v927 = vpop.permute.xlu0 %926
        %v930 = vadd.f32 %v770, %v925
        %v931 = vadd.f32 %v771, %v927
        %s932 = sld [smem:[#allocation6 + $0xdc]]
        %v933 = vstv %s932
        %v934 = vmul.f32 %v933, %v358
        %v935 = vmul.f32 %v933, %v359
        %v936 = vmul.f32 %v933, %v360
        %v940 = vrot.slane %v934, 1
        %v941 = vrot.slane %v935, 1
        %v942 = vsel %vm677, %v940, %v941
        %v943 = vrot.slane %v936, 1
        %v944 = vsel %vm677, %v941, %v943
        %945 = vrot.lane.b32.xlu0 %v942, 127
        %v946 = vpop.permute.xlu0 %945
        %947 = vrot.lane.b32.xlu0 %v944, 127
        %v948 = vpop.permute.xlu0 %947
        %v951 = vadd.f32 %v787, %v946
        %v952 = vadd.f32 %v788, %v948
        %s953 = sld [smem:[#allocation6 + $0x100]]
        %v954 = vstv %s953
        %v955 = vmul.f32 %v954, %v358
        %v956 = vmul.f32 %v954, %v359
        %v957 = vmul.f32 %v954, %v360
        %v961 = vrot.slane %v955, 1
        %v962 = vrot.slane %v956, 1
        %v963 = vsel %vm677, %v961, %v962
        %v964 = vrot.slane %v957, 1
        %v965 = vsel %vm677, %v962, %v964
        %966 = vrot.lane.b32.xlu0 %v963, 127
        %v967 = vpop.permute.xlu0 %966
        %968 = vrot.lane.b32.xlu0 %v965, 127
        %v969 = vpop.permute.xlu0 %968
        %v972 = vadd.f32 %v804, %v967
        %v973 = vadd.f32 %v805, %v969
        %s974 = sld [smem:[#allocation6 + $0x5]]
        %v975 = vstv %s974
        %v976 = vmul.f32 %v975, %v358
        %v977 = vmul.f32 %v975, %v359
        %v978 = vmul.f32 %v975, %v360
        %v982 = vrot.slane %v976, 1
        %v983 = vrot.slane %v977, 1
        %v984 = vsel %vm677, %v982, %v983
        %v985 = vrot.slane %v978, 1
        %v986 = vsel %vm677, %v983, %v985
        %987 = vrot.lane.b32.xlu0 %v984, 126
        %v988 = vpop.permute.xlu0 %987
        %989 = vrot.lane.b32.xlu0 %v986, 126
        %v990 = vpop.permute.xlu0 %989
        %v993 = vadd.f32 %v825, %v988
        %v994 = vadd.f32 %v826, %v990
        %s995 = sld [smem:[#allocation6 + $0x29]]
        %v996 = vstv %s995
        %v997 = vmul.f32 %v996, %v358
        %v998 = vmul.f32 %v996, %v359
        %v999 = vmul.f32 %v996, %v360
        %v1003 = vrot.slane %v997, 1
        %v1004 = vrot.slane %v998, 1
        %v1005 = vsel %vm677, %v1003, %v1004
        %v1006 = vrot.slane %v999, 1
        %v1007 = vsel %vm677, %v1004, %v1006
        %1008 = vrot.lane.b32.xlu0 %v1005, 126
        %v1009 = vpop.permute.xlu0 %1008
        %1010 = vrot.lane.b32.xlu0 %v1007, 126
        %v1011 = vpop.permute.xlu0 %1010
        %v1014 = vadd.f32 %v846, %v1009
        %v1015 = vadd.f32 %v847, %v1011
        %s1016 = sld [smem:[#allocation6 + $0x4d]]
        %v1017 = vstv %s1016
        %v1018 = vmul.f32 %v1017, %v358
        %v1019 = vmul.f32 %v1017, %v359
        %v1020 = vmul.f32 %v1017, %v360
        %v1024 = vrot.slane %v1018, 1
        %v1025 = vrot.slane %v1019, 1
        %v1026 = vsel %vm677, %v1024, %v1025
        %v1027 = vrot.slane %v1020, 1
        %v1028 = vsel %vm677, %v1025, %v1027
        %1029 = vrot.lane.b32.xlu0 %v1026, 126
        %v1030 = vpop.permute.xlu0 %1029
        %1031 = vrot.lane.b32.xlu0 %v1028, 126
        %v1032 = vpop.permute.xlu0 %1031
        %v1035 = vadd.f32 %v867, %v1030
        %v1036 = vadd.f32 %v868, %v1032
        %s1037 = sld [smem:[#allocation6 + $0x71]]
        %v1038 = vstv %s1037
        %v1039 = vmul.f32 %v1038, %v358
        %v1040 = vmul.f32 %v1038, %v359
        %v1041 = vmul.f32 %v1038, %v360
        %v1045 = vrot.slane %v1039, 1
        %v1046 = vrot.slane %v1040, 1
        %v1047 = vsel %vm677, %v1045, %v1046
        %v1048 = vrot.slane %v1041, 1
        %v1049 = vsel %vm677, %v1046, %v1048
        %1050 = vrot.lane.b32.xlu0 %v1047, 126
        %v1051 = vpop.permute.xlu0 %1050
        %1052 = vrot.lane.b32.xlu0 %v1049, 126
        %v1053 = vpop.permute.xlu0 %1052
        %v1056 = vadd.f32 %v888, %v1051
        %v1057 = vadd.f32 %v889, %v1053
        %s1058 = sld [smem:[#allocation6 + $0x95]]
        %v1059 = vstv %s1058
        %v1060 = vmul.f32 %v1059, %v358
        %v1061 = vmul.f32 %v1059, %v359
        %v1062 = vmul.f32 %v1059, %v360
        %v1066 = vrot.slane %v1060, 1
        %v1067 = vrot.slane %v1061, 1
        %v1068 = vsel %vm677, %v1066, %v1067
        %v1069 = vrot.slane %v1062, 1
        %v1070 = vsel %vm677, %v1067, %v1069
        %1071 = vrot.lane.b32.xlu0 %v1068, 126
        %v1072 = vpop.permute.xlu0 %1071
        %1073 = vrot.lane.b32.xlu0 %v1070, 126
        %v1074 = vpop.permute.xlu0 %1073
        %v1077 = vadd.f32 %v909, %v1072
        %v1078 = vadd.f32 %v910, %v1074
        %s1079 = sld [smem:[#allocation6 + $0xb9]]
        %v1080 = vstv %s1079
        %v1081 = vmul.f32 %v1080, %v358
        %v1082 = vmul.f32 %v1080, %v359
        %v1083 = vmul.f32 %v1080, %v360
        %v1087 = vrot.slane %v1081, 1
        %v1088 = vrot.slane %v1082, 1
        %v1089 = vsel %vm677, %v1087, %v1088
        %v1090 = vrot.slane %v1083, 1
        %v1091 = vsel %vm677, %v1088, %v1090
        %1092 = vrot.lane.b32.xlu0 %v1089, 126
        %v1093 = vpop.permute.xlu0 %1092
        %1094 = vrot.lane.b32.xlu0 %v1091, 126
        %v1095 = vpop.permute.xlu0 %1094
        %v1098 = vadd.f32 %v930, %v1093
        %v1099 = vadd.f32 %v931, %v1095
        %s1100 = sld [smem:[#allocation6 + $0xdd]]
        %v1101 = vstv %s1100
        %v1102 = vmul.f32 %v1101, %v358
        %v1103 = vmul.f32 %v1101, %v359
        %v1104 = vmul.f32 %v1101, %v360
        %v1108 = vrot.slane %v1102, 1
        %v1109 = vrot.slane %v1103, 1
        %v1110 = vsel %vm677, %v1108, %v1109
        %v1111 = vrot.slane %v1104, 1
        %v1112 = vsel %vm677, %v1109, %v1111
        %1113 = vrot.lane.b32.xlu0 %v1110, 126
        %v1114 = vpop.permute.xlu0 %1113
        %1115 = vrot.lane.b32.xlu0 %v1112, 126
        %v1116 = vpop.permute.xlu0 %1115
        %v1119 = vadd.f32 %v951, %v1114
        %v1120 = vadd.f32 %v952, %v1116
        %s1121 = sld [smem:[#allocation6 + $0x101]]
        %v1122 = vstv %s1121
        %v1123 = vmul.f32 %v1122, %v358
        %v1124 = vmul.f32 %v1122, %v359
        %v1125 = vmul.f32 %v1122, %v360
        %v1129 = vrot.slane %v1123, 1
        %v1130 = vrot.slane %v1124, 1
        %v1131 = vsel %vm677, %v1129, %v1130
        %v1132 = vrot.slane %v1125, 1
        %v1133 = vsel %vm677, %v1130, %v1132
        %1134 = vrot.lane.b32.xlu0 %v1131, 126
        %v1135 = vpop.permute.xlu0 %1134
        %1136 = vrot.lane.b32.xlu0 %v1133, 126
        %v1137 = vpop.permute.xlu0 %1136
        %v1140 = vadd.f32 %v972, %v1135
        %v1141 = vadd.f32 %v973, %v1137
        %s1142 = sld [smem:[#allocation6 + $0x6]]
        %v1143 = vstv %s1142
        %v1144 = vmul.f32 %v1143, %v358
        %v1145 = vmul.f32 %v1143, %v359
        %v1146 = vmul.f32 %v1143, %v360
        %vm1150 = vcmask 1045504
        %v1151 = vrot.slane %v1144, 2
        %v1152 = vrot.slane %v1145, 2
        %v1153 = vsel %vm1150, %v1151, %v1152
        %v1154 = vrot.slane %v1146, 2
        %v1155 = vsel %vm1150, %v1152, %v1154
        %v1158 = vadd.f32 %v993, %v1153
        %v1159 = vadd.f32 %v994, %v1155
        %s1160 = sld [smem:[#allocation6 + $0x2a]]
        %v1161 = vstv %s1160
        %v1162 = vmul.f32 %v1161, %v358
        %v1163 = vmul.f32 %v1161, %v359
        %v1164 = vmul.f32 %v1161, %v360
        %v1168 = vrot.slane %v1162, 2
        %v1169 = vrot.slane %v1163, 2
        %v1170 = vsel %vm1150, %v1168, %v1169
        %v1171 = vrot.slane %v1164, 2
        %v1172 = vsel %vm1150, %v1169, %v1171
        %v1175 = vadd.f32 %v1014, %v1170
        %v1176 = vadd.f32 %v1015, %v1172
        %s1177 = sld [smem:[#allocation6 + $0x4e]]
        %v1178 = vstv %s1177
        %v1179 = vmul.f32 %v1178, %v358
        %v1180 = vmul.f32 %v1178, %v359
        %v1181 = vmul.f32 %v1178, %v360
        %v1185 = vrot.slane %v1179, 2
        %v1186 = vrot.slane %v1180, 2
        %v1187 = vsel %vm1150, %v1185, %v1186
        %v1188 = vrot.slane %v1181, 2
        %v1189 = vsel %vm1150, %v1186, %v1188
        %v1192 = vadd.f32 %v1035, %v1187
        %v1193 = vadd.f32 %v1036, %v1189
        %s1194 = sld [smem:[#allocation6 + $0x72]]
        %v1195 = vstv %s1194
        %v1196 = vmul.f32 %v1195, %v358
        %v1197 = vmul.f32 %v1195, %v359
        %v1198 = vmul.f32 %v1195, %v360
        %v1202 = vrot.slane %v1196, 2
        %v1203 = vrot.slane %v1197, 2
        %v1204 = vsel %vm1150, %v1202, %v1203
        %v1205 = vrot.slane %v1198, 2
        %v1206 = vsel %vm1150, %v1203, %v1205
        %v1209 = vadd.f32 %v1056, %v1204
        %v1210 = vadd.f32 %v1057, %v1206
        %s1211 = sld [smem:[#allocation6 + $0x96]]
        %v1212 = vstv %s1211
        %v1213 = vmul.f32 %v1212, %v358
        %v1214 = vmul.f32 %v1212, %v359
        %v1215 = vmul.f32 %v1212, %v360
        %v1219 = vrot.slane %v1213, 2
        %v1220 = vrot.slane %v1214, 2
        %v1221 = vsel %vm1150, %v1219, %v1220
        %v1222 = vrot.slane %v1215, 2
        %v1223 = vsel %vm1150, %v1220, %v1222
        %v1226 = vadd.f32 %v1077, %v1221
        %v1227 = vadd.f32 %v1078, %v1223
        %s1228 = sld [smem:[#allocation6 + $0xba]]
        %v1229 = vstv %s1228
        %v1230 = vmul.f32 %v1229, %v358
        %v1231 = vmul.f32 %v1229, %v359
        %v1232 = vmul.f32 %v1229, %v360
        %v1236 = vrot.slane %v1230, 2
        %v1237 = vrot.slane %v1231, 2
        %v1238 = vsel %vm1150, %v1236, %v1237
        %v1239 = vrot.slane %v1232, 2
        %v1240 = vsel %vm1150, %v1237, %v1239
        %v1243 = vadd.f32 %v1098, %v1238
        %v1244 = vadd.f32 %v1099, %v1240
        %s1245 = sld [smem:[#allocation6 + $0xde]]
        %v1246 = vstv %s1245
        %v1247 = vmul.f32 %v1246, %v358
        %v1248 = vmul.f32 %v1246, %v359
        %v1249 = vmul.f32 %v1246, %v360
        %v1253 = vrot.slane %v1247, 2
        %v1254 = vrot.slane %v1248, 2
        %v1255 = vsel %vm1150, %v1253, %v1254
        %v1256 = vrot.slane %v1249, 2
        %v1257 = vsel %vm1150, %v1254, %v1256
        %v1260 = vadd.f32 %v1119, %v1255
        %v1261 = vadd.f32 %v1120, %v1257
        %s1262 = sld [smem:[#allocation6 + $0x102]]
        %v1263 = vstv %s1262
        %v1264 = vmul.f32 %v1263, %v358
        %v1265 = vmul.f32 %v1263, %v359
        %v1266 = vmul.f32 %v1263, %v360
        %v1270 = vrot.slane %v1264, 2
        %v1271 = vrot.slane %v1265, 2
        %v1272 = vsel %vm1150, %v1270, %v1271
        %v1273 = vrot.slane %v1266, 2
        %v1274 = vsel %vm1150, %v1271, %v1273
        %v1277 = vadd.f32 %v1140, %v1272
        %v1278 = vadd.f32 %v1141, %v1274
        %s1279 = sld [smem:[#allocation6 + $0x7]]
        %v1280 = vstv %s1279
        %v1281 = vmul.f32 %v1280, %v358
        %v1282 = vmul.f32 %v1280, %v359
        %v1283 = vmul.f32 %v1280, %v360
        %v1287 = vrot.slane %v1281, 2
        %v1288 = vrot.slane %v1282, 2
        %v1289 = vsel %vm1150, %v1287, %v1288
        %v1290 = vrot.slane %v1283, 2
        %v1291 = vsel %vm1150, %v1288, %v1290
        %1292 = vrot.lane.b32.xlu0 %v1289, 127
        %v1293 = vpop.permute.xlu0 %1292
        %1294 = vrot.lane.b32.xlu0 %v1291, 127
        %v1295 = vpop.permute.xlu0 %1294
        %v1298 = vadd.f32 %v1158, %v1293
        %v1299 = vadd.f32 %v1159, %v1295
        %s1300 = sld [smem:[#allocation6 + $0x2b]]
        %v1301 = vstv %s1300
        %v1302 = vmul.f32 %v1301, %v358
        %v1303 = vmul.f32 %v1301, %v359
        %v1304 = vmul.f32 %v1301, %v360
        %v1308 = vrot.slane %v1302, 2
        %v1309 = vrot.slane %v1303, 2
        %v1310 = vsel %vm1150, %v1308, %v1309
        %v1311 = vrot.slane %v1304, 2
        %v1312 = vsel %vm1150, %v1309, %v1311
        %1313 = vrot.lane.b32.xlu0 %v1310, 127
        %v1314 = vpop.permute.xlu0 %1313
        %1315 = vrot.lane.b32.xlu0 %v1312, 127
        %v1316 = vpop.permute.xlu0 %1315
        %v1319 = vadd.f32 %v1175, %v1314
        %v1320 = vadd.f32 %v1176, %v1316
        %s1321 = sld [smem:[#allocation6 + $0x4f]]
        %v1322 = vstv %s1321
        %v1323 = vmul.f32 %v1322, %v358
        %v1324 = vmul.f32 %v1322, %v359
        %v1325 = vmul.f32 %v1322, %v360
        %v1329 = vrot.slane %v1323, 2
        %v1330 = vrot.slane %v1324, 2
        %v1331 = vsel %vm1150, %v1329, %v1330
        %v1332 = vrot.slane %v1325, 2
        %v1333 = vsel %vm1150, %v1330, %v1332
        %1334 = vrot.lane.b32.xlu0 %v1331, 127
        %v1335 = vpop.permute.xlu0 %1334
        %1336 = vrot.lane.b32.xlu0 %v1333, 127
        %v1337 = vpop.permute.xlu0 %1336
        %v1340 = vadd.f32 %v1192, %v1335
        %v1341 = vadd.f32 %v1193, %v1337
        %s1342 = sld [smem:[#allocation6 + $0x73]]
        %v1343 = vstv %s1342
        %v1344 = vmul.f32 %v1343, %v358
        %v1345 = vmul.f32 %v1343, %v359
        %v1346 = vmul.f32 %v1343, %v360
        %v1350 = vrot.slane %v1344, 2
        %v1351 = vrot.slane %v1345, 2
        %v1352 = vsel %vm1150, %v1350, %v1351
        %v1353 = vrot.slane %v1346, 2
        %v1354 = vsel %vm1150, %v1351, %v1353
        %1355 = vrot.lane.b32.xlu0 %v1352, 127
        %v1356 = vpop.permute.xlu0 %1355
        %1357 = vrot.lane.b32.xlu0 %v1354, 127
        %v1358 = vpop.permute.xlu0 %1357
        %v1361 = vadd.f32 %v1209, %v1356
        %v1362 = vadd.f32 %v1210, %v1358
        %s1363 = sld [smem:[#allocation6 + $0x97]]
        %v1364 = vstv %s1363
        %v1365 = vmul.f32 %v1364, %v358
        %v1366 = vmul.f32 %v1364, %v359
        %v1367 = vmul.f32 %v1364, %v360
        %v1371 = vrot.slane %v1365, 2
        %v1372 = vrot.slane %v1366, 2
        %v1373 = vsel %vm1150, %v1371, %v1372
        %v1374 = vrot.slane %v1367, 2
        %v1375 = vsel %vm1150, %v1372, %v1374
        %1376 = vrot.lane.b32.xlu0 %v1373, 127
        %v1377 = vpop.permute.xlu0 %1376
        %1378 = vrot.lane.b32.xlu0 %v1375, 127
        %v1379 = vpop.permute.xlu0 %1378
        %v1382 = vadd.f32 %v1226, %v1377
        %v1383 = vadd.f32 %v1227, %v1379
        %s1384 = sld [smem:[#allocation6 + $0xbb]]
        %v1385 = vstv %s1384
        %v1386 = vmul.f32 %v1385, %v358
        %v1387 = vmul.f32 %v1385, %v359
        %v1388 = vmul.f32 %v1385, %v360
        %v1392 = vrot.slane %v1386, 2
        %v1393 = vrot.slane %v1387, 2
        %v1394 = vsel %vm1150, %v1392, %v1393
        %v1395 = vrot.slane %v1388, 2
        %v1396 = vsel %vm1150, %v1393, %v1395
        %1397 = vrot.lane.b32.xlu0 %v1394, 127
        %v1398 = vpop.permute.xlu0 %1397
        %1399 = vrot.lane.b32.xlu0 %v1396, 127
        %v1400 = vpop.permute.xlu0 %1399
        %v1403 = vadd.f32 %v1243, %v1398
        %v1404 = vadd.f32 %v1244, %v1400
        %s1405 = sld [smem:[#allocation6 + $0xdf]]
        %v1406 = vstv %s1405
        %v1407 = vmul.f32 %v1406, %v358
        %v1408 = vmul.f32 %v1406, %v359
        %v1409 = vmul.f32 %v1406, %v360
        %v1413 = vrot.slane %v1407, 2
        %v1414 = vrot.slane %v1408, 2
        %v1415 = vsel %vm1150, %v1413, %v1414
        %v1416 = vrot.slane %v1409, 2
        %v1417 = vsel %vm1150, %v1414, %v1416
        %1418 = vrot.lane.b32.xlu0 %v1415, 127
        %v1419 = vpop.permute.xlu0 %1418
        %1420 = vrot.lane.b32.xlu0 %v1417, 127
        %v1421 = vpop.permute.xlu0 %1420
        %v1424 = vadd.f32 %v1260, %v1419
        %v1425 = vadd.f32 %v1261, %v1421
        %s1426 = sld [smem:[#allocation6 + $0x103]]
        %v1427 = vstv %s1426
        %v1428 = vmul.f32 %v1427, %v358
        %v1429 = vmul.f32 %v1427, %v359
        %v1430 = vmul.f32 %v1427, %v360
        %v1434 = vrot.slane %v1428, 2
        %v1435 = vrot.slane %v1429, 2
        %v1436 = vsel %vm1150, %v1434, %v1435
        %v1437 = vrot.slane %v1430, 2
        %v1438 = vsel %vm1150, %v1435, %v1437
        %1439 = vrot.lane.b32.xlu0 %v1436, 127
        %v1440 = vpop.permute.xlu0 %1439
        %1441 = vrot.lane.b32.xlu0 %v1438, 127
        %v1442 = vpop.permute.xlu0 %1441
        %v1445 = vadd.f32 %v1277, %v1440
        %v1446 = vadd.f32 %v1278, %v1442
        %s1447 = sld [smem:[#allocation6 + $0x8]]
        %v1448 = vstv %s1447
        %v1449 = vmul.f32 %v1448, %v358
        %v1450 = vmul.f32 %v1448, %v359
        %v1451 = vmul.f32 %v1448, %v360
        %v1455 = vrot.slane %v1449, 2
        %v1456 = vrot.slane %v1450, 2
        %v1457 = vsel %vm1150, %v1455, %v1456
        %v1458 = vrot.slane %v1451, 2
        %v1459 = vsel %vm1150, %v1456, %v1458
        %1460 = vrot.lane.b32.xlu0 %v1457, 126
        %v1461 = vpop.permute.xlu0 %1460
        %1462 = vrot.lane.b32.xlu0 %v1459, 126
        %v1463 = vpop.permute.xlu0 %1462
        %v1466 = vadd.f32 %v1298, %v1461
        %v1467 = vadd.f32 %v1299, %v1463
        %s1468 = sld [smem:[#allocation6 + $0x2c]]
        %v1469 = vstv %s1468
        %v1470 = vmul.f32 %v1469, %v358
        %v1471 = vmul.f32 %v1469, %v359
        %v1472 = vmul.f32 %v1469, %v360
        %v1476 = vrot.slane %v1470, 2
        %v1477 = vrot.slane %v1471, 2
        %v1478 = vsel %vm1150, %v1476, %v1477
        %v1479 = vrot.slane %v1472, 2
        %v1480 = vsel %vm1150, %v1477, %v1479
        %1481 = vrot.lane.b32.xlu0 %v1478, 126
        %v1482 = vpop.permute.xlu0 %1481
        %1483 = vrot.lane.b32.xlu0 %v1480, 126
        %v1484 = vpop.permute.xlu0 %1483
        %v1487 = vadd.f32 %v1319, %v1482
        %v1488 = vadd.f32 %v1320, %v1484
        %s1489 = sld [smem:[#allocation6 + $0x50]]
        %v1490 = vstv %s1489
        %v1491 = vmul.f32 %v1490, %v358
        %v1492 = vmul.f32 %v1490, %v359
        %v1493 = vmul.f32 %v1490, %v360
        %v1497 = vrot.slane %v1491, 2
        %v1498 = vrot.slane %v1492, 2
        %v1499 = vsel %vm1150, %v1497, %v1498
        %v1500 = vrot.slane %v1493, 2
        %v1501 = vsel %vm1150, %v1498, %v1500
        %1502 = vrot.lane.b32.xlu0 %v1499, 126
        %v1503 = vpop.permute.xlu0 %1502
        %1504 = vrot.lane.b32.xlu0 %v1501, 126
        %v1505 = vpop.permute.xlu0 %1504
        %v1508 = vadd.f32 %v1340, %v1503
        %v1509 = vadd.f32 %v1341, %v1505
        %s1510 = sld [smem:[#allocation6 + $0x74]]
        %v1511 = vstv %s1510
        %v1512 = vmul.f32 %v1511, %v358
        %v1513 = vmul.f32 %v1511, %v359
        %v1514 = vmul.f32 %v1511, %v360
        %v1518 = vrot.slane %v1512, 2
        %v1519 = vrot.slane %v1513, 2
        %v1520 = vsel %vm1150, %v1518, %v1519
        %v1521 = vrot.slane %v1514, 2
        %v1522 = vsel %vm1150, %v1519, %v1521
        %1523 = vrot.lane.b32.xlu0 %v1520, 126
        %v1524 = vpop.permute.xlu0 %1523
        %1525 = vrot.lane.b32.xlu0 %v1522, 126
        %v1526 = vpop.permute.xlu0 %1525
        %v1529 = vadd.f32 %v1361, %v1524
        %v1530 = vadd.f32 %v1362, %v1526
        %s1531 = sld [smem:[#allocation6 + $0x98]]
        %v1532 = vstv %s1531
        %v1533 = vmul.f32 %v1532, %v358
        %v1534 = vmul.f32 %v1532, %v359
        %v1535 = vmul.f32 %v1532, %v360
        %v1539 = vrot.slane %v1533, 2
        %v1540 = vrot.slane %v1534, 2
        %v1541 = vsel %vm1150, %v1539, %v1540
        %v1542 = vrot.slane %v1535, 2
        %v1543 = vsel %vm1150, %v1540, %v1542
        %1544 = vrot.lane.b32.xlu0 %v1541, 126
        %v1545 = vpop.permute.xlu0 %1544
        %1546 = vrot.lane.b32.xlu0 %v1543, 126
        %v1547 = vpop.permute.xlu0 %1546
        %v1550 = vadd.f32 %v1382, %v1545
        %v1551 = vadd.f32 %v1383, %v1547
        %s1552 = sld [smem:[#allocation6 + $0xbc]]
        %v1553 = vstv %s1552
        %v1554 = vmul.f32 %v1553, %v358
        %v1555 = vmul.f32 %v1553, %v359
        %v1556 = vmul.f32 %v1553, %v360
        %v1560 = vrot.slane %v1554, 2
        %v1561 = vrot.slane %v1555, 2
        %v1562 = vsel %vm1150, %v1560, %v1561
        %v1563 = vrot.slane %v1556, 2
        %v1564 = vsel %vm1150, %v1561, %v1563
        %1565 = vrot.lane.b32.xlu0 %v1562, 126
        %v1566 = vpop.permute.xlu0 %1565
        %1567 = vrot.lane.b32.xlu0 %v1564, 126
        %v1568 = vpop.permute.xlu0 %1567
        %v1571 = vadd.f32 %v1403, %v1566
        %v1572 = vadd.f32 %v1404, %v1568
        %s1573 = sld [smem:[#allocation6 + $0xe0]]
        %v1574 = vstv %s1573
        %v1575 = vmul.f32 %v1574, %v358
        %v1576 = vmul.f32 %v1574, %v359
        %v1577 = vmul.f32 %v1574, %v360
        %v1581 = vrot.slane %v1575, 2
        %v1582 = vrot.slane %v1576, 2
        %v1583 = vsel %vm1150, %v1581, %v1582
        %v1584 = vrot.slane %v1577, 2
        %v1585 = vsel %vm1150, %v1582, %v1584
        %1586 = vrot.lane.b32.xlu0 %v1583, 126
        %v1587 = vpop.permute.xlu0 %1586
        %1588 = vrot.lane.b32.xlu0 %v1585, 126
        %v1589 = vpop.permute.xlu0 %1588
        %v1592 = vadd.f32 %v1424, %v1587
        %v1593 = vadd.f32 %v1425, %v1589
        %s1594 = sld [smem:[#allocation6 + $0x104]]
        %v1595 = vstv %s1594
        %v1596 = vmul.f32 %v1595, %v358
        %v1597 = vmul.f32 %v1595, %v359
        %v1598 = vmul.f32 %v1595, %v360
        %v1602 = vrot.slane %v1596, 2
        %v1603 = vrot.slane %v1597, 2
        %v1604 = vsel %vm1150, %v1602, %v1603
        %v1605 = vrot.slane %v1598, 2
        %v1606 = vsel %vm1150, %v1603, %v1605
        %1607 = vrot.lane.b32.xlu0 %v1604, 126
        %v1608 = vpop.permute.xlu0 %1607
        %1609 = vrot.lane.b32.xlu0 %v1606, 126
        %v1610 = vpop.permute.xlu0 %1609
        %v1613 = vadd.f32 %v1445, %v1608
        %v1614 = vadd.f32 %v1446, %v1610
        %s1615 = sld [smem:[#allocation6 + $0x9]]
        %v1616 = vstv %s1615
        %v1617 = vmul.f32 %v1616, %v361
        %v1618 = vmul.f32 %v1616, %v362
        %v1619 = vadd.f32 %v1466, %v1617
        %v1620 = vadd.f32 %v1467, %v1618
        %s1621 = sld [smem:[#allocation6 + $0x2d]]
        %v1622 = vstv %s1621
        %v1623 = vmul.f32 %v1622, %v361
        %v1624 = vmul.f32 %v1622, %v362
        %v1625 = vadd.f32 %v1487, %v1623
        %v1626 = vadd.f32 %v1488, %v1624
        %s1627 = sld [smem:[#allocation6 + $0x51]]
        %v1628 = vstv %s1627
        %v1629 = vmul.f32 %v1628, %v361
        %v1630 = vmul.f32 %v1628, %v362
        %v1631 = vadd.f32 %v1508, %v1629
        %v1632 = vadd.f32 %v1509, %v1630
        %s1633 = sld [smem:[#allocation6 + $0x75]]
        %v1634 = vstv %s1633
        %v1635 = vmul.f32 %v1634, %v361
        %v1636 = vmul.f32 %v1634, %v362
        %v1637 = vadd.f32 %v1529, %v1635
        %v1638 = vadd.f32 %v1530, %v1636
        %s1639 = sld [smem:[#allocation6 + $0x99]]
        %v1640 = vstv %s1639
        %v1641 = vmul.f32 %v1640, %v361
        %v1642 = vmul.f32 %v1640, %v362
        %v1643 = vadd.f32 %v1550, %v1641
        %v1644 = vadd.f32 %v1551, %v1642
        %s1645 = sld [smem:[#allocation6 + $0xbd]]
        %v1646 = vstv %s1645
        %v1647 = vmul.f32 %v1646, %v361
        %v1648 = vmul.f32 %v1646, %v362
        %v1649 = vadd.f32 %v1571, %v1647
        %v1650 = vadd.f32 %v1572, %v1648
        %s1651 = sld [smem:[#allocation6 + $0xe1]]
        %v1652 = vstv %s1651
        %v1653 = vmul.f32 %v1652, %v361
        %v1654 = vmul.f32 %v1652, %v362
        %v1655 = vadd.f32 %v1592, %v1653
        %v1656 = vadd.f32 %v1593, %v1654
        %s1657 = sld [smem:[#allocation6 + $0x105]]
        %v1658 = vstv %s1657
        %v1659 = vmul.f32 %v1658, %v361
        %v1660 = vmul.f32 %v1658, %v362
        %v1661 = vadd.f32 %v1613, %v1659
        %v1662 = vadd.f32 %v1614, %v1660
        %s1663 = sld [smem:[#allocation6 + $0xa]]
        %v1664 = vstv %s1663
        %v1665 = vmul.f32 %v1664, %v361
        %v1666 = vmul.f32 %v1664, %v362
        %1669 = vrot.lane.b32.xlu0 %v1665, 127
        %v1670 = vpop.permute.xlu0 %1669
        %1671 = vrot.lane.b32.xlu0 %v1666, 127
        %v1672 = vpop.permute.xlu0 %1671
        %v1675 = vadd.f32 %v1619, %v1670
        %v1676 = vadd.f32 %v1620, %v1672
        %s1677 = sld [smem:[#allocation6 + $0x2e]]
        %v1678 = vstv %s1677
        %v1679 = vmul.f32 %v1678, %v361
        %v1680 = vmul.f32 %v1678, %v362
        %1683 = vrot.lane.b32.xlu0 %v1679, 127
        %v1684 = vpop.permute.xlu0 %1683
        %1685 = vrot.lane.b32.xlu0 %v1680, 127
        %v1686 = vpop.permute.xlu0 %1685
        %v1689 = vadd.f32 %v1625, %v1684
        %v1690 = vadd.f32 %v1626, %v1686
        %s1691 = sld [smem:[#allocation6 + $0x52]]
        %v1692 = vstv %s1691
        %v1693 = vmul.f32 %v1692, %v361
        %v1694 = vmul.f32 %v1692, %v362
        %1697 = vrot.lane.b32.xlu0 %v1693, 127
        %v1698 = vpop.permute.xlu0 %1697
        %1699 = vrot.lane.b32.xlu0 %v1694, 127
        %v1700 = vpop.permute.xlu0 %1699
        %v1703 = vadd.f32 %v1631, %v1698
        %v1704 = vadd.f32 %v1632, %v1700
        %s1705 = sld [smem:[#allocation6 + $0x76]]
        %v1706 = vstv %s1705
        %v1707 = vmul.f32 %v1706, %v361
        %v1708 = vmul.f32 %v1706, %v362
        %1711 = vrot.lane.b32.xlu0 %v1707, 127
        %v1712 = vpop.permute.xlu0 %1711
        %1713 = vrot.lane.b32.xlu0 %v1708, 127
        %v1714 = vpop.permute.xlu0 %1713
        %v1717 = vadd.f32 %v1637, %v1712
        %v1718 = vadd.f32 %v1638, %v1714
        %s1719 = sld [smem:[#allocation6 + $0x9a]]
        %v1720 = vstv %s1719
        %v1721 = vmul.f32 %v1720, %v361
        %v1722 = vmul.f32 %v1720, %v362
        %1725 = vrot.lane.b32.xlu0 %v1721, 127
        %v1726 = vpop.permute.xlu0 %1725
        %1727 = vrot.lane.b32.xlu0 %v1722, 127
        %v1728 = vpop.permute.xlu0 %1727
        %v1731 = vadd.f32 %v1643, %v1726
        %v1732 = vadd.f32 %v1644, %v1728
        %s1733 = sld [smem:[#allocation6 + $0xbe]]
        %v1734 = vstv %s1733
        %v1735 = vmul.f32 %v1734, %v361
        %v1736 = vmul.f32 %v1734, %v362
        %1739 = vrot.lane.b32.xlu0 %v1735, 127
        %v1740 = vpop.permute.xlu0 %1739
        %1741 = vrot.lane.b32.xlu0 %v1736, 127
        %v1742 = vpop.permute.xlu0 %1741
        %v1745 = vadd.f32 %v1649, %v1740
        %v1746 = vadd.f32 %v1650, %v1742
        %s1747 = sld [smem:[#allocation6 + $0xe2]]
        %v1748 = vstv %s1747
        %v1749 = vmul.f32 %v1748, %v361
        %v1750 = vmul.f32 %v1748, %v362
        %1753 = vrot.lane.b32.xlu0 %v1749, 127
        %v1754 = vpop.permute.xlu0 %1753
        %1755 = vrot.lane.b32.xlu0 %v1750, 127
        %v1756 = vpop.permute.xlu0 %1755
        %v1759 = vadd.f32 %v1655, %v1754
        %v1760 = vadd.f32 %v1656, %v1756
        %s1761 = sld [smem:[#allocation6 + $0x106]]
        %v1762 = vstv %s1761
        %v1763 = vmul.f32 %v1762, %v361
        %v1764 = vmul.f32 %v1762, %v362
        %1767 = vrot.lane.b32.xlu0 %v1763, 127
        %v1768 = vpop.permute.xlu0 %1767
        %1769 = vrot.lane.b32.xlu0 %v1764, 127
        %v1770 = vpop.permute.xlu0 %1769
        %v1773 = vadd.f32 %v1661, %v1768
        %v1774 = vadd.f32 %v1662, %v1770
        %s1775 = sld [smem:[#allocation6 + $0xb]]
        %v1776 = vstv %s1775
        %v1777 = vmul.f32 %v1776, %v361
        %v1778 = vmul.f32 %v1776, %v362
        %1781 = vrot.lane.b32.xlu0 %v1777, 126
        %v1782 = vpop.permute.xlu0 %1781
        %1783 = vrot.lane.b32.xlu0 %v1778, 126
        %v1784 = vpop.permute.xlu0 %1783
        %v1787 = vadd.f32 %v1675, %v1782
        %v1788 = vadd.f32 %v1676, %v1784
        %s1789 = sld [smem:[#allocation6 + $0x2f]]
        %v1790 = vstv %s1789
        %v1791 = vmul.f32 %v1790, %v361
        %v1792 = vmul.f32 %v1790, %v362
        %1795 = vrot.lane.b32.xlu0 %v1791, 126
        %v1796 = vpop.permute.xlu0 %1795
        %1797 = vrot.lane.b32.xlu0 %v1792, 126
        %v1798 = vpop.permute.xlu0 %1797
        %v1801 = vadd.f32 %v1689, %v1796
        %v1802 = vadd.f32 %v1690, %v1798
        %s1803 = sld [smem:[#allocation6 + $0x53]]
        %v1804 = vstv %s1803
        %v1805 = vmul.f32 %v1804, %v361
        %v1806 = vmul.f32 %v1804, %v362
        %1809 = vrot.lane.b32.xlu0 %v1805, 126
        %v1810 = vpop.permute.xlu0 %1809
        %1811 = vrot.lane.b32.xlu0 %v1806, 126
        %v1812 = vpop.permute.xlu0 %1811
        %v1815 = vadd.f32 %v1703, %v1810
        %v1816 = vadd.f32 %v1704, %v1812
        %s1817 = sld [smem:[#allocation6 + $0x77]]
        %v1818 = vstv %s1817
        %v1819 = vmul.f32 %v1818, %v361
        %v1820 = vmul.f32 %v1818, %v362
        %1823 = vrot.lane.b32.xlu0 %v1819, 126
        %v1824 = vpop.permute.xlu0 %1823
        %1825 = vrot.lane.b32.xlu0 %v1820, 126
        %v1826 = vpop.permute.xlu0 %1825
        %v1829 = vadd.f32 %v1717, %v1824
        %v1830 = vadd.f32 %v1718, %v1826
        %s1831 = sld [smem:[#allocation6 + $0x9b]]
        %v1832 = vstv %s1831
        %v1833 = vmul.f32 %v1832, %v361
        %v1834 = vmul.f32 %v1832, %v362
        %1837 = vrot.lane.b32.xlu0 %v1833, 126
        %v1838 = vpop.permute.xlu0 %1837
        %1839 = vrot.lane.b32.xlu0 %v1834, 126
        %v1840 = vpop.permute.xlu0 %1839
        %v1843 = vadd.f32 %v1731, %v1838
        %v1844 = vadd.f32 %v1732, %v1840
        %s1845 = sld [smem:[#allocation6 + $0xbf]]
        %v1846 = vstv %s1845
        %v1847 = vmul.f32 %v1846, %v361
        %v1848 = vmul.f32 %v1846, %v362
        %1851 = vrot.lane.b32.xlu0 %v1847, 126
        %v1852 = vpop.permute.xlu0 %1851
        %1853 = vrot.lane.b32.xlu0 %v1848, 126
        %v1854 = vpop.permute.xlu0 %1853
        %v1857 = vadd.f32 %v1745, %v1852
        %v1858 = vadd.f32 %v1746, %v1854
        %s1859 = sld [smem:[#allocation6 + $0xe3]]
        %v1860 = vstv %s1859
        %v1861 = vmul.f32 %v1860, %v361
        %v1862 = vmul.f32 %v1860, %v362
        %1865 = vrot.lane.b32.xlu0 %v1861, 126
        %v1866 = vpop.permute.xlu0 %1865
        %1867 = vrot.lane.b32.xlu0 %v1862, 126
        %v1868 = vpop.permute.xlu0 %1867
        %v1871 = vadd.f32 %v1759, %v1866
        %v1872 = vadd.f32 %v1760, %v1868
        %s1873 = sld [smem:[#allocation6 + $0x107]]
        %v1874 = vstv %s1873
        %v1875 = vmul.f32 %v1874, %v361
        %v1876 = vmul.f32 %v1874, %v362
        %1879 = vrot.lane.b32.xlu0 %v1875, 126
        %v1880 = vpop.permute.xlu0 %1879
        %1881 = vrot.lane.b32.xlu0 %v1876, 126
        %v1882 = vpop.permute.xlu0 %1881
        %v1885 = vadd.f32 %v1773, %v1880
        %v1886 = vadd.f32 %v1774, %v1882
        %s1887 = sld [smem:[#allocation6 + $0xc]]
        %v1888 = vstv %s1887
        %v1889 = vmul.f32 %v1888, %v361
        %v1890 = vmul.f32 %v1888, %v362
        %v1891 = vmul.f32 %v1888, %v363
        %v1895 = vrot.slane %v1889, 1
        %v1896 = vrot.slane %v1890, 1
        %v1897 = vsel %vm677, %v1895, %v1896
        %v1898 = vrot.slane %v1891, 1
        %v1899 = vsel %vm677, %v1896, %v1898
        %v1902 = vadd.f32 %v1787, %v1897
        %v1903 = vadd.f32 %v1788, %v1899
        %s1904 = sld [smem:[#allocation6 + $0x30]]
        %v1905 = vstv %s1904
        %v1906 = vmul.f32 %v1905, %v361
        %v1907 = vmul.f32 %v1905, %v362
        %v1908 = vmul.f32 %v1905, %v363
        %v1912 = vrot.slane %v1906, 1
        %v1913 = vrot.slane %v1907, 1
        %v1914 = vsel %vm677, %v1912, %v1913
        %v1915 = vrot.slane %v1908, 1
        %v1916 = vsel %vm677, %v1913, %v1915
        %v1919 = vadd.f32 %v1801, %v1914
        %v1920 = vadd.f32 %v1802, %v1916
        %s1921 = sld [smem:[#allocation6 + $0x54]]
        %v1922 = vstv %s1921
        %v1923 = vmul.f32 %v1922, %v361
        %v1924 = vmul.f32 %v1922, %v362
        %v1925 = vmul.f32 %v1922, %v363
        %v1929 = vrot.slane %v1923, 1
        %v1930 = vrot.slane %v1924, 1
        %v1931 = vsel %vm677, %v1929, %v1930
        %v1932 = vrot.slane %v1925, 1
        %v1933 = vsel %vm677, %v1930, %v1932
        %v1936 = vadd.f32 %v1815, %v1931
        %v1937 = vadd.f32 %v1816, %v1933
        %s1938 = sld [smem:[#allocation6 + $0x78]]
        %v1939 = vstv %s1938
        %v1940 = vmul.f32 %v1939, %v361
        %v1941 = vmul.f32 %v1939, %v362
        %v1942 = vmul.f32 %v1939, %v363
        %v1946 = vrot.slane %v1940, 1
        %v1947 = vrot.slane %v1941, 1
        %v1948 = vsel %vm677, %v1946, %v1947
        %v1949 = vrot.slane %v1942, 1
        %v1950 = vsel %vm677, %v1947, %v1949
        %v1953 = vadd.f32 %v1829, %v1948
        %v1954 = vadd.f32 %v1830, %v1950
        %s1955 = sld [smem:[#allocation6 + $0x9c]]
        %v1956 = vstv %s1955
        %v1957 = vmul.f32 %v1956, %v361
        %v1958 = vmul.f32 %v1956, %v362
        %v1959 = vmul.f32 %v1956, %v363
        %v1963 = vrot.slane %v1957, 1
        %v1964 = vrot.slane %v1958, 1
        %v1965 = vsel %vm677, %v1963, %v1964
        %v1966 = vrot.slane %v1959, 1
        %v1967 = vsel %vm677, %v1964, %v1966
        %v1970 = vadd.f32 %v1843, %v1965
        %v1971 = vadd.f32 %v1844, %v1967
        %s1972 = sld [smem:[#allocation6 + $0xc0]]
        %v1973 = vstv %s1972
        %v1974 = vmul.f32 %v1973, %v361
        %v1975 = vmul.f32 %v1973, %v362
        %v1976 = vmul.f32 %v1973, %v363
        %v1980 = vrot.slane %v1974, 1
        %v1981 = vrot.slane %v1975, 1
        %v1982 = vsel %vm677, %v1980, %v1981
        %v1983 = vrot.slane %v1976, 1
        %v1984 = vsel %vm677, %v1981, %v1983
        %v1987 = vadd.f32 %v1857, %v1982
        %v1988 = vadd.f32 %v1858, %v1984
        %s1989 = sld [smem:[#allocation6 + $0xe4]]
        %v1990 = vstv %s1989
        %v1991 = vmul.f32 %v1990, %v361
        %v1992 = vmul.f32 %v1990, %v362
        %v1993 = vmul.f32 %v1990, %v363
        %v1997 = vrot.slane %v1991, 1
        %v1998 = vrot.slane %v1992, 1
        %v1999 = vsel %vm677, %v1997, %v1998
        %v2000 = vrot.slane %v1993, 1
        %v2001 = vsel %vm677, %v1998, %v2000
        %v2004 = vadd.f32 %v1871, %v1999
        %v2005 = vadd.f32 %v1872, %v2001
        %s2006 = sld [smem:[#allocation6 + $0x108]]
        %v2007 = vstv %s2006
        %v2008 = vmul.f32 %v2007, %v361
        %v2009 = vmul.f32 %v2007, %v362
        %v2010 = vmul.f32 %v2007, %v363
        %v2014 = vrot.slane %v2008, 1
        %v2015 = vrot.slane %v2009, 1
        %v2016 = vsel %vm677, %v2014, %v2015
        %v2017 = vrot.slane %v2010, 1
        %v2018 = vsel %vm677, %v2015, %v2017
        %v2021 = vadd.f32 %v1885, %v2016
        %v2022 = vadd.f32 %v1886, %v2018
        %s2023 = sld [smem:[#allocation6 + $0xd]]
        %v2024 = vstv %s2023
        %v2025 = vmul.f32 %v2024, %v361
        %v2026 = vmul.f32 %v2024, %v362
        %v2027 = vmul.f32 %v2024, %v363
        %v2031 = vrot.slane %v2025, 1
        %v2032 = vrot.slane %v2026, 1
        %v2033 = vsel %vm677, %v2031, %v2032
        %v2034 = vrot.slane %v2027, 1
        %v2035 = vsel %vm677, %v2032, %v2034
        %2036 = vrot.lane.b32.xlu0 %v2033, 127
        %v2037 = vpop.permute.xlu0 %2036
        %2038 = vrot.lane.b32.xlu0 %v2035, 127
        %v2039 = vpop.permute.xlu0 %2038
        %v2042 = vadd.f32 %v1902, %v2037
        %v2043 = vadd.f32 %v1903, %v2039
        %s2044 = sld [smem:[#allocation6 + $0x31]]
        %v2045 = vstv %s2044
        %v2046 = vmul.f32 %v2045, %v361
        %v2047 = vmul.f32 %v2045, %v362
        %v2048 = vmul.f32 %v2045, %v363
        %v2052 = vrot.slane %v2046, 1
        %v2053 = vrot.slane %v2047, 1
        %v2054 = vsel %vm677, %v2052, %v2053
        %v2055 = vrot.slane %v2048, 1
        %v2056 = vsel %vm677, %v2053, %v2055
        %2057 = vrot.lane.b32.xlu0 %v2054, 127
        %v2058 = vpop.permute.xlu0 %2057
        %2059 = vrot.lane.b32.xlu0 %v2056, 127
        %v2060 = vpop.permute.xlu0 %2059
        %v2063 = vadd.f32 %v1919, %v2058
        %v2064 = vadd.f32 %v1920, %v2060
        %s2065 = sld [smem:[#allocation6 + $0x55]]
        %v2066 = vstv %s2065
        %v2067 = vmul.f32 %v2066, %v361
        %v2068 = vmul.f32 %v2066, %v362
        %v2069 = vmul.f32 %v2066, %v363
        %v2073 = vrot.slane %v2067, 1
        %v2074 = vrot.slane %v2068, 1
        %v2075 = vsel %vm677, %v2073, %v2074
        %v2076 = vrot.slane %v2069, 1
        %v2077 = vsel %vm677, %v2074, %v2076
        %2078 = vrot.lane.b32.xlu0 %v2075, 127
        %v2079 = vpop.permute.xlu0 %2078
        %2080 = vrot.lane.b32.xlu0 %v2077, 127
        %v2081 = vpop.permute.xlu0 %2080
        %v2084 = vadd.f32 %v1936, %v2079
        %v2085 = vadd.f32 %v1937, %v2081
        %s2086 = sld [smem:[#allocation6 + $0x79]]
        %v2087 = vstv %s2086
        %v2088 = vmul.f32 %v2087, %v361
        %v2089 = vmul.f32 %v2087, %v362
        %v2090 = vmul.f32 %v2087, %v363
        %v2094 = vrot.slane %v2088, 1
        %v2095 = vrot.slane %v2089, 1
        %v2096 = vsel %vm677, %v2094, %v2095
        %v2097 = vrot.slane %v2090, 1
        %v2098 = vsel %vm677, %v2095, %v2097
        %2099 = vrot.lane.b32.xlu0 %v2096, 127
        %v2100 = vpop.permute.xlu0 %2099
        %2101 = vrot.lane.b32.xlu0 %v2098, 127
        %v2102 = vpop.permute.xlu0 %2101
        %v2105 = vadd.f32 %v1953, %v2100
        %v2106 = vadd.f32 %v1954, %v2102
        %s2107 = sld [smem:[#allocation6 + $0x9d]]
        %v2108 = vstv %s2107
        %v2109 = vmul.f32 %v2108, %v361
        %v2110 = vmul.f32 %v2108, %v362
        %v2111 = vmul.f32 %v2108, %v363
        %v2115 = vrot.slane %v2109, 1
        %v2116 = vrot.slane %v2110, 1
        %v2117 = vsel %vm677, %v2115, %v2116
        %v2118 = vrot.slane %v2111, 1
        %v2119 = vsel %vm677, %v2116, %v2118
        %2120 = vrot.lane.b32.xlu0 %v2117, 127
        %v2121 = vpop.permute.xlu0 %2120
        %2122 = vrot.lane.b32.xlu0 %v2119, 127
        %v2123 = vpop.permute.xlu0 %2122
        %v2126 = vadd.f32 %v1970, %v2121
        %v2127 = vadd.f32 %v1971, %v2123
        %s2128 = sld [smem:[#allocation6 + $0xc1]]
        %v2129 = vstv %s2128
        %v2130 = vmul.f32 %v2129, %v361
        %v2131 = vmul.f32 %v2129, %v362
        %v2132 = vmul.f32 %v2129, %v363
        %v2136 = vrot.slane %v2130, 1
        %v2137 = vrot.slane %v2131, 1
        %v2138 = vsel %vm677, %v2136, %v2137
        %v2139 = vrot.slane %v2132, 1
        %v2140 = vsel %vm677, %v2137, %v2139
        %2141 = vrot.lane.b32.xlu0 %v2138, 127
        %v2142 = vpop.permute.xlu0 %2141
        %2143 = vrot.lane.b32.xlu0 %v2140, 127
        %v2144 = vpop.permute.xlu0 %2143
        %v2147 = vadd.f32 %v1987, %v2142
        %v2148 = vadd.f32 %v1988, %v2144
        %s2149 = sld [smem:[#allocation6 + $0xe5]]
        %v2150 = vstv %s2149
        %v2151 = vmul.f32 %v2150, %v361
        %v2152 = vmul.f32 %v2150, %v362
        %v2153 = vmul.f32 %v2150, %v363
        %v2157 = vrot.slane %v2151, 1
        %v2158 = vrot.slane %v2152, 1
        %v2159 = vsel %vm677, %v2157, %v2158
        %v2160 = vrot.slane %v2153, 1
        %v2161 = vsel %vm677, %v2158, %v2160
        %2162 = vrot.lane.b32.xlu0 %v2159, 127
        %v2163 = vpop.permute.xlu0 %2162
        %2164 = vrot.lane.b32.xlu0 %v2161, 127
        %v2165 = vpop.permute.xlu0 %2164
        %v2168 = vadd.f32 %v2004, %v2163
        %v2169 = vadd.f32 %v2005, %v2165
        %s2170 = sld [smem:[#allocation6 + $0x109]]
        %v2171 = vstv %s2170
        %v2172 = vmul.f32 %v2171, %v361
        %v2173 = vmul.f32 %v2171, %v362
        %v2174 = vmul.f32 %v2171, %v363
        %v2178 = vrot.slane %v2172, 1
        %v2179 = vrot.slane %v2173, 1
        %v2180 = vsel %vm677, %v2178, %v2179
        %v2181 = vrot.slane %v2174, 1
        %v2182 = vsel %vm677, %v2179, %v2181
        %2183 = vrot.lane.b32.xlu0 %v2180, 127
        %v2184 = vpop.permute.xlu0 %2183
        %2185 = vrot.lane.b32.xlu0 %v2182, 127
        %v2186 = vpop.permute.xlu0 %2185
        %v2189 = vadd.f32 %v2021, %v2184
        %v2190 = vadd.f32 %v2022, %v2186
        %s2191 = sld [smem:[#allocation6 + $0xe]]
        %v2192 = vstv %s2191
        %v2193 = vmul.f32 %v2192, %v361
        %v2194 = vmul.f32 %v2192, %v362
        %v2195 = vmul.f32 %v2192, %v363
        %v2199 = vrot.slane %v2193, 1
        %v2200 = vrot.slane %v2194, 1
        %v2201 = vsel %vm677, %v2199, %v2200
        %v2202 = vrot.slane %v2195, 1
        %v2203 = vsel %vm677, %v2200, %v2202
        %2204 = vrot.lane.b32.xlu0 %v2201, 126
        %v2205 = vpop.permute.xlu0 %2204
        %2206 = vrot.lane.b32.xlu0 %v2203, 126
        %v2207 = vpop.permute.xlu0 %2206
        %v2210 = vadd.f32 %v2042, %v2205
        %v2211 = vadd.f32 %v2043, %v2207
        %s2212 = sld [smem:[#allocation6 + $0x32]]
        %v2213 = vstv %s2212
        %v2214 = vmul.f32 %v2213, %v361
        %v2215 = vmul.f32 %v2213, %v362
        %v2216 = vmul.f32 %v2213, %v363
        %v2220 = vrot.slane %v2214, 1
        %v2221 = vrot.slane %v2215, 1
        %v2222 = vsel %vm677, %v2220, %v2221
        %v2223 = vrot.slane %v2216, 1
        %v2224 = vsel %vm677, %v2221, %v2223
        %2225 = vrot.lane.b32.xlu0 %v2222, 126
        %v2226 = vpop.permute.xlu0 %2225
        %2227 = vrot.lane.b32.xlu0 %v2224, 126
        %v2228 = vpop.permute.xlu0 %2227
        %v2231 = vadd.f32 %v2063, %v2226
        %v2232 = vadd.f32 %v2064, %v2228
        %s2233 = sld [smem:[#allocation6 + $0x56]]
        %v2234 = vstv %s2233
        %v2235 = vmul.f32 %v2234, %v361
        %v2236 = vmul.f32 %v2234, %v362
        %v2237 = vmul.f32 %v2234, %v363
        %v2241 = vrot.slane %v2235, 1
        %v2242 = vrot.slane %v2236, 1
        %v2243 = vsel %vm677, %v2241, %v2242
        %v2244 = vrot.slane %v2237, 1
        %v2245 = vsel %vm677, %v2242, %v2244
        %2246 = vrot.lane.b32.xlu0 %v2243, 126
        %v2247 = vpop.permute.xlu0 %2246
        %2248 = vrot.lane.b32.xlu0 %v2245, 126
        %v2249 = vpop.permute.xlu0 %2248
        %v2252 = vadd.f32 %v2084, %v2247
        %v2253 = vadd.f32 %v2085, %v2249
        %s2254 = sld [smem:[#allocation6 + $0x7a]]
        %v2255 = vstv %s2254
        %v2256 = vmul.f32 %v2255, %v361
        %v2257 = vmul.f32 %v2255, %v362
        %v2258 = vmul.f32 %v2255, %v363
        %v2262 = vrot.slane %v2256, 1
        %v2263 = vrot.slane %v2257, 1
        %v2264 = vsel %vm677, %v2262, %v2263
        %v2265 = vrot.slane %v2258, 1
        %v2266 = vsel %vm677, %v2263, %v2265
        %2267 = vrot.lane.b32.xlu0 %v2264, 126
        %v2268 = vpop.permute.xlu0 %2267
        %2269 = vrot.lane.b32.xlu0 %v2266, 126
        %v2270 = vpop.permute.xlu0 %2269
        %v2273 = vadd.f32 %v2105, %v2268
        %v2274 = vadd.f32 %v2106, %v2270
        %s2275 = sld [smem:[#allocation6 + $0x9e]]
        %v2276 = vstv %s2275
        %v2277 = vmul.f32 %v2276, %v361
        %v2278 = vmul.f32 %v2276, %v362
        %v2279 = vmul.f32 %v2276, %v363
        %v2283 = vrot.slane %v2277, 1
        %v2284 = vrot.slane %v2278, 1
        %v2285 = vsel %vm677, %v2283, %v2284
        %v2286 = vrot.slane %v2279, 1
        %v2287 = vsel %vm677, %v2284, %v2286
        %2288 = vrot.lane.b32.xlu0 %v2285, 126
        %v2289 = vpop.permute.xlu0 %2288
        %2290 = vrot.lane.b32.xlu0 %v2287, 126
        %v2291 = vpop.permute.xlu0 %2290
        %v2294 = vadd.f32 %v2126, %v2289
        %v2295 = vadd.f32 %v2127, %v2291
        %s2296 = sld [smem:[#allocation6 + $0xc2]]
        %v2297 = vstv %s2296
        %v2298 = vmul.f32 %v2297, %v361
        %v2299 = vmul.f32 %v2297, %v362
        %v2300 = vmul.f32 %v2297, %v363
        %v2304 = vrot.slane %v2298, 1
        %v2305 = vrot.slane %v2299, 1
        %v2306 = vsel %vm677, %v2304, %v2305
        %v2307 = vrot.slane %v2300, 1
        %v2308 = vsel %vm677, %v2305, %v2307
        %2309 = vrot.lane.b32.xlu0 %v2306, 126
        %v2310 = vpop.permute.xlu0 %2309
        %2311 = vrot.lane.b32.xlu0 %v2308, 126
        %v2312 = vpop.permute.xlu0 %2311
        %v2315 = vadd.f32 %v2147, %v2310
        %v2316 = vadd.f32 %v2148, %v2312
        %s2317 = sld [smem:[#allocation6 + $0xe6]]
        %v2318 = vstv %s2317
        %v2319 = vmul.f32 %v2318, %v361
        %v2320 = vmul.f32 %v2318, %v362
        %v2321 = vmul.f32 %v2318, %v363
        %v2325 = vrot.slane %v2319, 1
        %v2326 = vrot.slane %v2320, 1
        %v2327 = vsel %vm677, %v2325, %v2326
        %v2328 = vrot.slane %v2321, 1
        %v2329 = vsel %vm677, %v2326, %v2328
        %2330 = vrot.lane.b32.xlu0 %v2327, 126
        %v2331 = vpop.permute.xlu0 %2330
        %2332 = vrot.lane.b32.xlu0 %v2329, 126
        %v2333 = vpop.permute.xlu0 %2332
        %v2336 = vadd.f32 %v2168, %v2331
        %v2337 = vadd.f32 %v2169, %v2333
        %s2338 = sld [smem:[#allocation6 + $0x10a]]
        %v2339 = vstv %s2338
        %v2340 = vmul.f32 %v2339, %v361
        %v2341 = vmul.f32 %v2339, %v362
        %v2342 = vmul.f32 %v2339, %v363
        %v2346 = vrot.slane %v2340, 1
        %v2347 = vrot.slane %v2341, 1
        %v2348 = vsel %vm677, %v2346, %v2347
        %v2349 = vrot.slane %v2342, 1
        %v2350 = vsel %vm677, %v2347, %v2349
        %2351 = vrot.lane.b32.xlu0 %v2348, 126
        %v2352 = vpop.permute.xlu0 %2351
        %2353 = vrot.lane.b32.xlu0 %v2350, 126
        %v2354 = vpop.permute.xlu0 %2353
        %v2357 = vadd.f32 %v2189, %v2352
        %v2358 = vadd.f32 %v2190, %v2354
        %s2359 = sld [smem:[#allocation6 + $0xf]]
        %v2360 = vstv %s2359
        %v2361 = vmul.f32 %v2360, %v361
        %v2362 = vmul.f32 %v2360, %v362
        %v2363 = vmul.f32 %v2360, %v363
        %v2367 = vrot.slane %v2361, 2
        %v2368 = vrot.slane %v2362, 2
        %v2369 = vsel %vm1150, %v2367, %v2368
        %v2370 = vrot.slane %v2363, 2
        %v2371 = vsel %vm1150, %v2368, %v2370
        %v2374 = vadd.f32 %v2210, %v2369
        %v2375 = vadd.f32 %v2211, %v2371
        %s2376 = sld [smem:[#allocation6 + $0x33]]
        %v2377 = vstv %s2376
        %v2378 = vmul.f32 %v2377, %v361
        %v2379 = vmul.f32 %v2377, %v362
        %v2380 = vmul.f32 %v2377, %v363
        %v2384 = vrot.slane %v2378, 2
        %v2385 = vrot.slane %v2379, 2
        %v2386 = vsel %vm1150, %v2384, %v2385
        %v2387 = vrot.slane %v2380, 2
        %v2388 = vsel %vm1150, %v2385, %v2387
        %v2391 = vadd.f32 %v2231, %v2386
        %v2392 = vadd.f32 %v2232, %v2388
        %s2393 = sld [smem:[#allocation6 + $0x57]]
        %v2394 = vstv %s2393
        %v2395 = vmul.f32 %v2394, %v361
        %v2396 = vmul.f32 %v2394, %v362
        %v2397 = vmul.f32 %v2394, %v363
        %v2401 = vrot.slane %v2395, 2
        %v2402 = vrot.slane %v2396, 2
        %v2403 = vsel %vm1150, %v2401, %v2402
        %v2404 = vrot.slane %v2397, 2
        %v2405 = vsel %vm1150, %v2402, %v2404
        %v2408 = vadd.f32 %v2252, %v2403
        %v2409 = vadd.f32 %v2253, %v2405
        %s2410 = sld [smem:[#allocation6 + $0x7b]]
        %v2411 = vstv %s2410
        %v2412 = vmul.f32 %v2411, %v361
        %v2413 = vmul.f32 %v2411, %v362
        %v2414 = vmul.f32 %v2411, %v363
        %v2418 = vrot.slane %v2412, 2
        %v2419 = vrot.slane %v2413, 2
        %v2420 = vsel %vm1150, %v2418, %v2419
        %v2421 = vrot.slane %v2414, 2
        %v2422 = vsel %vm1150, %v2419, %v2421
        %v2425 = vadd.f32 %v2273, %v2420
        %v2426 = vadd.f32 %v2274, %v2422
        %s2427 = sld [smem:[#allocation6 + $0x9f]]
        %v2428 = vstv %s2427
        %v2429 = vmul.f32 %v2428, %v361
        %v2430 = vmul.f32 %v2428, %v362
        %v2431 = vmul.f32 %v2428, %v363
        %v2435 = vrot.slane %v2429, 2
        %v2436 = vrot.slane %v2430, 2
        %v2437 = vsel %vm1150, %v2435, %v2436
        %v2438 = vrot.slane %v2431, 2
        %v2439 = vsel %vm1150, %v2436, %v2438
        %v2442 = vadd.f32 %v2294, %v2437
        %v2443 = vadd.f32 %v2295, %v2439
        %s2444 = sld [smem:[#allocation6 + $0xc3]]
        %v2445 = vstv %s2444
        %v2446 = vmul.f32 %v2445, %v361
        %v2447 = vmul.f32 %v2445, %v362
        %v2448 = vmul.f32 %v2445, %v363
        %v2452 = vrot.slane %v2446, 2
        %v2453 = vrot.slane %v2447, 2
        %v2454 = vsel %vm1150, %v2452, %v2453
        %v2455 = vrot.slane %v2448, 2
        %v2456 = vsel %vm1150, %v2453, %v2455
        %v2459 = vadd.f32 %v2315, %v2454
        %v2460 = vadd.f32 %v2316, %v2456
        %s2461 = sld [smem:[#allocation6 + $0xe7]]
        %v2462 = vstv %s2461
        %v2463 = vmul.f32 %v2462, %v361
        %v2464 = vmul.f32 %v2462, %v362
        %v2465 = vmul.f32 %v2462, %v363
        %v2469 = vrot.slane %v2463, 2
        %v2470 = vrot.slane %v2464, 2
        %v2471 = vsel %vm1150, %v2469, %v2470
        %v2472 = vrot.slane %v2465, 2
        %v2473 = vsel %vm1150, %v2470, %v2472
        %v2476 = vadd.f32 %v2336, %v2471
        %v2477 = vadd.f32 %v2337, %v2473
        %s2478 = sld [smem:[#allocation6 + $0x10b]]
        %v2479 = vstv %s2478
        %v2480 = vmul.f32 %v2479, %v361
        %v2481 = vmul.f32 %v2479, %v362
        %v2482 = vmul.f32 %v2479, %v363
        %v2486 = vrot.slane %v2480, 2
        %v2487 = vrot.slane %v2481, 2
        %v2488 = vsel %vm1150, %v2486, %v2487
        %v2489 = vrot.slane %v2482, 2
        %v2490 = vsel %vm1150, %v2487, %v2489
        %v2493 = vadd.f32 %v2357, %v2488
        %v2494 = vadd.f32 %v2358, %v2490
        %s2495 = sld [smem:[#allocation6 + $0x10]]
        %v2496 = vstv %s2495
        %v2497 = vmul.f32 %v2496, %v361
        %v2498 = vmul.f32 %v2496, %v362
        %v2499 = vmul.f32 %v2496, %v363
        %v2503 = vrot.slane %v2497, 2
        %v2504 = vrot.slane %v2498, 2
        %v2505 = vsel %vm1150, %v2503, %v2504
        %v2506 = vrot.slane %v2499, 2
        %v2507 = vsel %vm1150, %v2504, %v2506
        %2508 = vrot.lane.b32.xlu0 %v2505, 127
        %v2509 = vpop.permute.xlu0 %2508
        %2510 = vrot.lane.b32.xlu0 %v2507, 127
        %v2511 = vpop.permute.xlu0 %2510
        %v2514 = vadd.f32 %v2374, %v2509
        %v2515 = vadd.f32 %v2375, %v2511
        %s2516 = sld [smem:[#allocation6 + $0x34]]
        %v2517 = vstv %s2516
        %v2518 = vmul.f32 %v2517, %v361
        %v2519 = vmul.f32 %v2517, %v362
        %v2520 = vmul.f32 %v2517, %v363
        %v2524 = vrot.slane %v2518, 2
        %v2525 = vrot.slane %v2519, 2
        %v2526 = vsel %vm1150, %v2524, %v2525
        %v2527 = vrot.slane %v2520, 2
        %v2528 = vsel %vm1150, %v2525, %v2527
        %2529 = vrot.lane.b32.xlu0 %v2526, 127
        %v2530 = vpop.permute.xlu0 %2529
        %2531 = vrot.lane.b32.xlu0 %v2528, 127
        %v2532 = vpop.permute.xlu0 %2531
        %v2535 = vadd.f32 %v2391, %v2530
        %v2536 = vadd.f32 %v2392, %v2532
        %s2537 = sld [smem:[#allocation6 + $0x58]]
        %v2538 = vstv %s2537
        %v2539 = vmul.f32 %v2538, %v361
        %v2540 = vmul.f32 %v2538, %v362
        %v2541 = vmul.f32 %v2538, %v363
        %v2545 = vrot.slane %v2539, 2
        %v2546 = vrot.slane %v2540, 2
        %v2547 = vsel %vm1150, %v2545, %v2546
        %v2548 = vrot.slane %v2541, 2
        %v2549 = vsel %vm1150, %v2546, %v2548
        %2550 = vrot.lane.b32.xlu0 %v2547, 127
        %v2551 = vpop.permute.xlu0 %2550
        %2552 = vrot.lane.b32.xlu0 %v2549, 127
        %v2553 = vpop.permute.xlu0 %2552
        %v2556 = vadd.f32 %v2408, %v2551
        %v2557 = vadd.f32 %v2409, %v2553
        %s2558 = sld [smem:[#allocation6 + $0x7c]]
        %v2559 = vstv %s2558
        %v2560 = vmul.f32 %v2559, %v361
        %v2561 = vmul.f32 %v2559, %v362
        %v2562 = vmul.f32 %v2559, %v363
        %v2566 = vrot.slane %v2560, 2
        %v2567 = vrot.slane %v2561, 2
        %v2568 = vsel %vm1150, %v2566, %v2567
        %v2569 = vrot.slane %v2562, 2
        %v2570 = vsel %vm1150, %v2567, %v2569
        %2571 = vrot.lane.b32.xlu0 %v2568, 127
        %v2572 = vpop.permute.xlu0 %2571
        %2573 = vrot.lane.b32.xlu0 %v2570, 127
        %v2574 = vpop.permute.xlu0 %2573
        %v2577 = vadd.f32 %v2425, %v2572
        %v2578 = vadd.f32 %v2426, %v2574
        %s2579 = sld [smem:[#allocation6 + $0xa0]]
        %v2580 = vstv %s2579
        %v2581 = vmul.f32 %v2580, %v361
        %v2582 = vmul.f32 %v2580, %v362
        %v2583 = vmul.f32 %v2580, %v363
        %v2587 = vrot.slane %v2581, 2
        %v2588 = vrot.slane %v2582, 2
        %v2589 = vsel %vm1150, %v2587, %v2588
        %v2590 = vrot.slane %v2583, 2
        %v2591 = vsel %vm1150, %v2588, %v2590
        %2592 = vrot.lane.b32.xlu0 %v2589, 127
        %v2593 = vpop.permute.xlu0 %2592
        %2594 = vrot.lane.b32.xlu0 %v2591, 127
        %v2595 = vpop.permute.xlu0 %2594
        %v2598 = vadd.f32 %v2442, %v2593
        %v2599 = vadd.f32 %v2443, %v2595
        %s2600 = sld [smem:[#allocation6 + $0xc4]]
        %v2601 = vstv %s2600
        %v2602 = vmul.f32 %v2601, %v361
        %v2603 = vmul.f32 %v2601, %v362
        %v2604 = vmul.f32 %v2601, %v363
        %v2608 = vrot.slane %v2602, 2
        %v2609 = vrot.slane %v2603, 2
        %v2610 = vsel %vm1150, %v2608, %v2609
        %v2611 = vrot.slane %v2604, 2
        %v2612 = vsel %vm1150, %v2609, %v2611
        %2613 = vrot.lane.b32.xlu0 %v2610, 127
        %v2614 = vpop.permute.xlu0 %2613
        %2615 = vrot.lane.b32.xlu0 %v2612, 127
        %v2616 = vpop.permute.xlu0 %2615
        %v2619 = vadd.f32 %v2459, %v2614
        %v2620 = vadd.f32 %v2460, %v2616
        %s2621 = sld [smem:[#allocation6 + $0xe8]]
        %v2622 = vstv %s2621
        %v2623 = vmul.f32 %v2622, %v361
        %v2624 = vmul.f32 %v2622, %v362
        %v2625 = vmul.f32 %v2622, %v363
        %v2629 = vrot.slane %v2623, 2
        %v2630 = vrot.slane %v2624, 2
        %v2631 = vsel %vm1150, %v2629, %v2630
        %v2632 = vrot.slane %v2625, 2
        %v2633 = vsel %vm1150, %v2630, %v2632
        %2634 = vrot.lane.b32.xlu0 %v2631, 127
        %v2635 = vpop.permute.xlu0 %2634
        %2636 = vrot.lane.b32.xlu0 %v2633, 127
        %v2637 = vpop.permute.xlu0 %2636
        %v2640 = vadd.f32 %v2476, %v2635
        %v2641 = vadd.f32 %v2477, %v2637
        %s2642 = sld [smem:[#allocation6 + $0x10c]]
        %v2643 = vstv %s2642
        %v2644 = vmul.f32 %v2643, %v361
        %v2645 = vmul.f32 %v2643, %v362
        %v2646 = vmul.f32 %v2643, %v363
        %v2650 = vrot.slane %v2644, 2
        %v2651 = vrot.slane %v2645, 2
        %v2652 = vsel %vm1150, %v2650, %v2651
        %v2653 = vrot.slane %v2646, 2
        %v2654 = vsel %vm1150, %v2651, %v2653
        %2655 = vrot.lane.b32.xlu0 %v2652, 127
        %v2656 = vpop.permute.xlu0 %2655
        %2657 = vrot.lane.b32.xlu0 %v2654, 127
        %v2658 = vpop.permute.xlu0 %2657
        %v2661 = vadd.f32 %v2493, %v2656
        %v2662 = vadd.f32 %v2494, %v2658
        %s2663 = sld [smem:[#allocation6 + $0x11]]
        %v2664 = vstv %s2663
        %v2665 = vmul.f32 %v2664, %v361
        %v2666 = vmul.f32 %v2664, %v362
        %v2667 = vmul.f32 %v2664, %v363
        %v2671 = vrot.slane %v2665, 2
        %v2672 = vrot.slane %v2666, 2
        %v2673 = vsel %vm1150, %v2671, %v2672
        %v2674 = vrot.slane %v2667, 2
        %v2675 = vsel %vm1150, %v2672, %v2674
        %2676 = vrot.lane.b32.xlu0 %v2673, 126
        %v2677 = vpop.permute.xlu0 %2676
        %2678 = vrot.lane.b32.xlu0 %v2675, 126
        %v2679 = vpop.permute.xlu0 %2678
        %v2682 = vadd.f32 %v2514, %v2677
        %v2683 = vadd.f32 %v2515, %v2679
        %s2684 = sld [smem:[#allocation6 + $0x35]]
        %v2685 = vstv %s2684
        %v2686 = vmul.f32 %v2685, %v361
        %v2687 = vmul.f32 %v2685, %v362
        %v2688 = vmul.f32 %v2685, %v363
        %v2692 = vrot.slane %v2686, 2
        %v2693 = vrot.slane %v2687, 2
        %v2694 = vsel %vm1150, %v2692, %v2693
        %v2695 = vrot.slane %v2688, 2
        %v2696 = vsel %vm1150, %v2693, %v2695
        %2697 = vrot.lane.b32.xlu0 %v2694, 126
        %v2698 = vpop.permute.xlu0 %2697
        %2699 = vrot.lane.b32.xlu0 %v2696, 126
        %v2700 = vpop.permute.xlu0 %2699
        %v2703 = vadd.f32 %v2535, %v2698
        %v2704 = vadd.f32 %v2536, %v2700
        %s2705 = sld [smem:[#allocation6 + $0x59]]
        %v2706 = vstv %s2705
        %v2707 = vmul.f32 %v2706, %v361
        %v2708 = vmul.f32 %v2706, %v362
        %v2709 = vmul.f32 %v2706, %v363
        %v2713 = vrot.slane %v2707, 2
        %v2714 = vrot.slane %v2708, 2
        %v2715 = vsel %vm1150, %v2713, %v2714
        %v2716 = vrot.slane %v2709, 2
        %v2717 = vsel %vm1150, %v2714, %v2716
        %2718 = vrot.lane.b32.xlu0 %v2715, 126
        %v2719 = vpop.permute.xlu0 %2718
        %2720 = vrot.lane.b32.xlu0 %v2717, 126
        %v2721 = vpop.permute.xlu0 %2720
        %v2724 = vadd.f32 %v2556, %v2719
        %v2725 = vadd.f32 %v2557, %v2721
        %s2726 = sld [smem:[#allocation6 + $0x7d]]
        %v2727 = vstv %s2726
        %v2728 = vmul.f32 %v2727, %v361
        %v2729 = vmul.f32 %v2727, %v362
        %v2730 = vmul.f32 %v2727, %v363
        %v2734 = vrot.slane %v2728, 2
        %v2735 = vrot.slane %v2729, 2
        %v2736 = vsel %vm1150, %v2734, %v2735
        %v2737 = vrot.slane %v2730, 2
        %v2738 = vsel %vm1150, %v2735, %v2737
        %2739 = vrot.lane.b32.xlu0 %v2736, 126
        %v2740 = vpop.permute.xlu0 %2739
        %2741 = vrot.lane.b32.xlu0 %v2738, 126
        %v2742 = vpop.permute.xlu0 %2741
        %v2745 = vadd.f32 %v2577, %v2740
        %v2746 = vadd.f32 %v2578, %v2742
        %s2747 = sld [smem:[#allocation6 + $0xa1]]
        %v2748 = vstv %s2747
        %v2749 = vmul.f32 %v2748, %v361
        %v2750 = vmul.f32 %v2748, %v362
        %v2751 = vmul.f32 %v2748, %v363
        %v2755 = vrot.slane %v2749, 2
        %v2756 = vrot.slane %v2750, 2
        %v2757 = vsel %vm1150, %v2755, %v2756
        %v2758 = vrot.slane %v2751, 2
        %v2759 = vsel %vm1150, %v2756, %v2758
        %2760 = vrot.lane.b32.xlu0 %v2757, 126
        %v2761 = vpop.permute.xlu0 %2760
        %2762 = vrot.lane.b32.xlu0 %v2759, 126
        %v2763 = vpop.permute.xlu0 %2762
        %v2766 = vadd.f32 %v2598, %v2761
        %v2767 = vadd.f32 %v2599, %v2763
        %s2768 = sld [smem:[#allocation6 + $0xc5]]
        %v2769 = vstv %s2768
        %v2770 = vmul.f32 %v2769, %v361
        %v2771 = vmul.f32 %v2769, %v362
        %v2772 = vmul.f32 %v2769, %v363
        %v2776 = vrot.slane %v2770, 2
        %v2777 = vrot.slane %v2771, 2
        %v2778 = vsel %vm1150, %v2776, %v2777
        %v2779 = vrot.slane %v2772, 2
        %v2780 = vsel %vm1150, %v2777, %v2779
        %2781 = vrot.lane.b32.xlu0 %v2778, 126
        %v2782 = vpop.permute.xlu0 %2781
        %2783 = vrot.lane.b32.xlu0 %v2780, 126
        %v2784 = vpop.permute.xlu0 %2783
        %v2787 = vadd.f32 %v2619, %v2782
        %v2788 = vadd.f32 %v2620, %v2784
        %s2789 = sld [smem:[#allocation6 + $0xe9]]
        %v2790 = vstv %s2789
        %v2791 = vmul.f32 %v2790, %v361
        %v2792 = vmul.f32 %v2790, %v362
        %v2793 = vmul.f32 %v2790, %v363
        %v2797 = vrot.slane %v2791, 2
        %v2798 = vrot.slane %v2792, 2
        %v2799 = vsel %vm1150, %v2797, %v2798
        %v2800 = vrot.slane %v2793, 2
        %v2801 = vsel %vm1150, %v2798, %v2800
        %2802 = vrot.lane.b32.xlu0 %v2799, 126
        %v2803 = vpop.permute.xlu0 %2802
        %2804 = vrot.lane.b32.xlu0 %v2801, 126
        %v2805 = vpop.permute.xlu0 %2804
        %v2808 = vadd.f32 %v2640, %v2803
        %v2809 = vadd.f32 %v2641, %v2805
        %s2810 = sld [smem:[#allocation6 + $0x10d]]
        %v2811 = vstv %s2810
        %v2812 = vmul.f32 %v2811, %v361
        %v2813 = vmul.f32 %v2811, %v362
        %v2814 = vmul.f32 %v2811, %v363
        %v2818 = vrot.slane %v2812, 2
        %v2819 = vrot.slane %v2813, 2
        %v2820 = vsel %vm1150, %v2818, %v2819
        %v2821 = vrot.slane %v2814, 2
        %v2822 = vsel %vm1150, %v2819, %v2821
        %2823 = vrot.lane.b32.xlu0 %v2820, 126
        %v2824 = vpop.permute.xlu0 %2823
        %2825 = vrot.lane.b32.xlu0 %v2822, 126
        %v2826 = vpop.permute.xlu0 %2825
        %v2829 = vadd.f32 %v2661, %v2824
        %v2830 = vadd.f32 %v2662, %v2826
        %s2831 = sld [smem:[#allocation6 + $0x12]]
        %v2832 = vstv %s2831
        %v2833 = vmul.f32 %v2832, %v364
        %v2834 = vmul.f32 %v2832, %v365
        %v2835 = vadd.f32 %v2682, %v2833
        %v2836 = vadd.f32 %v2683, %v2834
        %s2837 = sld [smem:[#allocation6 + $0x36]]
        %v2838 = vstv %s2837
        %v2839 = vmul.f32 %v2838, %v364
        %v2840 = vmul.f32 %v2838, %v365
        %v2841 = vadd.f32 %v2703, %v2839
        %v2842 = vadd.f32 %v2704, %v2840
        %s2843 = sld [smem:[#allocation6 + $0x5a]]
        %v2844 = vstv %s2843
        %v2845 = vmul.f32 %v2844, %v364
        %v2846 = vmul.f32 %v2844, %v365
        %v2847 = vadd.f32 %v2724, %v2845
        %v2848 = vadd.f32 %v2725, %v2846
        %s2849 = sld [smem:[#allocation6 + $0x7e]]
        %v2850 = vstv %s2849
        %v2851 = vmul.f32 %v2850, %v364
        %v2852 = vmul.f32 %v2850, %v365
        %v2853 = vadd.f32 %v2745, %v2851
        %v2854 = vadd.f32 %v2746, %v2852
        %s2855 = sld [smem:[#allocation6 + $0xa2]]
        %v2856 = vstv %s2855
        %v2857 = vmul.f32 %v2856, %v364
        %v2858 = vmul.f32 %v2856, %v365
        %v2859 = vadd.f32 %v2766, %v2857
        %v2860 = vadd.f32 %v2767, %v2858
        %s2861 = sld [smem:[#allocation6 + $0xc6]]
        %v2862 = vstv %s2861
        %v2863 = vmul.f32 %v2862, %v364
        %v2864 = vmul.f32 %v2862, %v365
        %v2865 = vadd.f32 %v2787, %v2863
        %v2866 = vadd.f32 %v2788, %v2864
        %s2867 = sld [smem:[#allocation6 + $0xea]]
        %v2868 = vstv %s2867
        %v2869 = vmul.f32 %v2868, %v364
        %v2870 = vmul.f32 %v2868, %v365
        %v2871 = vadd.f32 %v2808, %v2869
        %v2872 = vadd.f32 %v2809, %v2870
        %s2873 = sld [smem:[#allocation6 + $0x10e]]
        %v2874 = vstv %s2873
        %v2875 = vmul.f32 %v2874, %v364
        %v2876 = vmul.f32 %v2874, %v365
        %v2877 = vadd.f32 %v2829, %v2875
        %v2878 = vadd.f32 %v2830, %v2876
        %s2879 = sld [smem:[#allocation6 + $0x13]]
        %v2880 = vstv %s2879
        %v2881 = vmul.f32 %v2880, %v364
        %v2882 = vmul.f32 %v2880, %v365
        %2885 = vrot.lane.b32.xlu0 %v2881, 127
        %v2886 = vpop.permute.xlu0 %2885
        %2887 = vrot.lane.b32.xlu0 %v2882, 127
        %v2888 = vpop.permute.xlu0 %2887
        %v2891 = vadd.f32 %v2835, %v2886
        %v2892 = vadd.f32 %v2836, %v2888
        %s2893 = sld [smem:[#allocation6 + $0x37]]
        %v2894 = vstv %s2893
        %v2895 = vmul.f32 %v2894, %v364
        %v2896 = vmul.f32 %v2894, %v365
        %2899 = vrot.lane.b32.xlu0 %v2895, 127
        %v2900 = vpop.permute.xlu0 %2899
        %2901 = vrot.lane.b32.xlu0 %v2896, 127
        %v2902 = vpop.permute.xlu0 %2901
        %v2905 = vadd.f32 %v2841, %v2900
        %v2906 = vadd.f32 %v2842, %v2902
        %s2907 = sld [smem:[#allocation6 + $0x5b]]
        %v2908 = vstv %s2907
        %v2909 = vmul.f32 %v2908, %v364
        %v2910 = vmul.f32 %v2908, %v365
        %2913 = vrot.lane.b32.xlu0 %v2909, 127
        %v2914 = vpop.permute.xlu0 %2913
        %2915 = vrot.lane.b32.xlu0 %v2910, 127
        %v2916 = vpop.permute.xlu0 %2915
        %v2919 = vadd.f32 %v2847, %v2914
        %v2920 = vadd.f32 %v2848, %v2916
        %s2921 = sld [smem:[#allocation6 + $0x7f]]
        %v2922 = vstv %s2921
        %v2923 = vmul.f32 %v2922, %v364
        %v2924 = vmul.f32 %v2922, %v365
        %2927 = vrot.lane.b32.xlu0 %v2923, 127
        %v2928 = vpop.permute.xlu0 %2927
        %2929 = vrot.lane.b32.xlu0 %v2924, 127
        %v2930 = vpop.permute.xlu0 %2929
        %v2933 = vadd.f32 %v2853, %v2928
        %v2934 = vadd.f32 %v2854, %v2930
        %s2935 = sld [smem:[#allocation6 + $0xa3]]
        %v2936 = vstv %s2935
        %v2937 = vmul.f32 %v2936, %v364
        %v2938 = vmul.f32 %v2936, %v365
        %2941 = vrot.lane.b32.xlu0 %v2937, 127
        %v2942 = vpop.permute.xlu0 %2941
        %2943 = vrot.lane.b32.xlu0 %v2938, 127
        %v2944 = vpop.permute.xlu0 %2943
        %v2947 = vadd.f32 %v2859, %v2942
        %v2948 = vadd.f32 %v2860, %v2944
        %s2949 = sld [smem:[#allocation6 + $0xc7]]
        %v2950 = vstv %s2949
        %v2951 = vmul.f32 %v2950, %v364
        %v2952 = vmul.f32 %v2950, %v365
        %2955 = vrot.lane.b32.xlu0 %v2951, 127
        %v2956 = vpop.permute.xlu0 %2955
        %2957 = vrot.lane.b32.xlu0 %v2952, 127
        %v2958 = vpop.permute.xlu0 %2957
        %v2961 = vadd.f32 %v2865, %v2956
        %v2962 = vadd.f32 %v2866, %v2958
        %s2963 = sld [smem:[#allocation6 + $0xeb]]
        %v2964 = vstv %s2963
        %v2965 = vmul.f32 %v2964, %v364
        %v2966 = vmul.f32 %v2964, %v365
        %2969 = vrot.lane.b32.xlu0 %v2965, 127
        %v2970 = vpop.permute.xlu0 %2969
        %2971 = vrot.lane.b32.xlu0 %v2966, 127
        %v2972 = vpop.permute.xlu0 %2971
        %v2975 = vadd.f32 %v2871, %v2970
        %v2976 = vadd.f32 %v2872, %v2972
        %s2977 = sld [smem:[#allocation6 + $0x10f]]
        %v2978 = vstv %s2977
        %v2979 = vmul.f32 %v2978, %v364
        %v2980 = vmul.f32 %v2978, %v365
        %2983 = vrot.lane.b32.xlu0 %v2979, 127
        %v2984 = vpop.permute.xlu0 %2983
        %2985 = vrot.lane.b32.xlu0 %v2980, 127
        %v2986 = vpop.permute.xlu0 %2985
        %v2989 = vadd.f32 %v2877, %v2984
        %v2990 = vadd.f32 %v2878, %v2986
        %s2991 = sld [smem:[#allocation6 + $0x14]]
        %v2992 = vstv %s2991
        %v2993 = vmul.f32 %v2992, %v364
        %v2994 = vmul.f32 %v2992, %v365
        %2997 = vrot.lane.b32.xlu0 %v2993, 126
        %v2998 = vpop.permute.xlu0 %2997
        %2999 = vrot.lane.b32.xlu0 %v2994, 126
        %v3000 = vpop.permute.xlu0 %2999
        %v3003 = vadd.f32 %v2891, %v2998
        %v3004 = vadd.f32 %v2892, %v3000
        %s3005 = sld [smem:[#allocation6 + $0x38]]
        %v3006 = vstv %s3005
        %v3007 = vmul.f32 %v3006, %v364
        %v3008 = vmul.f32 %v3006, %v365
        %3011 = vrot.lane.b32.xlu0 %v3007, 126
        %v3012 = vpop.permute.xlu0 %3011
        %3013 = vrot.lane.b32.xlu0 %v3008, 126
        %v3014 = vpop.permute.xlu0 %3013
        %v3017 = vadd.f32 %v2905, %v3012
        %v3018 = vadd.f32 %v2906, %v3014
        %s3019 = sld [smem:[#allocation6 + $0x5c]]
        %v3020 = vstv %s3019
        %v3021 = vmul.f32 %v3020, %v364
        %v3022 = vmul.f32 %v3020, %v365
        %3025 = vrot.lane.b32.xlu0 %v3021, 126
        %v3026 = vpop.permute.xlu0 %3025
        %3027 = vrot.lane.b32.xlu0 %v3022, 126
        %v3028 = vpop.permute.xlu0 %3027
        %v3031 = vadd.f32 %v2919, %v3026
        %v3032 = vadd.f32 %v2920, %v3028
        %s3033 = sld [smem:[#allocation6 + $0x80]]
        %v3034 = vstv %s3033
        %v3035 = vmul.f32 %v3034, %v364
        %v3036 = vmul.f32 %v3034, %v365
        %3039 = vrot.lane.b32.xlu0 %v3035, 126
        %v3040 = vpop.permute.xlu0 %3039
        %3041 = vrot.lane.b32.xlu0 %v3036, 126
        %v3042 = vpop.permute.xlu0 %3041
        %v3045 = vadd.f32 %v2933, %v3040
        %v3046 = vadd.f32 %v2934, %v3042
        %s3047 = sld [smem:[#allocation6 + $0xa4]]
        %v3048 = vstv %s3047
        %v3049 = vmul.f32 %v3048, %v364
        %v3050 = vmul.f32 %v3048, %v365
        %3053 = vrot.lane.b32.xlu0 %v3049, 126
        %v3054 = vpop.permute.xlu0 %3053
        %3055 = vrot.lane.b32.xlu0 %v3050, 126
        %v3056 = vpop.permute.xlu0 %3055
        %v3059 = vadd.f32 %v2947, %v3054
        %v3060 = vadd.f32 %v2948, %v3056
        %s3061 = sld [smem:[#allocation6 + $0xc8]]
        %v3062 = vstv %s3061
        %v3063 = vmul.f32 %v3062, %v364
        %v3064 = vmul.f32 %v3062, %v365
        %3067 = vrot.lane.b32.xlu0 %v3063, 126
        %v3068 = vpop.permute.xlu0 %3067
        %3069 = vrot.lane.b32.xlu0 %v3064, 126
        %v3070 = vpop.permute.xlu0 %3069
        %v3073 = vadd.f32 %v2961, %v3068
        %v3074 = vadd.f32 %v2962, %v3070
        %s3075 = sld [smem:[#allocation6 + $0xec]]
        %v3076 = vstv %s3075
        %v3077 = vmul.f32 %v3076, %v364
        %v3078 = vmul.f32 %v3076, %v365
        %3081 = vrot.lane.b32.xlu0 %v3077, 126
        %v3082 = vpop.permute.xlu0 %3081
        %3083 = vrot.lane.b32.xlu0 %v3078, 126
        %v3084 = vpop.permute.xlu0 %3083
        %v3087 = vadd.f32 %v2975, %v3082
        %v3088 = vadd.f32 %v2976, %v3084
        %s3089 = sld [smem:[#allocation6 + $0x110]]
        %v3090 = vstv %s3089
        %v3091 = vmul.f32 %v3090, %v364
        %v3092 = vmul.f32 %v3090, %v365
        %3095 = vrot.lane.b32.xlu0 %v3091, 126
        %v3096 = vpop.permute.xlu0 %3095
        %3097 = vrot.lane.b32.xlu0 %v3092, 126
        %v3098 = vpop.permute.xlu0 %3097
        %v3101 = vadd.f32 %v2989, %v3096
        %v3102 = vadd.f32 %v2990, %v3098
        %s3103 = sld [smem:[#allocation6 + $0x15]]
        %v3104 = vstv %s3103
        %v3105 = vmul.f32 %v3104, %v364
        %v3106 = vmul.f32 %v3104, %v365
        %v3107 = vmul.f32 %v3104, %v366
        %v3111 = vrot.slane %v3105, 1
        %v3112 = vrot.slane %v3106, 1
        %v3113 = vsel %vm677, %v3111, %v3112
        %v3114 = vrot.slane %v3107, 1
        %v3115 = vsel %vm677, %v3112, %v3114
        %v3118 = vadd.f32 %v3003, %v3113
        %v3119 = vadd.f32 %v3004, %v3115
        %s3120 = sld [smem:[#allocation6 + $0x39]]
        %v3121 = vstv %s3120
        %v3122 = vmul.f32 %v3121, %v364
        %v3123 = vmul.f32 %v3121, %v365
        %v3124 = vmul.f32 %v3121, %v366
        %v3128 = vrot.slane %v3122, 1
        %v3129 = vrot.slane %v3123, 1
        %v3130 = vsel %vm677, %v3128, %v3129
        %v3131 = vrot.slane %v3124, 1
        %v3132 = vsel %vm677, %v3129, %v3131
        %v3135 = vadd.f32 %v3017, %v3130
        %v3136 = vadd.f32 %v3018, %v3132
        %s3137 = sld [smem:[#allocation6 + $0x5d]]
        %v3138 = vstv %s3137
        %v3139 = vmul.f32 %v3138, %v364
        %v3140 = vmul.f32 %v3138, %v365
        %v3141 = vmul.f32 %v3138, %v366
        %v3145 = vrot.slane %v3139, 1
        %v3146 = vrot.slane %v3140, 1
        %v3147 = vsel %vm677, %v3145, %v3146
        %v3148 = vrot.slane %v3141, 1
        %v3149 = vsel %vm677, %v3146, %v3148
        %v3152 = vadd.f32 %v3031, %v3147
        %v3153 = vadd.f32 %v3032, %v3149
        %s3154 = sld [smem:[#allocation6 + $0x81]]
        %v3155 = vstv %s3154
        %v3156 = vmul.f32 %v3155, %v364
        %v3157 = vmul.f32 %v3155, %v365
        %v3158 = vmul.f32 %v3155, %v366
        %v3162 = vrot.slane %v3156, 1
        %v3163 = vrot.slane %v3157, 1
        %v3164 = vsel %vm677, %v3162, %v3163
        %v3165 = vrot.slane %v3158, 1
        %v3166 = vsel %vm677, %v3163, %v3165
        %v3169 = vadd.f32 %v3045, %v3164
        %v3170 = vadd.f32 %v3046, %v3166
        %s3171 = sld [smem:[#allocation6 + $0xa5]]
        %v3172 = vstv %s3171
        %v3173 = vmul.f32 %v3172, %v364
        %v3174 = vmul.f32 %v3172, %v365
        %v3175 = vmul.f32 %v3172, %v366
        %v3179 = vrot.slane %v3173, 1
        %v3180 = vrot.slane %v3174, 1
        %v3181 = vsel %vm677, %v3179, %v3180
        %v3182 = vrot.slane %v3175, 1
        %v3183 = vsel %vm677, %v3180, %v3182
        %v3186 = vadd.f32 %v3059, %v3181
        %v3187 = vadd.f32 %v3060, %v3183
        %s3188 = sld [smem:[#allocation6 + $0xc9]]
        %v3189 = vstv %s3188
        %v3190 = vmul.f32 %v3189, %v364
        %v3191 = vmul.f32 %v3189, %v365
        %v3192 = vmul.f32 %v3189, %v366
        %v3196 = vrot.slane %v3190, 1
        %v3197 = vrot.slane %v3191, 1
        %v3198 = vsel %vm677, %v3196, %v3197
        %v3199 = vrot.slane %v3192, 1
        %v3200 = vsel %vm677, %v3197, %v3199
        %v3203 = vadd.f32 %v3073, %v3198
        %v3204 = vadd.f32 %v3074, %v3200
        %s3205 = sld [smem:[#allocation6 + $0xed]]
        %v3206 = vstv %s3205
        %v3207 = vmul.f32 %v3206, %v364
        %v3208 = vmul.f32 %v3206, %v365
        %v3209 = vmul.f32 %v3206, %v366
        %v3213 = vrot.slane %v3207, 1
        %v3214 = vrot.slane %v3208, 1
        %v3215 = vsel %vm677, %v3213, %v3214
        %v3216 = vrot.slane %v3209, 1
        %v3217 = vsel %vm677, %v3214, %v3216
        %v3220 = vadd.f32 %v3087, %v3215
        %v3221 = vadd.f32 %v3088, %v3217
        %s3222 = sld [smem:[#allocation6 + $0x111]]
        %v3223 = vstv %s3222
        %v3224 = vmul.f32 %v3223, %v364
        %v3225 = vmul.f32 %v3223, %v365
        %v3226 = vmul.f32 %v3223, %v366
        %v3230 = vrot.slane %v3224, 1
        %v3231 = vrot.slane %v3225, 1
        %v3232 = vsel %vm677, %v3230, %v3231
        %v3233 = vrot.slane %v3226, 1
        %v3234 = vsel %vm677, %v3231, %v3233
        %v3237 = vadd.f32 %v3101, %v3232
        %v3238 = vadd.f32 %v3102, %v3234
        %s3239 = sld [smem:[#allocation6 + $0x16]]
        %v3240 = vstv %s3239
        %v3241 = vmul.f32 %v3240, %v364
        %v3242 = vmul.f32 %v3240, %v365
        %v3243 = vmul.f32 %v3240, %v366
        %v3247 = vrot.slane %v3241, 1
        %v3248 = vrot.slane %v3242, 1
        %v3249 = vsel %vm677, %v3247, %v3248
        %v3250 = vrot.slane %v3243, 1
        %v3251 = vsel %vm677, %v3248, %v3250
        %3252 = vrot.lane.b32.xlu0 %v3249, 127
        %v3253 = vpop.permute.xlu0 %3252
        %3254 = vrot.lane.b32.xlu0 %v3251, 127
        %v3255 = vpop.permute.xlu0 %3254
        %v3258 = vadd.f32 %v3118, %v3253
        %v3259 = vadd.f32 %v3119, %v3255
        %s3260 = sld [smem:[#allocation6 + $0x3a]]
        %v3261 = vstv %s3260
        %v3262 = vmul.f32 %v3261, %v364
        %v3263 = vmul.f32 %v3261, %v365
        %v3264 = vmul.f32 %v3261, %v366
        %v3268 = vrot.slane %v3262, 1
        %v3269 = vrot.slane %v3263, 1
        %v3270 = vsel %vm677, %v3268, %v3269
        %v3271 = vrot.slane %v3264, 1
        %v3272 = vsel %vm677, %v3269, %v3271
        %3273 = vrot.lane.b32.xlu0 %v3270, 127
        %v3274 = vpop.permute.xlu0 %3273
        %3275 = vrot.lane.b32.xlu0 %v3272, 127
        %v3276 = vpop.permute.xlu0 %3275
        %v3279 = vadd.f32 %v3135, %v3274
        %v3280 = vadd.f32 %v3136, %v3276
        %s3281 = sld [smem:[#allocation6 + $0x5e]]
        %v3282 = vstv %s3281
        %v3283 = vmul.f32 %v3282, %v364
        %v3284 = vmul.f32 %v3282, %v365
        %v3285 = vmul.f32 %v3282, %v366
        %v3289 = vrot.slane %v3283, 1
        %v3290 = vrot.slane %v3284, 1
        %v3291 = vsel %vm677, %v3289, %v3290
        %v3292 = vrot.slane %v3285, 1
        %v3293 = vsel %vm677, %v3290, %v3292
        %3294 = vrot.lane.b32.xlu0 %v3291, 127
        %v3295 = vpop.permute.xlu0 %3294
        %3296 = vrot.lane.b32.xlu0 %v3293, 127
        %v3297 = vpop.permute.xlu0 %3296
        %v3300 = vadd.f32 %v3152, %v3295
        %v3301 = vadd.f32 %v3153, %v3297
        %s3302 = sld [smem:[#allocation6 + $0x82]]
        %v3303 = vstv %s3302
        %v3304 = vmul.f32 %v3303, %v364
        %v3305 = vmul.f32 %v3303, %v365
        %v3306 = vmul.f32 %v3303, %v366
        %v3310 = vrot.slane %v3304, 1
        %v3311 = vrot.slane %v3305, 1
        %v3312 = vsel %vm677, %v3310, %v3311
        %v3313 = vrot.slane %v3306, 1
        %v3314 = vsel %vm677, %v3311, %v3313
        %3315 = vrot.lane.b32.xlu0 %v3312, 127
        %v3316 = vpop.permute.xlu0 %3315
        %3317 = vrot.lane.b32.xlu0 %v3314, 127
        %v3318 = vpop.permute.xlu0 %3317
        %v3321 = vadd.f32 %v3169, %v3316
        %v3322 = vadd.f32 %v3170, %v3318
        %s3323 = sld [smem:[#allocation6 + $0xa6]]
        %v3324 = vstv %s3323
        %v3325 = vmul.f32 %v3324, %v364
        %v3326 = vmul.f32 %v3324, %v365
        %v3327 = vmul.f32 %v3324, %v366
        %v3331 = vrot.slane %v3325, 1
        %v3332 = vrot.slane %v3326, 1
        %v3333 = vsel %vm677, %v3331, %v3332
        %v3334 = vrot.slane %v3327, 1
        %v3335 = vsel %vm677, %v3332, %v3334
        %3336 = vrot.lane.b32.xlu0 %v3333, 127
        %v3337 = vpop.permute.xlu0 %3336
        %3338 = vrot.lane.b32.xlu0 %v3335, 127
        %v3339 = vpop.permute.xlu0 %3338
        %v3342 = vadd.f32 %v3186, %v3337
        %v3343 = vadd.f32 %v3187, %v3339
        %s3344 = sld [smem:[#allocation6 + $0xca]]
        %v3345 = vstv %s3344
        %v3346 = vmul.f32 %v3345, %v364
        %v3347 = vmul.f32 %v3345, %v365
        %v3348 = vmul.f32 %v3345, %v366
        %v3352 = vrot.slane %v3346, 1
        %v3353 = vrot.slane %v3347, 1
        %v3354 = vsel %vm677, %v3352, %v3353
        %v3355 = vrot.slane %v3348, 1
        %v3356 = vsel %vm677, %v3353, %v3355
        %3357 = vrot.lane.b32.xlu0 %v3354, 127
        %v3358 = vpop.permute.xlu0 %3357
        %3359 = vrot.lane.b32.xlu0 %v3356, 127
        %v3360 = vpop.permute.xlu0 %3359
        %v3363 = vadd.f32 %v3203, %v3358
        %v3364 = vadd.f32 %v3204, %v3360
        %s3365 = sld [smem:[#allocation6 + $0xee]]
        %v3366 = vstv %s3365
        %v3367 = vmul.f32 %v3366, %v364
        %v3368 = vmul.f32 %v3366, %v365
        %v3369 = vmul.f32 %v3366, %v366
        %v3373 = vrot.slane %v3367, 1
        %v3374 = vrot.slane %v3368, 1
        %v3375 = vsel %vm677, %v3373, %v3374
        %v3376 = vrot.slane %v3369, 1
        %v3377 = vsel %vm677, %v3374, %v3376
        %3378 = vrot.lane.b32.xlu0 %v3375, 127
        %v3379 = vpop.permute.xlu0 %3378
        %3380 = vrot.lane.b32.xlu0 %v3377, 127
        %v3381 = vpop.permute.xlu0 %3380
        %v3384 = vadd.f32 %v3220, %v3379
        %v3385 = vadd.f32 %v3221, %v3381
        %s3386 = sld [smem:[#allocation6 + $0x112]]
        %v3387 = vstv %s3386
        %v3388 = vmul.f32 %v3387, %v364
        %v3389 = vmul.f32 %v3387, %v365
        %v3390 = vmul.f32 %v3387, %v366
        %v3394 = vrot.slane %v3388, 1
        %v3395 = vrot.slane %v3389, 1
        %v3396 = vsel %vm677, %v3394, %v3395
        %v3397 = vrot.slane %v3390, 1
        %v3398 = vsel %vm677, %v3395, %v3397
        %3399 = vrot.lane.b32.xlu0 %v3396, 127
        %v3400 = vpop.permute.xlu0 %3399
        %3401 = vrot.lane.b32.xlu0 %v3398, 127
        %v3402 = vpop.permute.xlu0 %3401
        %v3405 = vadd.f32 %v3237, %v3400
        %v3406 = vadd.f32 %v3238, %v3402
        %s3407 = sld [smem:[#allocation6 + $0x17]]
        %v3408 = vstv %s3407
        %v3409 = vmul.f32 %v3408, %v364
        %v3410 = vmul.f32 %v3408, %v365
        %v3411 = vmul.f32 %v3408, %v366
        %v3415 = vrot.slane %v3409, 1
        %v3416 = vrot.slane %v3410, 1
        %v3417 = vsel %vm677, %v3415, %v3416
        %v3418 = vrot.slane %v3411, 1
        %v3419 = vsel %vm677, %v3416, %v3418
        %3420 = vrot.lane.b32.xlu0 %v3417, 126
        %v3421 = vpop.permute.xlu0 %3420
        %3422 = vrot.lane.b32.xlu0 %v3419, 126
        %v3423 = vpop.permute.xlu0 %3422
        %v3426 = vadd.f32 %v3258, %v3421
        %v3427 = vadd.f32 %v3259, %v3423
        %s3428 = sld [smem:[#allocation6 + $0x3b]]
        %v3429 = vstv %s3428
        %v3430 = vmul.f32 %v3429, %v364
        %v3431 = vmul.f32 %v3429, %v365
        %v3432 = vmul.f32 %v3429, %v366
        %v3436 = vrot.slane %v3430, 1
        %v3437 = vrot.slane %v3431, 1
        %v3438 = vsel %vm677, %v3436, %v3437
        %v3439 = vrot.slane %v3432, 1
        %v3440 = vsel %vm677, %v3437, %v3439
        %3441 = vrot.lane.b32.xlu0 %v3438, 126
        %v3442 = vpop.permute.xlu0 %3441
        %3443 = vrot.lane.b32.xlu0 %v3440, 126
        %v3444 = vpop.permute.xlu0 %3443
        %v3447 = vadd.f32 %v3279, %v3442
        %v3448 = vadd.f32 %v3280, %v3444
        %s3449 = sld [smem:[#allocation6 + $0x5f]]
        %v3450 = vstv %s3449
        %v3451 = vmul.f32 %v3450, %v364
        %v3452 = vmul.f32 %v3450, %v365
        %v3453 = vmul.f32 %v3450, %v366
        %v3457 = vrot.slane %v3451, 1
        %v3458 = vrot.slane %v3452, 1
        %v3459 = vsel %vm677, %v3457, %v3458
        %v3460 = vrot.slane %v3453, 1
        %v3461 = vsel %vm677, %v3458, %v3460
        %3462 = vrot.lane.b32.xlu0 %v3459, 126
        %v3463 = vpop.permute.xlu0 %3462
        %3464 = vrot.lane.b32.xlu0 %v3461, 126
        %v3465 = vpop.permute.xlu0 %3464
        %v3468 = vadd.f32 %v3300, %v3463
        %v3469 = vadd.f32 %v3301, %v3465
        %s3470 = sld [smem:[#allocation6 + $0x83]]
        %v3471 = vstv %s3470
        %v3472 = vmul.f32 %v3471, %v364
        %v3473 = vmul.f32 %v3471, %v365
        %v3474 = vmul.f32 %v3471, %v366
        %v3478 = vrot.slane %v3472, 1
        %v3479 = vrot.slane %v3473, 1
        %v3480 = vsel %vm677, %v3478, %v3479
        %v3481 = vrot.slane %v3474, 1
        %v3482 = vsel %vm677, %v3479, %v3481
        %3483 = vrot.lane.b32.xlu0 %v3480, 126
        %v3484 = vpop.permute.xlu0 %3483
        %3485 = vrot.lane.b32.xlu0 %v3482, 126
        %v3486 = vpop.permute.xlu0 %3485
        %v3489 = vadd.f32 %v3321, %v3484
        %v3490 = vadd.f32 %v3322, %v3486
        %s3491 = sld [smem:[#allocation6 + $0xa7]]
        %v3492 = vstv %s3491
        %v3493 = vmul.f32 %v3492, %v364
        %v3494 = vmul.f32 %v3492, %v365
        %v3495 = vmul.f32 %v3492, %v366
        %v3499 = vrot.slane %v3493, 1
        %v3500 = vrot.slane %v3494, 1
        %v3501 = vsel %vm677, %v3499, %v3500
        %v3502 = vrot.slane %v3495, 1
        %v3503 = vsel %vm677, %v3500, %v3502
        %3504 = vrot.lane.b32.xlu0 %v3501, 126
        %v3505 = vpop.permute.xlu0 %3504
        %3506 = vrot.lane.b32.xlu0 %v3503, 126
        %v3507 = vpop.permute.xlu0 %3506
        %v3510 = vadd.f32 %v3342, %v3505
        %v3511 = vadd.f32 %v3343, %v3507
        %s3512 = sld [smem:[#allocation6 + $0xcb]]
        %v3513 = vstv %s3512
        %v3514 = vmul.f32 %v3513, %v364
        %v3515 = vmul.f32 %v3513, %v365
        %v3516 = vmul.f32 %v3513, %v366
        %v3520 = vrot.slane %v3514, 1
        %v3521 = vrot.slane %v3515, 1
        %v3522 = vsel %vm677, %v3520, %v3521
        %v3523 = vrot.slane %v3516, 1
        %v3524 = vsel %vm677, %v3521, %v3523
        %3525 = vrot.lane.b32.xlu0 %v3522, 126
        %v3526 = vpop.permute.xlu0 %3525
        %3527 = vrot.lane.b32.xlu0 %v3524, 126
        %v3528 = vpop.permute.xlu0 %3527
        %v3531 = vadd.f32 %v3363, %v3526
        %v3532 = vadd.f32 %v3364, %v3528
        %s3533 = sld [smem:[#allocation6 + $0xef]]
        %v3534 = vstv %s3533
        %v3535 = vmul.f32 %v3534, %v364
        %v3536 = vmul.f32 %v3534, %v365
        %v3537 = vmul.f32 %v3534, %v366
        %v3541 = vrot.slane %v3535, 1
        %v3542 = vrot.slane %v3536, 1
        %v3543 = vsel %vm677, %v3541, %v3542
        %v3544 = vrot.slane %v3537, 1
        %v3545 = vsel %vm677, %v3542, %v3544
        %3546 = vrot.lane.b32.xlu0 %v3543, 126
        %v3547 = vpop.permute.xlu0 %3546
        %3548 = vrot.lane.b32.xlu0 %v3545, 126
        %v3549 = vpop.permute.xlu0 %3548
        %v3552 = vadd.f32 %v3384, %v3547
        %v3553 = vadd.f32 %v3385, %v3549
        %s3554 = sld [smem:[#allocation6 + $0x113]]
        %v3555 = vstv %s3554
        %v3556 = vmul.f32 %v3555, %v364
        %v3557 = vmul.f32 %v3555, %v365
        %v3558 = vmul.f32 %v3555, %v366
        %v3562 = vrot.slane %v3556, 1
        %v3563 = vrot.slane %v3557, 1
        %v3564 = vsel %vm677, %v3562, %v3563
        %v3565 = vrot.slane %v3558, 1
        %v3566 = vsel %vm677, %v3563, %v3565
        %3567 = vrot.lane.b32.xlu0 %v3564, 126
        %v3568 = vpop.permute.xlu0 %3567
        %3569 = vrot.lane.b32.xlu0 %v3566, 126
        %v3570 = vpop.permute.xlu0 %3569
        %v3573 = vadd.f32 %v3405, %v3568
        %v3574 = vadd.f32 %v3406, %v3570
        %s3575 = sld [smem:[#allocation6 + $0x18]]
        %v3576 = vstv %s3575
        %v3577 = vmul.f32 %v3576, %v364
        %v3578 = vmul.f32 %v3576, %v365
        %v3579 = vmul.f32 %v3576, %v366
        %v3583 = vrot.slane %v3577, 2
        %v3584 = vrot.slane %v3578, 2
        %v3585 = vsel %vm1150, %v3583, %v3584
        %v3586 = vrot.slane %v3579, 2
        %v3587 = vsel %vm1150, %v3584, %v3586
        %v3590 = vadd.f32 %v3426, %v3585
        %v3591 = vadd.f32 %v3427, %v3587
        %s3592 = sld [smem:[#allocation6 + $0x3c]]
        %v3593 = vstv %s3592
        %v3594 = vmul.f32 %v3593, %v364
        %v3595 = vmul.f32 %v3593, %v365
        %v3596 = vmul.f32 %v3593, %v366
        %v3600 = vrot.slane %v3594, 2
        %v3601 = vrot.slane %v3595, 2
        %v3602 = vsel %vm1150, %v3600, %v3601
        %v3603 = vrot.slane %v3596, 2
        %v3604 = vsel %vm1150, %v3601, %v3603
        %v3607 = vadd.f32 %v3447, %v3602
        %v3608 = vadd.f32 %v3448, %v3604
        %s3609 = sld [smem:[#allocation6 + $0x60]]
        %v3610 = vstv %s3609
        %v3611 = vmul.f32 %v3610, %v364
        %v3612 = vmul.f32 %v3610, %v365
        %v3613 = vmul.f32 %v3610, %v366
        %v3617 = vrot.slane %v3611, 2
        %v3618 = vrot.slane %v3612, 2
        %v3619 = vsel %vm1150, %v3617, %v3618
        %v3620 = vrot.slane %v3613, 2
        %v3621 = vsel %vm1150, %v3618, %v3620
        %v3624 = vadd.f32 %v3468, %v3619
        %v3625 = vadd.f32 %v3469, %v3621
        %s3626 = sld [smem:[#allocation6 + $0x84]]
        %v3627 = vstv %s3626
        %v3628 = vmul.f32 %v3627, %v364
        %v3629 = vmul.f32 %v3627, %v365
        %v3630 = vmul.f32 %v3627, %v366
        %v3634 = vrot.slane %v3628, 2
        %v3635 = vrot.slane %v3629, 2
        %v3636 = vsel %vm1150, %v3634, %v3635
        %v3637 = vrot.slane %v3630, 2
        %v3638 = vsel %vm1150, %v3635, %v3637
        %v3641 = vadd.f32 %v3489, %v3636
        %v3642 = vadd.f32 %v3490, %v3638
        %s3643 = sld [smem:[#allocation6 + $0xa8]]
        %v3644 = vstv %s3643
        %v3645 = vmul.f32 %v3644, %v364
        %v3646 = vmul.f32 %v3644, %v365
        %v3647 = vmul.f32 %v3644, %v366
        %v3651 = vrot.slane %v3645, 2
        %v3652 = vrot.slane %v3646, 2
        %v3653 = vsel %vm1150, %v3651, %v3652
        %v3654 = vrot.slane %v3647, 2
        %v3655 = vsel %vm1150, %v3652, %v3654
        %v3658 = vadd.f32 %v3510, %v3653
        %v3659 = vadd.f32 %v3511, %v3655
        %s3660 = sld [smem:[#allocation6 + $0xcc]]
        %v3661 = vstv %s3660
        %v3662 = vmul.f32 %v3661, %v364
        %v3663 = vmul.f32 %v3661, %v365
        %v3664 = vmul.f32 %v3661, %v366
        %v3668 = vrot.slane %v3662, 2
        %v3669 = vrot.slane %v3663, 2
        %v3670 = vsel %vm1150, %v3668, %v3669
        %v3671 = vrot.slane %v3664, 2
        %v3672 = vsel %vm1150, %v3669, %v3671
        %v3675 = vadd.f32 %v3531, %v3670
        %v3676 = vadd.f32 %v3532, %v3672
        %s3677 = sld [smem:[#allocation6 + $0xf0]]
        %v3678 = vstv %s3677
        %v3679 = vmul.f32 %v3678, %v364
        %v3680 = vmul.f32 %v3678, %v365
        %v3681 = vmul.f32 %v3678, %v366
        %v3685 = vrot.slane %v3679, 2
        %v3686 = vrot.slane %v3680, 2
        %v3687 = vsel %vm1150, %v3685, %v3686
        %v3688 = vrot.slane %v3681, 2
        %v3689 = vsel %vm1150, %v3686, %v3688
        %v3692 = vadd.f32 %v3552, %v3687
        %v3693 = vadd.f32 %v3553, %v3689
        %s3694 = sld [smem:[#allocation6 + $0x114]]
        %v3695 = vstv %s3694
        %v3696 = vmul.f32 %v3695, %v364
        %v3697 = vmul.f32 %v3695, %v365
        %v3698 = vmul.f32 %v3695, %v366
        %v3702 = vrot.slane %v3696, 2
        %v3703 = vrot.slane %v3697, 2
        %v3704 = vsel %vm1150, %v3702, %v3703
        %v3705 = vrot.slane %v3698, 2
        %v3706 = vsel %vm1150, %v3703, %v3705
        %v3709 = vadd.f32 %v3573, %v3704
        %v3710 = vadd.f32 %v3574, %v3706
        %s3711 = sld [smem:[#allocation6 + $0x19]]
        %v3712 = vstv %s3711
        %v3713 = vmul.f32 %v3712, %v364
        %v3714 = vmul.f32 %v3712, %v365
        %v3715 = vmul.f32 %v3712, %v366
        %v3719 = vrot.slane %v3713, 2
        %v3720 = vrot.slane %v3714, 2
        %v3721 = vsel %vm1150, %v3719, %v3720
        %v3722 = vrot.slane %v3715, 2
        %v3723 = vsel %vm1150, %v3720, %v3722
        %3724 = vrot.lane.b32.xlu0 %v3721, 127
        %v3725 = vpop.permute.xlu0 %3724
        %3726 = vrot.lane.b32.xlu0 %v3723, 127
        %v3727 = vpop.permute.xlu0 %3726
        %v3730 = vadd.f32 %v3590, %v3725
        %v3731 = vadd.f32 %v3591, %v3727
        %s3732 = sld [smem:[#allocation6 + $0x3d]]
        %v3733 = vstv %s3732
        %v3734 = vmul.f32 %v3733, %v364
        %v3735 = vmul.f32 %v3733, %v365
        %v3736 = vmul.f32 %v3733, %v366
        %v3740 = vrot.slane %v3734, 2
        %v3741 = vrot.slane %v3735, 2
        %v3742 = vsel %vm1150, %v3740, %v3741
        %v3743 = vrot.slane %v3736, 2
        %v3744 = vsel %vm1150, %v3741, %v3743
        %3745 = vrot.lane.b32.xlu0 %v3742, 127
        %v3746 = vpop.permute.xlu0 %3745
        %3747 = vrot.lane.b32.xlu0 %v3744, 127
        %v3748 = vpop.permute.xlu0 %3747
        %v3751 = vadd.f32 %v3607, %v3746
        %v3752 = vadd.f32 %v3608, %v3748
        %s3753 = sld [smem:[#allocation6 + $0x61]]
        %v3754 = vstv %s3753
        %v3755 = vmul.f32 %v3754, %v364
        %v3756 = vmul.f32 %v3754, %v365
        %v3757 = vmul.f32 %v3754, %v366
        %v3761 = vrot.slane %v3755, 2
        %v3762 = vrot.slane %v3756, 2
        %v3763 = vsel %vm1150, %v3761, %v3762
        %v3764 = vrot.slane %v3757, 2
        %v3765 = vsel %vm1150, %v3762, %v3764
        %3766 = vrot.lane.b32.xlu0 %v3763, 127
        %v3767 = vpop.permute.xlu0 %3766
        %3768 = vrot.lane.b32.xlu0 %v3765, 127
        %v3769 = vpop.permute.xlu0 %3768
        %v3772 = vadd.f32 %v3624, %v3767
        %v3773 = vadd.f32 %v3625, %v3769
        %s3774 = sld [smem:[#allocation6 + $0x85]]
        %v3775 = vstv %s3774
        %v3776 = vmul.f32 %v3775, %v364
        %v3777 = vmul.f32 %v3775, %v365
        %v3778 = vmul.f32 %v3775, %v366
        %v3782 = vrot.slane %v3776, 2
        %v3783 = vrot.slane %v3777, 2
        %v3784 = vsel %vm1150, %v3782, %v3783
        %v3785 = vrot.slane %v3778, 2
        %v3786 = vsel %vm1150, %v3783, %v3785
        %3787 = vrot.lane.b32.xlu0 %v3784, 127
        %v3788 = vpop.permute.xlu0 %3787
        %3789 = vrot.lane.b32.xlu0 %v3786, 127
        %v3790 = vpop.permute.xlu0 %3789
        %v3793 = vadd.f32 %v3641, %v3788
        %v3794 = vadd.f32 %v3642, %v3790
        %s3795 = sld [smem:[#allocation6 + $0xa9]]
        %v3796 = vstv %s3795
        %v3797 = vmul.f32 %v3796, %v364
        %v3798 = vmul.f32 %v3796, %v365
        %v3799 = vmul.f32 %v3796, %v366
        %v3803 = vrot.slane %v3797, 2
        %v3804 = vrot.slane %v3798, 2
        %v3805 = vsel %vm1150, %v3803, %v3804
        %v3806 = vrot.slane %v3799, 2
        %v3807 = vsel %vm1150, %v3804, %v3806
        %3808 = vrot.lane.b32.xlu0 %v3805, 127
        %v3809 = vpop.permute.xlu0 %3808
        %3810 = vrot.lane.b32.xlu0 %v3807, 127
        %v3811 = vpop.permute.xlu0 %3810
        %v3814 = vadd.f32 %v3658, %v3809
        %v3815 = vadd.f32 %v3659, %v3811
        %s3816 = sld [smem:[#allocation6 + $0xcd]]
        %v3817 = vstv %s3816
        %v3818 = vmul.f32 %v3817, %v364
        %v3819 = vmul.f32 %v3817, %v365
        %v3820 = vmul.f32 %v3817, %v366
        %v3824 = vrot.slane %v3818, 2
        %v3825 = vrot.slane %v3819, 2
        %v3826 = vsel %vm1150, %v3824, %v3825
        %v3827 = vrot.slane %v3820, 2
        %v3828 = vsel %vm1150, %v3825, %v3827
        %3829 = vrot.lane.b32.xlu0 %v3826, 127
        %v3830 = vpop.permute.xlu0 %3829
        %3831 = vrot.lane.b32.xlu0 %v3828, 127
        %v3832 = vpop.permute.xlu0 %3831
        %v3835 = vadd.f32 %v3675, %v3830
        %v3836 = vadd.f32 %v3676, %v3832
        %s3837 = sld [smem:[#allocation6 + $0xf1]]
        %v3838 = vstv %s3837
        %v3839 = vmul.f32 %v3838, %v364
        %v3840 = vmul.f32 %v3838, %v365
        %v3841 = vmul.f32 %v3838, %v366
        %v3845 = vrot.slane %v3839, 2
        %v3846 = vrot.slane %v3840, 2
        %v3847 = vsel %vm1150, %v3845, %v3846
        %v3848 = vrot.slane %v3841, 2
        %v3849 = vsel %vm1150, %v3846, %v3848
        %3850 = vrot.lane.b32.xlu0 %v3847, 127
        %v3851 = vpop.permute.xlu0 %3850
        %3852 = vrot.lane.b32.xlu0 %v3849, 127
        %v3853 = vpop.permute.xlu0 %3852
        %v3856 = vadd.f32 %v3692, %v3851
        %v3857 = vadd.f32 %v3693, %v3853
        %s3858 = sld [smem:[#allocation6 + $0x115]]
        %v3859 = vstv %s3858
        %v3860 = vmul.f32 %v3859, %v364
        %v3861 = vmul.f32 %v3859, %v365
        %v3862 = vmul.f32 %v3859, %v366
        %v3866 = vrot.slane %v3860, 2
        %v3867 = vrot.slane %v3861, 2
        %v3868 = vsel %vm1150, %v3866, %v3867
        %v3869 = vrot.slane %v3862, 2
        %v3870 = vsel %vm1150, %v3867, %v3869
        %3871 = vrot.lane.b32.xlu0 %v3868, 127
        %v3872 = vpop.permute.xlu0 %3871
        %3873 = vrot.lane.b32.xlu0 %v3870, 127
        %v3874 = vpop.permute.xlu0 %3873
        %v3877 = vadd.f32 %v3709, %v3872
        %v3878 = vadd.f32 %v3710, %v3874
        %s3879 = sld [smem:[#allocation6 + $0x1a]]
        %v3880 = vstv %s3879
        %v3881 = vmul.f32 %v3880, %v364
        %v3882 = vmul.f32 %v3880, %v365
        %v3883 = vmul.f32 %v3880, %v366
        %v3887 = vrot.slane %v3881, 2
        %v3888 = vrot.slane %v3882, 2
        %v3889 = vsel %vm1150, %v3887, %v3888
        %v3890 = vrot.slane %v3883, 2
        %v3891 = vsel %vm1150, %v3888, %v3890
        %3892 = vrot.lane.b32.xlu0 %v3889, 126
        %v3893 = vpop.permute.xlu0 %3892
        %3894 = vrot.lane.b32.xlu0 %v3891, 126
        %v3895 = vpop.permute.xlu0 %3894
        %v3898 = vadd.f32 %v3730, %v3893
        %v3899 = vadd.f32 %v3731, %v3895
        %s3900 = sld [smem:[#allocation6 + $0x3e]]
        %v3901 = vstv %s3900
        %v3902 = vmul.f32 %v3901, %v364
        %v3903 = vmul.f32 %v3901, %v365
        %v3904 = vmul.f32 %v3901, %v366
        %v3908 = vrot.slane %v3902, 2
        %v3909 = vrot.slane %v3903, 2
        %v3910 = vsel %vm1150, %v3908, %v3909
        %v3911 = vrot.slane %v3904, 2
        %v3912 = vsel %vm1150, %v3909, %v3911
        %3913 = vrot.lane.b32.xlu0 %v3910, 126
        %v3914 = vpop.permute.xlu0 %3913
        %3915 = vrot.lane.b32.xlu0 %v3912, 126
        %v3916 = vpop.permute.xlu0 %3915
        %v3919 = vadd.f32 %v3751, %v3914
        %v3920 = vadd.f32 %v3752, %v3916
        %s3921 = sld [smem:[#allocation6 + $0x62]]
        %v3922 = vstv %s3921
        %v3923 = vmul.f32 %v3922, %v364
        %v3924 = vmul.f32 %v3922, %v365
        %v3925 = vmul.f32 %v3922, %v366
        %v3929 = vrot.slane %v3923, 2
        %v3930 = vrot.slane %v3924, 2
        %v3931 = vsel %vm1150, %v3929, %v3930
        %v3932 = vrot.slane %v3925, 2
        %v3933 = vsel %vm1150, %v3930, %v3932
        %3934 = vrot.lane.b32.xlu0 %v3931, 126
        %v3935 = vpop.permute.xlu0 %3934
        %3936 = vrot.lane.b32.xlu0 %v3933, 126
        %v3937 = vpop.permute.xlu0 %3936
        %v3940 = vadd.f32 %v3772, %v3935
        %v3941 = vadd.f32 %v3773, %v3937
        %s3942 = sld [smem:[#allocation6 + $0x86]]
        %v3943 = vstv %s3942
        %v3944 = vmul.f32 %v3943, %v364
        %v3945 = vmul.f32 %v3943, %v365
        %v3946 = vmul.f32 %v3943, %v366
        %v3950 = vrot.slane %v3944, 2
        %v3951 = vrot.slane %v3945, 2
        %v3952 = vsel %vm1150, %v3950, %v3951
        %v3953 = vrot.slane %v3946, 2
        %v3954 = vsel %vm1150, %v3951, %v3953
        %3955 = vrot.lane.b32.xlu0 %v3952, 126
        %v3956 = vpop.permute.xlu0 %3955
        %3957 = vrot.lane.b32.xlu0 %v3954, 126
        %v3958 = vpop.permute.xlu0 %3957
        %v3961 = vadd.f32 %v3793, %v3956
        %v3962 = vadd.f32 %v3794, %v3958
        %s3963 = sld [smem:[#allocation6 + $0xaa]]
        %v3964 = vstv %s3963
        %v3965 = vmul.f32 %v3964, %v364
        %v3966 = vmul.f32 %v3964, %v365
        %v3967 = vmul.f32 %v3964, %v366
        %v3971 = vrot.slane %v3965, 2
        %v3972 = vrot.slane %v3966, 2
        %v3973 = vsel %vm1150, %v3971, %v3972
        %v3974 = vrot.slane %v3967, 2
        %v3975 = vsel %vm1150, %v3972, %v3974
        %3976 = vrot.lane.b32.xlu0 %v3973, 126
        %v3977 = vpop.permute.xlu0 %3976
        %3978 = vrot.lane.b32.xlu0 %v3975, 126
        %v3979 = vpop.permute.xlu0 %3978
        %v3982 = vadd.f32 %v3814, %v3977
        %v3983 = vadd.f32 %v3815, %v3979
        %s3984 = sld [smem:[#allocation6 + $0xce]]
        %v3985 = vstv %s3984
        %v3986 = vmul.f32 %v3985, %v364
        %v3987 = vmul.f32 %v3985, %v365
        %v3988 = vmul.f32 %v3985, %v366
        %v3992 = vrot.slane %v3986, 2
        %v3993 = vrot.slane %v3987, 2
        %v3994 = vsel %vm1150, %v3992, %v3993
        %v3995 = vrot.slane %v3988, 2
        %v3996 = vsel %vm1150, %v3993, %v3995
        %3997 = vrot.lane.b32.xlu0 %v3994, 126
        %v3998 = vpop.permute.xlu0 %3997
        %3999 = vrot.lane.b32.xlu0 %v3996, 126
        %v4000 = vpop.permute.xlu0 %3999
        %v4003 = vadd.f32 %v3835, %v3998
        %v4004 = vadd.f32 %v3836, %v4000
        %s4005 = sld [smem:[#allocation6 + $0xf2]]
        %v4006 = vstv %s4005
        %v4007 = vmul.f32 %v4006, %v364
        %v4008 = vmul.f32 %v4006, %v365
        %v4009 = vmul.f32 %v4006, %v366
        %v4013 = vrot.slane %v4007, 2
        %v4014 = vrot.slane %v4008, 2
        %v4015 = vsel %vm1150, %v4013, %v4014
        %v4016 = vrot.slane %v4009, 2
        %v4017 = vsel %vm1150, %v4014, %v4016
        %4018 = vrot.lane.b32.xlu0 %v4015, 126
        %v4019 = vpop.permute.xlu0 %4018
        %4020 = vrot.lane.b32.xlu0 %v4017, 126
        %v4021 = vpop.permute.xlu0 %4020
        %v4024 = vadd.f32 %v3856, %v4019
        %v4025 = vadd.f32 %v3857, %v4021
        %s4026 = sld [smem:[#allocation6 + $0x116]]
        %v4027 = vstv %s4026
        %v4028 = vmul.f32 %v4027, %v364
        %v4029 = vmul.f32 %v4027, %v365
        %v4030 = vmul.f32 %v4027, %v366
        %v4034 = vrot.slane %v4028, 2
        %v4035 = vrot.slane %v4029, 2
        %v4036 = vsel %vm1150, %v4034, %v4035
        %v4037 = vrot.slane %v4030, 2
        %v4038 = vsel %vm1150, %v4035, %v4037
        %4039 = vrot.lane.b32.xlu0 %v4036, 126
        %v4040 = vpop.permute.xlu0 %4039
        %4041 = vrot.lane.b32.xlu0 %v4038, 126
        %v4042 = vpop.permute.xlu0 %4041
        %v4045 = vadd.f32 %v3877, %v4040
        %v4046 = vadd.f32 %v3878, %v4042
        %s4047 = sld [smem:[#allocation6 + $0x1b]]
        %v4048 = vstv %s4047
        %v4049 = vmul.f32 %v4048, %v367
        %v4050 = vmul.f32 %v4048, %v368
        %v4051 = vadd.f32 %v3898, %v4049
        %v4052 = vadd.f32 %v3899, %v4050
        %s4053 = sld [smem:[#allocation6 + $0x3f]]
        %v4054 = vstv %s4053
        %v4055 = vmul.f32 %v4054, %v367
        %v4056 = vmul.f32 %v4054, %v368
        %v4057 = vadd.f32 %v3919, %v4055
        %v4058 = vadd.f32 %v3920, %v4056
        %s4059 = sld [smem:[#allocation6 + $0x63]]
        %v4060 = vstv %s4059
        %v4061 = vmul.f32 %v4060, %v367
        %v4062 = vmul.f32 %v4060, %v368
        %v4063 = vadd.f32 %v3940, %v4061
        %v4064 = vadd.f32 %v3941, %v4062
        %s4065 = sld [smem:[#allocation6 + $0x87]]
        %v4066 = vstv %s4065
        %v4067 = vmul.f32 %v4066, %v367
        %v4068 = vmul.f32 %v4066, %v368
        %v4069 = vadd.f32 %v3961, %v4067
        %v4070 = vadd.f32 %v3962, %v4068
        %s4071 = sld [smem:[#allocation6 + $0xab]]
        %v4072 = vstv %s4071
        %v4073 = vmul.f32 %v4072, %v367
        %v4074 = vmul.f32 %v4072, %v368
        %v4075 = vadd.f32 %v3982, %v4073
        %v4076 = vadd.f32 %v3983, %v4074
        %s4077 = sld [smem:[#allocation6 + $0xcf]]
        %v4078 = vstv %s4077
        %v4079 = vmul.f32 %v4078, %v367
        %v4080 = vmul.f32 %v4078, %v368
        %v4081 = vadd.f32 %v4003, %v4079
        %v4082 = vadd.f32 %v4004, %v4080
        %s4083 = sld [smem:[#allocation6 + $0xf3]]
        %v4084 = vstv %s4083
        %v4085 = vmul.f32 %v4084, %v367
        %v4086 = vmul.f32 %v4084, %v368
        %v4087 = vadd.f32 %v4024, %v4085
        %v4088 = vadd.f32 %v4025, %v4086
        %s4089 = sld [smem:[#allocation6 + $0x117]]
        %v4090 = vstv %s4089
        %v4091 = vmul.f32 %v4090, %v367
        %v4092 = vmul.f32 %v4090, %v368
        %v4093 = vadd.f32 %v4045, %v4091
        %v4094 = vadd.f32 %v4046, %v4092
        %s4095 = sld [smem:[#allocation6 + $0x1c]]
        %v4096 = vstv %s4095
        %v4097 = vmul.f32 %v4096, %v367
        %v4098 = vmul.f32 %v4096, %v368
        %4101 = vrot.lane.b32.xlu0 %v4097, 127
        %v4102 = vpop.permute.xlu0 %4101
        %4103 = vrot.lane.b32.xlu0 %v4098, 127
        %v4104 = vpop.permute.xlu0 %4103
        %v4107 = vadd.f32 %v4051, %v4102
        %v4108 = vadd.f32 %v4052, %v4104
        %s4109 = sld [smem:[#allocation6 + $0x40]]
        %v4110 = vstv %s4109
        %v4111 = vmul.f32 %v4110, %v367
        %v4112 = vmul.f32 %v4110, %v368
        %4115 = vrot.lane.b32.xlu0 %v4111, 127
        %v4116 = vpop.permute.xlu0 %4115
        %4117 = vrot.lane.b32.xlu0 %v4112, 127
        %v4118 = vpop.permute.xlu0 %4117
        %v4121 = vadd.f32 %v4057, %v4116
        %v4122 = vadd.f32 %v4058, %v4118
        %s4123 = sld [smem:[#allocation6 + $0x64]]
        %v4124 = vstv %s4123
        %v4125 = vmul.f32 %v4124, %v367
        %v4126 = vmul.f32 %v4124, %v368
        %4129 = vrot.lane.b32.xlu0 %v4125, 127
        %v4130 = vpop.permute.xlu0 %4129
        %4131 = vrot.lane.b32.xlu0 %v4126, 127
        %v4132 = vpop.permute.xlu0 %4131
        %v4135 = vadd.f32 %v4063, %v4130
        %v4136 = vadd.f32 %v4064, %v4132
        %s4137 = sld [smem:[#allocation6 + $0x88]]
        %v4138 = vstv %s4137
        %v4139 = vmul.f32 %v4138, %v367
        %v4140 = vmul.f32 %v4138, %v368
        %4143 = vrot.lane.b32.xlu0 %v4139, 127
        %v4144 = vpop.permute.xlu0 %4143
        %4145 = vrot.lane.b32.xlu0 %v4140, 127
        %v4146 = vpop.permute.xlu0 %4145
        %v4149 = vadd.f32 %v4069, %v4144
        %v4150 = vadd.f32 %v4070, %v4146
        %s4151 = sld [smem:[#allocation6 + $0xac]]
        %v4152 = vstv %s4151
        %v4153 = vmul.f32 %v4152, %v367
        %v4154 = vmul.f32 %v4152, %v368
        %4157 = vrot.lane.b32.xlu0 %v4153, 127
        %v4158 = vpop.permute.xlu0 %4157
        %4159 = vrot.lane.b32.xlu0 %v4154, 127
        %v4160 = vpop.permute.xlu0 %4159
        %v4163 = vadd.f32 %v4075, %v4158
        %v4164 = vadd.f32 %v4076, %v4160
        %s4165 = sld [smem:[#allocation6 + $0xd0]]
        %v4166 = vstv %s4165
        %v4167 = vmul.f32 %v4166, %v367
        %v4168 = vmul.f32 %v4166, %v368
        %4171 = vrot.lane.b32.xlu0 %v4167, 127
        %v4172 = vpop.permute.xlu0 %4171
        %4173 = vrot.lane.b32.xlu0 %v4168, 127
        %v4174 = vpop.permute.xlu0 %4173
        %v4177 = vadd.f32 %v4081, %v4172
        %v4178 = vadd.f32 %v4082, %v4174
        %s4179 = sld [smem:[#allocation6 + $0xf4]]
        %v4180 = vstv %s4179
        %v4181 = vmul.f32 %v4180, %v367
        %v4182 = vmul.f32 %v4180, %v368
        %4185 = vrot.lane.b32.xlu0 %v4181, 127
        %v4186 = vpop.permute.xlu0 %4185
        %4187 = vrot.lane.b32.xlu0 %v4182, 127
        %v4188 = vpop.permute.xlu0 %4187
        %v4191 = vadd.f32 %v4087, %v4186
        %v4192 = vadd.f32 %v4088, %v4188
        %s4193 = sld [smem:[#allocation6 + $0x118]]
        %v4194 = vstv %s4193
        %v4195 = vmul.f32 %v4194, %v367
        %v4196 = vmul.f32 %v4194, %v368
        %4199 = vrot.lane.b32.xlu0 %v4195, 127
        %v4200 = vpop.permute.xlu0 %4199
        %4201 = vrot.lane.b32.xlu0 %v4196, 127
        %v4202 = vpop.permute.xlu0 %4201
        %v4205 = vadd.f32 %v4093, %v4200
        %v4206 = vadd.f32 %v4094, %v4202
        %s4207 = sld [smem:[#allocation6 + $0x1d]]
        %v4208 = vstv %s4207
        %v4209 = vmul.f32 %v4208, %v367
        %v4210 = vmul.f32 %v4208, %v368
        %4213 = vrot.lane.b32.xlu0 %v4209, 126
        %v4214 = vpop.permute.xlu0 %4213
        %4215 = vrot.lane.b32.xlu0 %v4210, 126
        %v4216 = vpop.permute.xlu0 %4215
        %v4219 = vadd.f32 %v4107, %v4214
        %v4220 = vadd.f32 %v4108, %v4216
        %s4221 = sld [smem:[#allocation6 + $0x41]]
        %v4222 = vstv %s4221
        %v4223 = vmul.f32 %v4222, %v367
        %v4224 = vmul.f32 %v4222, %v368
        %4227 = vrot.lane.b32.xlu0 %v4223, 126
        %v4228 = vpop.permute.xlu0 %4227
        %4229 = vrot.lane.b32.xlu0 %v4224, 126
        %v4230 = vpop.permute.xlu0 %4229
        %v4233 = vadd.f32 %v4121, %v4228
        %v4234 = vadd.f32 %v4122, %v4230
        %s4235 = sld [smem:[#allocation6 + $0x65]]
        %v4236 = vstv %s4235
        %v4237 = vmul.f32 %v4236, %v367
        %v4238 = vmul.f32 %v4236, %v368
        %4241 = vrot.lane.b32.xlu0 %v4237, 126
        %v4242 = vpop.permute.xlu0 %4241
        %4243 = vrot.lane.b32.xlu0 %v4238, 126
        %v4244 = vpop.permute.xlu0 %4243
        %v4247 = vadd.f32 %v4135, %v4242
        %v4248 = vadd.f32 %v4136, %v4244
        %s4249 = sld [smem:[#allocation6 + $0x89]]
        %v4250 = vstv %s4249
        %v4251 = vmul.f32 %v4250, %v367
        %v4252 = vmul.f32 %v4250, %v368
        %4255 = vrot.lane.b32.xlu0 %v4251, 126
        %v4256 = vpop.permute.xlu0 %4255
        %4257 = vrot.lane.b32.xlu0 %v4252, 126
        %v4258 = vpop.permute.xlu0 %4257
        %v4261 = vadd.f32 %v4149, %v4256
        %v4262 = vadd.f32 %v4150, %v4258
        %s4263 = sld [smem:[#allocation6 + $0xad]]
        %v4264 = vstv %s4263
        %v4265 = vmul.f32 %v4264, %v367
        %v4266 = vmul.f32 %v4264, %v368
        %4269 = vrot.lane.b32.xlu0 %v4265, 126
        %v4270 = vpop.permute.xlu0 %4269
        %4271 = vrot.lane.b32.xlu0 %v4266, 126
        %v4272 = vpop.permute.xlu0 %4271
        %v4275 = vadd.f32 %v4163, %v4270
        %v4276 = vadd.f32 %v4164, %v4272
        %s4277 = sld [smem:[#allocation6 + $0xd1]]
        %v4278 = vstv %s4277
        %v4279 = vmul.f32 %v4278, %v367
        %v4280 = vmul.f32 %v4278, %v368
        %4283 = vrot.lane.b32.xlu0 %v4279, 126
        %v4284 = vpop.permute.xlu0 %4283
        %4285 = vrot.lane.b32.xlu0 %v4280, 126
        %v4286 = vpop.permute.xlu0 %4285
        %v4289 = vadd.f32 %v4177, %v4284
        %v4290 = vadd.f32 %v4178, %v4286
        %s4291 = sld [smem:[#allocation6 + $0xf5]]
        %v4292 = vstv %s4291
        %v4293 = vmul.f32 %v4292, %v367
        %v4294 = vmul.f32 %v4292, %v368
        %4297 = vrot.lane.b32.xlu0 %v4293, 126
        %v4298 = vpop.permute.xlu0 %4297
        %4299 = vrot.lane.b32.xlu0 %v4294, 126
        %v4300 = vpop.permute.xlu0 %4299
        %v4303 = vadd.f32 %v4191, %v4298
        %v4304 = vadd.f32 %v4192, %v4300
        %s4305 = sld [smem:[#allocation6 + $0x119]]
        %v4306 = vstv %s4305
        %v4307 = vmul.f32 %v4306, %v367
        %v4308 = vmul.f32 %v4306, %v368
        %4311 = vrot.lane.b32.xlu0 %v4307, 126
        %v4312 = vpop.permute.xlu0 %4311
        %4313 = vrot.lane.b32.xlu0 %v4308, 126
        %v4314 = vpop.permute.xlu0 %4313
        %v4317 = vadd.f32 %v4205, %v4312
        %v4318 = vadd.f32 %v4206, %v4314
        %s4319 = sld [smem:[#allocation6 + $0x1e]]
        %v4320 = vstv %s4319
        %v4321 = vmul.f32 %v4320, %v367
        %v4322 = vmul.f32 %v4320, %v368
        %v4323 = vmul.f32 %v4320, %v369
        %v4327 = vrot.slane %v4321, 1
        %v4328 = vrot.slane %v4322, 1
        %v4329 = vsel %vm677, %v4327, %v4328
        %v4330 = vrot.slane %v4323, 1
        %v4331 = vsel %vm677, %v4328, %v4330
        %v4334 = vadd.f32 %v4219, %v4329
        %v4335 = vadd.f32 %v4220, %v4331
        %s4336 = sld [smem:[#allocation6 + $0x42]]
        %v4337 = vstv %s4336
        %v4338 = vmul.f32 %v4337, %v367
        %v4339 = vmul.f32 %v4337, %v368
        %v4340 = vmul.f32 %v4337, %v369
        %v4344 = vrot.slane %v4338, 1
        %v4345 = vrot.slane %v4339, 1
        %v4346 = vsel %vm677, %v4344, %v4345
        %v4347 = vrot.slane %v4340, 1
        %v4348 = vsel %vm677, %v4345, %v4347
        %v4351 = vadd.f32 %v4233, %v4346
        %v4352 = vadd.f32 %v4234, %v4348
        %s4353 = sld [smem:[#allocation6 + $0x66]]
        %v4354 = vstv %s4353
        %v4355 = vmul.f32 %v4354, %v367
        %v4356 = vmul.f32 %v4354, %v368
        %v4357 = vmul.f32 %v4354, %v369
        %v4361 = vrot.slane %v4355, 1
        %v4362 = vrot.slane %v4356, 1
        %v4363 = vsel %vm677, %v4361, %v4362
        %v4364 = vrot.slane %v4357, 1
        %v4365 = vsel %vm677, %v4362, %v4364
        %v4368 = vadd.f32 %v4247, %v4363
        %v4369 = vadd.f32 %v4248, %v4365
        %s4370 = sld [smem:[#allocation6 + $0x8a]]
        %v4371 = vstv %s4370
        %v4372 = vmul.f32 %v4371, %v367
        %v4373 = vmul.f32 %v4371, %v368
        %v4374 = vmul.f32 %v4371, %v369
        %v4378 = vrot.slane %v4372, 1
        %v4379 = vrot.slane %v4373, 1
        %v4380 = vsel %vm677, %v4378, %v4379
        %v4381 = vrot.slane %v4374, 1
        %v4382 = vsel %vm677, %v4379, %v4381
        %v4385 = vadd.f32 %v4261, %v4380
        %v4386 = vadd.f32 %v4262, %v4382
        %s4387 = sld [smem:[#allocation6 + $0xae]]
        %v4388 = vstv %s4387
        %v4389 = vmul.f32 %v4388, %v367
        %v4390 = vmul.f32 %v4388, %v368
        %v4391 = vmul.f32 %v4388, %v369
        %v4395 = vrot.slane %v4389, 1
        %v4396 = vrot.slane %v4390, 1
        %v4397 = vsel %vm677, %v4395, %v4396
        %v4398 = vrot.slane %v4391, 1
        %v4399 = vsel %vm677, %v4396, %v4398
        %v4402 = vadd.f32 %v4275, %v4397
        %v4403 = vadd.f32 %v4276, %v4399
        %s4404 = sld [smem:[#allocation6 + $0xd2]]
        %v4405 = vstv %s4404
        %v4406 = vmul.f32 %v4405, %v367
        %v4407 = vmul.f32 %v4405, %v368
        %v4408 = vmul.f32 %v4405, %v369
        %v4412 = vrot.slane %v4406, 1
        %v4413 = vrot.slane %v4407, 1
        %v4414 = vsel %vm677, %v4412, %v4413
        %v4415 = vrot.slane %v4408, 1
        %v4416 = vsel %vm677, %v4413, %v4415
        %v4419 = vadd.f32 %v4289, %v4414
        %v4420 = vadd.f32 %v4290, %v4416
        %s4421 = sld [smem:[#allocation6 + $0xf6]]
        %v4422 = vstv %s4421
        %v4423 = vmul.f32 %v4422, %v367
        %v4424 = vmul.f32 %v4422, %v368
        %v4425 = vmul.f32 %v4422, %v369
        %v4429 = vrot.slane %v4423, 1
        %v4430 = vrot.slane %v4424, 1
        %v4431 = vsel %vm677, %v4429, %v4430
        %v4432 = vrot.slane %v4425, 1
        %v4433 = vsel %vm677, %v4430, %v4432
        %v4436 = vadd.f32 %v4303, %v4431
        %v4437 = vadd.f32 %v4304, %v4433
        %s4438 = sld [smem:[#allocation6 + $0x11a]]
        %v4439 = vstv %s4438
        %v4440 = vmul.f32 %v4439, %v367
        %v4441 = vmul.f32 %v4439, %v368
        %v4442 = vmul.f32 %v4439, %v369
        %v4446 = vrot.slane %v4440, 1
        %v4447 = vrot.slane %v4441, 1
        %v4448 = vsel %vm677, %v4446, %v4447
        %v4449 = vrot.slane %v4442, 1
        %v4450 = vsel %vm677, %v4447, %v4449
        %v4453 = vadd.f32 %v4317, %v4448
        %v4454 = vadd.f32 %v4318, %v4450
        %s4455 = sld [smem:[#allocation6 + $0x1f]]
        %v4456 = vstv %s4455
        %v4457 = vmul.f32 %v4456, %v367
        %v4458 = vmul.f32 %v4456, %v368
        %v4459 = vmul.f32 %v4456, %v369
        %v4463 = vrot.slane %v4457, 1
        %v4464 = vrot.slane %v4458, 1
        %v4465 = vsel %vm677, %v4463, %v4464
        %v4466 = vrot.slane %v4459, 1
        %v4467 = vsel %vm677, %v4464, %v4466
        %4468 = vrot.lane.b32.xlu0 %v4465, 127
        %v4469 = vpop.permute.xlu0 %4468
        %4470 = vrot.lane.b32.xlu0 %v4467, 127
        %v4471 = vpop.permute.xlu0 %4470
        %v4474 = vadd.f32 %v4334, %v4469
        %v4475 = vadd.f32 %v4335, %v4471
        %s4476 = sld [smem:[#allocation6 + $0x43]]
        %v4477 = vstv %s4476
        %v4478 = vmul.f32 %v4477, %v367
        %v4479 = vmul.f32 %v4477, %v368
        %v4480 = vmul.f32 %v4477, %v369
        %v4484 = vrot.slane %v4478, 1
        %v4485 = vrot.slane %v4479, 1
        %v4486 = vsel %vm677, %v4484, %v4485
        %v4487 = vrot.slane %v4480, 1
        %v4488 = vsel %vm677, %v4485, %v4487
        %4489 = vrot.lane.b32.xlu0 %v4486, 127
        %v4490 = vpop.permute.xlu0 %4489
        %4491 = vrot.lane.b32.xlu0 %v4488, 127
        %v4492 = vpop.permute.xlu0 %4491
        %v4495 = vadd.f32 %v4351, %v4490
        %v4496 = vadd.f32 %v4352, %v4492
        %s4497 = sld [smem:[#allocation6 + $0x67]]
        %v4498 = vstv %s4497
        %v4499 = vmul.f32 %v4498, %v367
        %v4500 = vmul.f32 %v4498, %v368
        %v4501 = vmul.f32 %v4498, %v369
        %v4505 = vrot.slane %v4499, 1
        %v4506 = vrot.slane %v4500, 1
        %v4507 = vsel %vm677, %v4505, %v4506
        %v4508 = vrot.slane %v4501, 1
        %v4509 = vsel %vm677, %v4506, %v4508
        %4510 = vrot.lane.b32.xlu0 %v4507, 127
        %v4511 = vpop.permute.xlu0 %4510
        %4512 = vrot.lane.b32.xlu0 %v4509, 127
        %v4513 = vpop.permute.xlu0 %4512
        %v4516 = vadd.f32 %v4368, %v4511
        %v4517 = vadd.f32 %v4369, %v4513
        %s4518 = sld [smem:[#allocation6 + $0x8b]]
        %v4519 = vstv %s4518
        %v4520 = vmul.f32 %v4519, %v367
        %v4521 = vmul.f32 %v4519, %v368
        %v4522 = vmul.f32 %v4519, %v369
        %v4526 = vrot.slane %v4520, 1
        %v4527 = vrot.slane %v4521, 1
        %v4528 = vsel %vm677, %v4526, %v4527
        %v4529 = vrot.slane %v4522, 1
        %v4530 = vsel %vm677, %v4527, %v4529
        %4531 = vrot.lane.b32.xlu0 %v4528, 127
        %v4532 = vpop.permute.xlu0 %4531
        %4533 = vrot.lane.b32.xlu0 %v4530, 127
        %v4534 = vpop.permute.xlu0 %4533
        %v4537 = vadd.f32 %v4385, %v4532
        %v4538 = vadd.f32 %v4386, %v4534
        %s4539 = sld [smem:[#allocation6 + $0xaf]]
        %v4540 = vstv %s4539
        %v4541 = vmul.f32 %v4540, %v367
        %v4542 = vmul.f32 %v4540, %v368
        %v4543 = vmul.f32 %v4540, %v369
        %v4547 = vrot.slane %v4541, 1
        %v4548 = vrot.slane %v4542, 1
        %v4549 = vsel %vm677, %v4547, %v4548
        %v4550 = vrot.slane %v4543, 1
        %v4551 = vsel %vm677, %v4548, %v4550
        %4552 = vrot.lane.b32.xlu0 %v4549, 127
        %v4553 = vpop.permute.xlu0 %4552
        %4554 = vrot.lane.b32.xlu0 %v4551, 127
        %v4555 = vpop.permute.xlu0 %4554
        %v4558 = vadd.f32 %v4402, %v4553
        %v4559 = vadd.f32 %v4403, %v4555
        %s4560 = sld [smem:[#allocation6 + $0xd3]]
        %v4561 = vstv %s4560
        %v4562 = vmul.f32 %v4561, %v367
        %v4563 = vmul.f32 %v4561, %v368
        %v4564 = vmul.f32 %v4561, %v369
        %v4568 = vrot.slane %v4562, 1
        %v4569 = vrot.slane %v4563, 1
        %v4570 = vsel %vm677, %v4568, %v4569
        %v4571 = vrot.slane %v4564, 1
        %v4572 = vsel %vm677, %v4569, %v4571
        %4573 = vrot.lane.b32.xlu0 %v4570, 127
        %v4574 = vpop.permute.xlu0 %4573
        %4575 = vrot.lane.b32.xlu0 %v4572, 127
        %v4576 = vpop.permute.xlu0 %4575
        %v4579 = vadd.f32 %v4419, %v4574
        %v4580 = vadd.f32 %v4420, %v4576
        %s4581 = sld [smem:[#allocation6 + $0xf7]]
        %v4582 = vstv %s4581
        %v4583 = vmul.f32 %v4582, %v367
        %v4584 = vmul.f32 %v4582, %v368
        %v4585 = vmul.f32 %v4582, %v369
        %v4589 = vrot.slane %v4583, 1
        %v4590 = vrot.slane %v4584, 1
        %v4591 = vsel %vm677, %v4589, %v4590
        %v4592 = vrot.slane %v4585, 1
        %v4593 = vsel %vm677, %v4590, %v4592
        %4594 = vrot.lane.b32.xlu0 %v4591, 127
        %v4595 = vpop.permute.xlu0 %4594
        %4596 = vrot.lane.b32.xlu0 %v4593, 127
        %v4597 = vpop.permute.xlu0 %4596
        %v4600 = vadd.f32 %v4436, %v4595
        %v4601 = vadd.f32 %v4437, %v4597
        %s4602 = sld [smem:[#allocation6 + $0x11b]]
        %v4603 = vstv %s4602
        %v4604 = vmul.f32 %v4603, %v367
        %v4605 = vmul.f32 %v4603, %v368
        %v4606 = vmul.f32 %v4603, %v369
        %v4610 = vrot.slane %v4604, 1
        %v4611 = vrot.slane %v4605, 1
        %v4612 = vsel %vm677, %v4610, %v4611
        %v4613 = vrot.slane %v4606, 1
        %v4614 = vsel %vm677, %v4611, %v4613
        %4615 = vrot.lane.b32.xlu0 %v4612, 127
        %v4616 = vpop.permute.xlu0 %4615
        %4617 = vrot.lane.b32.xlu0 %v4614, 127
        %v4618 = vpop.permute.xlu0 %4617
        %v4621 = vadd.f32 %v4453, %v4616
        %v4622 = vadd.f32 %v4454, %v4618
        %s4623 = sld [smem:[#allocation6 + $0x20]]
        %v4624 = vstv %s4623
        %v4625 = vmul.f32 %v4624, %v367
        %v4626 = vmul.f32 %v4624, %v368
        %v4627 = vmul.f32 %v4624, %v369
        %v4631 = vrot.slane %v4625, 1
        %v4632 = vrot.slane %v4626, 1
        %v4633 = vsel %vm677, %v4631, %v4632
        %v4634 = vrot.slane %v4627, 1
        %v4635 = vsel %vm677, %v4632, %v4634
        %4636 = vrot.lane.b32.xlu0 %v4633, 126
        %v4637 = vpop.permute.xlu0 %4636
        %4638 = vrot.lane.b32.xlu0 %v4635, 126
        %v4639 = vpop.permute.xlu0 %4638
        %v4642 = vadd.f32 %v4474, %v4637
        %v4643 = vadd.f32 %v4475, %v4639
        %s4644 = sld [smem:[#allocation6 + $0x44]]
        %v4645 = vstv %s4644
        %v4646 = vmul.f32 %v4645, %v367
        %v4647 = vmul.f32 %v4645, %v368
        %v4648 = vmul.f32 %v4645, %v369
        %v4652 = vrot.slane %v4646, 1
        %v4653 = vrot.slane %v4647, 1
        %v4654 = vsel %vm677, %v4652, %v4653
        %v4655 = vrot.slane %v4648, 1
        %v4656 = vsel %vm677, %v4653, %v4655
        %4657 = vrot.lane.b32.xlu0 %v4654, 126
        %v4658 = vpop.permute.xlu0 %4657
        %4659 = vrot.lane.b32.xlu0 %v4656, 126
        %v4660 = vpop.permute.xlu0 %4659
        %v4663 = vadd.f32 %v4495, %v4658
        %v4664 = vadd.f32 %v4496, %v4660
        %s4665 = sld [smem:[#allocation6 + $0x68]]
        %v4666 = vstv %s4665
        %v4667 = vmul.f32 %v4666, %v367
        %v4668 = vmul.f32 %v4666, %v368
        %v4669 = vmul.f32 %v4666, %v369
        %v4673 = vrot.slane %v4667, 1
        %v4674 = vrot.slane %v4668, 1
        %v4675 = vsel %vm677, %v4673, %v4674
        %v4676 = vrot.slane %v4669, 1
        %v4677 = vsel %vm677, %v4674, %v4676
        %4678 = vrot.lane.b32.xlu0 %v4675, 126
        %v4679 = vpop.permute.xlu0 %4678
        %4680 = vrot.lane.b32.xlu0 %v4677, 126
        %v4681 = vpop.permute.xlu0 %4680
        %v4684 = vadd.f32 %v4516, %v4679
        %v4685 = vadd.f32 %v4517, %v4681
        %s4686 = sld [smem:[#allocation6 + $0x8c]]
        %v4687 = vstv %s4686
        %v4688 = vmul.f32 %v4687, %v367
        %v4689 = vmul.f32 %v4687, %v368
        %v4690 = vmul.f32 %v4687, %v369
        %v4694 = vrot.slane %v4688, 1
        %v4695 = vrot.slane %v4689, 1
        %v4696 = vsel %vm677, %v4694, %v4695
        %v4697 = vrot.slane %v4690, 1
        %v4698 = vsel %vm677, %v4695, %v4697
        %4699 = vrot.lane.b32.xlu0 %v4696, 126
        %v4700 = vpop.permute.xlu0 %4699
        %4701 = vrot.lane.b32.xlu0 %v4698, 126
        %v4702 = vpop.permute.xlu0 %4701
        %v4705 = vadd.f32 %v4537, %v4700
        %v4706 = vadd.f32 %v4538, %v4702
        %s4707 = sld [smem:[#allocation6 + $0xb0]]
        %v4708 = vstv %s4707
        %v4709 = vmul.f32 %v4708, %v367
        %v4710 = vmul.f32 %v4708, %v368
        %v4711 = vmul.f32 %v4708, %v369
        %v4715 = vrot.slane %v4709, 1
        %v4716 = vrot.slane %v4710, 1
        %v4717 = vsel %vm677, %v4715, %v4716
        %v4718 = vrot.slane %v4711, 1
        %v4719 = vsel %vm677, %v4716, %v4718
        %4720 = vrot.lane.b32.xlu0 %v4717, 126
        %v4721 = vpop.permute.xlu0 %4720
        %4722 = vrot.lane.b32.xlu0 %v4719, 126
        %v4723 = vpop.permute.xlu0 %4722
        %v4726 = vadd.f32 %v4558, %v4721
        %v4727 = vadd.f32 %v4559, %v4723
        %s4728 = sld [smem:[#allocation6 + $0xd4]]
        %v4729 = vstv %s4728
        %v4730 = vmul.f32 %v4729, %v367
        %v4731 = vmul.f32 %v4729, %v368
        %v4732 = vmul.f32 %v4729, %v369
        %v4736 = vrot.slane %v4730, 1
        %v4737 = vrot.slane %v4731, 1
        %v4738 = vsel %vm677, %v4736, %v4737
        %v4739 = vrot.slane %v4732, 1
        %v4740 = vsel %vm677, %v4737, %v4739
        %4741 = vrot.lane.b32.xlu0 %v4738, 126
        %v4742 = vpop.permute.xlu0 %4741
        %4743 = vrot.lane.b32.xlu0 %v4740, 126
        %v4744 = vpop.permute.xlu0 %4743
        %v4747 = vadd.f32 %v4579, %v4742
        %v4748 = vadd.f32 %v4580, %v4744
        %s4749 = sld [smem:[#allocation6 + $0xf8]]
        %v4750 = vstv %s4749
        %v4751 = vmul.f32 %v4750, %v367
        %v4752 = vmul.f32 %v4750, %v368
        %v4753 = vmul.f32 %v4750, %v369
        %v4757 = vrot.slane %v4751, 1
        %v4758 = vrot.slane %v4752, 1
        %v4759 = vsel %vm677, %v4757, %v4758
        %v4760 = vrot.slane %v4753, 1
        %v4761 = vsel %vm677, %v4758, %v4760
        %4762 = vrot.lane.b32.xlu0 %v4759, 126
        %v4763 = vpop.permute.xlu0 %4762
        %4764 = vrot.lane.b32.xlu0 %v4761, 126
        %v4765 = vpop.permute.xlu0 %4764
        %v4768 = vadd.f32 %v4600, %v4763
        %v4769 = vadd.f32 %v4601, %v4765
        %s4770 = sld [smem:[#allocation6 + $0x11c]]
        %v4771 = vstv %s4770
        %v4772 = vmul.f32 %v4771, %v367
        %v4773 = vmul.f32 %v4771, %v368
        %v4774 = vmul.f32 %v4771, %v369
        %v4778 = vrot.slane %v4772, 1
        %v4779 = vrot.slane %v4773, 1
        %v4780 = vsel %vm677, %v4778, %v4779
        %v4781 = vrot.slane %v4774, 1
        %v4782 = vsel %vm677, %v4779, %v4781
        %4783 = vrot.lane.b32.xlu0 %v4780, 126
        %v4784 = vpop.permute.xlu0 %4783
        %4785 = vrot.lane.b32.xlu0 %v4782, 126
        %v4786 = vpop.permute.xlu0 %4785
        %v4789 = vadd.f32 %v4621, %v4784
        %v4790 = vadd.f32 %v4622, %v4786
        %s4791 = sld [smem:[#allocation6 + $0x21]]
        %v4792 = vstv %s4791
        %v4793 = vmul.f32 %v4792, %v367
        %v4794 = vmul.f32 %v4792, %v368
        %v4795 = vmul.f32 %v4792, %v369
        %v4799 = vrot.slane %v4793, 2
        %v4800 = vrot.slane %v4794, 2
        %v4801 = vsel %vm1150, %v4799, %v4800
        %v4802 = vrot.slane %v4795, 2
        %v4803 = vsel %vm1150, %v4800, %v4802
        %v4806 = vadd.f32 %v4642, %v4801
        %v4807 = vadd.f32 %v4643, %v4803
        %s4808 = sld [smem:[#allocation6 + $0x45]]
        %v4809 = vstv %s4808
        %v4810 = vmul.f32 %v4809, %v367
        %v4811 = vmul.f32 %v4809, %v368
        %v4812 = vmul.f32 %v4809, %v369
        %v4816 = vrot.slane %v4810, 2
        %v4817 = vrot.slane %v4811, 2
        %v4818 = vsel %vm1150, %v4816, %v4817
        %v4819 = vrot.slane %v4812, 2
        %v4820 = vsel %vm1150, %v4817, %v4819
        %v4823 = vadd.f32 %v4663, %v4818
        %v4824 = vadd.f32 %v4664, %v4820
        %s4825 = sld [smem:[#allocation6 + $0x69]]
        %v4826 = vstv %s4825
        %v4827 = vmul.f32 %v4826, %v367
        %v4828 = vmul.f32 %v4826, %v368
        %v4829 = vmul.f32 %v4826, %v369
        %v4833 = vrot.slane %v4827, 2
        %v4834 = vrot.slane %v4828, 2
        %v4835 = vsel %vm1150, %v4833, %v4834
        %v4836 = vrot.slane %v4829, 2
        %v4837 = vsel %vm1150, %v4834, %v4836
        %v4840 = vadd.f32 %v4684, %v4835
        %v4841 = vadd.f32 %v4685, %v4837
        %s4842 = sld [smem:[#allocation6 + $0x8d]]
        %v4843 = vstv %s4842
        %v4844 = vmul.f32 %v4843, %v367
        %v4845 = vmul.f32 %v4843, %v368
        %v4846 = vmul.f32 %v4843, %v369
        %v4850 = vrot.slane %v4844, 2
        %v4851 = vrot.slane %v4845, 2
        %v4852 = vsel %vm1150, %v4850, %v4851
        %v4853 = vrot.slane %v4846, 2
        %v4854 = vsel %vm1150, %v4851, %v4853
        %v4857 = vadd.f32 %v4705, %v4852
        %v4858 = vadd.f32 %v4706, %v4854
        %s4859 = sld [smem:[#allocation6 + $0xb1]]
        %v4860 = vstv %s4859
        %v4861 = vmul.f32 %v4860, %v367
        %v4862 = vmul.f32 %v4860, %v368
        %v4863 = vmul.f32 %v4860, %v369
        %v4867 = vrot.slane %v4861, 2
        %v4868 = vrot.slane %v4862, 2
        %v4869 = vsel %vm1150, %v4867, %v4868
        %v4870 = vrot.slane %v4863, 2
        %v4871 = vsel %vm1150, %v4868, %v4870
        %v4874 = vadd.f32 %v4726, %v4869
        %v4875 = vadd.f32 %v4727, %v4871
        %s4876 = sld [smem:[#allocation6 + $0xd5]]
        %v4877 = vstv %s4876
        %v4878 = vmul.f32 %v4877, %v367
        %v4879 = vmul.f32 %v4877, %v368
        %v4880 = vmul.f32 %v4877, %v369
        %v4884 = vrot.slane %v4878, 2
        %v4885 = vrot.slane %v4879, 2
        %v4886 = vsel %vm1150, %v4884, %v4885
        %v4887 = vrot.slane %v4880, 2
        %v4888 = vsel %vm1150, %v4885, %v4887
        %v4891 = vadd.f32 %v4747, %v4886
        %v4892 = vadd.f32 %v4748, %v4888
        %s4893 = sld [smem:[#allocation6 + $0xf9]]
        %v4894 = vstv %s4893
        %v4895 = vmul.f32 %v4894, %v367
        %v4896 = vmul.f32 %v4894, %v368
        %v4897 = vmul.f32 %v4894, %v369
        %v4901 = vrot.slane %v4895, 2
        %v4902 = vrot.slane %v4896, 2
        %v4903 = vsel %vm1150, %v4901, %v4902
        %v4904 = vrot.slane %v4897, 2
        %v4905 = vsel %vm1150, %v4902, %v4904
        %v4908 = vadd.f32 %v4768, %v4903
        %v4909 = vadd.f32 %v4769, %v4905
        %s4910 = sld [smem:[#allocation6 + $0x11d]]
        %v4911 = vstv %s4910
        %v4912 = vmul.f32 %v4911, %v367
        %v4913 = vmul.f32 %v4911, %v368
        %v4914 = vmul.f32 %v4911, %v369
        %v4918 = vrot.slane %v4912, 2
        %v4919 = vrot.slane %v4913, 2
        %v4920 = vsel %vm1150, %v4918, %v4919
        %v4921 = vrot.slane %v4914, 2
        %v4922 = vsel %vm1150, %v4919, %v4921
        %v4925 = vadd.f32 %v4789, %v4920
        %v4926 = vadd.f32 %v4790, %v4922
        %s4927 = sld [smem:[#allocation6 + $0x22]]
        %v4928 = vstv %s4927
        %v4929 = vmul.f32 %v4928, %v367
        %v4930 = vmul.f32 %v4928, %v368
        %v4931 = vmul.f32 %v4928, %v369
        %v4935 = vrot.slane %v4929, 2
        %v4936 = vrot.slane %v4930, 2
        %v4937 = vsel %vm1150, %v4935, %v4936
        %v4938 = vrot.slane %v4931, 2
        %v4939 = vsel %vm1150, %v4936, %v4938
        %4940 = vrot.lane.b32.xlu0 %v4937, 127
        %v4941 = vpop.permute.xlu0 %4940
        %4942 = vrot.lane.b32.xlu0 %v4939, 127
        %v4943 = vpop.permute.xlu0 %4942
        %v4946 = vadd.f32 %v4806, %v4941
        %v4947 = vadd.f32 %v4807, %v4943
        %s4948 = sld [smem:[#allocation6 + $0x46]]
        %v4949 = vstv %s4948
        %v4950 = vmul.f32 %v4949, %v367
        %v4951 = vmul.f32 %v4949, %v368
        %v4952 = vmul.f32 %v4949, %v369
        %v4956 = vrot.slane %v4950, 2
        %v4957 = vrot.slane %v4951, 2
        %v4958 = vsel %vm1150, %v4956, %v4957
        %v4959 = vrot.slane %v4952, 2
        %v4960 = vsel %vm1150, %v4957, %v4959
        %4961 = vrot.lane.b32.xlu0 %v4958, 127
        %v4962 = vpop.permute.xlu0 %4961
        %4963 = vrot.lane.b32.xlu0 %v4960, 127
        %v4964 = vpop.permute.xlu0 %4963
        %v4967 = vadd.f32 %v4823, %v4962
        %v4968 = vadd.f32 %v4824, %v4964
        %s4969 = sld [smem:[#allocation6 + $0x6a]]
        %v4970 = vstv %s4969
        %v4971 = vmul.f32 %v4970, %v367
        %v4972 = vmul.f32 %v4970, %v368
        %v4973 = vmul.f32 %v4970, %v369
        %v4977 = vrot.slane %v4971, 2
        %v4978 = vrot.slane %v4972, 2
        %v4979 = vsel %vm1150, %v4977, %v4978
        %v4980 = vrot.slane %v4973, 2
        %v4981 = vsel %vm1150, %v4978, %v4980
        %4982 = vrot.lane.b32.xlu0 %v4979, 127
        %v4983 = vpop.permute.xlu0 %4982
        %4984 = vrot.lane.b32.xlu0 %v4981, 127
        %v4985 = vpop.permute.xlu0 %4984
        %v4988 = vadd.f32 %v4840, %v4983
        %v4989 = vadd.f32 %v4841, %v4985
        %s4990 = sld [smem:[#allocation6 + $0x8e]]
        %v4991 = vstv %s4990
        %v4992 = vmul.f32 %v4991, %v367
        %v4993 = vmul.f32 %v4991, %v368
        %v4994 = vmul.f32 %v4991, %v369
        %v4998 = vrot.slane %v4992, 2
        %v4999 = vrot.slane %v4993, 2
        %v5000 = vsel %vm1150, %v4998, %v4999
        %v5001 = vrot.slane %v4994, 2
        %v5002 = vsel %vm1150, %v4999, %v5001
        %5003 = vrot.lane.b32.xlu0 %v5000, 127
        %v5004 = vpop.permute.xlu0 %5003
        %5005 = vrot.lane.b32.xlu0 %v5002, 127
        %v5006 = vpop.permute.xlu0 %5005
        %v5009 = vadd.f32 %v4857, %v5004
        %v5010 = vadd.f32 %v4858, %v5006
        %s5011 = sld [smem:[#allocation6 + $0xb2]]
        %v5012 = vstv %s5011
        %v5013 = vmul.f32 %v5012, %v367
        %v5014 = vmul.f32 %v5012, %v368
        %v5015 = vmul.f32 %v5012, %v369
        %v5019 = vrot.slane %v5013, 2
        %v5020 = vrot.slane %v5014, 2
        %v5021 = vsel %vm1150, %v5019, %v5020
        %v5022 = vrot.slane %v5015, 2
        %v5023 = vsel %vm1150, %v5020, %v5022
        %5024 = vrot.lane.b32.xlu0 %v5021, 127
        %v5025 = vpop.permute.xlu0 %5024
        %5026 = vrot.lane.b32.xlu0 %v5023, 127
        %v5027 = vpop.permute.xlu0 %5026
        %v5030 = vadd.f32 %v4874, %v5025
        %v5031 = vadd.f32 %v4875, %v5027
        %s5032 = sld [smem:[#allocation6 + $0xd6]]
        %v5033 = vstv %s5032
        %v5034 = vmul.f32 %v5033, %v367
        %v5035 = vmul.f32 %v5033, %v368
        %v5036 = vmul.f32 %v5033, %v369
        %v5040 = vrot.slane %v5034, 2
        %v5041 = vrot.slane %v5035, 2
        %v5042 = vsel %vm1150, %v5040, %v5041
        %v5043 = vrot.slane %v5036, 2
        %v5044 = vsel %vm1150, %v5041, %v5043
        %5045 = vrot.lane.b32.xlu0 %v5042, 127
        %v5046 = vpop.permute.xlu0 %5045
        %5047 = vrot.lane.b32.xlu0 %v5044, 127
        %v5048 = vpop.permute.xlu0 %5047
        %v5051 = vadd.f32 %v4891, %v5046
        %v5052 = vadd.f32 %v4892, %v5048
        %s5053 = sld [smem:[#allocation6 + $0xfa]]
        %v5054 = vstv %s5053
        %v5055 = vmul.f32 %v5054, %v367
        %v5056 = vmul.f32 %v5054, %v368
        %v5057 = vmul.f32 %v5054, %v369
        %v5061 = vrot.slane %v5055, 2
        %v5062 = vrot.slane %v5056, 2
        %v5063 = vsel %vm1150, %v5061, %v5062
        %v5064 = vrot.slane %v5057, 2
        %v5065 = vsel %vm1150, %v5062, %v5064
        %5066 = vrot.lane.b32.xlu0 %v5063, 127
        %v5067 = vpop.permute.xlu0 %5066
        %5068 = vrot.lane.b32.xlu0 %v5065, 127
        %v5069 = vpop.permute.xlu0 %5068
        %v5072 = vadd.f32 %v4908, %v5067
        %v5073 = vadd.f32 %v4909, %v5069
        %s5074 = sld [smem:[#allocation6 + $0x11e]]
        %v5075 = vstv %s5074
        %v5076 = vmul.f32 %v5075, %v367
        %v5077 = vmul.f32 %v5075, %v368
        %v5078 = vmul.f32 %v5075, %v369
        %v5082 = vrot.slane %v5076, 2
        %v5083 = vrot.slane %v5077, 2
        %v5084 = vsel %vm1150, %v5082, %v5083
        %v5085 = vrot.slane %v5078, 2
        %v5086 = vsel %vm1150, %v5083, %v5085
        %5087 = vrot.lane.b32.xlu0 %v5084, 127
        %v5088 = vpop.permute.xlu0 %5087
        %5089 = vrot.lane.b32.xlu0 %v5086, 127
        %v5090 = vpop.permute.xlu0 %5089
        %v5093 = vadd.f32 %v4925, %v5088
        %v5094 = vadd.f32 %v4926, %v5090
        %s5095 = sld [smem:[#allocation6 + $0x23]]
        %v5096 = vstv %s5095
        %v5097 = vmul.f32 %v5096, %v367
        %v5098 = vmul.f32 %v5096, %v368
        %v5099 = vmul.f32 %v5096, %v369
        %v5103 = vrot.slane %v5097, 2
        %v5104 = vrot.slane %v5098, 2
        %v5105 = vsel %vm1150, %v5103, %v5104
        %v5106 = vrot.slane %v5099, 2
        %v5107 = vsel %vm1150, %v5104, %v5106
        %5108 = vrot.lane.b32.xlu0 %v5105, 126
        %v5109 = vpop.permute.xlu0 %5108
        %5110 = vrot.lane.b32.xlu0 %v5107, 126
        %v5111 = vpop.permute.xlu0 %5110
        %v5114 = vadd.f32 %v4946, %v5109
        %v5115 = vadd.f32 %v4947, %v5111
        %s5116 = sld [smem:[#allocation6 + $0x47]]
        %v5117 = vstv %s5116
        %v5118 = vmul.f32 %v5117, %v367
        %v5119 = vmul.f32 %v5117, %v368
        %v5120 = vmul.f32 %v5117, %v369
        %v5124 = vrot.slane %v5118, 2
        %v5125 = vrot.slane %v5119, 2
        %v5126 = vsel %vm1150, %v5124, %v5125
        %v5127 = vrot.slane %v5120, 2
        %v5128 = vsel %vm1150, %v5125, %v5127
        %5129 = vrot.lane.b32.xlu0 %v5126, 126
        %v5130 = vpop.permute.xlu0 %5129
        %5131 = vrot.lane.b32.xlu0 %v5128, 126
        %v5132 = vpop.permute.xlu0 %5131
        %v5135 = vadd.f32 %v4967, %v5130
        %v5136 = vadd.f32 %v4968, %v5132
        %s5137 = sld [smem:[#allocation6 + $0x6b]]
        %v5138 = vstv %s5137
        %v5139 = vmul.f32 %v5138, %v367
        %v5140 = vmul.f32 %v5138, %v368
        %v5141 = vmul.f32 %v5138, %v369
        %v5145 = vrot.slane %v5139, 2
        %v5146 = vrot.slane %v5140, 2
        %v5147 = vsel %vm1150, %v5145, %v5146
        %v5148 = vrot.slane %v5141, 2
        %v5149 = vsel %vm1150, %v5146, %v5148
        %5150 = vrot.lane.b32.xlu0 %v5147, 126
        %v5151 = vpop.permute.xlu0 %5150
        %5152 = vrot.lane.b32.xlu0 %v5149, 126
        %v5153 = vpop.permute.xlu0 %5152
        %v5156 = vadd.f32 %v4988, %v5151
        %v5157 = vadd.f32 %v4989, %v5153
        %s5158 = sld [smem:[#allocation6 + $0x8f]]
        %v5159 = vstv %s5158
        %v5160 = vmul.f32 %v5159, %v367
        %v5161 = vmul.f32 %v5159, %v368
        %v5162 = vmul.f32 %v5159, %v369
        %v5166 = vrot.slane %v5160, 2
        %v5167 = vrot.slane %v5161, 2
        %v5168 = vsel %vm1150, %v5166, %v5167
        %v5169 = vrot.slane %v5162, 2
        %v5170 = vsel %vm1150, %v5167, %v5169
        %5171 = vrot.lane.b32.xlu0 %v5168, 126
        %v5172 = vpop.permute.xlu0 %5171
        %5173 = vrot.lane.b32.xlu0 %v5170, 126
        %v5174 = vpop.permute.xlu0 %5173
        %v5177 = vadd.f32 %v5009, %v5172
        %v5178 = vadd.f32 %v5010, %v5174
        %s5179 = sld [smem:[#allocation6 + $0xb3]]
        %v5180 = vstv %s5179
        %v5181 = vmul.f32 %v5180, %v367
        %v5182 = vmul.f32 %v5180, %v368
        %v5183 = vmul.f32 %v5180, %v369
        %v5187 = vrot.slane %v5181, 2
        %v5188 = vrot.slane %v5182, 2
        %v5189 = vsel %vm1150, %v5187, %v5188
        %v5190 = vrot.slane %v5183, 2
        %v5191 = vsel %vm1150, %v5188, %v5190
        %5192 = vrot.lane.b32.xlu0 %v5189, 126
        %v5193 = vpop.permute.xlu0 %5192
        %5194 = vrot.lane.b32.xlu0 %v5191, 126
        %v5195 = vpop.permute.xlu0 %5194
        %v5198 = vadd.f32 %v5030, %v5193
        %v5199 = vadd.f32 %v5031, %v5195
        %s5200 = sld [smem:[#allocation6 + $0xd7]]
        %v5201 = vstv %s5200
        %v5202 = vmul.f32 %v5201, %v367
        %v5203 = vmul.f32 %v5201, %v368
        %v5204 = vmul.f32 %v5201, %v369
        %v5208 = vrot.slane %v5202, 2
        %v5209 = vrot.slane %v5203, 2
        %v5210 = vsel %vm1150, %v5208, %v5209
        %v5211 = vrot.slane %v5204, 2
        %v5212 = vsel %vm1150, %v5209, %v5211
        %5213 = vrot.lane.b32.xlu0 %v5210, 126
        %v5214 = vpop.permute.xlu0 %5213
        %5215 = vrot.lane.b32.xlu0 %v5212, 126
        %v5216 = vpop.permute.xlu0 %5215
        %v5219 = vadd.f32 %v5051, %v5214
        %v5220 = vadd.f32 %v5052, %v5216
        %s5221 = sld [smem:[#allocation6 + $0xfb]]
        %v5222 = vstv %s5221
        %v5223 = vmul.f32 %v5222, %v367
        %v5224 = vmul.f32 %v5222, %v368
        %v5225 = vmul.f32 %v5222, %v369
        %v5229 = vrot.slane %v5223, 2
        %v5230 = vrot.slane %v5224, 2
        %v5231 = vsel %vm1150, %v5229, %v5230
        %v5232 = vrot.slane %v5225, 2
        %v5233 = vsel %vm1150, %v5230, %v5232
        %5234 = vrot.lane.b32.xlu0 %v5231, 126
        %v5235 = vpop.permute.xlu0 %5234
        %5236 = vrot.lane.b32.xlu0 %v5233, 126
        %v5237 = vpop.permute.xlu0 %5236
        %v5240 = vadd.f32 %v5072, %v5235
        %v5241 = vadd.f32 %v5073, %v5237
        %s5242 = sld [smem:[#allocation6 + $0x11f]]
        %v5243 = vstv %s5242
        %v5244 = vmul.f32 %v5243, %v367
        %v5245 = vmul.f32 %v5243, %v368
        %v5246 = vmul.f32 %v5243, %v369
        %v5250 = vrot.slane %v5244, 2
        %v5251 = vrot.slane %v5245, 2
        %v5252 = vsel %vm1150, %v5250, %v5251
        %v5253 = vrot.slane %v5246, 2
        %v5254 = vsel %vm1150, %v5251, %v5253
        %5255 = vrot.lane.b32.xlu0 %v5252, 126
        %v5256 = vpop.permute.xlu0 %5255
        %5257 = vrot.lane.b32.xlu0 %v5254, 126
        %v5258 = vpop.permute.xlu0 %5257
        %v5261 = vadd.f32 %v5093, %v5256
        %v5262 = vadd.f32 %v5094, %v5258
        %vm5263 = vcmp.gt.f32.partialorder %v5114, 0.0
        %vm5264 = vcmp.gt.f32.partialorder %v5115, 0.0
        %v5265 = vmul.f32 %v5114, 0.1
        %v5266 = vmul.f32 %v5115, 0.1
        %v5267 = vsel %vm5263, %v5114, %v5265
        %v5268 = vsel %vm5264, %v5115, %v5266
        %vm5269 = vcmask 130048
        %v5271 = vsel %vm5269, %v378, 0
        %5273 = vmatprep.subr.mxu0 0.0
        %5274 = vmatpush1.msra.mxu0 %v5267
        %5275 = vmatprep.subr.mxu0 0.0
        %5276 = vmatpush1.msra.mxu0 %v5268
        %5277 = vmatprep.subr.mxu0 0.0
        %5278 = vmatpush1.msra.mxu0 0.0
        %5279 = vmatprep.subr.mxu0 0.0
        %5280 = vmatpush1.msra.mxu0 0.0
        %5281 = vmatprep.subr.mxu0 0.0
        %5282 = vmatpush1.msra.mxu0 0.0
        %5283 = vmatprep.subr.mxu0 0.0
        %5284 = vmatpush1.msra.mxu0 0.0
        %5285 = vmatprep.subr.mxu0 0.0
        %5286 = vmatpush1.msra.mxu0 0.0
        %5287 = vmatprep.subr.mxu0 0.0
        %5288 = vmatpush1.msra.mxu0 0.0
        %5289 = vmatprep.subr.mxu0 0.0
        %5290 = vmatpush1.msra.mxu0 0.0
        %5291 = vmatprep.subr.mxu0 0.0
        %5292 = vmatpush1.msra.mxu0 0.0
        %5293 = vmatprep.subr.mxu0 0.0
        %5294 = vmatpush1.msra.mxu0 0.0
        %5295 = vmatprep.subr.mxu0 0.0
        %5296 = vmatpush1.msra.mxu0 0.0
        %5297 = vmatprep.subr.mxu0 0.0
        %5298 = vmatpush1.msra.mxu0 0.0
        %5299 = vmatprep.subr.mxu0 0.0
        %5300 = vmatpush1.msra.mxu0 0.0
        %5301 = vmatprep.subr.mxu0 0.0
        %5302 = vmatpush1.msra.mxu0 0.0
        %5303 = vmatprep.subr.mxu0 0.0
        %5304 = vmatpush1.msra.mxu0 0.0
        %5305 = vmatprep.subr.mxu0 0.0
        %5306 = vmatpush1.msra.mxu0 0.0
        %5307 = vmatprep.subr.mxu0 0.0
        %5308 = vmatpush1.msra.mxu0 0.0
        %5309 = vmatprep.subr.mxu0 0.0
        %5310 = vmatpush1.msra.mxu0 0.0
        %5311 = vmatprep.subr.mxu0 0.0
        %5312 = vmatpush1.msra.mxu0 0.0
        %5313 = vmatprep.subr.mxu0 0.0
        %5314 = vmatpush1.msra.mxu0 0.0
        %5315 = vmatprep.subr.mxu0 0.0
        %5316 = vmatpush1.msra.mxu0 0.0
        %5317 = vmatprep.subr.mxu0 0.0
        %5318 = vmatpush1.msra.mxu0 0.0
        %5319 = vmatprep.subr.mxu0 0.0
        %5320 = vmatpush1.msra.mxu0 0.0
        %5321 = vmatprep.subr.mxu0 0.0
        %5322 = vmatpush1.msra.mxu0 0.0
        %5323 = vmatprep.subr.mxu0 0.0
        %5324 = vmatpush1.msra.mxu0 0.0
        %5325 = vmatprep.subr.mxu0 0.0
        %5326 = vmatpush1.msra.mxu0 0.0
        %5327 = vmatprep.subr.mxu0 0.0
        %5328 = vmatpush1.msra.mxu0 0.0
        %5329 = vmatprep.subr.mxu0 0.0
        %5330 = vmatpush1.msra.mxu0 0.0
        %5331 = vmatprep.subr.mxu0 0.0
        %5332 = vmatpush1.msra.mxu0 0.0
        %5333 = vmatprep.subr.mxu0 0.0
        %5334 = vmatpush1.msra.mxu0 0.0
        %5335 = vmatprep.subr.mxu0 0.0
        %5336 = vmatpush1.msra.mxu0 0.0
        %5337 = vmatprep.mubr.f32.mxu0 0.0
        %5338 = vmatmul.mubr.f32.gmra.mrb[0].mxu0 %v5271
        %v5339 = vpop.f32.mrb[0].mxu0
        %v5340 = vadd.f32 0.0, %v5339
        %v5341 = vpop.f32.mrb[0].mxu0
        %5342 = vdwg.mxu0
        %v5344 = vsel %vm5269, %v381, 0
        %5346 = vmatprep.subr.mxu0 0.0
        %5347 = vmatpush1.msra.mxu0 %v5267
        %5348 = vmatprep.subr.mxu0 0.0
        %5349 = vmatpush1.msra.mxu0 %v5268
        %5350 = vmatprep.subr.mxu0 0.0
        %5351 = vmatpush1.msra.mxu0 0.0
        %5352 = vmatprep.subr.mxu0 0.0
        %5353 = vmatpush1.msra.mxu0 0.0
        %5354 = vmatprep.subr.mxu0 0.0
        %5355 = vmatpush1.msra.mxu0 0.0
        %5356 = vmatprep.subr.mxu0 0.0
        %5357 = vmatpush1.msra.mxu0 0.0
        %5358 = vmatprep.subr.mxu0 0.0
        %5359 = vmatpush1.msra.mxu0 0.0
        %5360 = vmatprep.subr.mxu0 0.0
        %5361 = vmatpush1.msra.mxu0 0.0
        %5362 = vmatprep.subr.mxu0 0.0
        %5363 = vmatpush1.msra.mxu0 0.0
        %5364 = vmatprep.subr.mxu0 0.0
        %5365 = vmatpush1.msra.mxu0 0.0
        %5366 = vmatprep.subr.mxu0 0.0
        %5367 = vmatpush1.msra.mxu0 0.0
        %5368 = vmatprep.subr.mxu0 0.0
        %5369 = vmatpush1.msra.mxu0 0.0
        %5370 = vmatprep.subr.mxu0 0.0
        %5371 = vmatpush1.msra.mxu0 0.0
        %5372 = vmatprep.subr.mxu0 0.0
        %5373 = vmatpush1.msra.mxu0 0.0
        %5374 = vmatprep.subr.mxu0 0.0
        %5375 = vmatpush1.msra.mxu0 0.0
        %5376 = vmatprep.subr.mxu0 0.0
        %5377 = vmatpush1.msra.mxu0 0.0
        %5378 = vmatprep.subr.mxu0 0.0
        %5379 = vmatpush1.msra.mxu0 0.0
        %5380 = vmatprep.subr.mxu0 0.0
        %5381 = vmatpush1.msra.mxu0 0.0
        %5382 = vmatprep.subr.mxu0 0.0
        %5383 = vmatpush1.msra.mxu0 0.0
        %5384 = vmatprep.subr.mxu0 0.0
        %5385 = vmatpush1.msra.mxu0 0.0
        %5386 = vmatprep.subr.mxu0 0.0
        %5387 = vmatpush1.msra.mxu0 0.0
        %5388 = vmatprep.subr.mxu0 0.0
        %5389 = vmatpush1.msra.mxu0 0.0
        %5390 = vmatprep.subr.mxu0 0.0
        %5391 = vmatpush1.msra.mxu0 0.0
        %5392 = vmatprep.subr.mxu0 0.0
        %5393 = vmatpush1.msra.mxu0 0.0
        %5394 = vmatprep.subr.mxu0 0.0
        %5395 = vmatpush1.msra.mxu0 0.0
        %5396 = vmatprep.subr.mxu0 0.0
        %5397 = vmatpush1.msra.mxu0 0.0
        %5398 = vmatprep.subr.mxu0 0.0
        %5399 = vmatpush1.msra.mxu0 0.0
        %5400 = vmatprep.subr.mxu0 0.0
        %5401 = vmatpush1.msra.mxu0 0.0
        %5402 = vmatprep.subr.mxu0 0.0
        %5403 = vmatpush1.msra.mxu0 0.0
        %5404 = vmatprep.subr.mxu0 0.0
        %5405 = vmatpush1.msra.mxu0 0.0
        %5406 = vmatprep.subr.mxu0 0.0
        %5407 = vmatpush1.msra.mxu0 0.0
        %5408 = vmatprep.subr.mxu0 0.0
        %5409 = vmatpush1.msra.mxu0 0.0
        %5410 = vmatprep.mubr.f32.mxu0 0.0
        %5411 = vmatmul.mubr.f32.gmra.mrb[0].mxu0 %v5344
        %v5412 = vpop.f32.mrb[0].mxu0
        %v5413 = vadd.f32 0.0, %v5412
        %v5414 = vpop.f32.mrb[0].mxu0
        %5415 = vdwg.mxu0
        %v5416 = vmax.f32 %v5340, %v5413
        %v5418 = vsel %vm5269, %v5416, 0
        %5420 = vmatprep.subr.mxu0 0.0
        %5421 = vmatpush1.msra.mxu0 %v388
        %5422 = vmatprep.subr.mxu0 0.0
        %5423 = vmatpush1.msra.mxu0 %v389
        %5424 = vmatprep.subr.mxu0 0.0
        %5425 = vmatpush1.msra.mxu0 0.0
        %5426 = vmatprep.subr.mxu0 0.0
        %5427 = vmatpush1.msra.mxu0 0.0
        %5428 = vmatprep.subr.mxu0 0.0
        %5429 = vmatpush1.msra.mxu0 0.0
        %5430 = vmatprep.subr.mxu0 0.0
        %5431 = vmatpush1.msra.mxu0 0.0
        %5432 = vmatprep.subr.mxu0 0.0
        %5433 = vmatpush1.msra.mxu0 0.0
        %5434 = vmatprep.subr.mxu0 0.0
        %5435 = vmatpush1.msra.mxu0 0.0
        %5436 = vmatprep.subr.mxu0 0.0
        %5437 = vmatpush1.msra.mxu0 0.0
        %5438 = vmatprep.subr.mxu0 0.0
        %5439 = vmatpush1.msra.mxu0 0.0
        %5440 = vmatprep.subr.mxu0 0.0
        %5441 = vmatpush1.msra.mxu0 0.0
        %5442 = vmatprep.subr.mxu0 0.0
        %5443 = vmatpush1.msra.mxu0 0.0
        %5444 = vmatprep.subr.mxu0 0.0
        %5445 = vmatpush1.msra.mxu0 0.0
        %5446 = vmatprep.subr.mxu0 0.0
        %5447 = vmatpush1.msra.mxu0 0.0
        %5448 = vmatprep.subr.mxu0 0.0
        %5449 = vmatpush1.msra.mxu0 0.0
        %5450 = vmatprep.subr.mxu0 0.0
        %5451 = vmatpush1.msra.mxu0 0.0
        %5452 = vmatprep.subr.mxu0 0.0
        %5453 = vmatpush1.msra.mxu0 0.0
        %5454 = vmatprep.subr.mxu0 0.0
        %5455 = vmatpush1.msra.mxu0 0.0
        %5456 = vmatprep.subr.mxu0 0.0
        %5457 = vmatpush1.msra.mxu0 0.0
        %5458 = vmatprep.subr.mxu0 0.0
        %5459 = vmatpush1.msra.mxu0 0.0
        %5460 = vmatprep.subr.mxu0 0.0
        %5461 = vmatpush1.msra.mxu0 0.0
        %5462 = vmatprep.subr.mxu0 0.0
        %5463 = vmatpush1.msra.mxu0 0.0
        %5464 = vmatprep.subr.mxu0 0.0
        %5465 = vmatpush1.msra.mxu0 0.0
        %5466 = vmatprep.subr.mxu0 0.0
        %5467 = vmatpush1.msra.mxu0 0.0
        %5468 = vmatprep.subr.mxu0 0.0
        %5469 = vmatpush1.msra.mxu0 0.0
        %5470 = vmatprep.subr.mxu0 0.0
        %5471 = vmatpush1.msra.mxu0 0.0
        %5472 = vmatprep.subr.mxu0 0.0
        %5473 = vmatpush1.msra.mxu0 0.0
        %5474 = vmatprep.subr.mxu0 0.0
        %5475 = vmatpush1.msra.mxu0 0.0
        %5476 = vmatprep.subr.mxu0 0.0
        %5477 = vmatpush1.msra.mxu0 0.0
        %5478 = vmatprep.subr.mxu0 0.0
        %5479 = vmatpush1.msra.mxu0 0.0
        %5480 = vmatprep.subr.mxu0 0.0
        %5481 = vmatpush1.msra.mxu0 0.0
        %5482 = vmatprep.subr.mxu0 0.0
        %5483 = vmatpush1.msra.mxu0 0.0
        %5484 = vmatprep.mubr.f32.mxu0 0.0
        %5485 = vmatmul.mubr.f32.gmra.mrb[0].mxu0 %v5418
        %v5486 = vpop.f32.mrb[0].mxu0
        %v5487 = vadd.f32 0.0, %v5486
        %v5488 = vpop.f32.mrb[0].mxu0
        %5489 = vdwg.mxu0
        %5490 = vmatprep.subr.mxu0 0.0
        %5491 = vmatpush1.msra.mxu0 %v395
        %5492 = vmatprep.subr.mxu0 0.0
        %5493 = vmatpush1.msra.mxu0 %v396
        %5494 = vmatprep.subr.mxu0 0.0
        %5495 = vmatpush1.msra.mxu0 0.0
        %5496 = vmatprep.subr.mxu0 0.0
        %5497 = vmatpush1.msra.mxu0 0.0
        %5498 = vmatprep.subr.mxu0 0.0
        %5499 = vmatpush1.msra.mxu0 0.0
        %5500 = vmatprep.subr.mxu0 0.0
        %5501 = vmatpush1.msra.mxu0 0.0
        %5502 = vmatprep.subr.mxu0 0.0
        %5503 = vmatpush1.msra.mxu0 0.0
        %5504 = vmatprep.subr.mxu0 0.0
        %5505 = vmatpush1.msra.mxu0 0.0
        %5506 = vmatprep.subr.mxu0 0.0
        %5507 = vmatpush1.msra.mxu0 0.0
        %5508 = vmatprep.subr.mxu0 0.0
        %5509 = vmatpush1.msra.mxu0 0.0
        %5510 = vmatprep.subr.mxu0 0.0
        %5511 = vmatpush1.msra.mxu0 0.0
        %5512 = vmatprep.subr.mxu0 0.0
        %5513 = vmatpush1.msra.mxu0 0.0
        %5514 = vmatprep.subr.mxu0 0.0
        %5515 = vmatpush1.msra.mxu0 0.0
        %5516 = vmatprep.subr.mxu0 0.0
        %5517 = vmatpush1.msra.mxu0 0.0
        %5518 = vmatprep.subr.mxu0 0.0
        %5519 = vmatpush1.msra.mxu0 0.0
        %5520 = vmatprep.subr.mxu0 0.0
        %5521 = vmatpush1.msra.mxu0 0.0
        %5522 = vmatprep.subr.mxu0 0.0
        %5523 = vmatpush1.msra.mxu0 0.0
        %5524 = vmatprep.subr.mxu0 0.0
        %5525 = vmatpush1.msra.mxu0 0.0
        %5526 = vmatprep.subr.mxu0 0.0
        %5527 = vmatpush1.msra.mxu0 0.0
        %5528 = vmatprep.subr.mxu0 0.0
        %5529 = vmatpush1.msra.mxu0 0.0
        %5530 = vmatprep.subr.mxu0 0.0
        %5531 = vmatpush1.msra.mxu0 0.0
        %5532 = vmatprep.subr.mxu0 0.0
        %5533 = vmatpush1.msra.mxu0 0.0
        %5534 = vmatprep.subr.mxu0 0.0
        %5535 = vmatpush1.msra.mxu0 0.0
        %5536 = vmatprep.subr.mxu0 0.0
        %5537 = vmatpush1.msra.mxu0 0.0
        %5538 = vmatprep.subr.mxu0 0.0
        %5539 = vmatpush1.msra.mxu0 0.0
        %5540 = vmatprep.subr.mxu0 0.0
        %5541 = vmatpush1.msra.mxu0 0.0
        %5542 = vmatprep.subr.mxu0 0.0
        %5543 = vmatpush1.msra.mxu0 0.0
        %5544 = vmatprep.subr.mxu0 0.0
        %5545 = vmatpush1.msra.mxu0 0.0
        %5546 = vmatprep.subr.mxu0 0.0
        %5547 = vmatpush1.msra.mxu0 0.0
        %5548 = vmatprep.subr.mxu0 0.0
        %5549 = vmatpush1.msra.mxu0 0.0
        %5550 = vmatprep.subr.mxu0 0.0
        %5551 = vmatpush1.msra.mxu0 0.0
        %5552 = vmatprep.subr.mxu0 0.0
        %5553 = vmatpush1.msra.mxu0 0.0
        %5554 = vmatprep.mubr.f32.mxu0 0.0
        %5555 = vmatmul.mubr.f32.gmra.mrb[0].mxu0 %v5418
        %v5556 = vpop.f32.mrb[0].mxu0
        %v5557 = vadd.f32 0.0, %v5556
        %v5558 = vpop.f32.mrb[0].mxu0
        %5559 = vdwg.mxu0
        %v5560 = vmax.f32 %v5487, %v5557
        %vm5561 = vcmask 64512
        %5562 = vst.msk [vmem:[%s173] sm:$0xff] %vm5561, %v5560
        %vm5563 = vcmp.gt.f32.partialorder %v5135, 0.0
        %vm5564 = vcmp.gt.f32.partialorder %v5136, 0.0
        %v5565 = vmul.f32 %v5135, 0.1
        %v5566 = vmul.f32 %v5136, 0.1
        %v5567 = vsel %vm5563, %v5135, %v5565
        %v5568 = vsel %vm5564, %v5136, %v5566
        %5569 = vmatprep.subr.mxu0 0.0
        %5570 = vmatpush1.msra.mxu0 %v5567
        %5571 = vmatprep.subr.mxu0 0.0
        %5572 = vmatpush1.msra.mxu0 %v5568
        %5573 = vmatprep.subr.mxu0 0.0
        %5574 = vmatpush1.msra.mxu0 0.0
        %5575 = vmatprep.subr.mxu0 0.0
        %5576 = vmatpush1.msra.mxu0 0.0
        %5577 = vmatprep.subr.mxu0 0.0
        %5578 = vmatpush1.msra.mxu0 0.0
        %5579 = vmatprep.subr.mxu0 0.0
        %5580 = vmatpush1.msra.mxu0 0.0
        %5581 = vmatprep.subr.mxu0 0.0
        %5582 = vmatpush1.msra.mxu0 0.0
        %5583 = vmatprep.subr.mxu0 0.0
        %5584 = vmatpush1.msra.mxu0 0.0
        %5585 = vmatprep.subr.mxu0 0.0
        %5586 = vmatpush1.msra.mxu0 0.0
        %5587 = vmatprep.subr.mxu0 0.0
        %5588 = vmatpush1.msra.mxu0 0.0
        %5589 = vmatprep.subr.mxu0 0.0
        %5590 = vmatpush1.msra.mxu0 0.0
        %5591 = vmatprep.subr.mxu0 0.0
        %5592 = vmatpush1.msra.mxu0 0.0
        %5593 = vmatprep.subr.mxu0 0.0
        %5594 = vmatpush1.msra.mxu0 0.0
        %5595 = vmatprep.subr.mxu0 0.0
        %5596 = vmatpush1.msra.mxu0 0.0
        %5597 = vmatprep.subr.mxu0 0.0
        %5598 = vmatpush1.msra.mxu0 0.0
        %5599 = vmatprep.subr.mxu0 0.0
        %5600 = vmatpush1.msra.mxu0 0.0
        %5601 = vmatprep.subr.mxu0 0.0
        %5602 = vmatpush1.msra.mxu0 0.0
        %5603 = vmatprep.subr.mxu0 0.0
        %5604 = vmatpush1.msra.mxu0 0.0
        %5605 = vmatprep.subr.mxu0 0.0
        %5606 = vmatpush1.msra.mxu0 0.0
        %5607 = vmatprep.subr.mxu0 0.0
        %5608 = vmatpush1.msra.mxu0 0.0
        %5609 = vmatprep.subr.mxu0 0.0
        %5610 = vmatpush1.msra.mxu0 0.0
        %5611 = vmatprep.subr.mxu0 0.0
        %5612 = vmatpush1.msra.mxu0 0.0
        %5613 = vmatprep.subr.mxu0 0.0
        %5614 = vmatpush1.msra.mxu0 0.0
        %5615 = vmatprep.subr.mxu0 0.0
        %5616 = vmatpush1.msra.mxu0 0.0
        %5617 = vmatprep.subr.mxu0 0.0
        %5618 = vmatpush1.msra.mxu0 0.0
        %5619 = vmatprep.subr.mxu0 0.0
        %5620 = vmatpush1.msra.mxu0 0.0
        %5621 = vmatprep.subr.mxu0 0.0
        %5622 = vmatpush1.msra.mxu0 0.0
        %5623 = vmatprep.subr.mxu0 0.0
        %5624 = vmatpush1.msra.mxu0 0.0
        %5625 = vmatprep.subr.mxu0 0.0
        %5626 = vmatpush1.msra.mxu0 0.0
        %5627 = vmatprep.subr.mxu0 0.0
        %5628 = vmatpush1.msra.mxu0 0.0
        %5629 = vmatprep.subr.mxu0 0.0
        %5630 = vmatpush1.msra.mxu0 0.0
        %5631 = vmatprep.subr.mxu0 0.0
        %5632 = vmatpush1.msra.mxu0 0.0
        %5633 = vmatprep.mubr.f32.mxu0 0.0
        %5634 = vmatmul.mubr.f32.gmra.mrb[0].mxu0 %v5271
        %v5635 = vpop.f32.mrb[0].mxu0
        %v5636 = vadd.f32 0.0, %v5635
        %v5637 = vpop.f32.mrb[0].mxu0
        %5638 = vdwg.mxu0
        %5639 = vmatprep.subr.mxu0 0.0
        %5640 = vmatpush1.msra.mxu0 %v5567
        %5641 = vmatprep.subr.mxu0 0.0
        %5642 = vmatpush1.msra.mxu0 %v5568
        %5643 = vmatprep.subr.mxu0 0.0
        %5644 = vmatpush1.msra.mxu0 0.0
        %5645 = vmatprep.subr.mxu0 0.0
        %5646 = vmatpush1.msra.mxu0 0.0
        %5647 = vmatprep.subr.mxu0 0.0
        %5648 = vmatpush1.msra.mxu0 0.0
        %5649 = vmatprep.subr.mxu0 0.0
        %5650 = vmatpush1.msra.mxu0 0.0
        %5651 = vmatprep.subr.mxu0 0.0
        %5652 = vmatpush1.msra.mxu0 0.0
        %5653 = vmatprep.subr.mxu0 0.0
        %5654 = vmatpush1.msra.mxu0 0.0
        %5655 = vmatprep.subr.mxu0 0.0
        %5656 = vmatpush1.msra.mxu0 0.0
        %5657 = vmatprep.subr.mxu0 0.0
        %5658 = vmatpush1.msra.mxu0 0.0
        %5659 = vmatprep.subr.mxu0 0.0
        %5660 = vmatpush1.msra.mxu0 0.0
        %5661 = vmatprep.subr.mxu0 0.0
        %5662 = vmatpush1.msra.mxu0 0.0
        %5663 = vmatprep.subr.mxu0 0.0
        %5664 = vmatpush1.msra.mxu0 0.0
        %5665 = vmatprep.subr.mxu0 0.0
        %5666 = vmatpush1.msra.mxu0 0.0
        %5667 = vmatprep.subr.mxu0 0.0
        %5668 = vmatpush1.msra.mxu0 0.0
        %5669 = vmatprep.subr.mxu0 0.0
        %5670 = vmatpush1.msra.mxu0 0.0
        %5671 = vmatprep.subr.mxu0 0.0
        %5672 = vmatpush1.msra.mxu0 0.0
        %5673 = vmatprep.subr.mxu0 0.0
        %5674 = vmatpush1.msra.mxu0 0.0
        %5675 = vmatprep.subr.mxu0 0.0
        %5676 = vmatpush1.msra.mxu0 0.0
        %5677 = vmatprep.subr.mxu0 0.0
        %5678 = vmatpush1.msra.mxu0 0.0
        %5679 = vmatprep.subr.mxu0 0.0
        %5680 = vmatpush1.msra.mxu0 0.0
        %5681 = vmatprep.subr.mxu0 0.0
        %5682 = vmatpush1.msra.mxu0 0.0
        %5683 = vmatprep.subr.mxu0 0.0
        %5684 = vmatpush1.msra.mxu0 0.0
        %5685 = vmatprep.subr.mxu0 0.0
        %5686 = vmatpush1.msra.mxu0 0.0
        %5687 = vmatprep.subr.mxu0 0.0
        %5688 = vmatpush1.msra.mxu0 0.0
        %5689 = vmatprep.subr.mxu0 0.0
        %5690 = vmatpush1.msra.mxu0 0.0
        %5691 = vmatprep.subr.mxu0 0.0
        %5692 = vmatpush1.msra.mxu0 0.0
        %5693 = vmatprep.subr.mxu0 0.0
        %5694 = vmatpush1.msra.mxu0 0.0
        %5695 = vmatprep.subr.mxu0 0.0
        %5696 = vmatpush1.msra.mxu0 0.0
        %5697 = vmatprep.subr.mxu0 0.0
        %5698 = vmatpush1.msra.mxu0 0.0
        %5699 = vmatprep.subr.mxu0 0.0
        %5700 = vmatpush1.msra.mxu0 0.0
        %5701 = vmatprep.subr.mxu0 0.0
        %5702 = vmatpush1.msra.mxu0 0.0
        %5703 = vmatprep.mubr.f32.mxu0 0.0
        %5704 = vmatmul.mubr.f32.gmra.mrb[0].mxu0 %v5344
        %v5705 = vpop.f32.mrb[0].mxu0
        %v5706 = vadd.f32 0.0, %v5705
        %v5707 = vpop.f32.mrb[0].mxu0
        %5708 = vdwg.mxu0
        %v5709 = vmax.f32 %v5636, %v5706
        %v5711 = vsel %vm5269, %v5709, 0
        %5713 = vmatprep.subr.mxu0 0.0
        %5714 = vmatpush1.msra.mxu0 %v388
        %5715 = vmatprep.subr.mxu0 0.0
        %5716 = vmatpush1.msra.mxu0 %v389
        %5717 = vmatprep.subr.mxu0 0.0
        %5718 = vmatpush1.msra.mxu0 0.0
        %5719 = vmatprep.subr.mxu0 0.0
        %5720 = vmatpush1.msra.mxu0 0.0
        %5721 = vmatprep.subr.mxu0 0.0
        %5722 = vmatpush1.msra.mxu0 0.0
        %5723 = vmatprep.subr.mxu0 0.0
        %5724 = vmatpush1.msra.mxu0 0.0
        %5725 = vmatprep.subr.mxu0 0.0
        %5726 = vmatpush1.msra.mxu0 0.0
        %5727 = vmatprep.subr.mxu0 0.0
        %5728 = vmatpush1.msra.mxu0 0.0
        %5729 = vmatprep.subr.mxu0 0.0
        %5730 = vmatpush1.msra.mxu0 0.0
        %5731 = vmatprep.subr.mxu0 0.0
        %5732 = vmatpush1.msra.mxu0 0.0
        %5733 = vmatprep.subr.mxu0 0.0
        %5734 = vmatpush1.msra.mxu0 0.0
        %5735 = vmatprep.subr.mxu0 0.0
        %5736 = vmatpush1.msra.mxu0 0.0
        %5737 = vmatprep.subr.mxu0 0.0
        %5738 = vmatpush1.msra.mxu0 0.0
        %5739 = vmatprep.subr.mxu0 0.0
        %5740 = vmatpush1.msra.mxu0 0.0
        %5741 = vmatprep.subr.mxu0 0.0
        %5742 = vmatpush1.msra.mxu0 0.0
        %5743 = vmatprep.subr.mxu0 0.0
        %5744 = vmatpush1.msra.mxu0 0.0
        %5745 = vmatprep.subr.mxu0 0.0
        %5746 = vmatpush1.msra.mxu0 0.0
        %5747 = vmatprep.subr.mxu0 0.0
        %5748 = vmatpush1.msra.mxu0 0.0
        %5749 = vmatprep.subr.mxu0 0.0
        %5750 = vmatpush1.msra.mxu0 0.0
        %5751 = vmatprep.subr.mxu0 0.0
        %5752 = vmatpush1.msra.mxu0 0.0
        %5753 = vmatprep.subr.mxu0 0.0
        %5754 = vmatpush1.msra.mxu0 0.0
        %5755 = vmatprep.subr.mxu0 0.0
        %5756 = vmatpush1.msra.mxu0 0.0
        %5757 = vmatprep.subr.mxu0 0.0
        %5758 = vmatpush1.msra.mxu0 0.0
        %5759 = vmatprep.subr.mxu0 0.0
        %5760 = vmatpush1.msra.mxu0 0.0
        %5761 = vmatprep.subr.mxu0 0.0
        %5762 = vmatpush1.msra.mxu0 0.0
        %5763 = vmatprep.subr.mxu0 0.0
        %5764 = vmatpush1.msra.mxu0 0.0
        %5765 = vmatprep.subr.mxu0 0.0
        %5766 = vmatpush1.msra.mxu0 0.0
        %5767 = vmatprep.subr.mxu0 0.0
        %5768 = vmatpush1.msra.mxu0 0.0
        %5769 = vmatprep.subr.mxu0 0.0
        %5770 = vmatpush1.msra.mxu0 0.0
        %5771 = vmatprep.subr.mxu0 0.0
        %5772 = vmatpush1.msra.mxu0 0.0
        %5773 = vmatprep.subr.mxu0 0.0
        %5774 = vmatpush1.msra.mxu0 0.0
        %5775 = vmatprep.subr.mxu0 0.0
        %5776 = vmatpush1.msra.mxu0 0.0
        %5777 = vmatprep.mubr.f32.mxu0 0.0
        %5778 = vmatmul.mubr.f32.gmra.mrb[0].mxu0 %v5711
        %v5779 = vpop.f32.mrb[0].mxu0
        %v5780 = vadd.f32 0.0, %v5779
        %v5781 = vpop.f32.mrb[0].mxu0
        %5782 = vdwg.mxu0
        %5783 = vmatprep.subr.mxu0 0.0
        %5784 = vmatpush1.msra.mxu0 %v395
        %5785 = vmatprep.subr.mxu0 0.0
        %5786 = vmatpush1.msra.mxu0 %v396
        %5787 = vmatprep.subr.mxu0 0.0
        %5788 = vmatpush1.msra.mxu0 0.0
        %5789 = vmatprep.subr.mxu0 0.0
        %5790 = vmatpush1.msra.mxu0 0.0
        %5791 = vmatprep.subr.mxu0 0.0
        %5792 = vmatpush1.msra.mxu0 0.0
        %5793 = vmatprep.subr.mxu0 0.0
        %5794 = vmatpush1.msra.mxu0 0.0
        %5795 = vmatprep.subr.mxu0 0.0
        %5796 = vmatpush1.msra.mxu0 0.0
        %5797 = vmatprep.subr.mxu0 0.0
        %5798 = vmatpush1.msra.mxu0 0.0
        %5799 = vmatprep.subr.mxu0 0.0
        %5800 = vmatpush1.msra.mxu0 0.0
        %5801 = vmatprep.subr.mxu0 0.0
        %5802 = vmatpush1.msra.mxu0 0.0
        %5803 = vmatprep.subr.mxu0 0.0
        %5804 = vmatpush1.msra.mxu0 0.0
        %5805 = vmatprep.subr.mxu0 0.0
        %5806 = vmatpush1.msra.mxu0 0.0
        %5807 = vmatprep.subr.mxu0 0.0
        %5808 = vmatpush1.msra.mxu0 0.0
        %5809 = vmatprep.subr.mxu0 0.0
        %5810 = vmatpush1.msra.mxu0 0.0
        %5811 = vmatprep.subr.mxu0 0.0
        %5812 = vmatpush1.msra.mxu0 0.0
        %5813 = vmatprep.subr.mxu0 0.0
        %5814 = vmatpush1.msra.mxu0 0.0
        %5815 = vmatprep.subr.mxu0 0.0
        %5816 = vmatpush1.msra.mxu0 0.0
        %5817 = vmatprep.subr.mxu0 0.0
        %5818 = vmatpush1.msra.mxu0 0.0
        %5819 = vmatprep.subr.mxu0 0.0
        %5820 = vmatpush1.msra.mxu0 0.0
        %5821 = vmatprep.subr.mxu0 0.0
        %5822 = vmatpush1.msra.mxu0 0.0
        %5823 = vmatprep.subr.mxu0 0.0
        %5824 = vmatpush1.msra.mxu0 0.0
        %5825 = vmatprep.subr.mxu0 0.0
        %5826 = vmatpush1.msra.mxu0 0.0
        %5827 = vmatprep.subr.mxu0 0.0
        %5828 = vmatpush1.msra.mxu0 0.0
        %5829 = vmatprep.subr.mxu0 0.0
        %5830 = vmatpush1.msra.mxu0 0.0
        %5831 = vmatprep.subr.mxu0 0.0
        %5832 = vmatpush1.msra.mxu0 0.0
        %5833 = vmatprep.subr.mxu0 0.0
        %5834 = vmatpush1.msra.mxu0 0.0
        %5835 = vmatprep.subr.mxu0 0.0
        %5836 = vmatpush1.msra.mxu0 0.0
        %5837 = vmatprep.subr.mxu0 0.0
        %5838 = vmatpush1.msra.mxu0 0.0
        %5839 = vmatprep.subr.mxu0 0.0
        %5840 = vmatpush1.msra.mxu0 0.0
        %5841 = vmatprep.subr.mxu0 0.0
        %5842 = vmatpush1.msra.mxu0 0.0
        %5843 = vmatprep.subr.mxu0 0.0
        %5844 = vmatpush1.msra.mxu0 0.0
        %5845 = vmatprep.subr.mxu0 0.0
        %5846 = vmatpush1.msra.mxu0 0.0
        %5847 = vmatprep.mubr.f32.mxu0 0.0
        %5848 = vmatmul.mubr.f32.gmra.mrb[0].mxu0 %v5711
        %v5849 = vpop.f32.mrb[0].mxu0
        %v5850 = vadd.f32 0.0, %v5849
        %v5851 = vpop.f32.mrb[0].mxu0
        %5852 = vdwg.mxu0
        %v5853 = vmax.f32 %v5780, %v5850
        %s5854 = scalar_lea.vmem %s173, 8 [#allocation7]
        %5855 = vst.msk [vmem:[%s5854] sm:$0xff] %vm5561, %v5853
        %vm5856 = vcmp.gt.f32.partialorder %v5156, 0.0
        %vm5857 = vcmp.gt.f32.partialorder %v5157, 0.0
        %v5858 = vmul.f32 %v5156, 0.1
        %v5859 = vmul.f32 %v5157, 0.1
        %v5860 = vsel %vm5856, %v5156, %v5858
        %v5861 = vsel %vm5857, %v5157, %v5859
        %5862 = vmatprep.subr.mxu0 0.0
        %5863 = vmatpush1.msra.mxu0 %v5860
        %5864 = vmatprep.subr.mxu0 0.0
        %5865 = vmatpush1.msra.mxu0 %v5861
        %5866 = vmatprep.subr.mxu0 0.0
        %5867 = vmatpush1.msra.mxu0 0.0
        %5868 = vmatprep.subr.mxu0 0.0
        %5869 = vmatpush1.msra.mxu0 0.0
        %5870 = vmatprep.subr.mxu0 0.0
        %5871 = vmatpush1.msra.mxu0 0.0
        %5872 = vmatprep.subr.mxu0 0.0
        %5873 = vmatpush1.msra.mxu0 0.0
        %5874 = vmatprep.subr.mxu0 0.0
        %5875 = vmatpush1.msra.mxu0 0.0
        %5876 = vmatprep.subr.mxu0 0.0
        %5877 = vmatpush1.msra.mxu0 0.0
        %5878 = vmatprep.subr.mxu0 0.0
        %5879 = vmatpush1.msra.mxu0 0.0
        %5880 = vmatprep.subr.mxu0 0.0
        %5881 = vmatpush1.msra.mxu0 0.0
        %5882 = vmatprep.subr.mxu0 0.0
        %5883 = vmatpush1.msra.mxu0 0.0
        %5884 = vmatprep.subr.mxu0 0.0
        %5885 = vmatpush1.msra.mxu0 0.0
        %5886 = vmatprep.subr.mxu0 0.0
        %5887 = vmatpush1.msra.mxu0 0.0
        %5888 = vmatprep.subr.mxu0 0.0
        %5889 = vmatpush1.msra.mxu0 0.0
        %5890 = vmatprep.subr.mxu0 0.0
        %5891 = vmatpush1.msra.mxu0 0.0
        %5892 = vmatprep.subr.mxu0 0.0
        %5893 = vmatpush1.msra.mxu0 0.0
        %5894 = vmatprep.subr.mxu0 0.0
        %5895 = vmatpush1.msra.mxu0 0.0
        %5896 = vmatprep.subr.mxu0 0.0
        %5897 = vmatpush1.msra.mxu0 0.0
        %5898 = vmatprep.subr.mxu0 0.0
        %5899 = vmatpush1.msra.mxu0 0.0
        %5900 = vmatprep.subr.mxu0 0.0
        %5901 = vmatpush1.msra.mxu0 0.0
        %5902 = vmatprep.subr.mxu0 0.0
        %5903 = vmatpush1.msra.mxu0 0.0
        %5904 = vmatprep.subr.mxu0 0.0
        %5905 = vmatpush1.msra.mxu0 0.0
        %5906 = vmatprep.subr.mxu0 0.0
        %5907 = vmatpush1.msra.mxu0 0.0
        %5908 = vmatprep.subr.mxu0 0.0
        %5909 = vmatpush1.msra.mxu0 0.0
        %5910 = vmatprep.subr.mxu0 0.0
        %5911 = vmatpush1.msra.mxu0 0.0
        %5912 = vmatprep.subr.mxu0 0.0
        %5913 = vmatpush1.msra.mxu0 0.0
        %5914 = vmatprep.subr.mxu0 0.0
        %5915 = vmatpush1.msra.mxu0 0.0
        %5916 = vmatprep.subr.mxu0 0.0
        %5917 = vmatpush1.msra.mxu0 0.0
        %5918 = vmatprep.subr.mxu0 0.0
        %5919 = vmatpush1.msra.mxu0 0.0
        %5920 = vmatprep.subr.mxu0 0.0
        %5921 = vmatpush1.msra.mxu0 0.0
        %5922 = vmatprep.subr.mxu0 0.0
        %5923 = vmatpush1.msra.mxu0 0.0
        %5924 = vmatprep.subr.mxu0 0.0
        %5925 = vmatpush1.msra.mxu0 0.0
        %5926 = vmatprep.mubr.f32.mxu0 0.0
        %5927 = vmatmul.mubr.f32.gmra.mrb[0].mxu0 %v5271
        %v5928 = vpop.f32.mrb[0].mxu0
        %v5929 = vadd.f32 0.0, %v5928
        %v5930 = vpop.f32.mrb[0].mxu0
        %5931 = vdwg.mxu0
        %5932 = vmatprep.subr.mxu0 0.0
        %5933 = vmatpush1.msra.mxu0 %v5860
        %5934 = vmatprep.subr.mxu0 0.0
        %5935 = vmatpush1.msra.mxu0 %v5861
        %5936 = vmatprep.subr.mxu0 0.0
        %5937 = vmatpush1.msra.mxu0 0.0
        %5938 = vmatprep.subr.mxu0 0.0
        %5939 = vmatpush1.msra.mxu0 0.0
        %5940 = vmatprep.subr.mxu0 0.0
        %5941 = vmatpush1.msra.mxu0 0.0
        %5942 = vmatprep.subr.mxu0 0.0
        %5943 = vmatpush1.msra.mxu0 0.0
        %5944 = vmatprep.subr.mxu0 0.0
        %5945 = vmatpush1.msra.mxu0 0.0
        %5946 = vmatprep.subr.mxu0 0.0
        %5947 = vmatpush1.msra.mxu0 0.0
        %5948 = vmatprep.subr.mxu0 0.0
        %5949 = vmatpush1.msra.mxu0 0.0
        %5950 = vmatprep.subr.mxu0 0.0
        %5951 = vmatpush1.msra.mxu0 0.0
        %5952 = vmatprep.subr.mxu0 0.0
        %5953 = vmatpush1.msra.mxu0 0.0
        %5954 = vmatprep.subr.mxu0 0.0
        %5955 = vmatpush1.msra.mxu0 0.0
        %5956 = vmatprep.subr.mxu0 0.0
        %5957 = vmatpush1.msra.mxu0 0.0
        %5958 = vmatprep.subr.mxu0 0.0
        %5959 = vmatpush1.msra.mxu0 0.0
        %5960 = vmatprep.subr.mxu0 0.0
        %5961 = vmatpush1.msra.mxu0 0.0
        %5962 = vmatprep.subr.mxu0 0.0
        %5963 = vmatpush1.msra.mxu0 0.0
        %5964 = vmatprep.subr.mxu0 0.0
        %5965 = vmatpush1.msra.mxu0 0.0
        %5966 = vmatprep.subr.mxu0 0.0
        %5967 = vmatpush1.msra.mxu0 0.0
        %5968 = vmatprep.subr.mxu0 0.0
        %5969 = vmatpush1.msra.mxu0 0.0
        %5970 = vmatprep.subr.mxu0 0.0
        %5971 = vmatpush1.msra.mxu0 0.0
        %5972 = vmatprep.subr.mxu0 0.0
        %5973 = vmatpush1.msra.mxu0 0.0
        %5974 = vmatprep.subr.mxu0 0.0
        %5975 = vmatpush1.msra.mxu0 0.0
        %5976 = vmatprep.subr.mxu0 0.0
        %5977 = vmatpush1.msra.mxu0 0.0
        %5978 = vmatprep.subr.mxu0 0.0
        %5979 = vmatpush1.msra.mxu0 0.0
        %5980 = vmatprep.subr.mxu0 0.0
        %5981 = vmatpush1.msra.mxu0 0.0
        %5982 = vmatprep.subr.mxu0 0.0
        %5983 = vmatpush1.msra.mxu0 0.0
        %5984 = vmatprep.subr.mxu0 0.0
        %5985 = vmatpush1.msra.mxu0 0.0
        %5986 = vmatprep.subr.mxu0 0.0
        %5987 = vmatpush1.msra.mxu0 0.0
        %5988 = vmatprep.subr.mxu0 0.0
        %5989 = vmatpush1.msra.mxu0 0.0
        %5990 = vmatprep.subr.mxu0 0.0
        %5991 = vmatpush1.msra.mxu0 0.0
        %5992 = vmatprep.subr.mxu0 0.0
        %5993 = vmatpush1.msra.mxu0 0.0
        %5994 = vmatprep.subr.mxu0 0.0
        %5995 = vmatpush1.msra.mxu0 0.0
        %5996 = vmatprep.mubr.f32.mxu0 0.0
        %5997 = vmatmul.mubr.f32.gmra.mrb[0].mxu0 %v5344
        %v5998 = vpop.f32.mrb[0].mxu0
        %v5999 = vadd.f32 0.0, %v5998
        %v6000 = vpop.f32.mrb[0].mxu0
        %6001 = vdwg.mxu0
        %v6002 = vmax.f32 %v5929, %v5999
        %v6004 = vsel %vm5269, %v6002, 0
        %6006 = vmatprep.subr.mxu0 0.0
        %6007 = vmatpush1.msra.mxu0 %v388
        %6008 = vmatprep.subr.mxu0 0.0
        %6009 = vmatpush1.msra.mxu0 %v389
        %6010 = vmatprep.subr.mxu0 0.0
        %6011 = vmatpush1.msra.mxu0 0.0
        %6012 = vmatprep.subr.mxu0 0.0
        %6013 = vmatpush1.msra.mxu0 0.0
        %6014 = vmatprep.subr.mxu0 0.0
        %6015 = vmatpush1.msra.mxu0 0.0
        %6016 = vmatprep.subr.mxu0 0.0
        %6017 = vmatpush1.msra.mxu0 0.0
        %6018 = vmatprep.subr.mxu0 0.0
        %6019 = vmatpush1.msra.mxu0 0.0
        %6020 = vmatprep.subr.mxu0 0.0
        %6021 = vmatpush1.msra.mxu0 0.0
        %6022 = vmatprep.subr.mxu0 0.0
        %6023 = vmatpush1.msra.mxu0 0.0
        %6024 = vmatprep.subr.mxu0 0.0
        %6025 = vmatpush1.msra.mxu0 0.0
        %6026 = vmatprep.subr.mxu0 0.0
        %6027 = vmatpush1.msra.mxu0 0.0
        %6028 = vmatprep.subr.mxu0 0.0
        %6029 = vmatpush1.msra.mxu0 0.0
        %6030 = vmatprep.subr.mxu0 0.0
        %6031 = vmatpush1.msra.mxu0 0.0
        %6032 = vmatprep.subr.mxu0 0.0
        %6033 = vmatpush1.msra.mxu0 0.0
        %6034 = vmatprep.subr.mxu0 0.0
        %6035 = vmatpush1.msra.mxu0 0.0
        %6036 = vmatprep.subr.mxu0 0.0
        %6037 = vmatpush1.msra.mxu0 0.0
        %6038 = vmatprep.subr.mxu0 0.0
        %6039 = vmatpush1.msra.mxu0 0.0
        %6040 = vmatprep.subr.mxu0 0.0
        %6041 = vmatpush1.msra.mxu0 0.0
        %6042 = vmatprep.subr.mxu0 0.0
        %6043 = vmatpush1.msra.mxu0 0.0
        %6044 = vmatprep.subr.mxu0 0.0
        %6045 = vmatpush1.msra.mxu0 0.0
        %6046 = vmatprep.subr.mxu0 0.0
        %6047 = vmatpush1.msra.mxu0 0.0
        %6048 = vmatprep.subr.mxu0 0.0
        %6049 = vmatpush1.msra.mxu0 0.0
        %6050 = vmatprep.subr.mxu0 0.0
        %6051 = vmatpush1.msra.mxu0 0.0
        %6052 = vmatprep.subr.mxu0 0.0
        %6053 = vmatpush1.msra.mxu0 0.0
        %6054 = vmatprep.subr.mxu0 0.0
        %6055 = vmatpush1.msra.mxu0 0.0
        %6056 = vmatprep.subr.mxu0 0.0
        %6057 = vmatpush1.msra.mxu0 0.0
        %6058 = vmatprep.subr.mxu0 0.0
        %6059 = vmatpush1.msra.mxu0 0.0
        %6060 = vmatprep.subr.mxu0 0.0
        %6061 = vmatpush1.msra.mxu0 0.0
        %6062 = vmatprep.subr.mxu0 0.0
        %6063 = vmatpush1.msra.mxu0 0.0
        %6064 = vmatprep.subr.mxu0 0.0
        %6065 = vmatpush1.msra.mxu0 0.0
        %6066 = vmatprep.subr.mxu0 0.0
        %6067 = vmatpush1.msra.mxu0 0.0
        %6068 = vmatprep.subr.mxu0 0.0
        %6069 = vmatpush1.msra.mxu0 0.0
        %6070 = vmatprep.mubr.f32.mxu0 0.0
        %6071 = vmatmul.mubr.f32.gmra.mrb[0].mxu0 %v6004
        %v6072 = vpop.f32.mrb[0].mxu0
        %v6073 = vadd.f32 0.0, %v6072
        %v6074 = vpop.f32.mrb[0].mxu0
        %6075 = vdwg.mxu0
        %6076 = vmatprep.subr.mxu0 0.0
        %6077 = vmatpush1.msra.mxu0 %v395
        %6078 = vmatprep.subr.mxu0 0.0
        %6079 = vmatpush1.msra.mxu0 %v396
        %6080 = vmatprep.subr.mxu0 0.0
        %6081 = vmatpush1.msra.mxu0 0.0
        %6082 = vmatprep.subr.mxu0 0.0
        %6083 = vmatpush1.msra.mxu0 0.0
        %6084 = vmatprep.subr.mxu0 0.0
        %6085 = vmatpush1.msra.mxu0 0.0
        %6086 = vmatprep.subr.mxu0 0.0
        %6087 = vmatpush1.msra.mxu0 0.0
        %6088 = vmatprep.subr.mxu0 0.0
        %6089 = vmatpush1.msra.mxu0 0.0
        %6090 = vmatprep.subr.mxu0 0.0
        %6091 = vmatpush1.msra.mxu0 0.0
        %6092 = vmatprep.subr.mxu0 0.0
        %6093 = vmatpush1.msra.mxu0 0.0
        %6094 = vmatprep.subr.mxu0 0.0
        %6095 = vmatpush1.msra.mxu0 0.0
        %6096 = vmatprep.subr.mxu0 0.0
        %6097 = vmatpush1.msra.mxu0 0.0
        %6098 = vmatprep.subr.mxu0 0.0
        %6099 = vmatpush1.msra.mxu0 0.0
        %6100 = vmatprep.subr.mxu0 0.0
        %6101 = vmatpush1.msra.mxu0 0.0
        %6102 = vmatprep.subr.mxu0 0.0
        %6103 = vmatpush1.msra.mxu0 0.0
        %6104 = vmatprep.subr.mxu0 0.0
        %6105 = vmatpush1.msra.mxu0 0.0
        %6106 = vmatprep.subr.mxu0 0.0
        %6107 = vmatpush1.msra.mxu0 0.0
        %6108 = vmatprep.subr.mxu0 0.0
        %6109 = vmatpush1.msra.mxu0 0.0
        %6110 = vmatprep.subr.mxu0 0.0
        %6111 = vmatpush1.msra.mxu0 0.0
        %6112 = vmatprep.subr.mxu0 0.0
        %6113 = vmatpush1.msra.mxu0 0.0
        %6114 = vmatprep.subr.mxu0 0.0
        %6115 = vmatpush1.msra.mxu0 0.0
        %6116 = vmatprep.subr.mxu0 0.0
        %6117 = vmatpush1.msra.mxu0 0.0
        %6118 = vmatprep.subr.mxu0 0.0
        %6119 = vmatpush1.msra.mxu0 0.0
        %6120 = vmatprep.subr.mxu0 0.0
        %6121 = vmatpush1.msra.mxu0 0.0
        %6122 = vmatprep.subr.mxu0 0.0
        %6123 = vmatpush1.msra.mxu0 0.0
        %6124 = vmatprep.subr.mxu0 0.0
        %6125 = vmatpush1.msra.mxu0 0.0
        %6126 = vmatprep.subr.mxu0 0.0
        %6127 = vmatpush1.msra.mxu0 0.0
        %6128 = vmatprep.subr.mxu0 0.0
        %6129 = vmatpush1.msra.mxu0 0.0
        %6130 = vmatprep.subr.mxu0 0.0
        %6131 = vmatpush1.msra.mxu0 0.0
        %6132 = vmatprep.subr.mxu0 0.0
        %6133 = vmatpush1.msra.mxu0 0.0
        %6134 = vmatprep.subr.mxu0 0.0
        %6135 = vmatpush1.msra.mxu0 0.0
        %6136 = vmatprep.subr.mxu0 0.0
        %6137 = vmatpush1.msra.mxu0 0.0
        %6138 = vmatprep.subr.mxu0 0.0
        %6139 = vmatpush1.msra.mxu0 0.0
        %6140 = vmatprep.mubr.f32.mxu0 0.0
        %6141 = vmatmul.mubr.f32.gmra.mrb[0].mxu0 %v6004
        %v6142 = vpop.f32.mrb[0].mxu0
        %v6143 = vadd.f32 0.0, %v6142
        %v6144 = vpop.f32.mrb[0].mxu0
        %6145 = vdwg.mxu0
        %v6146 = vmax.f32 %v6073, %v6143
        %s6147 = scalar_lea.vmem %s173, 16 [#allocation7]
        %6148 = vst.msk [vmem:[%s6147] sm:$0xff] %vm5561, %v6146
        %vm6149 = vcmp.gt.f32.partialorder %v5177, 0.0
        %vm6150 = vcmp.gt.f32.partialorder %v5178, 0.0
        %v6151 = vmul.f32 %v5177, 0.1
        %v6152 = vmul.f32 %v5178, 0.1
        %v6153 = vsel %vm6149, %v5177, %v6151
        %v6154 = vsel %vm6150, %v5178, %v6152
        %6155 = vmatprep.subr.mxu0 0.0
        %6156 = vmatpush1.msra.mxu0 %v6153
        %6157 = vmatprep.subr.mxu0 0.0
        %6158 = vmatpush1.msra.mxu0 %v6154
        %6159 = vmatprep.subr.mxu0 0.0
        %6160 = vmatpush1.msra.mxu0 0.0
        %6161 = vmatprep.subr.mxu0 0.0
        %6162 = vmatpush1.msra.mxu0 0.0
        %6163 = vmatprep.subr.mxu0 0.0
        %6164 = vmatpush1.msra.mxu0 0.0
        %6165 = vmatprep.subr.mxu0 0.0
        %6166 = vmatpush1.msra.mxu0 0.0
        %6167 = vmatprep.subr.mxu0 0.0
        %6168 = vmatpush1.msra.mxu0 0.0
        %6169 = vmatprep.subr.mxu0 0.0
        %6170 = vmatpush1.msra.mxu0 0.0
        %6171 = vmatprep.subr.mxu0 0.0
        %6172 = vmatpush1.msra.mxu0 0.0
        %6173 = vmatprep.subr.mxu0 0.0
        %6174 = vmatpush1.msra.mxu0 0.0
        %6175 = vmatprep.subr.mxu0 0.0
        %6176 = vmatpush1.msra.mxu0 0.0
        %6177 = vmatprep.subr.mxu0 0.0
        %6178 = vmatpush1.msra.mxu0 0.0
        %6179 = vmatprep.subr.mxu0 0.0
        %6180 = vmatpush1.msra.mxu0 0.0
        %6181 = vmatprep.subr.mxu0 0.0
        %6182 = vmatpush1.msra.mxu0 0.0
        %6183 = vmatprep.subr.mxu0 0.0
        %6184 = vmatpush1.msra.mxu0 0.0
        %6185 = vmatprep.subr.mxu0 0.0
        %6186 = vmatpush1.msra.mxu0 0.0
        %6187 = vmatprep.subr.mxu0 0.0
        %6188 = vmatpush1.msra.mxu0 0.0
        %6189 = vmatprep.subr.mxu0 0.0
        %6190 = vmatpush1.msra.mxu0 0.0
        %6191 = vmatprep.subr.mxu0 0.0
        %6192 = vmatpush1.msra.mxu0 0.0
        %6193 = vmatprep.subr.mxu0 0.0
        %6194 = vmatpush1.msra.mxu0 0.0
        %6195 = vmatprep.subr.mxu0 0.0
        %6196 = vmatpush1.msra.mxu0 0.0
        %6197 = vmatprep.subr.mxu0 0.0
        %6198 = vmatpush1.msra.mxu0 0.0
        %6199 = vmatprep.subr.mxu0 0.0
        %6200 = vmatpush1.msra.mxu0 0.0
        %6201 = vmatprep.subr.mxu0 0.0
        %6202 = vmatpush1.msra.mxu0 0.0
        %6203 = vmatprep.subr.mxu0 0.0
        %6204 = vmatpush1.msra.mxu0 0.0
        %6205 = vmatprep.subr.mxu0 0.0
        %6206 = vmatpush1.msra.mxu0 0.0
        %6207 = vmatprep.subr.mxu0 0.0
        %6208 = vmatpush1.msra.mxu0 0.0
        %6209 = vmatprep.subr.mxu0 0.0
        %6210 = vmatpush1.msra.mxu0 0.0
        %6211 = vmatprep.subr.mxu0 0.0
        %6212 = vmatpush1.msra.mxu0 0.0
        %6213 = vmatprep.subr.mxu0 0.0
        %6214 = vmatpush1.msra.mxu0 0.0
        %6215 = vmatprep.subr.mxu0 0.0
        %6216 = vmatpush1.msra.mxu0 0.0
        %6217 = vmatprep.subr.mxu0 0.0
        %6218 = vmatpush1.msra.mxu0 0.0
        %6219 = vmatprep.mubr.f32.mxu0 0.0
        %6220 = vmatmul.mubr.f32.gmra.mrb[0].mxu0 %v5271
        %v6221 = vpop.f32.mrb[0].mxu0
        %v6222 = vadd.f32 0.0, %v6221
        %v6223 = vpop.f32.mrb[0].mxu0
        %6224 = vdwg.mxu0
        %6225 = vmatprep.subr.mxu0 0.0
        %6226 = vmatpush1.msra.mxu0 %v6153
        %6227 = vmatprep.subr.mxu0 0.0
        %6228 = vmatpush1.msra.mxu0 %v6154
        %6229 = vmatprep.subr.mxu0 0.0
        %6230 = vmatpush1.msra.mxu0 0.0
        %6231 = vmatprep.subr.mxu0 0.0
        %6232 = vmatpush1.msra.mxu0 0.0
        %6233 = vmatprep.subr.mxu0 0.0
        %6234 = vmatpush1.msra.mxu0 0.0
        %6235 = vmatprep.subr.mxu0 0.0
        %6236 = vmatpush1.msra.mxu0 0.0
        %6237 = vmatprep.subr.mxu0 0.0
        %6238 = vmatpush1.msra.mxu0 0.0
        %6239 = vmatprep.subr.mxu0 0.0
        %6240 = vmatpush1.msra.mxu0 0.0
        %6241 = vmatprep.subr.mxu0 0.0
        %6242 = vmatpush1.msra.mxu0 0.0
        %6243 = vmatprep.subr.mxu0 0.0
        %6244 = vmatpush1.msra.mxu0 0.0
        %6245 = vmatprep.subr.mxu0 0.0
        %6246 = vmatpush1.msra.mxu0 0.0
        %6247 = vmatprep.subr.mxu0 0.0
        %6248 = vmatpush1.msra.mxu0 0.0
        %6249 = vmatprep.subr.mxu0 0.0
        %6250 = vmatpush1.msra.mxu0 0.0
        %6251 = vmatprep.subr.mxu0 0.0
        %6252 = vmatpush1.msra.mxu0 0.0
        %6253 = vmatprep.subr.mxu0 0.0
        %6254 = vmatpush1.msra.mxu0 0.0
        %6255 = vmatprep.subr.mxu0 0.0
        %6256 = vmatpush1.msra.mxu0 0.0
        %6257 = vmatprep.subr.mxu0 0.0
        %6258 = vmatpush1.msra.mxu0 0.0
        %6259 = vmatprep.subr.mxu0 0.0
        %6260 = vmatpush1.msra.mxu0 0.0
        %6261 = vmatprep.subr.mxu0 0.0
        %6262 = vmatpush1.msra.mxu0 0.0
        %6263 = vmatprep.subr.mxu0 0.0
        %6264 = vmatpush1.msra.mxu0 0.0
        %6265 = vmatprep.subr.mxu0 0.0
        %6266 = vmatpush1.msra.mxu0 0.0
        %6267 = vmatprep.subr.mxu0 0.0
        %6268 = vmatpush1.msra.mxu0 0.0
        %6269 = vmatprep.subr.mxu0 0.0
        %6270 = vmatpush1.msra.mxu0 0.0
        %6271 = vmatprep.subr.mxu0 0.0
        %6272 = vmatpush1.msra.mxu0 0.0
        %6273 = vmatprep.subr.mxu0 0.0
        %6274 = vmatpush1.msra.mxu0 0.0
        %6275 = vmatprep.subr.mxu0 0.0
        %6276 = vmatpush1.msra.mxu0 0.0
        %6277 = vmatprep.subr.mxu0 0.0
        %6278 = vmatpush1.msra.mxu0 0.0
        %6279 = vmatprep.subr.mxu0 0.0
        %6280 = vmatpush1.msra.mxu0 0.0
        %6281 = vmatprep.subr.mxu0 0.0
        %6282 = vmatpush1.msra.mxu0 0.0
        %6283 = vmatprep.subr.mxu0 0.0
        %6284 = vmatpush1.msra.mxu0 0.0
        %6285 = vmatprep.subr.mxu0 0.0
        %6286 = vmatpush1.msra.mxu0 0.0
        %6287 = vmatprep.subr.mxu0 0.0
        %6288 = vmatpush1.msra.mxu0 0.0
        %6289 = vmatprep.mubr.f32.mxu0 0.0
        %6290 = vmatmul.mubr.f32.gmra.mrb[0].mxu0 %v5344
        %v6291 = vpop.f32.mrb[0].mxu0
        %v6292 = vadd.f32 0.0, %v6291
        %v6293 = vpop.f32.mrb[0].mxu0
        %6294 = vdwg.mxu0
        %v6295 = vmax.f32 %v6222, %v6292
        %v6297 = vsel %vm5269, %v6295, 0
        %6299 = vmatprep.subr.mxu0 0.0
        %6300 = vmatpush1.msra.mxu0 %v388
        %6301 = vmatprep.subr.mxu0 0.0
        %6302 = vmatpush1.msra.mxu0 %v389
        %6303 = vmatprep.subr.mxu0 0.0
        %6304 = vmatpush1.msra.mxu0 0.0
        %6305 = vmatprep.subr.mxu0 0.0
        %6306 = vmatpush1.msra.mxu0 0.0
        %6307 = vmatprep.subr.mxu0 0.0
        %6308 = vmatpush1.msra.mxu0 0.0
        %6309 = vmatprep.subr.mxu0 0.0
        %6310 = vmatpush1.msra.mxu0 0.0
        %6311 = vmatprep.subr.mxu0 0.0
        %6312 = vmatpush1.msra.mxu0 0.0
        %6313 = vmatprep.subr.mxu0 0.0
        %6314 = vmatpush1.msra.mxu0 0.0
        %6315 = vmatprep.subr.mxu0 0.0
        %6316 = vmatpush1.msra.mxu0 0.0
        %6317 = vmatprep.subr.mxu0 0.0
        %6318 = vmatpush1.msra.mxu0 0.0
        %6319 = vmatprep.subr.mxu0 0.0
        %6320 = vmatpush1.msra.mxu0 0.0
        %6321 = vmatprep.subr.mxu0 0.0
        %6322 = vmatpush1.msra.mxu0 0.0
        %6323 = vmatprep.subr.mxu0 0.0
        %6324 = vmatpush1.msra.mxu0 0.0
        %6325 = vmatprep.subr.mxu0 0.0
        %6326 = vmatpush1.msra.mxu0 0.0
        %6327 = vmatprep.subr.mxu0 0.0
        %6328 = vmatpush1.msra.mxu0 0.0
        %6329 = vmatprep.subr.mxu0 0.0
        %6330 = vmatpush1.msra.mxu0 0.0
        %6331 = vmatprep.subr.mxu0 0.0
        %6332 = vmatpush1.msra.mxu0 0.0
        %6333 = vmatprep.subr.mxu0 0.0
        %6334 = vmatpush1.msra.mxu0 0.0
        %6335 = vmatprep.subr.mxu0 0.0
        %6336 = vmatpush1.msra.mxu0 0.0
        %6337 = vmatprep.subr.mxu0 0.0
        %6338 = vmatpush1.msra.mxu0 0.0
        %6339 = vmatprep.subr.mxu0 0.0
        %6340 = vmatpush1.msra.mxu0 0.0
        %6341 = vmatprep.subr.mxu0 0.0
        %6342 = vmatpush1.msra.mxu0 0.0
        %6343 = vmatprep.subr.mxu0 0.0
        %6344 = vmatpush1.msra.mxu0 0.0
        %6345 = vmatprep.subr.mxu0 0.0
        %6346 = vmatpush1.msra.mxu0 0.0
        %6347 = vmatprep.subr.mxu0 0.0
        %6348 = vmatpush1.msra.mxu0 0.0
        %6349 = vmatprep.subr.mxu0 0.0
        %6350 = vmatpush1.msra.mxu0 0.0
        %6351 = vmatprep.subr.mxu0 0.0
        %6352 = vmatpush1.msra.mxu0 0.0
        %6353 = vmatprep.subr.mxu0 0.0
        %6354 = vmatpush1.msra.mxu0 0.0
        %6355 = vmatprep.subr.mxu0 0.0
        %6356 = vmatpush1.msra.mxu0 0.0
        %6357 = vmatprep.subr.mxu0 0.0
        %6358 = vmatpush1.msra.mxu0 0.0
        %6359 = vmatprep.subr.mxu0 0.0
        %6360 = vmatpush1.msra.mxu0 0.0
        %6361 = vmatprep.subr.mxu0 0.0
        %6362 = vmatpush1.msra.mxu0 0.0
        %6363 = vmatprep.mubr.f32.mxu0 0.0
        %6364 = vmatmul.mubr.f32.gmra.mrb[0].mxu0 %v6297
        %v6365 = vpop.f32.mrb[0].mxu0
        %v6366 = vadd.f32 0.0, %v6365
        %v6367 = vpop.f32.mrb[0].mxu0
        %6368 = vdwg.mxu0
        %6369 = vmatprep.subr.mxu0 0.0
        %6370 = vmatpush1.msra.mxu0 %v395
        %6371 = vmatprep.subr.mxu0 0.0
        %6372 = vmatpush1.msra.mxu0 %v396
        %6373 = vmatprep.subr.mxu0 0.0
        %6374 = vmatpush1.msra.mxu0 0.0
        %6375 = vmatprep.subr.mxu0 0.0
        %6376 = vmatpush1.msra.mxu0 0.0
        %6377 = vmatprep.subr.mxu0 0.0
        %6378 = vmatpush1.msra.mxu0 0.0
        %6379 = vmatprep.subr.mxu0 0.0
        %6380 = vmatpush1.msra.mxu0 0.0
        %6381 = vmatprep.subr.mxu0 0.0
        %6382 = vmatpush1.msra.mxu0 0.0
        %6383 = vmatprep.subr.mxu0 0.0
        %6384 = vmatpush1.msra.mxu0 0.0
        %6385 = vmatprep.subr.mxu0 0.0
        %6386 = vmatpush1.msra.mxu0 0.0
        %6387 = vmatprep.subr.mxu0 0.0
        %6388 = vmatpush1.msra.mxu0 0.0
        %6389 = vmatprep.subr.mxu0 0.0
        %6390 = vmatpush1.msra.mxu0 0.0
        %6391 = vmatprep.subr.mxu0 0.0
        %6392 = vmatpush1.msra.mxu0 0.0
        %6393 = vmatprep.subr.mxu0 0.0
        %6394 = vmatpush1.msra.mxu0 0.0
        %6395 = vmatprep.subr.mxu0 0.0
        %6396 = vmatpush1.msra.mxu0 0.0
        %6397 = vmatprep.subr.mxu0 0.0
        %6398 = vmatpush1.msra.mxu0 0.0
        %6399 = vmatprep.subr.mxu0 0.0
        %6400 = vmatpush1.msra.mxu0 0.0
        %6401 = vmatprep.subr.mxu0 0.0
        %6402 = vmatpush1.msra.mxu0 0.0
        %6403 = vmatprep.subr.mxu0 0.0
        %6404 = vmatpush1.msra.mxu0 0.0
        %6405 = vmatprep.subr.mxu0 0.0
        %6406 = vmatpush1.msra.mxu0 0.0
        %6407 = vmatprep.subr.mxu0 0.0
        %6408 = vmatpush1.msra.mxu0 0.0
        %6409 = vmatprep.subr.mxu0 0.0
        %6410 = vmatpush1.msra.mxu0 0.0
        %6411 = vmatprep.subr.mxu0 0.0
        %6412 = vmatpush1.msra.mxu0 0.0
        %6413 = vmatprep.subr.mxu0 0.0
        %6414 = vmatpush1.msra.mxu0 0.0
        %6415 = vmatprep.subr.mxu0 0.0
        %6416 = vmatpush1.msra.mxu0 0.0
        %6417 = vmatprep.subr.mxu0 0.0
        %6418 = vmatpush1.msra.mxu0 0.0
        %6419 = vmatprep.subr.mxu0 0.0
        %6420 = vmatpush1.msra.mxu0 0.0
        %6421 = vmatprep.subr.mxu0 0.0
        %6422 = vmatpush1.msra.mxu0 0.0
        %6423 = vmatprep.subr.mxu0 0.0
        %6424 = vmatpush1.msra.mxu0 0.0
        %6425 = vmatprep.subr.mxu0 0.0
        %6426 = vmatpush1.msra.mxu0 0.0
        %6427 = vmatprep.subr.mxu0 0.0
        %6428 = vmatpush1.msra.mxu0 0.0
        %6429 = vmatprep.subr.mxu0 0.0
        %6430 = vmatpush1.msra.mxu0 0.0
        %6431 = vmatprep.subr.mxu0 0.0
        %6432 = vmatpush1.msra.mxu0 0.0
        %6433 = vmatprep.mubr.f32.mxu0 0.0
        %6434 = vmatmul.mubr.f32.gmra.mrb[0].mxu0 %v6297
        %v6435 = vpop.f32.mrb[0].mxu0
        %v6436 = vadd.f32 0.0, %v6435
        %v6437 = vpop.f32.mrb[0].mxu0
        %6438 = vdwg.mxu0
        %v6439 = vmax.f32 %v6366, %v6436
        %s6440 = scalar_lea.vmem %s173, 24 [#allocation7]
        %6441 = vst.msk [vmem:[%s6440] sm:$0xff] %vm5561, %v6439
        %vm6442 = vcmp.gt.f32.partialorder %v5198, 0.0
        %vm6443 = vcmp.gt.f32.partialorder %v5199, 0.0
        %v6444 = vmul.f32 %v5198, 0.1
        %v6445 = vmul.f32 %v5199, 0.1
        %v6446 = vsel %vm6442, %v5198, %v6444
        %v6447 = vsel %vm6443, %v5199, %v6445
        %6448 = vmatprep.subr.mxu0 0.0
        %6449 = vmatpush1.msra.mxu0 %v6446
        %6450 = vmatprep.subr.mxu0 0.0
        %6451 = vmatpush1.msra.mxu0 %v6447
        %6452 = vmatprep.subr.mxu0 0.0
        %6453 = vmatpush1.msra.mxu0 0.0
        %6454 = vmatprep.subr.mxu0 0.0
        %6455 = vmatpush1.msra.mxu0 0.0
        %6456 = vmatprep.subr.mxu0 0.0
        %6457 = vmatpush1.msra.mxu0 0.0
        %6458 = vmatprep.subr.mxu0 0.0
        %6459 = vmatpush1.msra.mxu0 0.0
        %6460 = vmatprep.subr.mxu0 0.0
        %6461 = vmatpush1.msra.mxu0 0.0
        %6462 = vmatprep.subr.mxu0 0.0
        %6463 = vmatpush1.msra.mxu0 0.0
        %6464 = vmatprep.subr.mxu0 0.0
        %6465 = vmatpush1.msra.mxu0 0.0
        %6466 = vmatprep.subr.mxu0 0.0
        %6467 = vmatpush1.msra.mxu0 0.0
        %6468 = vmatprep.subr.mxu0 0.0
        %6469 = vmatpush1.msra.mxu0 0.0
        %6470 = vmatprep.subr.mxu0 0.0
        %6471 = vmatpush1.msra.mxu0 0.0
        %6472 = vmatprep.subr.mxu0 0.0
        %6473 = vmatpush1.msra.mxu0 0.0
        %6474 = vmatprep.subr.mxu0 0.0
        %6475 = vmatpush1.msra.mxu0 0.0
        %6476 = vmatprep.subr.mxu0 0.0
        %6477 = vmatpush1.msra.mxu0 0.0
        %6478 = vmatprep.subr.mxu0 0.0
        %6479 = vmatpush1.msra.mxu0 0.0
        %6480 = vmatprep.subr.mxu0 0.0
        %6481 = vmatpush1.msra.mxu0 0.0
        %6482 = vmatprep.subr.mxu0 0.0
        %6483 = vmatpush1.msra.mxu0 0.0
        %6484 = vmatprep.subr.mxu0 0.0
        %6485 = vmatpush1.msra.mxu0 0.0
        %6486 = vmatprep.subr.mxu0 0.0
        %6487 = vmatpush1.msra.mxu0 0.0
        %6488 = vmatprep.subr.mxu0 0.0
        %6489 = vmatpush1.msra.mxu0 0.0
        %6490 = vmatprep.subr.mxu0 0.0
        %6491 = vmatpush1.msra.mxu0 0.0
        %6492 = vmatprep.subr.mxu0 0.0
        %6493 = vmatpush1.msra.mxu0 0.0
        %6494 = vmatprep.subr.mxu0 0.0
        %6495 = vmatpush1.msra.mxu0 0.0
        %6496 = vmatprep.subr.mxu0 0.0
        %6497 = vmatpush1.msra.mxu0 0.0
        %6498 = vmatprep.subr.mxu0 0.0
        %6499 = vmatpush1.msra.mxu0 0.0
        %6500 = vmatprep.subr.mxu0 0.0
        %6501 = vmatpush1.msra.mxu0 0.0
        %6502 = vmatprep.subr.mxu0 0.0
        %6503 = vmatpush1.msra.mxu0 0.0
        %6504 = vmatprep.subr.mxu0 0.0
        %6505 = vmatpush1.msra.mxu0 0.0
        %6506 = vmatprep.subr.mxu0 0.0
        %6507 = vmatpush1.msra.mxu0 0.0
        %6508 = vmatprep.subr.mxu0 0.0
        %6509 = vmatpush1.msra.mxu0 0.0
        %6510 = vmatprep.subr.mxu0 0.0
        %6511 = vmatpush1.msra.mxu0 0.0
        %6512 = vmatprep.mubr.f32.mxu0 0.0
        %6513 = vmatmul.mubr.f32.gmra.mrb[0].mxu0 %v5271
        %v6514 = vpop.f32.mrb[0].mxu0
        %v6515 = vadd.f32 0.0, %v6514
        %v6516 = vpop.f32.mrb[0].mxu0
        %6517 = vdwg.mxu0
        %6518 = vmatprep.subr.mxu0 0.0
        %6519 = vmatpush1.msra.mxu0 %v6446
        %6520 = vmatprep.subr.mxu0 0.0
        %6521 = vmatpush1.msra.mxu0 %v6447
        %6522 = vmatprep.subr.mxu0 0.0
        %6523 = vmatpush1.msra.mxu0 0.0
        %6524 = vmatprep.subr.mxu0 0.0
        %6525 = vmatpush1.msra.mxu0 0.0
        %6526 = vmatprep.subr.mxu0 0.0
        %6527 = vmatpush1.msra.mxu0 0.0
        %6528 = vmatprep.subr.mxu0 0.0
        %6529 = vmatpush1.msra.mxu0 0.0
        %6530 = vmatprep.subr.mxu0 0.0
        %6531 = vmatpush1.msra.mxu0 0.0
        %6532 = vmatprep.subr.mxu0 0.0
        %6533 = vmatpush1.msra.mxu0 0.0
        %6534 = vmatprep.subr.mxu0 0.0
        %6535 = vmatpush1.msra.mxu0 0.0
        %6536 = vmatprep.subr.mxu0 0.0
        %6537 = vmatpush1.msra.mxu0 0.0
        %6538 = vmatprep.subr.mxu0 0.0
        %6539 = vmatpush1.msra.mxu0 0.0
        %6540 = vmatprep.subr.mxu0 0.0
        %6541 = vmatpush1.msra.mxu0 0.0
        %6542 = vmatprep.subr.mxu0 0.0
        %6543 = vmatpush1.msra.mxu0 0.0
        %6544 = vmatprep.subr.mxu0 0.0
        %6545 = vmatpush1.msra.mxu0 0.0
        %6546 = vmatprep.subr.mxu0 0.0
        %6547 = vmatpush1.msra.mxu0 0.0
        %6548 = vmatprep.subr.mxu0 0.0
        %6549 = vmatpush1.msra.mxu0 0.0
        %6550 = vmatprep.subr.mxu0 0.0
        %6551 = vmatpush1.msra.mxu0 0.0
        %6552 = vmatprep.subr.mxu0 0.0
        %6553 = vmatpush1.msra.mxu0 0.0
        %6554 = vmatprep.subr.mxu0 0.0
        %6555 = vmatpush1.msra.mxu0 0.0
        %6556 = vmatprep.subr.mxu0 0.0
        %6557 = vmatpush1.msra.mxu0 0.0
        %6558 = vmatprep.subr.mxu0 0.0
        %6559 = vmatpush1.msra.mxu0 0.0
        %6560 = vmatprep.subr.mxu0 0.0
        %6561 = vmatpush1.msra.mxu0 0.0
        %6562 = vmatprep.subr.mxu0 0.0
        %6563 = vmatpush1.msra.mxu0 0.0
        %6564 = vmatprep.subr.mxu0 0.0
        %6565 = vmatpush1.msra.mxu0 0.0
        %6566 = vmatprep.subr.mxu0 0.0
        %6567 = vmatpush1.msra.mxu0 0.0
        %6568 = vmatprep.subr.mxu0 0.0
        %6569 = vmatpush1.msra.mxu0 0.0
        %6570 = vmatprep.subr.mxu0 0.0
        %6571 = vmatpush1.msra.mxu0 0.0
        %6572 = vmatprep.subr.mxu0 0.0
        %6573 = vmatpush1.msra.mxu0 0.0
        %6574 = vmatprep.subr.mxu0 0.0
        %6575 = vmatpush1.msra.mxu0 0.0
        %6576 = vmatprep.subr.mxu0 0.0
        %6577 = vmatpush1.msra.mxu0 0.0
        %6578 = vmatprep.subr.mxu0 0.0
        %6579 = vmatpush1.msra.mxu0 0.0
        %6580 = vmatprep.subr.mxu0 0.0
        %6581 = vmatpush1.msra.mxu0 0.0
        %6582 = vmatprep.mubr.f32.mxu0 0.0
        %6583 = vmatmul.mubr.f32.gmra.mrb[0].mxu0 %v5344
        %v6584 = vpop.f32.mrb[0].mxu0
        %v6585 = vadd.f32 0.0, %v6584
        %v6586 = vpop.f32.mrb[0].mxu0
        %6587 = vdwg.mxu0
        %v6588 = vmax.f32 %v6515, %v6585
        %v6590 = vsel %vm5269, %v6588, 0
        %6592 = vmatprep.subr.mxu0 0.0
        %6593 = vmatpush1.msra.mxu0 %v388
        %6594 = vmatprep.subr.mxu0 0.0
        %6595 = vmatpush1.msra.mxu0 %v389
        %6596 = vmatprep.subr.mxu0 0.0
        %6597 = vmatpush1.msra.mxu0 0.0
        %6598 = vmatprep.subr.mxu0 0.0
        %6599 = vmatpush1.msra.mxu0 0.0
        %6600 = vmatprep.subr.mxu0 0.0
        %6601 = vmatpush1.msra.mxu0 0.0
        %6602 = vmatprep.subr.mxu0 0.0
        %6603 = vmatpush1.msra.mxu0 0.0
        %6604 = vmatprep.subr.mxu0 0.0
        %6605 = vmatpush1.msra.mxu0 0.0
        %6606 = vmatprep.subr.mxu0 0.0
        %6607 = vmatpush1.msra.mxu0 0.0
        %6608 = vmatprep.subr.mxu0 0.0
        %6609 = vmatpush1.msra.mxu0 0.0
        %6610 = vmatprep.subr.mxu0 0.0
        %6611 = vmatpush1.msra.mxu0 0.0
        %6612 = vmatprep.subr.mxu0 0.0
        %6613 = vmatpush1.msra.mxu0 0.0
        %6614 = vmatprep.subr.mxu0 0.0
        %6615 = vmatpush1.msra.mxu0 0.0
        %6616 = vmatprep.subr.mxu0 0.0
        %6617 = vmatpush1.msra.mxu0 0.0
        %6618 = vmatprep.subr.mxu0 0.0
        %6619 = vmatpush1.msra.mxu0 0.0
        %6620 = vmatprep.subr.mxu0 0.0
        %6621 = vmatpush1.msra.mxu0 0.0
        %6622 = vmatprep.subr.mxu0 0.0
        %6623 = vmatpush1.msra.mxu0 0.0
        %6624 = vmatprep.subr.mxu0 0.0
        %6625 = vmatpush1.msra.mxu0 0.0
        %6626 = vmatprep.subr.mxu0 0.0
        %6627 = vmatpush1.msra.mxu0 0.0
        %6628 = vmatprep.subr.mxu0 0.0
        %6629 = vmatpush1.msra.mxu0 0.0
        %6630 = vmatprep.subr.mxu0 0.0
        %6631 = vmatpush1.msra.mxu0 0.0
        %6632 = vmatprep.subr.mxu0 0.0
        %6633 = vmatpush1.msra.mxu0 0.0
        %6634 = vmatprep.subr.mxu0 0.0
        %6635 = vmatpush1.msra.mxu0 0.0
        %6636 = vmatprep.subr.mxu0 0.0
        %6637 = vmatpush1.msra.mxu0 0.0
        %6638 = vmatprep.subr.mxu0 0.0
        %6639 = vmatpush1.msra.mxu0 0.0
        %6640 = vmatprep.subr.mxu0 0.0
        %6641 = vmatpush1.msra.mxu0 0.0
        %6642 = vmatprep.subr.mxu0 0.0
        %6643 = vmatpush1.msra.mxu0 0.0
        %6644 = vmatprep.subr.mxu0 0.0
        %6645 = vmatpush1.msra.mxu0 0.0
        %6646 = vmatprep.subr.mxu0 0.0
        %6647 = vmatpush1.msra.mxu0 0.0
        %6648 = vmatprep.subr.mxu0 0.0
        %6649 = vmatpush1.msra.mxu0 0.0
        %6650 = vmatprep.subr.mxu0 0.0
        %6651 = vmatpush1.msra.mxu0 0.0
        %6652 = vmatprep.subr.mxu0 0.0
        %6653 = vmatpush1.msra.mxu0 0.0
        %6654 = vmatprep.subr.mxu0 0.0
        %6655 = vmatpush1.msra.mxu0 0.0
        %6656 = vmatprep.mubr.f32.mxu0 0.0
        %6657 = vmatmul.mubr.f32.gmra.mrb[0].mxu0 %v6590
        %v6658 = vpop.f32.mrb[0].mxu0
        %v6659 = vadd.f32 0.0, %v6658
        %v6660 = vpop.f32.mrb[0].mxu0
        %6661 = vdwg.mxu0
        %6662 = vmatprep.subr.mxu0 0.0
        %6663 = vmatpush1.msra.mxu0 %v395
        %6664 = vmatprep.subr.mxu0 0.0
        %6665 = vmatpush1.msra.mxu0 %v396
        %6666 = vmatprep.subr.mxu0 0.0
        %6667 = vmatpush1.msra.mxu0 0.0
        %6668 = vmatprep.subr.mxu0 0.0
        %6669 = vmatpush1.msra.mxu0 0.0
        %6670 = vmatprep.subr.mxu0 0.0
        %6671 = vmatpush1.msra.mxu0 0.0
        %6672 = vmatprep.subr.mxu0 0.0
        %6673 = vmatpush1.msra.mxu0 0.0
        %6674 = vmatprep.subr.mxu0 0.0
        %6675 = vmatpush1.msra.mxu0 0.0
        %6676 = vmatprep.subr.mxu0 0.0
        %6677 = vmatpush1.msra.mxu0 0.0
        %6678 = vmatprep.subr.mxu0 0.0
        %6679 = vmatpush1.msra.mxu0 0.0
        %6680 = vmatprep.subr.mxu0 0.0
        %6681 = vmatpush1.msra.mxu0 0.0
        %6682 = vmatprep.subr.mxu0 0.0
        %6683 = vmatpush1.msra.mxu0 0.0
        %6684 = vmatprep.subr.mxu0 0.0
        %6685 = vmatpush1.msra.mxu0 0.0
        %6686 = vmatprep.subr.mxu0 0.0
        %6687 = vmatpush1.msra.mxu0 0.0
        %6688 = vmatprep.subr.mxu0 0.0
        %6689 = vmatpush1.msra.mxu0 0.0
        %6690 = vmatprep.subr.mxu0 0.0
        %6691 = vmatpush1.msra.mxu0 0.0
        %6692 = vmatprep.subr.mxu0 0.0
        %6693 = vmatpush1.msra.mxu0 0.0
        %6694 = vmatprep.subr.mxu0 0.0
        %6695 = vmatpush1.msra.mxu0 0.0
        %6696 = vmatprep.subr.mxu0 0.0
        %6697 = vmatpush1.msra.mxu0 0.0
        %6698 = vmatprep.subr.mxu0 0.0
        %6699 = vmatpush1.msra.mxu0 0.0
        %6700 = vmatprep.subr.mxu0 0.0
        %6701 = vmatpush1.msra.mxu0 0.0
        %6702 = vmatprep.subr.mxu0 0.0
        %6703 = vmatpush1.msra.mxu0 0.0
        %6704 = vmatprep.subr.mxu0 0.0
        %6705 = vmatpush1.msra.mxu0 0.0
        %6706 = vmatprep.subr.mxu0 0.0
        %6707 = vmatpush1.msra.mxu0 0.0
        %6708 = vmatprep.subr.mxu0 0.0
        %6709 = vmatpush1.msra.mxu0 0.0
        %6710 = vmatprep.subr.mxu0 0.0
        %6711 = vmatpush1.msra.mxu0 0.0
        %6712 = vmatprep.subr.mxu0 0.0
        %6713 = vmatpush1.msra.mxu0 0.0
        %6714 = vmatprep.subr.mxu0 0.0
        %6715 = vmatpush1.msra.mxu0 0.0
        %6716 = vmatprep.subr.mxu0 0.0
        %6717 = vmatpush1.msra.mxu0 0.0
        %6718 = vmatprep.subr.mxu0 0.0
        %6719 = vmatpush1.msra.mxu0 0.0
        %6720 = vmatprep.subr.mxu0 0.0
        %6721 = vmatpush1.msra.mxu0 0.0
        %6722 = vmatprep.subr.mxu0 0.0
        %6723 = vmatpush1.msra.mxu0 0.0
        %6724 = vmatprep.subr.mxu0 0.0
        %6725 = vmatpush1.msra.mxu0 0.0
        %6726 = vmatprep.mubr.f32.mxu0 0.0
        %6727 = vmatmul.mubr.f32.gmra.mrb[0].mxu0 %v6590
        %v6728 = vpop.f32.mrb[0].mxu0
        %v6729 = vadd.f32 0.0, %v6728
        %v6730 = vpop.f32.mrb[0].mxu0
        %6731 = vdwg.mxu0
        %v6732 = vmax.f32 %v6659, %v6729
        %s6733 = scalar_lea.vmem %s173, 32 [#allocation7]
        %6734 = vst.msk [vmem:[%s6733] sm:$0xff] %vm5561, %v6732
        %vm6735 = vcmp.gt.f32.partialorder %v5219, 0.0
        %vm6736 = vcmp.gt.f32.partialorder %v5220, 0.0
        %v6737 = vmul.f32 %v5219, 0.1
        %v6738 = vmul.f32 %v5220, 0.1
        %v6739 = vsel %vm6735, %v5219, %v6737
        %v6740 = vsel %vm6736, %v5220, %v6738
        %6741 = vmatprep.subr.mxu0 0.0
        %6742 = vmatpush1.msra.mxu0 %v6739
        %6743 = vmatprep.subr.mxu0 0.0
        %6744 = vmatpush1.msra.mxu0 %v6740
        %6745 = vmatprep.subr.mxu0 0.0
        %6746 = vmatpush1.msra.mxu0 0.0
        %6747 = vmatprep.subr.mxu0 0.0
        %6748 = vmatpush1.msra.mxu0 0.0
        %6749 = vmatprep.subr.mxu0 0.0
        %6750 = vmatpush1.msra.mxu0 0.0
        %6751 = vmatprep.subr.mxu0 0.0
        %6752 = vmatpush1.msra.mxu0 0.0
        %6753 = vmatprep.subr.mxu0 0.0
        %6754 = vmatpush1.msra.mxu0 0.0
        %6755 = vmatprep.subr.mxu0 0.0
        %6756 = vmatpush1.msra.mxu0 0.0
        %6757 = vmatprep.subr.mxu0 0.0
        %6758 = vmatpush1.msra.mxu0 0.0
        %6759 = vmatprep.subr.mxu0 0.0
        %6760 = vmatpush1.msra.mxu0 0.0
        %6761 = vmatprep.subr.mxu0 0.0
        %6762 = vmatpush1.msra.mxu0 0.0
        %6763 = vmatprep.subr.mxu0 0.0
        %6764 = vmatpush1.msra.mxu0 0.0
        %6765 = vmatprep.subr.mxu0 0.0
        %6766 = vmatpush1.msra.mxu0 0.0
        %6767 = vmatprep.subr.mxu0 0.0
        %6768 = vmatpush1.msra.mxu0 0.0
        %6769 = vmatprep.subr.mxu0 0.0
        %6770 = vmatpush1.msra.mxu0 0.0
        %6771 = vmatprep.subr.mxu0 0.0
        %6772 = vmatpush1.msra.mxu0 0.0
        %6773 = vmatprep.subr.mxu0 0.0
        %6774 = vmatpush1.msra.mxu0 0.0
        %6775 = vmatprep.subr.mxu0 0.0
        %6776 = vmatpush1.msra.mxu0 0.0
        %6777 = vmatprep.subr.mxu0 0.0
        %6778 = vmatpush1.msra.mxu0 0.0
        %6779 = vmatprep.subr.mxu0 0.0
        %6780 = vmatpush1.msra.mxu0 0.0
        %6781 = vmatprep.subr.mxu0 0.0
        %6782 = vmatpush1.msra.mxu0 0.0
        %6783 = vmatprep.subr.mxu0 0.0
        %6784 = vmatpush1.msra.mxu0 0.0
        %6785 = vmatprep.subr.mxu0 0.0
        %6786 = vmatpush1.msra.mxu0 0.0
        %6787 = vmatprep.subr.mxu0 0.0
        %6788 = vmatpush1.msra.mxu0 0.0
        %6789 = vmatprep.subr.mxu0 0.0
        %6790 = vmatpush1.msra.mxu0 0.0
        %6791 = vmatprep.subr.mxu0 0.0
        %6792 = vmatpush1.msra.mxu0 0.0
        %6793 = vmatprep.subr.mxu0 0.0
        %6794 = vmatpush1.msra.mxu0 0.0
        %6795 = vmatprep.subr.mxu0 0.0
        %6796 = vmatpush1.msra.mxu0 0.0
        %6797 = vmatprep.subr.mxu0 0.0
        %6798 = vmatpush1.msra.mxu0 0.0
        %6799 = vmatprep.subr.mxu0 0.0
        %6800 = vmatpush1.msra.mxu0 0.0
        %6801 = vmatprep.subr.mxu0 0.0
        %6802 = vmatpush1.msra.mxu0 0.0
        %6803 = vmatprep.subr.mxu0 0.0
        %6804 = vmatpush1.msra.mxu0 0.0
        %6805 = vmatprep.mubr.f32.mxu0 0.0
        %6806 = vmatmul.mubr.f32.gmra.mrb[0].mxu0 %v5271
        %v6807 = vpop.f32.mrb[0].mxu0
        %v6808 = vadd.f32 0.0, %v6807
        %v6809 = vpop.f32.mrb[0].mxu0
        %6810 = vdwg.mxu0
        %6811 = vmatprep.subr.mxu0 0.0
        %6812 = vmatpush1.msra.mxu0 %v6739
        %6813 = vmatprep.subr.mxu0 0.0
        %6814 = vmatpush1.msra.mxu0 %v6740
        %6815 = vmatprep.subr.mxu0 0.0
        %6816 = vmatpush1.msra.mxu0 0.0
        %6817 = vmatprep.subr.mxu0 0.0
        %6818 = vmatpush1.msra.mxu0 0.0
        %6819 = vmatprep.subr.mxu0 0.0
        %6820 = vmatpush1.msra.mxu0 0.0
        %6821 = vmatprep.subr.mxu0 0.0
        %6822 = vmatpush1.msra.mxu0 0.0
        %6823 = vmatprep.subr.mxu0 0.0
        %6824 = vmatpush1.msra.mxu0 0.0
        %6825 = vmatprep.subr.mxu0 0.0
        %6826 = vmatpush1.msra.mxu0 0.0
        %6827 = vmatprep.subr.mxu0 0.0
        %6828 = vmatpush1.msra.mxu0 0.0
        %6829 = vmatprep.subr.mxu0 0.0
        %6830 = vmatpush1.msra.mxu0 0.0
        %6831 = vmatprep.subr.mxu0 0.0
        %6832 = vmatpush1.msra.mxu0 0.0
        %6833 = vmatprep.subr.mxu0 0.0
        %6834 = vmatpush1.msra.mxu0 0.0
        %6835 = vmatprep.subr.mxu0 0.0
        %6836 = vmatpush1.msra.mxu0 0.0
        %6837 = vmatprep.subr.mxu0 0.0
        %6838 = vmatpush1.msra.mxu0 0.0
        %6839 = vmatprep.subr.mxu0 0.0
        %6840 = vmatpush1.msra.mxu0 0.0
        %6841 = vmatprep.subr.mxu0 0.0
        %6842 = vmatpush1.msra.mxu0 0.0
        %6843 = vmatprep.subr.mxu0 0.0
        %6844 = vmatpush1.msra.mxu0 0.0
        %6845 = vmatprep.subr.mxu0 0.0
        %6846 = vmatpush1.msra.mxu0 0.0
        %6847 = vmatprep.subr.mxu0 0.0
        %6848 = vmatpush1.msra.mxu0 0.0
        %6849 = vmatprep.subr.mxu0 0.0
        %6850 = vmatpush1.msra.mxu0 0.0
        %6851 = vmatprep.subr.mxu0 0.0
        %6852 = vmatpush1.msra.mxu0 0.0
        %6853 = vmatprep.subr.mxu0 0.0
        %6854 = vmatpush1.msra.mxu0 0.0
        %6855 = vmatprep.subr.mxu0 0.0
        %6856 = vmatpush1.msra.mxu0 0.0
        %6857 = vmatprep.subr.mxu0 0.0
        %6858 = vmatpush1.msra.mxu0 0.0
        %6859 = vmatprep.subr.mxu0 0.0
        %6860 = vmatpush1.msra.mxu0 0.0
        %6861 = vmatprep.subr.mxu0 0.0
        %6862 = vmatpush1.msra.mxu0 0.0
        %6863 = vmatprep.subr.mxu0 0.0
        %6864 = vmatpush1.msra.mxu0 0.0
        %6865 = vmatprep.subr.mxu0 0.0
        %6866 = vmatpush1.msra.mxu0 0.0
        %6867 = vmatprep.subr.mxu0 0.0
        %6868 = vmatpush1.msra.mxu0 0.0
        %6869 = vmatprep.subr.mxu0 0.0
        %6870 = vmatpush1.msra.mxu0 0.0
        %6871 = vmatprep.subr.mxu0 0.0
        %6872 = vmatpush1.msra.mxu0 0.0
        %6873 = vmatprep.subr.mxu0 0.0
        %6874 = vmatpush1.msra.mxu0 0.0
        %6875 = vmatprep.mubr.f32.mxu0 0.0
        %6876 = vmatmul.mubr.f32.gmra.mrb[0].mxu0 %v5344
        %v6877 = vpop.f32.mrb[0].mxu0
        %v6878 = vadd.f32 0.0, %v6877
        %v6879 = vpop.f32.mrb[0].mxu0
        %6880 = vdwg.mxu0
        %v6881 = vmax.f32 %v6808, %v6878
        %v6883 = vsel %vm5269, %v6881, 0
        %6885 = vmatprep.subr.mxu0 0.0
        %6886 = vmatpush1.msra.mxu0 %v388
        %6887 = vmatprep.subr.mxu0 0.0
        %6888 = vmatpush1.msra.mxu0 %v389
        %6889 = vmatprep.subr.mxu0 0.0
        %6890 = vmatpush1.msra.mxu0 0.0
        %6891 = vmatprep.subr.mxu0 0.0
        %6892 = vmatpush1.msra.mxu0 0.0
        %6893 = vmatprep.subr.mxu0 0.0
        %6894 = vmatpush1.msra.mxu0 0.0
        %6895 = vmatprep.subr.mxu0 0.0
        %6896 = vmatpush1.msra.mxu0 0.0
        %6897 = vmatprep.subr.mxu0 0.0
        %6898 = vmatpush1.msra.mxu0 0.0
        %6899 = vmatprep.subr.mxu0 0.0
        %6900 = vmatpush1.msra.mxu0 0.0
        %6901 = vmatprep.subr.mxu0 0.0
        %6902 = vmatpush1.msra.mxu0 0.0
        %6903 = vmatprep.subr.mxu0 0.0
        %6904 = vmatpush1.msra.mxu0 0.0
        %6905 = vmatprep.subr.mxu0 0.0
        %6906 = vmatpush1.msra.mxu0 0.0
        %6907 = vmatprep.subr.mxu0 0.0
        %6908 = vmatpush1.msra.mxu0 0.0
        %6909 = vmatprep.subr.mxu0 0.0
        %6910 = vmatpush1.msra.mxu0 0.0
        %6911 = vmatprep.subr.mxu0 0.0
        %6912 = vmatpush1.msra.mxu0 0.0
        %6913 = vmatprep.subr.mxu0 0.0
        %6914 = vmatpush1.msra.mxu0 0.0
        %6915 = vmatprep.subr.mxu0 0.0
        %6916 = vmatpush1.msra.mxu0 0.0
        %6917 = vmatprep.subr.mxu0 0.0
        %6918 = vmatpush1.msra.mxu0 0.0
        %6919 = vmatprep.subr.mxu0 0.0
        %6920 = vmatpush1.msra.mxu0 0.0
        %6921 = vmatprep.subr.mxu0 0.0
        %6922 = vmatpush1.msra.mxu0 0.0
        %6923 = vmatprep.subr.mxu0 0.0
        %6924 = vmatpush1.msra.mxu0 0.0
        %6925 = vmatprep.subr.mxu0 0.0
        %6926 = vmatpush1.msra.mxu0 0.0
        %6927 = vmatprep.subr.mxu0 0.0
        %6928 = vmatpush1.msra.mxu0 0.0
        %6929 = vmatprep.subr.mxu0 0.0
        %6930 = vmatpush1.msra.mxu0 0.0
        %6931 = vmatprep.subr.mxu0 0.0
        %6932 = vmatpush1.msra.mxu0 0.0
        %6933 = vmatprep.subr.mxu0 0.0
        %6934 = vmatpush1.msra.mxu0 0.0
        %6935 = vmatprep.subr.mxu0 0.0
        %6936 = vmatpush1.msra.mxu0 0.0
        %6937 = vmatprep.subr.mxu0 0.0
        %6938 = vmatpush1.msra.mxu0 0.0
        %6939 = vmatprep.subr.mxu0 0.0
        %6940 = vmatpush1.msra.mxu0 0.0
        %6941 = vmatprep.subr.mxu0 0.0
        %6942 = vmatpush1.msra.mxu0 0.0
        %6943 = vmatprep.subr.mxu0 0.0
        %6944 = vmatpush1.msra.mxu0 0.0
        %6945 = vmatprep.subr.mxu0 0.0
        %6946 = vmatpush1.msra.mxu0 0.0
        %6947 = vmatprep.subr.mxu0 0.0
        %6948 = vmatpush1.msra.mxu0 0.0
        %6949 = vmatprep.mubr.f32.mxu0 0.0
        %6950 = vmatmul.mubr.f32.gmra.mrb[0].mxu0 %v6883
        %v6951 = vpop.f32.mrb[0].mxu0
        %v6952 = vadd.f32 0.0, %v6951
        %v6953 = vpop.f32.mrb[0].mxu0
        %6954 = vdwg.mxu0
        %6955 = vmatprep.subr.mxu0 0.0
        %6956 = vmatpush1.msra.mxu0 %v395
        %6957 = vmatprep.subr.mxu0 0.0
        %6958 = vmatpush1.msra.mxu0 %v396
        %6959 = vmatprep.subr.mxu0 0.0
        %6960 = vmatpush1.msra.mxu0 0.0
        %6961 = vmatprep.subr.mxu0 0.0
        %6962 = vmatpush1.msra.mxu0 0.0
        %6963 = vmatprep.subr.mxu0 0.0
        %6964 = vmatpush1.msra.mxu0 0.0
        %6965 = vmatprep.subr.mxu0 0.0
        %6966 = vmatpush1.msra.mxu0 0.0
        %6967 = vmatprep.subr.mxu0 0.0
        %6968 = vmatpush1.msra.mxu0 0.0
        %6969 = vmatprep.subr.mxu0 0.0
        %6970 = vmatpush1.msra.mxu0 0.0
        %6971 = vmatprep.subr.mxu0 0.0
        %6972 = vmatpush1.msra.mxu0 0.0
        %6973 = vmatprep.subr.mxu0 0.0
        %6974 = vmatpush1.msra.mxu0 0.0
        %6975 = vmatprep.subr.mxu0 0.0
        %6976 = vmatpush1.msra.mxu0 0.0
        %6977 = vmatprep.subr.mxu0 0.0
        %6978 = vmatpush1.msra.mxu0 0.0
        %6979 = vmatprep.subr.mxu0 0.0
        %6980 = vmatpush1.msra.mxu0 0.0
        %6981 = vmatprep.subr.mxu0 0.0
        %6982 = vmatpush1.msra.mxu0 0.0
        %6983 = vmatprep.subr.mxu0 0.0
        %6984 = vmatpush1.msra.mxu0 0.0
        %6985 = vmatprep.subr.mxu0 0.0
        %6986 = vmatpush1.msra.mxu0 0.0
        %6987 = vmatprep.subr.mxu0 0.0
        %6988 = vmatpush1.msra.mxu0 0.0
        %6989 = vmatprep.subr.mxu0 0.0
        %6990 = vmatpush1.msra.mxu0 0.0
        %6991 = vmatprep.subr.mxu0 0.0
        %6992 = vmatpush1.msra.mxu0 0.0
        %6993 = vmatprep.subr.mxu0 0.0
        %6994 = vmatpush1.msra.mxu0 0.0
        %6995 = vmatprep.subr.mxu0 0.0
        %6996 = vmatpush1.msra.mxu0 0.0
        %6997 = vmatprep.subr.mxu0 0.0
        %6998 = vmatpush1.msra.mxu0 0.0
        %6999 = vmatprep.subr.mxu0 0.0
        %7000 = vmatpush1.msra.mxu0 0.0
        %7001 = vmatprep.subr.mxu0 0.0
        %7002 = vmatpush1.msra.mxu0 0.0
        %7003 = vmatprep.subr.mxu0 0.0
        %7004 = vmatpush1.msra.mxu0 0.0
        %7005 = vmatprep.subr.mxu0 0.0
        %7006 = vmatpush1.msra.mxu0 0.0
        %7007 = vmatprep.subr.mxu0 0.0
        %7008 = vmatpush1.msra.mxu0 0.0
        %7009 = vmatprep.subr.mxu0 0.0
        %7010 = vmatpush1.msra.mxu0 0.0
        %7011 = vmatprep.subr.mxu0 0.0
        %7012 = vmatpush1.msra.mxu0 0.0
        %7013 = vmatprep.subr.mxu0 0.0
        %7014 = vmatpush1.msra.mxu0 0.0
        %7015 = vmatprep.subr.mxu0 0.0
        %7016 = vmatpush1.msra.mxu0 0.0
        %7017 = vmatprep.subr.mxu0 0.0
        %7018 = vmatpush1.msra.mxu0 0.0
        %7019 = vmatprep.mubr.f32.mxu0 0.0
        %7020 = vmatmul.mubr.f32.gmra.mrb[0].mxu0 %v6883
        %v7021 = vpop.f32.mrb[0].mxu0
        %v7022 = vadd.f32 0.0, %v7021
        %v7023 = vpop.f32.mrb[0].mxu0
        %7024 = vdwg.mxu0
        %v7025 = vmax.f32 %v6952, %v7022
        %s7026 = scalar_lea.vmem %s173, 40 [#allocation7]
        %7027 = vst.msk [vmem:[%s7026] sm:$0xff] %vm5561, %v7025
        %vm7028 = vcmp.gt.f32.partialorder %v5240, 0.0
        %vm7029 = vcmp.gt.f32.partialorder %v5241, 0.0
        %v7030 = vmul.f32 %v5240, 0.1
        %v7031 = vmul.f32 %v5241, 0.1
        %v7032 = vsel %vm7028, %v5240, %v7030
        %v7033 = vsel %vm7029, %v5241, %v7031
        %7034 = vmatprep.subr.mxu0 0.0
        %7035 = vmatpush1.msra.mxu0 %v7032
        %7036 = vmatprep.subr.mxu0 0.0
        %7037 = vmatpush1.msra.mxu0 %v7033
        %7038 = vmatprep.subr.mxu0 0.0
        %7039 = vmatpush1.msra.mxu0 0.0
        %7040 = vmatprep.subr.mxu0 0.0
        %7041 = vmatpush1.msra.mxu0 0.0
        %7042 = vmatprep.subr.mxu0 0.0
        %7043 = vmatpush1.msra.mxu0 0.0
        %7044 = vmatprep.subr.mxu0 0.0
        %7045 = vmatpush1.msra.mxu0 0.0
        %7046 = vmatprep.subr.mxu0 0.0
        %7047 = vmatpush1.msra.mxu0 0.0
        %7048 = vmatprep.subr.mxu0 0.0
        %7049 = vmatpush1.msra.mxu0 0.0
        %7050 = vmatprep.subr.mxu0 0.0
        %7051 = vmatpush1.msra.mxu0 0.0
        %7052 = vmatprep.subr.mxu0 0.0
        %7053 = vmatpush1.msra.mxu0 0.0
        %7054 = vmatprep.subr.mxu0 0.0
        %7055 = vmatpush1.msra.mxu0 0.0
        %7056 = vmatprep.subr.mxu0 0.0
        %7057 = vmatpush1.msra.mxu0 0.0
        %7058 = vmatprep.subr.mxu0 0.0
        %7059 = vmatpush1.msra.mxu0 0.0
        %7060 = vmatprep.subr.mxu0 0.0
        %7061 = vmatpush1.msra.mxu0 0.0
        %7062 = vmatprep.subr.mxu0 0.0
        %7063 = vmatpush1.msra.mxu0 0.0
        %7064 = vmatprep.subr.mxu0 0.0
        %7065 = vmatpush1.msra.mxu0 0.0
        %7066 = vmatprep.subr.mxu0 0.0
        %7067 = vmatpush1.msra.mxu0 0.0
        %7068 = vmatprep.subr.mxu0 0.0
        %7069 = vmatpush1.msra.mxu0 0.0
        %7070 = vmatprep.subr.mxu0 0.0
        %7071 = vmatpush1.msra.mxu0 0.0
        %7072 = vmatprep.subr.mxu0 0.0
        %7073 = vmatpush1.msra.mxu0 0.0
        %7074 = vmatprep.subr.mxu0 0.0
        %7075 = vmatpush1.msra.mxu0 0.0
        %7076 = vmatprep.subr.mxu0 0.0
        %7077 = vmatpush1.msra.mxu0 0.0
        %7078 = vmatprep.subr.mxu0 0.0
        %7079 = vmatpush1.msra.mxu0 0.0
        %7080 = vmatprep.subr.mxu0 0.0
        %7081 = vmatpush1.msra.mxu0 0.0
        %7082 = vmatprep.subr.mxu0 0.0
        %7083 = vmatpush1.msra.mxu0 0.0
        %7084 = vmatprep.subr.mxu0 0.0
        %7085 = vmatpush1.msra.mxu0 0.0
        %7086 = vmatprep.subr.mxu0 0.0
        %7087 = vmatpush1.msra.mxu0 0.0
        %7088 = vmatprep.subr.mxu0 0.0
        %7089 = vmatpush1.msra.mxu0 0.0
        %7090 = vmatprep.subr.mxu0 0.0
        %7091 = vmatpush1.msra.mxu0 0.0
        %7092 = vmatprep.subr.mxu0 0.0
        %7093 = vmatpush1.msra.mxu0 0.0
        %7094 = vmatprep.subr.mxu0 0.0
        %7095 = vmatpush1.msra.mxu0 0.0
        %7096 = vmatprep.subr.mxu0 0.0
        %7097 = vmatpush1.msra.mxu0 0.0
        %7098 = vmatprep.mubr.f32.mxu0 0.0
        %7099 = vmatmul.mubr.f32.gmra.mrb[0].mxu0 %v5271
        %v7100 = vpop.f32.mrb[0].mxu0
        %v7101 = vadd.f32 0.0, %v7100
        %v7102 = vpop.f32.mrb[0].mxu0
        %7103 = vdwg.mxu0
        %7104 = vmatprep.subr.mxu0 0.0
        %7105 = vmatpush1.msra.mxu0 %v7032
        %7106 = vmatprep.subr.mxu0 0.0
        %7107 = vmatpush1.msra.mxu0 %v7033
        %7108 = vmatprep.subr.mxu0 0.0
        %7109 = vmatpush1.msra.mxu0 0.0
        %7110 = vmatprep.subr.mxu0 0.0
        %7111 = vmatpush1.msra.mxu0 0.0
        %7112 = vmatprep.subr.mxu0 0.0
        %7113 = vmatpush1.msra.mxu0 0.0
        %7114 = vmatprep.subr.mxu0 0.0
        %7115 = vmatpush1.msra.mxu0 0.0
        %7116 = vmatprep.subr.mxu0 0.0
        %7117 = vmatpush1.msra.mxu0 0.0
        %7118 = vmatprep.subr.mxu0 0.0
        %7119 = vmatpush1.msra.mxu0 0.0
        %7120 = vmatprep.subr.mxu0 0.0
        %7121 = vmatpush1.msra.mxu0 0.0
        %7122 = vmatprep.subr.mxu0 0.0
        %7123 = vmatpush1.msra.mxu0 0.0
        %7124 = vmatprep.subr.mxu0 0.0
        %7125 = vmatpush1.msra.mxu0 0.0
        %7126 = vmatprep.subr.mxu0 0.0
        %7127 = vmatpush1.msra.mxu0 0.0
        %7128 = vmatprep.subr.mxu0 0.0
        %7129 = vmatpush1.msra.mxu0 0.0
        %7130 = vmatprep.subr.mxu0 0.0
        %7131 = vmatpush1.msra.mxu0 0.0
        %7132 = vmatprep.subr.mxu0 0.0
        %7133 = vmatpush1.msra.mxu0 0.0
        %7134 = vmatprep.subr.mxu0 0.0
        %7135 = vmatpush1.msra.mxu0 0.0
        %7136 = vmatprep.subr.mxu0 0.0
        %7137 = vmatpush1.msra.mxu0 0.0
        %7138 = vmatprep.subr.mxu0 0.0
        %7139 = vmatpush1.msra.mxu0 0.0
        %7140 = vmatprep.subr.mxu0 0.0
        %7141 = vmatpush1.msra.mxu0 0.0
        %7142 = vmatprep.subr.mxu0 0.0
        %7143 = vmatpush1.msra.mxu0 0.0
        %7144 = vmatprep.subr.mxu0 0.0
        %7145 = vmatpush1.msra.mxu0 0.0
        %7146 = vmatprep.subr.mxu0 0.0
        %7147 = vmatpush1.msra.mxu0 0.0
        %7148 = vmatprep.subr.mxu0 0.0
        %7149 = vmatpush1.msra.mxu0 0.0
        %7150 = vmatprep.subr.mxu0 0.0
        %7151 = vmatpush1.msra.mxu0 0.0
        %7152 = vmatprep.subr.mxu0 0.0
        %7153 = vmatpush1.msra.mxu0 0.0
        %7154 = vmatprep.subr.mxu0 0.0
        %7155 = vmatpush1.msra.mxu0 0.0
        %7156 = vmatprep.subr.mxu0 0.0
        %7157 = vmatpush1.msra.mxu0 0.0
        %7158 = vmatprep.subr.mxu0 0.0
        %7159 = vmatpush1.msra.mxu0 0.0
        %7160 = vmatprep.subr.mxu0 0.0
        %7161 = vmatpush1.msra.mxu0 0.0
        %7162 = vmatprep.subr.mxu0 0.0
        %7163 = vmatpush1.msra.mxu0 0.0
        %7164 = vmatprep.subr.mxu0 0.0
        %7165 = vmatpush1.msra.mxu0 0.0
        %7166 = vmatprep.subr.mxu0 0.0
        %7167 = vmatpush1.msra.mxu0 0.0
        %7168 = vmatprep.mubr.f32.mxu0 0.0
        %7169 = vmatmul.mubr.f32.gmra.mrb[0].mxu0 %v5344
        %v7170 = vpop.f32.mrb[0].mxu0
        %v7171 = vadd.f32 0.0, %v7170
        %v7172 = vpop.f32.mrb[0].mxu0
        %7173 = vdwg.mxu0
        %v7174 = vmax.f32 %v7101, %v7171
        %v7176 = vsel %vm5269, %v7174, 0
        %7178 = vmatprep.subr.mxu0 0.0
        %7179 = vmatpush1.msra.mxu0 %v388
        %7180 = vmatprep.subr.mxu0 0.0
        %7181 = vmatpush1.msra.mxu0 %v389
        %7182 = vmatprep.subr.mxu0 0.0
        %7183 = vmatpush1.msra.mxu0 0.0
        %7184 = vmatprep.subr.mxu0 0.0
        %7185 = vmatpush1.msra.mxu0 0.0
        %7186 = vmatprep.subr.mxu0 0.0
        %7187 = vmatpush1.msra.mxu0 0.0
        %7188 = vmatprep.subr.mxu0 0.0
        %7189 = vmatpush1.msra.mxu0 0.0
        %7190 = vmatprep.subr.mxu0 0.0
        %7191 = vmatpush1.msra.mxu0 0.0
        %7192 = vmatprep.subr.mxu0 0.0
        %7193 = vmatpush1.msra.mxu0 0.0
        %7194 = vmatprep.subr.mxu0 0.0
        %7195 = vmatpush1.msra.mxu0 0.0
        %7196 = vmatprep.subr.mxu0 0.0
        %7197 = vmatpush1.msra.mxu0 0.0
        %7198 = vmatprep.subr.mxu0 0.0
        %7199 = vmatpush1.msra.mxu0 0.0
        %7200 = vmatprep.subr.mxu0 0.0
        %7201 = vmatpush1.msra.mxu0 0.0
        %7202 = vmatprep.subr.mxu0 0.0
        %7203 = vmatpush1.msra.mxu0 0.0
        %7204 = vmatprep.subr.mxu0 0.0
        %7205 = vmatpush1.msra.mxu0 0.0
        %7206 = vmatprep.subr.mxu0 0.0
        %7207 = vmatpush1.msra.mxu0 0.0
        %7208 = vmatprep.subr.mxu0 0.0
        %7209 = vmatpush1.msra.mxu0 0.0
        %7210 = vmatprep.subr.mxu0 0.0
        %7211 = vmatpush1.msra.mxu0 0.0
        %7212 = vmatprep.subr.mxu0 0.0
        %7213 = vmatpush1.msra.mxu0 0.0
        %7214 = vmatprep.subr.mxu0 0.0
        %7215 = vmatpush1.msra.mxu0 0.0
        %7216 = vmatprep.subr.mxu0 0.0
        %7217 = vmatpush1.msra.mxu0 0.0
        %7218 = vmatprep.subr.mxu0 0.0
        %7219 = vmatpush1.msra.mxu0 0.0
        %7220 = vmatprep.subr.mxu0 0.0
        %7221 = vmatpush1.msra.mxu0 0.0
        %7222 = vmatprep.subr.mxu0 0.0
        %7223 = vmatpush1.msra.mxu0 0.0
        %7224 = vmatprep.subr.mxu0 0.0
        %7225 = vmatpush1.msra.mxu0 0.0
        %7226 = vmatprep.subr.mxu0 0.0
        %7227 = vmatpush1.msra.mxu0 0.0
        %7228 = vmatprep.subr.mxu0 0.0
        %7229 = vmatpush1.msra.mxu0 0.0
        %7230 = vmatprep.subr.mxu0 0.0
        %7231 = vmatpush1.msra.mxu0 0.0
        %7232 = vmatprep.subr.mxu0 0.0
        %7233 = vmatpush1.msra.mxu0 0.0
        %7234 = vmatprep.subr.mxu0 0.0
        %7235 = vmatpush1.msra.mxu0 0.0
        %7236 = vmatprep.subr.mxu0 0.0
        %7237 = vmatpush1.msra.mxu0 0.0
        %7238 = vmatprep.subr.mxu0 0.0
        %7239 = vmatpush1.msra.mxu0 0.0
        %7240 = vmatprep.subr.mxu0 0.0
        %7241 = vmatpush1.msra.mxu0 0.0
        %7242 = vmatprep.mubr.f32.mxu0 0.0
        %7243 = vmatmul.mubr.f32.gmra.mrb[0].mxu0 %v7176
        %v7244 = vpop.f32.mrb[0].mxu0
        %v7245 = vadd.f32 0.0, %v7244
        %v7246 = vpop.f32.mrb[0].mxu0
        %7247 = vdwg.mxu0
        %7248 = vmatprep.subr.mxu0 0.0
        %7249 = vmatpush1.msra.mxu0 %v395
        %7250 = vmatprep.subr.mxu0 0.0
        %7251 = vmatpush1.msra.mxu0 %v396
        %7252 = vmatprep.subr.mxu0 0.0
        %7253 = vmatpush1.msra.mxu0 0.0
        %7254 = vmatprep.subr.mxu0 0.0
        %7255 = vmatpush1.msra.mxu0 0.0
        %7256 = vmatprep.subr.mxu0 0.0
        %7257 = vmatpush1.msra.mxu0 0.0
        %7258 = vmatprep.subr.mxu0 0.0
        %7259 = vmatpush1.msra.mxu0 0.0
        %7260 = vmatprep.subr.mxu0 0.0
        %7261 = vmatpush1.msra.mxu0 0.0
        %7262 = vmatprep.subr.mxu0 0.0
        %7263 = vmatpush1.msra.mxu0 0.0
        %7264 = vmatprep.subr.mxu0 0.0
        %7265 = vmatpush1.msra.mxu0 0.0
        %7266 = vmatprep.subr.mxu0 0.0
        %7267 = vmatpush1.msra.mxu0 0.0
        %7268 = vmatprep.subr.mxu0 0.0
        %7269 = vmatpush1.msra.mxu0 0.0
        %7270 = vmatprep.subr.mxu0 0.0
        %7271 = vmatpush1.msra.mxu0 0.0
        %7272 = vmatprep.subr.mxu0 0.0
        %7273 = vmatpush1.msra.mxu0 0.0
        %7274 = vmatprep.subr.mxu0 0.0
        %7275 = vmatpush1.msra.mxu0 0.0
        %7276 = vmatprep.subr.mxu0 0.0
        %7277 = vmatpush1.msra.mxu0 0.0
        %7278 = vmatprep.subr.mxu0 0.0
        %7279 = vmatpush1.msra.mxu0 0.0
        %7280 = vmatprep.subr.mxu0 0.0
        %7281 = vmatpush1.msra.mxu0 0.0
        %7282 = vmatprep.subr.mxu0 0.0
        %7283 = vmatpush1.msra.mxu0 0.0
        %7284 = vmatprep.subr.mxu0 0.0
        %7285 = vmatpush1.msra.mxu0 0.0
        %7286 = vmatprep.subr.mxu0 0.0
        %7287 = vmatpush1.msra.mxu0 0.0
        %7288 = vmatprep.subr.mxu0 0.0
        %7289 = vmatpush1.msra.mxu0 0.0
        %7290 = vmatprep.subr.mxu0 0.0
        %7291 = vmatpush1.msra.mxu0 0.0
        %7292 = vmatprep.subr.mxu0 0.0
        %7293 = vmatpush1.msra.mxu0 0.0
        %7294 = vmatprep.subr.mxu0 0.0
        %7295 = vmatpush1.msra.mxu0 0.0
        %7296 = vmatprep.subr.mxu0 0.0
        %7297 = vmatpush1.msra.mxu0 0.0
        %7298 = vmatprep.subr.mxu0 0.0
        %7299 = vmatpush1.msra.mxu0 0.0
        %7300 = vmatprep.subr.mxu0 0.0
        %7301 = vmatpush1.msra.mxu0 0.0
        %7302 = vmatprep.subr.mxu0 0.0
        %7303 = vmatpush1.msra.mxu0 0.0
        %7304 = vmatprep.subr.mxu0 0.0
        %7305 = vmatpush1.msra.mxu0 0.0
        %7306 = vmatprep.subr.mxu0 0.0
        %7307 = vmatpush1.msra.mxu0 0.0
        %7308 = vmatprep.subr.mxu0 0.0
        %7309 = vmatpush1.msra.mxu0 0.0
        %7310 = vmatprep.subr.mxu0 0.0
        %7311 = vmatpush1.msra.mxu0 0.0
        %7312 = vmatprep.mubr.f32.mxu0 0.0
        %7313 = vmatmul.mubr.f32.gmra.mrb[0].mxu0 %v7176
        %v7314 = vpop.f32.mrb[0].mxu0
        %v7315 = vadd.f32 0.0, %v7314
        %v7316 = vpop.f32.mrb[0].mxu0
        %7317 = vdwg.mxu0
        %v7318 = vmax.f32 %v7245, %v7315
        %s7319 = scalar_lea.vmem %s173, 48 [#allocation7]
        %7320 = vst.msk [vmem:[%s7319] sm:$0xff] %vm5561, %v7318
        %vm7321 = vcmp.gt.f32.partialorder %v5261, 0.0
        %vm7322 = vcmp.gt.f32.partialorder %v5262, 0.0
        %v7323 = vmul.f32 %v5261, 0.1
        %v7324 = vmul.f32 %v5262, 0.1
        %v7325 = vsel %vm7321, %v5261, %v7323
        %v7326 = vsel %vm7322, %v5262, %v7324
        %7327 = vmatprep.subr.mxu0 0.0
        %7328 = vmatpush1.msra.mxu0 %v7325
        %7329 = vmatprep.subr.mxu0 0.0
        %7330 = vmatpush1.msra.mxu0 %v7326
        %7331 = vmatprep.subr.mxu0 0.0
        %7332 = vmatpush1.msra.mxu0 0.0
        %7333 = vmatprep.subr.mxu0 0.0
        %7334 = vmatpush1.msra.mxu0 0.0
        %7335 = vmatprep.subr.mxu0 0.0
        %7336 = vmatpush1.msra.mxu0 0.0
        %7337 = vmatprep.subr.mxu0 0.0
        %7338 = vmatpush1.msra.mxu0 0.0
        %7339 = vmatprep.subr.mxu0 0.0
        %7340 = vmatpush1.msra.mxu0 0.0
        %7341 = vmatprep.subr.mxu0 0.0
        %7342 = vmatpush1.msra.mxu0 0.0
        %7343 = vmatprep.subr.mxu0 0.0
        %7344 = vmatpush1.msra.mxu0 0.0
        %7345 = vmatprep.subr.mxu0 0.0
        %7346 = vmatpush1.msra.mxu0 0.0
        %7347 = vmatprep.subr.mxu0 0.0
        %7348 = vmatpush1.msra.mxu0 0.0
        %7349 = vmatprep.subr.mxu0 0.0
        %7350 = vmatpush1.msra.mxu0 0.0
        %7351 = vmatprep.subr.mxu0 0.0
        %7352 = vmatpush1.msra.mxu0 0.0
        %7353 = vmatprep.subr.mxu0 0.0
        %7354 = vmatpush1.msra.mxu0 0.0
        %7355 = vmatprep.subr.mxu0 0.0
        %7356 = vmatpush1.msra.mxu0 0.0
        %7357 = vmatprep.subr.mxu0 0.0
        %7358 = vmatpush1.msra.mxu0 0.0
        %7359 = vmatprep.subr.mxu0 0.0
        %7360 = vmatpush1.msra.mxu0 0.0
        %7361 = vmatprep.subr.mxu0 0.0
        %7362 = vmatpush1.msra.mxu0 0.0
        %7363 = vmatprep.subr.mxu0 0.0
        %7364 = vmatpush1.msra.mxu0 0.0
        %7365 = vmatprep.subr.mxu0 0.0
        %7366 = vmatpush1.msra.mxu0 0.0
        %7367 = vmatprep.subr.mxu0 0.0
        %7368 = vmatpush1.msra.mxu0 0.0
        %7369 = vmatprep.subr.mxu0 0.0
        %7370 = vmatpush1.msra.mxu0 0.0
        %7371 = vmatprep.subr.mxu0 0.0
        %7372 = vmatpush1.msra.mxu0 0.0
        %7373 = vmatprep.subr.mxu0 0.0
        %7374 = vmatpush1.msra.mxu0 0.0
        %7375 = vmatprep.subr.mxu0 0.0
        %7376 = vmatpush1.msra.mxu0 0.0
        %7377 = vmatprep.subr.mxu0 0.0
        %7378 = vmatpush1.msra.mxu0 0.0
        %7379 = vmatprep.subr.mxu0 0.0
        %7380 = vmatpush1.msra.mxu0 0.0
        %7381 = vmatprep.subr.mxu0 0.0
        %7382 = vmatpush1.msra.mxu0 0.0
        %7383 = vmatprep.subr.mxu0 0.0
        %7384 = vmatpush1.msra.mxu0 0.0
        %7385 = vmatprep.subr.mxu0 0.0
        %7386 = vmatpush1.msra.mxu0 0.0
        %7387 = vmatprep.subr.mxu0 0.0
        %7388 = vmatpush1.msra.mxu0 0.0
        %7389 = vmatprep.subr.mxu0 0.0
        %7390 = vmatpush1.msra.mxu0 0.0
        %7391 = vmatprep.mubr.f32.mxu0 0.0
        %7392 = vmatmul.mubr.f32.gmra.mrb[0].mxu0 %v5271
        %v7393 = vpop.f32.mrb[0].mxu0
        %v7394 = vadd.f32 0.0, %v7393
        %v7395 = vpop.f32.mrb[0].mxu0
        %7396 = vdwg.mxu0
        %7397 = vmatprep.subr.mxu0 0.0
        %7398 = vmatpush1.msra.mxu0 %v7325
        %7399 = vmatprep.subr.mxu0 0.0
        %7400 = vmatpush1.msra.mxu0 %v7326
        %7401 = vmatprep.subr.mxu0 0.0
        %7402 = vmatpush1.msra.mxu0 0.0
        %7403 = vmatprep.subr.mxu0 0.0
        %7404 = vmatpush1.msra.mxu0 0.0
        %7405 = vmatprep.subr.mxu0 0.0
        %7406 = vmatpush1.msra.mxu0 0.0
        %7407 = vmatprep.subr.mxu0 0.0
        %7408 = vmatpush1.msra.mxu0 0.0
        %7409 = vmatprep.subr.mxu0 0.0
        %7410 = vmatpush1.msra.mxu0 0.0
        %7411 = vmatprep.subr.mxu0 0.0
        %7412 = vmatpush1.msra.mxu0 0.0
        %7413 = vmatprep.subr.mxu0 0.0
        %7414 = vmatpush1.msra.mxu0 0.0
        %7415 = vmatprep.subr.mxu0 0.0
        %7416 = vmatpush1.msra.mxu0 0.0
        %7417 = vmatprep.subr.mxu0 0.0
        %7418 = vmatpush1.msra.mxu0 0.0
        %7419 = vmatprep.subr.mxu0 0.0
        %7420 = vmatpush1.msra.mxu0 0.0
        %7421 = vmatprep.subr.mxu0 0.0
        %7422 = vmatpush1.msra.mxu0 0.0
        %7423 = vmatprep.subr.mxu0 0.0
        %7424 = vmatpush1.msra.mxu0 0.0
        %7425 = vmatprep.subr.mxu0 0.0
        %7426 = vmatpush1.msra.mxu0 0.0
        %7427 = vmatprep.subr.mxu0 0.0
        %7428 = vmatpush1.msra.mxu0 0.0
        %7429 = vmatprep.subr.mxu0 0.0
        %7430 = vmatpush1.msra.mxu0 0.0
        %7431 = vmatprep.subr.mxu0 0.0
        %7432 = vmatpush1.msra.mxu0 0.0
        %7433 = vmatprep.subr.mxu0 0.0
        %7434 = vmatpush1.msra.mxu0 0.0
        %7435 = vmatprep.subr.mxu0 0.0
        %7436 = vmatpush1.msra.mxu0 0.0
        %7437 = vmatprep.subr.mxu0 0.0
        %7438 = vmatpush1.msra.mxu0 0.0
        %7439 = vmatprep.subr.mxu0 0.0
        %7440 = vmatpush1.msra.mxu0 0.0
        %7441 = vmatprep.subr.mxu0 0.0
        %7442 = vmatpush1.msra.mxu0 0.0
        %7443 = vmatprep.subr.mxu0 0.0
        %7444 = vmatpush1.msra.mxu0 0.0
        %7445 = vmatprep.subr.mxu0 0.0
        %7446 = vmatpush1.msra.mxu0 0.0
        %7447 = vmatprep.subr.mxu0 0.0
        %7448 = vmatpush1.msra.mxu0 0.0
        %7449 = vmatprep.subr.mxu0 0.0
        %7450 = vmatpush1.msra.mxu0 0.0
        %7451 = vmatprep.subr.mxu0 0.0
        %7452 = vmatpush1.msra.mxu0 0.0
        %7453 = vmatprep.subr.mxu0 0.0
        %7454 = vmatpush1.msra.mxu0 0.0
        %7455 = vmatprep.subr.mxu0 0.0
        %7456 = vmatpush1.msra.mxu0 0.0
        %7457 = vmatprep.subr.mxu0 0.0
        %7458 = vmatpush1.msra.mxu0 0.0
        %7459 = vmatprep.subr.mxu0 0.0
        %7460 = vmatpush1.msra.mxu0 0.0
        %7461 = vmatprep.mubr.f32.mxu0 0.0
        %7462 = vmatmul.mubr.f32.gmra.mrb[0].mxu0 %v5344
        %v7463 = vpop.f32.mrb[0].mxu0
        %v7464 = vadd.f32 0.0, %v7463
        %v7465 = vpop.f32.mrb[0].mxu0
        %7466 = vdwg.mxu0
        %v7467 = vmax.f32 %v7394, %v7464
        %v7469 = vsel %vm5269, %v7467, 0
        %7471 = vmatprep.subr.mxu0 0.0
        %7472 = vmatpush1.msra.mxu0 %v388
        %7473 = vmatprep.subr.mxu0 0.0
        %7474 = vmatpush1.msra.mxu0 %v389
        %7475 = vmatprep.subr.mxu0 0.0
        %7476 = vmatpush1.msra.mxu0 0.0
        %7477 = vmatprep.subr.mxu0 0.0
        %7478 = vmatpush1.msra.mxu0 0.0
        %7479 = vmatprep.subr.mxu0 0.0
        %7480 = vmatpush1.msra.mxu0 0.0
        %7481 = vmatprep.subr.mxu0 0.0
        %7482 = vmatpush1.msra.mxu0 0.0
        %7483 = vmatprep.subr.mxu0 0.0
        %7484 = vmatpush1.msra.mxu0 0.0
        %7485 = vmatprep.subr.mxu0 0.0
        %7486 = vmatpush1.msra.mxu0 0.0
        %7487 = vmatprep.subr.mxu0 0.0
        %7488 = vmatpush1.msra.mxu0 0.0
        %7489 = vmatprep.subr.mxu0 0.0
        %7490 = vmatpush1.msra.mxu0 0.0
        %7491 = vmatprep.subr.mxu0 0.0
        %7492 = vmatpush1.msra.mxu0 0.0
        %7493 = vmatprep.subr.mxu0 0.0
        %7494 = vmatpush1.msra.mxu0 0.0
        %7495 = vmatprep.subr.mxu0 0.0
        %7496 = vmatpush1.msra.mxu0 0.0
        %7497 = vmatprep.subr.mxu0 0.0
        %7498 = vmatpush1.msra.mxu0 0.0
        %7499 = vmatprep.subr.mxu0 0.0
        %7500 = vmatpush1.msra.mxu0 0.0
        %7501 = vmatprep.subr.mxu0 0.0
        %7502 = vmatpush1.msra.mxu0 0.0
        %7503 = vmatprep.subr.mxu0 0.0
        %7504 = vmatpush1.msra.mxu0 0.0
        %7505 = vmatprep.subr.mxu0 0.0
        %7506 = vmatpush1.msra.mxu0 0.0
        %7507 = vmatprep.subr.mxu0 0.0
        %7508 = vmatpush1.msra.mxu0 0.0
        %7509 = vmatprep.subr.mxu0 0.0
        %7510 = vmatpush1.msra.mxu0 0.0
        %7511 = vmatprep.subr.mxu0 0.0
        %7512 = vmatpush1.msra.mxu0 0.0
        %7513 = vmatprep.subr.mxu0 0.0
        %7514 = vmatpush1.msra.mxu0 0.0
        %7515 = vmatprep.subr.mxu0 0.0
        %7516 = vmatpush1.msra.mxu0 0.0
        %7517 = vmatprep.subr.mxu0 0.0
        %7518 = vmatpush1.msra.mxu0 0.0
        %7519 = vmatprep.subr.mxu0 0.0
        %7520 = vmatpush1.msra.mxu0 0.0
        %7521 = vmatprep.subr.mxu0 0.0
        %7522 = vmatpush1.msra.mxu0 0.0
        %7523 = vmatprep.subr.mxu0 0.0
        %7524 = vmatpush1.msra.mxu0 0.0
        %7525 = vmatprep.subr.mxu0 0.0
        %7526 = vmatpush1.msra.mxu0 0.0
        %7527 = vmatprep.subr.mxu0 0.0
        %7528 = vmatpush1.msra.mxu0 0.0
        %7529 = vmatprep.subr.mxu0 0.0
        %7530 = vmatpush1.msra.mxu0 0.0
        %7531 = vmatprep.subr.mxu0 0.0
        %7532 = vmatpush1.msra.mxu0 0.0
        %7533 = vmatprep.subr.mxu0 0.0
        %7534 = vmatpush1.msra.mxu0 0.0
        %7535 = vmatprep.mubr.f32.mxu0 0.0
        %7536 = vmatmul.mubr.f32.gmra.mrb[0].mxu0 %v7469
        %v7537 = vpop.f32.mrb[0].mxu0
        %v7538 = vadd.f32 0.0, %v7537
        %v7539 = vpop.f32.mrb[0].mxu0
        %7540 = vdwg.mxu0
        %7541 = vmatprep.subr.mxu0 0.0
        %7542 = vmatpush1.msra.mxu0 %v395
        %7543 = vmatprep.subr.mxu0 0.0
        %7544 = vmatpush1.msra.mxu0 %v396
        %7545 = vmatprep.subr.mxu0 0.0
        %7546 = vmatpush1.msra.mxu0 0.0
        %7547 = vmatprep.subr.mxu0 0.0
        %7548 = vmatpush1.msra.mxu0 0.0
        %7549 = vmatprep.subr.mxu0 0.0
        %7550 = vmatpush1.msra.mxu0 0.0
        %7551 = vmatprep.subr.mxu0 0.0
        %7552 = vmatpush1.msra.mxu0 0.0
        %7553 = vmatprep.subr.mxu0 0.0
        %7554 = vmatpush1.msra.mxu0 0.0
        %7555 = vmatprep.subr.mxu0 0.0
        %7556 = vmatpush1.msra.mxu0 0.0
        %7557 = vmatprep.subr.mxu0 0.0
        %7558 = vmatpush1.msra.mxu0 0.0
        %7559 = vmatprep.subr.mxu0 0.0
        %7560 = vmatpush1.msra.mxu0 0.0
        %7561 = vmatprep.subr.mxu0 0.0
        %7562 = vmatpush1.msra.mxu0 0.0
        %7563 = vmatprep.subr.mxu0 0.0
        %7564 = vmatpush1.msra.mxu0 0.0
        %7565 = vmatprep.subr.mxu0 0.0
        %7566 = vmatpush1.msra.mxu0 0.0
        %7567 = vmatprep.subr.mxu0 0.0
        %7568 = vmatpush1.msra.mxu0 0.0
        %7569 = vmatprep.subr.mxu0 0.0
        %7570 = vmatpush1.msra.mxu0 0.0
        %7571 = vmatprep.subr.mxu0 0.0
        %7572 = vmatpush1.msra.mxu0 0.0
        %7573 = vmatprep.subr.mxu0 0.0
        %7574 = vmatpush1.msra.mxu0 0.0
        %7575 = vmatprep.subr.mxu0 0.0
        %7576 = vmatpush1.msra.mxu0 0.0
        %7577 = vmatprep.subr.mxu0 0.0
        %7578 = vmatpush1.msra.mxu0 0.0
        %7579 = vmatprep.subr.mxu0 0.0
        %7580 = vmatpush1.msra.mxu0 0.0
        %7581 = vmatprep.subr.mxu0 0.0
        %7582 = vmatpush1.msra.mxu0 0.0
        %7583 = vmatprep.subr.mxu0 0.0
        %7584 = vmatpush1.msra.mxu0 0.0
        %7585 = vmatprep.subr.mxu0 0.0
        %7586 = vmatpush1.msra.mxu0 0.0
        %7587 = vmatprep.subr.mxu0 0.0
        %7588 = vmatpush1.msra.mxu0 0.0
        %7589 = vmatprep.subr.mxu0 0.0
        %7590 = vmatpush1.msra.mxu0 0.0
        %7591 = vmatprep.subr.mxu0 0.0
        %7592 = vmatpush1.msra.mxu0 0.0
        %7593 = vmatprep.subr.mxu0 0.0
        %7594 = vmatpush1.msra.mxu0 0.0
        %7595 = vmatprep.subr.mxu0 0.0
        %7596 = vmatpush1.msra.mxu0 0.0
        %7597 = vmatprep.subr.mxu0 0.0
        %7598 = vmatpush1.msra.mxu0 0.0
        %7599 = vmatprep.subr.mxu0 0.0
        %7600 = vmatpush1.msra.mxu0 0.0
        %7601 = vmatprep.subr.mxu0 0.0
        %7602 = vmatpush1.msra.mxu0 0.0
        %7603 = vmatprep.subr.mxu0 0.0
        %7604 = vmatpush1.msra.mxu0 0.0
        %7605 = vmatprep.mubr.f32.mxu0 0.0
        %7606 = vmatmul.mubr.f32.gmra.mrb[0].mxu0 %v7469
        %v7607 = vpop.f32.mrb[0].mxu0
        %v7608 = vadd.f32 0.0, %v7607
        %v7609 = vpop.f32.mrb[0].mxu0
        %7610 = vdwg.mxu0
        %v7611 = vmax.f32 %v7538, %v7608
        %s7612 = scalar_lea.vmem %s173, 56 [#allocation7]
        %7613 = vst.msk [vmem:[%s7612] sm:$0xff] %vm5561, %v7611
        %s7614 = sand.u32 %s75, 1
        %s7615 = scalar_lea.sflag [#allocation4], %s7614
        %s7616 = sand.u32 %s75, 1
        %s7617 = smul.addr %s7616, 64
        %s7618 = scalar_lea.vmem [#allocation7], %s7617
        // Predicated region
        $region37: #{tpu_custom_call.1} parent=27 // pred_check
          %p7619 = pneg %p85
        $region38: #{tpu_custom_call.1} parent=27 // pred_check_branch
          %7621 = sbr.rel (%p7619) target = $region40
        $region39: #{tpu_custom_call.1} parent=27 // pred_region
          %s7623 = ssub.s32 1024, 1024
          %7624 = vsyncadd %s7615, %s7623
          %s7625 = smul.addr %s20, 8
          %s7626 = smul.addr %s7625, 128
          %s7627 = scalar_lea.hbm %s2, %s7626
          %s7628 = sshll.u32 %s7618, 4
          %s7629 = int_to_ptr.vmem [resolvable:$true] %s7628
          %7634 = dma.vmem_to_hbm [thread:$0]  %s7629, 1024, %s7627, %s7615, 128, 128, 8
        $region40: #{tpu_custom_call.1} parent=27 // pred_fallthru
          _
      $region28: #{tpu_custom_call.1} parent=5 // pred_fallthru
        _
      %p7635 = scmp.le.s32.totalorder 2, %s15
      // Predicated region
      $region41: #{tpu_custom_call.1} parent=5 // pred_check
        %p7636 = pneg %p7635
      $region42: #{tpu_custom_call.1} parent=5 // pred_check_branch
        %7638 = sbr.rel (%p7636) target = $region44
      $region43: #{tpu_custom_call.1} parent=5 // pred_region
        %s7639 = ssub.s32 %s15, 2
        // Predicated region
        $region45: #{tpu_custom_call.1} parent=43 // pred_check
          %p7640 = pneg %p91
        $region46: #{tpu_custom_call.1} parent=43 // pred_check_branch
          %7642 = sbr.rel (%p7640) target = $region48
        $region47: #{tpu_custom_call.1} parent=43 // pred_region
          %s7643 = sand.u32 %s76, 1
          %s7644 = scalar_lea.sflag [#allocation4], %s7643
          %s7645 = sand.u32 %s76, 1
          %s7646 = smul.addr %s7645, 64
          %s7647 = scalar_lea.vmem [#allocation7], %s7646
          %7648 = dma.done %s7644, 1024
        $region48: #{tpu_custom_call.1} parent=43 // pred_fallthru
          _
      $region44: #{tpu_custom_call.1} parent=5 // pred_fallthru
        _
    $region6: #{tpu_custom_call.1} parent=1 // loop_footer
      %s19 = sadd.s32 1, %s15
    $region7: #{tpu_custom_call.1} parent=1 // loop_footer_branch
      %14 = sbr.rel target = $region3
    $region8: #{tpu_custom_call.1} parent=1 // loop_exit
      _
    %7649 = vsyncpa [#allocation3], 1
    %s7650 = scalar_lea.sflag [#allocation3], 1
    %7651 = vsyncpa %s7650, 1
    %7652 = vsyncpa [#allocation4], 1
    %s7653 = scalar_lea.sflag [#allocation4], 1
    %7654 = vsyncpa %s7653, 1
    %7655 = vsyncpa [#allocation5], 1
    %s7656 = scalar_lea.sflag [#allocation5], 1
    %7657 = vsyncpa %s7656, 1

</llo_original>
